<compile_context>
chip_gen: v6e
topology: v6e:2x2x1
jax: 0.10.0
libtpu: 0.0.40
codegen_flags: <defaults>
</compile_context>

<pallas_src>
import functools

import jax
import jax.numpy as jnp
from jax.experimental import pallas as pl
from jax.experimental.pallas import tpu as pltpu

NUM_CLASSES = 22
STEM_C = 40          # EfficientNet-B3 stem output channels
STEM_C_PAD = 64      # padded for clean MXU / lane layout
K_STEM = 27          # 3*3*3 im2col contraction
K_STEM_PAD = 32      # padded contraction dim
FEAT_C = 1536        # EfficientNet-B3 classifier in_features
NC_PAD = 128         # logits padded to a lane-dense slab
BN2D_EPS = 1e-3      # EfficientNet BatchNorm2d eps
BN1D_EPS = 1e-5      # nn.BatchNorm1d default eps


def _round_up(x, m):
    return ((x + m - 1) // m) * m


def _use_bf16_epilogue():
    """bf16 SiLU epilogue only on generations with bf16 VPU/EUP (v6e, v7x)."""
    try:
        kind = jax.devices()[0].device_kind.lower()
    except Exception:
        return False
    return any(tag in kind for tag in ("v6", "v7", "7x"))


_BF16_EPILOGUE = _use_bf16_epilogue()


# ----------------------------- Pallas kernels ------------------------------

def _backbone_kernel(hw, ts, needs_mask, bf16_act,
                     p_ref, ws_ref, bs_ref, wf_ref, bf_ref, o_ref, acc_ref):
    """Fused backbone: stem conv (im2col matmul) + BN + SiLU, 1x1 feature conv
    + BN + SiLU, and global-average-pool accumulation, per (batch, row-tile)."""
    s = pl.program_id(1)
    last = pl.num_programs(1) - 1

    @pl.when(s == 0)
    def _():
        acc_ref[...] = jnp.zeros_like(acc_ref)

    # Stem: [ts, 32](bf16) @ [32, 64](bf16) -> f32, folded BN, SiLU (f32; tiny).
    h = jnp.dot(p_ref[...], ws_ref[...], preferred_element_type=jnp.float32)
    h = h + bs_ref[...]
    h = h * jax.nn.sigmoid(h)

    # 1x1 feature conv: [ts, 64](bf16) @ [64, 1536](bf16) -> f32 + BN bias.
    y = jnp.dot(h.astype(jnp.bfloat16), wf_ref[...],
                preferred_element_type=jnp.float32)
    y = y + bf_ref[...]

    # SiLU epilogue: bf16 on v6e/v7x (EUP slot is the binding slot), f32 on v5e.
    if bf16_act:
        yb = y.astype(jnp.bfloat16)
        act = yb * jax.nn.sigmoid(yb)
    else:
        act = y * jax.nn.sigmoid(y)

    # Sublane-partial GAP accumulation: VALU-only vreg adds into an (8, 1536)
    # f32 accumulator; the cross-sublane (XLU) collapse is deferred to finalize.
    def _partial_sum(a):
        return jnp.sum(a.reshape(ts // 8, 8, FEAT_C), axis=0,
                       dtype=jnp.float32)

    if needs_mask:
        # Row mask only on the last (partial) tile; full tiles take the fast path.
        @pl.when(s < last)
        def _():
            acc_ref[...] += _partial_sum(act)

        @pl.when(s == last)
        def _():
            row = jax.lax.broadcasted_iota(jnp.int32, (ts, 1), 0) + s * ts
            masked = jnp.where(row < hw, act.astype(jnp.float32), 0.0)
            acc_ref[...] += _partial_sum(masked)
    else:
        acc_ref[...] += _partial_sum(act)

    @pl.when(s == last)
    def _():
        pooled = jnp.sum(acc_ref[...], axis=0, keepdims=True) * (1.0 / hw)
        o_ref[...] = pooled


def _head_kernel(x_ref, w1_ref, b1_ref, w2_ref, b2_ref, w3_ref, b3_ref, o_ref):
    """Fused classifier head: Linear(+folded BN1d)->ReLU x2 -> Linear.
    Dropout = identity at inference. bf16 MXU operands, f32 accumulation."""
    h = jnp.dot(x_ref[...], w1_ref[...],
                preferred_element_type=jnp.float32) + b1_ref[...]
    h = jnp.maximum(h, 0.0)
    h = jnp.dot(h.astype(jnp.bfloat16), w2_ref[...],
                preferred_element_type=jnp.float32) + b2_ref[...]
    h = jnp.maximum(h, 0.0)
    o_ref[...] = jnp.dot(h.astype(jnp.bfloat16), w3_ref[...],
                         preferred_element_type=jnp.float32) + b3_ref[...]


# ------------------------------ Pallas glue --------------------------------

def _full_spec(shape):
    return pl.BlockSpec(shape, lambda i, _n=len(shape): (0,) * _n)


def _backbone(patches, w_stem, b_stem, w_feat, b_feat, B, hw):
    """Row-tiled fused backbone pass -> pooled features [B, FEAT_C] (f32)."""
    kp = patches.shape[-1]
    # Up-to-1024-row tiles (multiple of 8 sublanes): amortizes per-step overhead
    # at realistic B3 spatial sizes while staying inside v7x's 64 MiB VMEM.
    ts = min(1024, _round_up(hw, 8))
    n_s = pl.cdiv(hw, ts)
    needs_mask = (hw % ts) != 0

    cost = pl.CostEstimate(
        flops=2 * B * n_s * ts * (kp * STEM_C_PAD + STEM_C_PAD * FEAT_C),
        transcendentals=B * n_s * ts * (STEM_C_PAD + FEAT_C),
        bytes_accessed=(patches.size * patches.dtype.itemsize
                        + (w_stem.size + w_feat.size) * 2
                        + (b_stem.size + b_feat.size) * 4
                        + B * FEAT_C * 4),
    )

    # TODO(synk): on v7x with B == 1 the batch "parallel" axis leaves one
    # TensorCore idle; a spatial core-split (grid (2, B, n_s//2) with per-core
    # partial pooled outputs summed in the wrapper) would recover ~2x there.
    out = pl.pallas_call(
        functools.partial(_backbone_kernel, hw, ts, needs_mask, _BF16_EPILOGUE),
        out_shape=jax.ShapeDtypeStruct((B, 1, FEAT_C), jnp.float32),
        grid=(B, n_s),
        in_specs=[
            pl.BlockSpec((None, ts, kp), lambda b, s: (b, s, 0)),          # patches
            pl.BlockSpec((kp, STEM_C_PAD), lambda b, s: (0, 0)),           # w_stem
            pl.BlockSpec((1, STEM_C_PAD), lambda b, s: (0, 0)),            # b_stem
            pl.BlockSpec((STEM_C_PAD, FEAT_C), lambda b, s: (0, 0)),       # w_feat
            pl.BlockSpec((1, FEAT_C), lambda b, s: (0, 0)),                # b_feat
        ],
        out_specs=pl.BlockSpec((None, 1, FEAT_C), lambda b, s: (b, 0, 0)),
        scratch_shapes=[pltpu.VMEM((8, FEAT_C), jnp.float32)],
        compiler_params=pltpu.CompilerParams(
            dimension_semantics=("parallel", "arbitrary"),
            vmem_limit_bytes=48 * 1024 * 1024,
        ),
        cost_estimate=cost,
    )(patches, w_stem, b_stem, w_feat, b_feat)
    return out.reshape(B, FEAT_C)


def _im2col(x_nhwc, kh, kw, stride, pad):
    # TODO(synk): im2col stays in the wrapper (in-kernel shifted-window DMA
    # gather would cut stem HBM traffic further); the input is pre-cast to
    # bf16 so the [B, hw, K] intermediate is emitted at half the traffic.
    x = jnp.pad(x_nhwc, ((0, 0), (pad, pad), (pad, pad), (0, 0)))
    B, H, W, C = x.shape
    oh = (H - kh) // stride + 1
    ow = (W - kw) // stride + 1
    cols = []
    for i in range(kh):
        for j in range(kw):
            cols.append(x[:, i:i + oh * stride:stride, j:j + ow * stride:stride, :])
    p = jnp.stack(cols, axis=3)                    # [B, oh, ow, kh*kw, C]
    return p.reshape(B, oh * ow, kh * kw * C), oh, ow


# ------------------------------- parameters --------------------------------

def _bn_params(n):
    return {"gamma": jnp.ones((n,), jnp.float32),
            "beta": jnp.zeros((n,), jnp.float32),
            "mean": jnp.zeros((n,), jnp.float32),
            "var": jnp.ones((n,), jnp.float32)}


def _bn_fold(bn, eps):
    scale = bn["gamma"] * jax.lax.rsqrt(bn["var"] + eps)
    shift = bn["beta"] - bn["mean"] * scale
    return scale, shift


def _xavier_linear(key, fan_in, fan_out):
    # nn.init.xavier_uniform_ on weight [out, in]; bias = 0 (as in __init__).
    bound = (6.0 / (fan_in + fan_out)) ** 0.5
    w = jax.random.uniform(key, (fan_out, fan_in), jnp.float32, -bound, bound)
    b = jnp.zeros((fan_out,), jnp.float32)
    return w, b


def init_params(key):
    ks = jax.random.split(key, 5)
    p = {}

    # Backbone stem: Conv2d(3, 40, 3, stride=2, pad=1, bias=False) + BN2d + SiLU.
    # BN folded into the weight, padded 27->32 / 40->64, stored kernel-ready (bf16).
    stem_w = jax.random.normal(ks[0], (STEM_C, 3, 3, 3), jnp.float32) * 0.1
    sc, sh = _bn_fold(_bn_params(STEM_C), BN2D_EPS)
    w_stem = jnp.transpose(stem_w, (2, 3, 1, 0)).reshape(K_STEM, STEM_C)
    p["stem_wk"] = jnp.pad(w_stem * sc[None, :],
                           ((0, K_STEM_PAD - K_STEM),
                            (0, STEM_C_PAD - STEM_C))).astype(jnp.bfloat16)
    p["stem_bk"] = jnp.pad(sh, (0, STEM_C_PAD - STEM_C))[None, :]

    # Backbone final features conv: 1x1 -> 1536 channels + BN2d + SiLU.
    # TODO(synk): the intermediate EfficientNet-B3 MBConv/SE block stack
    # (depthwise convs, squeeze-excitation, stochastic depth) is not replicated;
    # the backbone here is stem conv -> 1x1 feature conv -> GAP with matching dims.
    feat_w = jax.random.normal(ks[1], (FEAT_C, STEM_C, 1, 1), jnp.float32) * 0.1
    sc, sh = _bn_fold(_bn_params(FEAT_C), BN2D_EPS)
    w_feat = jnp.transpose(feat_w, (2, 3, 1, 0)).reshape(STEM_C, FEAT_C)
    p["feat_wk"] = jnp.pad(w_feat * sc[None, :],
                           ((0, STEM_C_PAD - STEM_C), (0, 0))).astype(jnp.bfloat16)
    p["feat_bk"] = sh[None, :]

    # Custom classifier head: BN1d (eval) folded into the Linears; transposes,
    # lane padding and bf16 cast hoisted to init.
    w1, b1 = _xavier_linear(ks[2], FEAT_C, 512)
    a1, c1 = _bn_fold(_bn_params(512), BN1D_EPS)
    w2, b2 = _xavier_linear(ks[3], 512, 256)
    a2, c2 = _bn_fold(_bn_params(256), BN1D_EPS)
    w3, b3 = _xavier_linear(ks[4], 256, NUM_CLASSES)

    p["fc1_wt"] = (w1.T * a1[None, :]).astype(jnp.bfloat16)
    p["fc1_b"] = (b1 * a1 + c1)[None, :]
    p["fc2_wt"] = (w2.T * a2[None, :]).astype(jnp.bfloat16)
    p["fc2_b"] = (b2 * a2 + c2)[None, :]
    p["fc3_wt"] = jnp.pad(w3.T, ((0, 0),
                                 (0, NC_PAD - NUM_CLASSES))).astype(jnp.bfloat16)
    p["fc3_b"] = jnp.pad(b3, (0, NC_PAD - NUM_CLASSES))[None, :]
    return p


# -------------------------------- forward ----------------------------------

@jax.jit
def forward(params, x_nchw):
    x = jnp.transpose(x_nchw, (0, 2, 3, 1)).astype(jnp.bfloat16)   # NCHW -> NHWC
    B = x.shape[0]

    # im2col of the 3x3 stride-2 pad-1 stem conv; pad K 27->32 (bf16 throughout).
    patches, oh, ow = _im2col(x, 3, 3, 2, 1)        # [B, hw, 27] bf16
    hw = oh * ow
    patches = jnp.pad(patches, ((0, 0), (0, 0), (0, K_STEM_PAD - K_STEM)))

    # Fused stem + feature conv + SiLU + global-average-pool -> [B, 1536] f32.
    feats = _backbone(patches, params["stem_wk"], params["stem_bk"],
                      params["feat_wk"], params["feat_bk"], B, hw)

    # Classifier head. Pad rows to a sublane multiple, logits to a 128-lane
    # slab; bf16 activations/weights on the MXU, f32 bias/ReLU; slice back.
    BP = _round_up(B, 8)
    feats_p = jnp.pad(feats, ((0, BP - B), (0, 0))).astype(jnp.bfloat16)

    head_args = (
        feats_p,
        params["fc1_wt"], params["fc1_b"],
        params["fc2_wt"], params["fc2_b"],
        params["fc3_wt"], params["fc3_b"],
    )
    # TODO(synk): tile the head over 128-row blocks ("parallel" grid axis) once
    # serving batch sizes exceed a few sublanes; grid=(1,) is fine at B<=8.
    logits_p = pl.pallas_call(
        _head_kernel,
        out_shape=jax.ShapeDtypeStruct((BP, NC_PAD), jnp.float32),
        grid=(1,),
        in_specs=[_full_spec(a.shape) for a in head_args],
        out_specs=_full_spec((BP, NC_PAD)),
        compiler_params=pltpu.CompilerParams(
            dimension_semantics=("arbitrary",),
            vmem_limit_bytes=32 * 1024 * 1024,
        ),
    )(*head_args)
    return logits_p[:B, :NUM_CLASSES]


if __name__ == "__main__":
    key = jax.random.PRNGKey(0)
    pkey, xkey = jax.random.split(key)
    params = init_params(pkey)
    # Small PyTorch-style NCHW input: batch=2, channels=3, spatial=32.
    x = jax.random.normal(xkey, (2, 3, 32, 32), jnp.float32)
    logits = forward(params, x)
    jax.block_until_ready(logits)
    assert logits.shape == (2, NUM_CLASSES) and logits.dtype == jnp.float32
    assert bool(jnp.all(jnp.isfinite(logits)))
    print("KERNEL_OK")
</pallas_src>

<mosaic_0001>
module attributes {stable_mosaic.version = 11 : i64} {
  func.func @_backbone_kernel(%arg0: i32, %arg1: i32, %arg2: memref<1x256x32xbf16, #tpu.memory_space<vmem>>, %arg3: memref<32x64xbf16, #tpu.memory_space<vmem>>, %arg4: memref<1x64xf32, #tpu.memory_space<vmem>>, %arg5: memref<64x1536xbf16, #tpu.memory_space<vmem>>, %arg6: memref<1x1536xf32, #tpu.memory_space<vmem>>, %arg7: memref<1x1x1536xf32, #tpu.memory_space<vmem>>, %arg8: memref<8x1536xf32, #tpu.memory_space<vmem>>) attributes {dimension_semantics = [#tpu.dimension_semantics<parallel>, #tpu.dimension_semantics<arbitrary>], iteration_bounds = array<i64: 2, 1>, scalar_prefetch = 0 : i64, scratch_operands = 1 : i64, tpu.core_type = #tpu.core_type<tc>, window_params = [{transform_indices = @transform_0, window_bounds = array<i64: 1, 256, 32>}, {pipeline_mode = #tpu.pipeline_mode<synchronous>, transform_indices = @transform_1, window_bounds = array<i64: 32, 64>}, {pipeline_mode = #tpu.pipeline_mode<synchronous>, transform_indices = @transform_2, window_bounds = array<i64: 1, 64>}, {pipeline_mode = #tpu.pipeline_mode<synchronous>, transform_indices = @transform_3, window_bounds = array<i64: 64, 1536>}, {pipeline_mode = #tpu.pipeline_mode<synchronous>, transform_indices = @transform_4, window_bounds = array<i64: 1, 1536>}, {transform_indices = @transform_5, window_bounds = array<i64: 1, 1, 1536>}]} {
    %c0_i32 = arith.constant 0 : i32
    %0 = arith.cmpi eq, %arg1, %c0_i32 : i32
    %1 = arith.extui %0 : i1 to i32
    %c0_i32_0 = arith.constant 0 : i32
    %2 = arith.cmpi ne, %1, %c0_i32_0 : i32
    scf.if %2 {
      %cst_21 = arith.constant 0.000000e+00 : f32
      %36 = vector.broadcast %cst_21 : f32 to vector<8x1536xf32>
      %c0_22 = arith.constant 0 : index
      %c0_23 = arith.constant 0 : index
      %37 = vector.load %arg8[%c0_22, %c0_23] : memref<8x1536xf32, #tpu.memory_space<vmem>>, vector<8x1536xf32>
      tpu.vector_store %arg8[%c0_22, %c0_23], %36 {strides = array<i32>} : memref<8x1536xf32, #tpu.memory_space<vmem>>, vector<8x1536xf32>,
    } else {
    }
    %c0 = arith.constant 0 : index
    %c0_1 = arith.constant 0 : index
    %c0_2 = arith.constant 0 : index
    %3 = vector.load %arg2[%c0, %c0_1, %c0_2] : memref<1x256x32xbf16, #tpu.memory_space<vmem>>, vector<1x256x32xbf16>
    %4 = vector.shape_cast %3 : vector<1x256x32xbf16> to vector<256x32xbf16>
    %c0_3 = arith.constant 0 : index
    %c0_4 = arith.constant 0 : index
    %5 = vector.load %arg3[%c0_3, %c0_4] : memref<32x64xbf16, #tpu.memory_space<vmem>>, vector<32x64xbf16>
    %cst = arith.constant dense<0.000000e+00> : vector<256x64xf32>
    %6 = tpu.matmul %4, %5, %cst {dimension_numbers = #tpu.dot_dimension_numbers<[1], [0], [0], [1], [0, 0, 1, 1], [], []>} : vector<256x32xbf16>, vector<32x64xbf16>, vector<256x64xf32> -> vector<256x64xf32>
    %c0_5 = arith.constant 0 : index
    %c0_6 = arith.constant 0 : index
    %7 = vector.load %arg4[%c0_5, %c0_6] : memref<1x64xf32, #tpu.memory_space<vmem>>, vector<1x64xf32>
    %8 = vector.broadcast %7 : vector<1x64xf32> to vector<256x64xf32>
    %9 = arith.addf %6, %8 : vector<256x64xf32>
    %10 = arith.negf %9 : vector<256x64xf32>
    %11 = math.exp %10 : vector<256x64xf32>
    %cst_7 = arith.constant 1.000000e+00 : f32
    %12 = vector.broadcast %cst_7 : f32 to vector<256x64xf32>
    %13 = arith.addf %12, %11 : vector<256x64xf32>
    %14 = arith.divf %12, %13 : vector<256x64xf32>
    %15 = arith.mulf %9, %14 : vector<256x64xf32>
    %16 = arith.truncf %15 : vector<256x64xf32> to vector<256x64xbf16>
    %c0_8 = arith.constant 0 : index
    %c0_9 = arith.constant 0 : index
    %17 = vector.load %arg5[%c0_8, %c0_9] : memref<64x1536xbf16, #tpu.memory_space<vmem>>, vector<64x1536xbf16>
    %cst_10 = arith.constant dense<0.000000e+00> : vector<256x1536xf32>
    %18 = tpu.matmul %16, %17, %cst_10 {dimension_numbers = #tpu.dot_dimension_numbers<[1], [0], [0], [1], [0, 0, 1, 1], [], []>} : vector<256x64xbf16>, vector<64x1536xbf16>, vector<256x1536xf32> -> vector<256x1536xf32>
    %c0_11 = arith.constant 0 : index
    %c0_12 = arith.constant 0 : index
    %19 = vector.load %arg6[%c0_11, %c0_12] : memref<1x1536xf32, #tpu.memory_space<vmem>>, vector<1x1536xf32>
    %20 = vector.broadcast %19 : vector<1x1536xf32> to vector<256x1536xf32>
    %21 = arith.addf %18, %20 : vector<256x1536xf32>
    %22 = arith.negf %21 : vector<256x1536xf32>
    %23 = math.exp %22 : vector<256x1536xf32>
    %cst_13 = arith.constant 1.000000e+00 : f32
    %24 = vector.broadcast %cst_13 : f32 to vector<256x1536xf32>
    %25 = arith.addf %24, %23 : vector<256x1536xf32>
    %26 = arith.divf %24, %25 : vector<256x1536xf32>
    %27 = arith.mulf %21, %26 : vector<256x1536xf32>
    %c0_14 = arith.constant 0 : index
    %c0_15 = arith.constant 0 : index
    %28 = vector.load %arg8[%c0_14, %c0_15] : memref<8x1536xf32, #tpu.memory_space<vmem>>, vector<8x1536xf32>
    %29 = vector.shape_cast %27 : vector<256x1536xf32> to vector<32x8x1536xf32>
    %cst_16 = arith.constant dense<0.000000e+00> : vector<8x1536xf32>
    %30 = vector.multi_reduction <add>, %29, %cst_16 [0] : vector<32x8x1536xf32> to vector<8x1536xf32>
    %31 = arith.addf %28, %30 : vector<8x1536xf32>
    %c0_17 = arith.constant 0 : index
    %c0_18 = arith.constant 0 : index
    %32 = vector.load %arg8[%c0_17, %c0_18] : memref<8x1536xf32, #tpu.memory_space<vmem>>, vector<8x1536xf32>
    tpu.vector_store %arg8[%c0_17, %c0_18], %31 {strides = array<i32>} : memref<8x1536xf32, #tpu.memory_space<vmem>>, vector<8x1536xf32>,
    %c0_i32_19 = arith.constant 0 : i32
    %33 = arith.cmpi eq, %arg1, %c0_i32_19 : i32
    %34 = arith.extui %33 : i1 to i32
    %c0_i32_20 = arith.constant 0 : i32
    %35 = arith.cmpi ne, %34, %c0_i32_20 : i32
    scf.if %35 {
      %c0_21 = arith.constant 0 : index
      %c0_22 = arith.constant 0 : index
      %36 = vector.load %arg8[%c0_21, %c0_22] : memref<8x1536xf32, #tpu.memory_space<vmem>>, vector<8x1536xf32>
      %cst_23 = arith.constant dense<0.000000e+00> : vector<1536xf32>
      %37 = vector.multi_reduction <add>, %36, %cst_23 [0] : vector<8x1536xf32> to vector<1536xf32>
      %38 = vector.shape_cast %37 : vector<1536xf32> to vector<1x1536xf32>
      %cst_24 = arith.constant 3.906250e-03 : f32
      %39 = vector.broadcast %cst_24 : f32 to vector<1x1536xf32>
      %40 = arith.mulf %38, %39 : vector<1x1536xf32>
      %c0_25 = arith.constant 0 : index
      %c0_26 = arith.constant 0 : index
      %c0_27 = arith.constant 0 : index
      %41 = vector.load %arg7[%c0_25, %c0_26, %c0_27] : memref<1x1x1536xf32, #tpu.memory_space<vmem>>, vector<1x1x1536xf32>
      %42 = vector.shape_cast %41 : vector<1x1x1536xf32> to vector<1x1536xf32>
      %43 = vector.shape_cast %40 : vector<1x1536xf32> to vector<1x1x1536xf32>
      tpu.vector_store %arg7[%c0_25, %c0_26, %c0_27], %43 {strides = array<i32>} : memref<1x1x1536xf32, #tpu.memory_space<vmem>>, vector<1x1x1536xf32>,
    } else {
    }
    return
  }
  func.func @transform_0(%arg0: i32, %arg1: i32) -> (i32, i32, i32) {
    %c0_i32 = arith.constant 0 : i32
    %c0_i32_0 = arith.constant 0 : i32
    return %arg0, %arg1, %c0_i32 : i32, i32, i32
  }
  func.func @transform_1(%arg0: i32, %arg1: i32) -> (i32, i32) {
    %c0_i32 = arith.constant 0 : i32
    %c0_i32_0 = arith.constant 0 : i32
    %c0_i32_1 = arith.constant 0 : i32
    return %c0_i32, %c0_i32_0 : i32, i32
  }
  func.func @transform_2(%arg0: i32, %arg1: i32) -> (i32, i32) {
    %c0_i32 = arith.constant 0 : i32
    %c0_i32_0 = arith.constant 0 : i32
    %c0_i32_1 = arith.constant 0 : i32
    return %c0_i32, %c0_i32_0 : i32, i32
  }
  func.func @transform_3(%arg0: i32, %arg1: i32) -> (i32, i32) {
    %c0_i32 = arith.constant 0 : i32
    %c0_i32_0 = arith.constant 0 : i32
    %c0_i32_1 = arith.constant 0 : i32
    return %c0_i32, %c0_i32_0 : i32, i32
  }
  func.func @transform_4(%arg0: i32, %arg1: i32) -> (i32, i32) {
    %c0_i32 = arith.constant 0 : i32
    %c0_i32_0 = arith.constant 0 : i32
    %c0_i32_1 = arith.constant 0 : i32
    return %c0_i32, %c0_i32_0 : i32, i32
  }
  func.func @transform_5(%arg0: i32, %arg1: i32) -> (i32, i32, i32) {
    %c0_i32 = arith.constant 0 : i32
    %c0_i32_0 = arith.constant 0 : i32
    %c0_i32_1 = arith.constant 0 : i32
    return %arg0, %c0_i32, %c0_i32_0 : i32, i32, i32
  }
}

module attributes {stable_mosaic.version = 11 : i64} {
  func.func @_head_kernel(%arg0: i32, %arg1: memref<8x1536xbf16, #tpu.memory_space<vmem>>, %arg2: memref<1536x512xbf16, #tpu.memory_space<vmem>>, %arg3: memref<1x512xf32, #tpu.memory_space<vmem>>, %arg4: memref<512x256xbf16, #tpu.memory_space<vmem>>, %arg5: memref<1x256xf32, #tpu.memory_space<vmem>>, %arg6: memref<256x128xbf16, #tpu.memory_space<vmem>>, %arg7: memref<1x128xf32, #tpu.memory_space<vmem>>, %arg8: memref<8x128xf32, #tpu.memory_space<vmem>>) attributes {dimension_semantics = [#tpu.dimension_semantics<arbitrary>], iteration_bounds = array<i64: 1>, scalar_prefetch = 0 : i64, scratch_operands = 0 : i64, tpu.core_type = #tpu.core_type<tc>, window_params = [{pipeline_mode = #tpu.pipeline_mode<synchronous>, transform_indices = @transform_0, window_bounds = array<i64: 8, 1536>}, {pipeline_mode = #tpu.pipeline_mode<synchronous>, transform_indices = @transform_1, window_bounds = array<i64: 1536, 512>}, {pipeline_mode = #tpu.pipeline_mode<synchronous>, transform_indices = @transform_2, window_bounds = array<i64: 1, 512>}, {pipeline_mode = #tpu.pipeline_mode<synchronous>, transform_indices = @transform_3, window_bounds = array<i64: 512, 256>}, {pipeline_mode = #tpu.pipeline_mode<synchronous>, transform_indices = @transform_4, window_bounds = array<i64: 1, 256>}, {pipeline_mode = #tpu.pipeline_mode<synchronous>, transform_indices = @transform_5, window_bounds = array<i64: 256, 128>}, {pipeline_mode = #tpu.pipeline_mode<synchronous>, transform_indices = @transform_6, window_bounds = array<i64: 1, 128>}, {pipeline_mode = #tpu.pipeline_mode<synchronous>, transform_indices = @transform_7, window_bounds = array<i64: 8, 128>}]} {
    %c0 = arith.constant 0 : index
    %c0_0 = arith.constant 0 : index
    %0 = vector.load %arg1[%c0, %c0_0] : memref<8x1536xbf16, #tpu.memory_space<vmem>>, vector<8x1536xbf16>
    %c0_1 = arith.constant 0 : index
    %c0_2 = arith.constant 0 : index
    %1 = vector.load %arg2[%c0_1, %c0_2] : memref<1536x512xbf16, #tpu.memory_space<vmem>>, vector<1536x512xbf16>
    %cst = arith.constant dense<0.000000e+00> : vector<8x512xf32>
    %2 = tpu.matmul %0, %1, %cst {dimension_numbers = #tpu.dot_dimension_numbers<[1], [0], [0], [1], [0, 0, 1, 1], [], []>} : vector<8x1536xbf16>, vector<1536x512xbf16>, vector<8x512xf32> -> vector<8x512xf32>
    %c0_3 = arith.constant 0 : index
    %c0_4 = arith.constant 0 : index
    %3 = vector.load %arg3[%c0_3, %c0_4] : memref<1x512xf32, #tpu.memory_space<vmem>>, vector<1x512xf32>
    %4 = vector.broadcast %3 : vector<1x512xf32> to vector<8x512xf32>
    %5 = arith.addf %2, %4 : vector<8x512xf32>
    %cst_5 = arith.constant 0.000000e+00 : f32
    %6 = vector.broadcast %cst_5 : f32 to vector<8x512xf32>
    %7 = arith.maximumf %5, %6 : vector<8x512xf32>
    %8 = arith.truncf %7 : vector<8x512xf32> to vector<8x512xbf16>
    %c0_6 = arith.constant 0 : index
    %c0_7 = arith.constant 0 : index
    %9 = vector.load %arg4[%c0_6, %c0_7] : memref<512x256xbf16, #tpu.memory_space<vmem>>, vector<512x256xbf16>
    %cst_8 = arith.constant dense<0.000000e+00> : vector<8x256xf32>
    %10 = tpu.matmul %8, %9, %cst_8 {dimension_numbers = #tpu.dot_dimension_numbers<[1], [0], [0], [1], [0, 0, 1, 1], [], []>} : vector<8x512xbf16>, vector<512x256xbf16>, vector<8x256xf32> -> vector<8x256xf32>
    %c0_9 = arith.constant 0 : index
    %c0_10 = arith.constant 0 : index
    %11 = vector.load %arg5[%c0_9, %c0_10] : memref<1x256xf32, #tpu.memory_space<vmem>>, vector<1x256xf32>
    %12 = vector.broadcast %11 : vector<1x256xf32> to vector<8x256xf32>
    %13 = arith.addf %10, %12 : vector<8x256xf32>
    %cst_11 = arith.constant 0.000000e+00 : f32
    %14 = vector.broadcast %cst_11 : f32 to vector<8x256xf32>
    %15 = arith.maximumf %13, %14 : vector<8x256xf32>
    %16 = arith.truncf %15 : vector<8x256xf32> to vector<8x256xbf16>
    %c0_12 = arith.constant 0 : index
    %c0_13 = arith.constant 0 : index
    %17 = vector.load %arg6[%c0_12, %c0_13] : memref<256x128xbf16, #tpu.memory_space<vmem>>, vector<256x128xbf16>
    %cst_14 = arith.constant dense<0.000000e+00> : vector<8x128xf32>
    %18 = tpu.matmul %16, %17, %cst_14 {dimension_numbers = #tpu.dot_dimension_numbers<[1], [0], [0], [1], [0, 0, 1, 1], [], []>} : vector<8x256xbf16>, vector<256x128xbf16>, vector<8x128xf32> -> vector<8x128xf32>
    %c0_15 = arith.constant 0 : index
    %c0_16 = arith.constant 0 : index
    %19 = vector.load %arg7[%c0_15, %c0_16] : memref<1x128xf32, #tpu.memory_space<vmem>>, vector<1x128xf32>
    %20 = vector.broadcast %19 : vector<1x128xf32> to vector<8x128xf32>
    %21 = arith.addf %18, %20 : vector<8x128xf32>
    %c0_17 = arith.constant 0 : index
    %c0_18 = arith.constant 0 : index
    %22 = vector.load %arg8[%c0_17, %c0_18] : memref<8x128xf32, #tpu.memory_space<vmem>>, vector<8x128xf32>
    tpu.vector_store %arg8[%c0_17, %c0_18], %21 {strides = array<i32>} : memref<8x128xf32, #tpu.memory_space<vmem>>, vector<8x128xf32>,
    return
  }
  func.func @transform_0(%arg0: i32) -> (i32, i32) {
    %c0_i32 = arith.constant 0 : i32
    %c0_i32_0 = arith.constant 0 : i32
    %c0_i32_1 = arith.constant 0 : i32
    return %c0_i32, %c0_i32_0 : i32, i32
  }
  func.func @transform_1(%arg0: i32) -> (i32, i32) {
    %c0_i32 = arith.constant 0 : i32
    %c0_i32_0 = arith.constant 0 : i32
    %c0_i32_1 = arith.constant 0 : i32
    return %c0_i32, %c0_i32_0 : i32, i32
  }
  func.func @transform_2(%arg0: i32) -> (i32, i32) {
    %c0_i32 = arith.constant 0 : i32
    %c0_i32_0 = arith.constant 0 : i32
    %c0_i32_1 = arith.constant 0 : i32
    return %c0_i32, %c0_i32_0 : i32, i32
  }
  func.func @transform_3(%arg0: i32) -> (i32, i32) {
    %c0_i32 = arith.constant 0 : i32
    %c0_i32_0 = arith.constant 0 : i32
    %c0_i32_1 = arith.constant 0 : i32
    return %c0_i32, %c0_i32_0 : i32, i32
  }
  func.func @transform_4(%arg0: i32) -> (i32, i32) {
    %c0_i32 = arith.constant 0 : i32
    %c0_i32_0 = arith.constant 0 : i32
    %c0_i32_1 = arith.constant 0 : i32
    return %c0_i32, %c0_i32_0 : i32, i32
  }
  func.func @transform_5(%arg0: i32) -> (i32, i32) {
    %c0_i32 = arith.constant 0 : i32
    %c0_i32_0 = arith.constant 0 : i32
    %c0_i32_1 = arith.constant 0 : i32
    return %c0_i32, %c0_i32_0 : i32, i32
  }
  func.func @transform_6(%arg0: i32) -> (i32, i32) {
    %c0_i32 = arith.constant 0 : i32
    %c0_i32_0 = arith.constant 0 : i32
    %c0_i32_1 = arith.constant 0 : i32
    return %c0_i32, %c0_i32_0 : i32, i32
  }
  func.func @transform_7(%arg0: i32) -> (i32, i32) {
    %c0_i32 = arith.constant 0 : i32
    %c0_i32_0 = arith.constant 0 : i32
    %c0_i32_1 = arith.constant 0 : i32
    return %c0_i32, %c0_i32_0 : i32, i32
  }
}

</mosaic_0001>

<llo_original>
// kernel: forward.2
$region0: #{forward.2}
  #allocation0 [shape = 'u32[]', space=smem, size = 0x4, offset = 0x4, fixed_abs, tag = 'smem constant byte address 0x4 - core index']
  #allocation1 [shape = 'u32[144,128]{1,0:T(1,128)}', space=vmem, size = 0x12000, scoped, tag = 'internal scratch']
  #allocation2 [shape = 'f32[8,1536]{1,0:T(8,128)}', space=vmem, size = 0xc000, scoped, tag = 'scratch operand']
  %s0 = inlined_call_operand.vmem [shape: bf16[2,256,32], index: 0, kind: input, shape index: {}]
  %s1 = inlined_call_operand.vmem [shape: bf16[32,64], index: 1, kind: input, shape index: {}]
  %s2 = inlined_call_operand.vmem [shape: f32[1,64], index: 2, kind: input, shape index: {}]
  %s3 = inlined_call_operand.vmem [shape: bf16[64,1536], index: 3, kind: input, shape index: {}]
  %s4 = inlined_call_operand.vmem [shape: f32[1,1536], index: 4, kind: input, shape index: {}]
  %s5 = inlined_call_operand.vmem [shape: f32[2,1,1536], index: 5, kind: output, shape index: {}]
  %s6 = sld [smem:[#allocation0]]
  $region61: #{forward.2} parent=0
    _
  %s8 = ssub.s32 1, %s6
  %s9 = scalar_select 0, %s8, %s6
  loop: start=0, step=1, limit=4
  $region2: #{forward.2} parent=0 // loop_pre_header
    _
  $region3: #{forward.2} parent=0 // loop_header
    %s11 = sphi 0, %s15
    %p12 = scmp.ge.s32.totalorder %s11, 4
    %s18 = sphi 0, %s30
    %s19 = sphi 0, %s26
    %s20 = sphi 0, %s18
    %s21 = sphi 0, %s19
    %s22 = sphi 0, %s20
    %s23 = sphi 0, %s21
    %s35 = sphi 0, %s37
    %s38 = sphi 0, %s35
    %s39 = sphi 0, %s38
    %s55 = sphi 0, %s39
    %s59 = sphi 0, %s59
    %s61 = sphi 0, %s59
    %s62 = sphi 0, %s61
    %s76 = sphi 0, %s62
    %s80 = sphi 0, %s80
    %s82 = sphi 0, %s80
    %s83 = sphi 0, %s82
    %s97 = sphi 0, %s83
    %s101 = sphi 0, %s101
    %s103 = sphi 0, %s101
    %s104 = sphi 0, %s103
    %s118 = sphi 0, %s104
    %s122 = sphi 0, %s122
    %s124 = sphi 0, %s122
    %s125 = sphi 0, %s124
    %s139 = sphi 0, %s125
    %s145 = sphi 0, %s147
    %s148 = sphi 0, %s145
    %s149 = sphi 0, %s148
    %s165 = sphi 0, %s149
  $region4: #{forward.2} parent=0 // loop_header_branch
    %14 = sbr.rel (%p12) target = $region8
  $region5: #{forward.2} parent=0 // loop_body
    %s16 = ssub.s32 %s11, 1
    %s17 = ssub.s32 %s11, 2
    %s24 = sadd.s32 1, %s19
    %p25 = scmp.ge.s32.totalorder %s24, 1
    %s26 = scalar_select %p25, 0, %s24
    %s27 = sadd.s32 1, %s18
    %s28 = scalar_select %p25, %s27, %s18
    %p29 = scmp.ge.s32.totalorder %s28, 2
    %s30 = scalar_select %p29, 0, %s28
    %s31 = ssub.s32 %s18, %s30
    %s32 = ssub.s32 %s19, %s26
    %s33 = sor.u32 %s31, %s32
    %p34 = scmp.eq.s32.totalorder %s33, 0
    %s36 = sadd.s32 %s35, 1
    %s37 = scalar_select %p34, %s35, %s36
    %p40 = pneg %p34
    %p41 = scmp.eq.s32.totalorder %s11, 1
    %p42 = por %p40, %p41
    %p43 = scmp.ne.s32.totalorder %s35, %s38
    %p44 = scmp.eq.s32.totalorder %s11, 0
    %p45 = por %p43, %p44
    %p46 = scmp.ne.s32.totalorder %s35, %s38
    %p47 = scmp.eq.s32.totalorder %s16, 1
    %p48 = por %p46, %p47
    %p49 = scmp.ne.s32.totalorder %s38, %s39
    %p50 = scmp.eq.s32.totalorder %s16, 0
    %p51 = por %p49, %p50
    %p52 = scmp.ne.s32.totalorder %s38, %s39
    %p53 = scmp.eq.s32.totalorder %s17, 1
    %p54 = por %p52, %p53
    %p56 = scmp.ne.s32.totalorder %s39, %s55
    %p57 = scmp.eq.s32.totalorder %s17, 0
    %p58 = por %p56, %p57
    %s60 = sadd.s32 %s59, 1
    %p63 = scmp.eq.s32.totalorder %s11, 1
    %p64 = scmp.ne.s32.totalorder %s59, %s61
    %p65 = scmp.eq.s32.totalorder %s11, 0
    %p66 = por %p64, %p65
    %p67 = scmp.ne.s32.totalorder %s59, %s61
    %p68 = scmp.eq.s32.totalorder %s16, 1
    %p69 = por %p67, %p68
    %p70 = scmp.ne.s32.totalorder %s61, %s62
    %p71 = scmp.eq.s32.totalorder %s16, 0
    %p72 = por %p70, %p71
    %p73 = scmp.ne.s32.totalorder %s61, %s62
    %p74 = scmp.eq.s32.totalorder %s17, 1
    %p75 = por %p73, %p74
    %p77 = scmp.ne.s32.totalorder %s62, %s76
    %p78 = scmp.eq.s32.totalorder %s17, 0
    %p79 = por %p77, %p78
    %s81 = sadd.s32 %s80, 1
    %p84 = scmp.eq.s32.totalorder %s11, 1
    %p85 = scmp.ne.s32.totalorder %s80, %s82
    %p86 = scmp.eq.s32.totalorder %s11, 0
    %p87 = por %p85, %p86
    %p88 = scmp.ne.s32.totalorder %s80, %s82
    %p89 = scmp.eq.s32.totalorder %s16, 1
    %p90 = por %p88, %p89
    %p91 = scmp.ne.s32.totalorder %s82, %s83
    %p92 = scmp.eq.s32.totalorder %s16, 0
    %p93 = por %p91, %p92
    %p94 = scmp.ne.s32.totalorder %s82, %s83
    %p95 = scmp.eq.s32.totalorder %s17, 1
    %p96 = por %p94, %p95
    %p98 = scmp.ne.s32.totalorder %s83, %s97
    %p99 = scmp.eq.s32.totalorder %s17, 0
    %p100 = por %p98, %p99
    %s102 = sadd.s32 %s101, 1
    %p105 = scmp.eq.s32.totalorder %s11, 1
    %p106 = scmp.ne.s32.totalorder %s101, %s103
    %p107 = scmp.eq.s32.totalorder %s11, 0
    %p108 = por %p106, %p107
    %p109 = scmp.ne.s32.totalorder %s101, %s103
    %p110 = scmp.eq.s32.totalorder %s16, 1
    %p111 = por %p109, %p110
    %p112 = scmp.ne.s32.totalorder %s103, %s104
    %p113 = scmp.eq.s32.totalorder %s16, 0
    %p114 = por %p112, %p113
    %p115 = scmp.ne.s32.totalorder %s103, %s104
    %p116 = scmp.eq.s32.totalorder %s17, 1
    %p117 = por %p115, %p116
    %p119 = scmp.ne.s32.totalorder %s104, %s118
    %p120 = scmp.eq.s32.totalorder %s17, 0
    %p121 = por %p119, %p120
    %s123 = sadd.s32 %s122, 1
    %p126 = scmp.eq.s32.totalorder %s11, 1
    %p127 = scmp.ne.s32.totalorder %s122, %s124
    %p128 = scmp.eq.s32.totalorder %s11, 0
    %p129 = por %p127, %p128
    %p130 = scmp.ne.s32.totalorder %s122, %s124
    %p131 = scmp.eq.s32.totalorder %s16, 1
    %p132 = por %p130, %p131
    %p133 = scmp.ne.s32.totalorder %s124, %s125
    %p134 = scmp.eq.s32.totalorder %s16, 0
    %p135 = por %p133, %p134
    %p136 = scmp.ne.s32.totalorder %s124, %s125
    %p137 = scmp.eq.s32.totalorder %s17, 1
    %p138 = por %p136, %p137
    %p140 = scmp.ne.s32.totalorder %s125, %s139
    %p141 = scmp.eq.s32.totalorder %s17, 0
    %p142 = por %p140, %p141
    %s143 = ssub.s32 %s18, %s30
    %p144 = scmp.eq.s32.totalorder %s143, 0
    %s146 = sadd.s32 %s145, 1
    %s147 = scalar_select %p144, %s145, %s146
    %p150 = pneg %p144
    %p151 = scmp.eq.s32.totalorder %s11, 1
    %p152 = por %p150, %p151
    %p153 = scmp.ne.s32.totalorder %s145, %s148
    %p154 = scmp.eq.s32.totalorder %s11, 0
    %p155 = por %p153, %p154
    %p156 = scmp.ne.s32.totalorder %s145, %s148
    %p157 = scmp.eq.s32.totalorder %s16, 1
    %p158 = por %p156, %p157
    %p159 = scmp.ne.s32.totalorder %s148, %s149
    %p160 = scmp.eq.s32.totalorder %s16, 0
    %p161 = por %p159, %p160
    %p162 = scmp.ne.s32.totalorder %s148, %s149
    %p163 = scmp.eq.s32.totalorder %s17, 1
    %p164 = por %p162, %p163
    %p166 = scmp.ne.s32.totalorder %s149, %s165
    %p167 = scmp.eq.s32.totalorder %s17, 0
    %p168 = por %p166, %p167
    %p169 = scmp.le.s32.totalorder 1, %s11
    %p170 = scmp.lt.s32.totalorder %s11, 3
    %p171 = pnand %p169, %p170
    %p172 = pneg %p171
    // Predicated region
    $region9: #{forward.2} parent=5 // pred_check
      _
    $region10: #{forward.2} parent=5 // pred_check_branch
      %174 = sbr.rel (%p171) target = $region12
    $region11: #{forward.2} parent=5 // pred_region
      %s175 = ssub.s32 %s11, 1
      // Predicated region
      $region13: #{forward.2} parent=11 // pred_check
        %p176 = pneg %p72
      $region14: #{forward.2} parent=11 // pred_check_branch
        %178 = sbr.rel (%p176) target = $region16
      $region15: #{forward.2} parent=11 // pred_region
        _
      $region16: #{forward.2} parent=11 // pred_fallthru
        _
      // Predicated region
      $region17: #{forward.2} parent=11 // pred_check
        %p179 = pneg %p93
      $region18: #{forward.2} parent=11 // pred_check_branch
        %181 = sbr.rel (%p179) target = $region20
      $region19: #{forward.2} parent=11 // pred_region
        _
      $region20: #{forward.2} parent=11 // pred_fallthru
        _
      // Predicated region
      $region21: #{forward.2} parent=11 // pred_check
        %p182 = pneg %p114
      $region22: #{forward.2} parent=11 // pred_check_branch
        %184 = sbr.rel (%p182) target = $region24
      $region23: #{forward.2} parent=11 // pred_region
        _
      $region24: #{forward.2} parent=11 // pred_fallthru
        _
      // Predicated region
      $region25: #{forward.2} parent=11 // pred_check
        %p185 = pneg %p135
      $region26: #{forward.2} parent=11 // pred_check_branch
        %187 = sbr.rel (%p185) target = $region28
      $region27: #{forward.2} parent=11 // pred_region
        _
      $region28: #{forward.2} parent=11 // pred_fallthru
        _
    $region12: #{forward.2} parent=5 // pred_fallthru
      _
    %p188 = scmp.lt.s32.totalorder %s11, 2
    // Predicated region
    $region29: #{forward.2} parent=5 // pred_check
      %p189 = pneg %p188
    $region30: #{forward.2} parent=5 // pred_check_branch
      %191 = sbr.rel (%p189) target = $region32
    $region31: #{forward.2} parent=5 // pred_region
      // Predicated region
      $region33: #{forward.2} parent=31 // pred_check
        %p192 = pneg %p45
      $region34: #{forward.2} parent=31 // pred_check_branch
        %194 = sbr.rel (%p192) target = $region36
      $region35: #{forward.2} parent=31 // pred_region
        %s195 = smul.u32 32, %s19
        %p196 = scmp.lt.s32.totalorder %s18, 1
        %s197 = scalar_select %p196, %s18, 1
        %p198 = scmp.lt.s32.totalorder %s195, 31
        %s199 = scalar_select %p198, %s195, 31
        %s200 = smul.addr %s197, 32
        %s201 = sadd.s32 %s199, %s200
        %s202 = smul.addr %s201, 4
        %s203 = scalar_lea.vmem %s0, %s202
        %s204 = smul.u32 32, %s19
      $region36: #{forward.2} parent=31 // pred_fallthru
        _
    $region32: #{forward.2} parent=5 // pred_fallthru
      _
    %p205 = scmp.le.s32.totalorder 1, %s11
    %p206 = scmp.lt.s32.totalorder %s11, 3
    %p207 = pnand %p205, %p206
    %p208 = pneg %p207
    // Predicated region
    $region37: #{forward.2} parent=5 // pred_check
      _
    $region38: #{forward.2} parent=5 // pred_check_branch
      %210 = sbr.rel (%p207) target = $region40
    $region39: #{forward.2} parent=5 // pred_region
      %s211 = ssub.s32 %s11, 1
      %s212 = smul.u32 32, %s21
      %p213 = scmp.lt.s32.totalorder %s20, 1
      %s214 = scalar_select %p213, %s20, 1
      %p215 = scmp.lt.s32.totalorder %s212, 31
      %s216 = scalar_select %p215, %s212, 31
      %s217 = smul.addr %s214, 32
      %s218 = sadd.s32 %s216, %s217
      %s219 = smul.addr %s218, 4
      %s220 = scalar_lea.vmem %s0, %s219
      %p221 = pneg %p51
      %p222 = pneg %p48
      %p223 = pneg %p72
      %p224 = pneg %p69
      %p225 = pneg %p93
      %p226 = pneg %p90
      %p227 = pneg %p114
      %p228 = pneg %p111
      %p229 = pneg %p135
      %p230 = pneg %p132
      %p231 = pneg %p161
      %p232 = pneg %p158
      %p233 = scmp.lt.s32.totalorder %s20, 1
      %s234 = scalar_select %p233, %s20, 1
      %s235 = smul.addr %s234, 12
      %s236 = scalar_lea.vmem %s5, %s235
      %s237 = smul.u32 32, %s21
      %p238 = scmp.lt.s32.totalorder %s20, 1
      %s239 = scalar_select %p238, %s20, 1
      %p240 = scmp.lt.s32.totalorder %s237, 31
      %s241 = scalar_select %p240, %s237, 31
      %s242 = smul.addr %s239, 32
      %s243 = sadd.s32 %s241, %s242
      %s244 = smul.addr %s243, 4
      %s245 = scalar_lea.vmem %s0, %s244
      %s246 = smul.u32 32, %s21
      %p247 = scmp.lt.s32.totalorder %s20, 1
      %s248 = scalar_select %p247, %s20, 1
      %s249 = smul.addr %s248, 12
      %s250 = scalar_lea.vmem %s5, %s249
      %p252 = scmp.eq.s32.totalorder %s21, 0
      // Predicated region
      $region41: #{forward.2} parent=39 // pred_check
        %p253 = pneg %p252
      $region42: #{forward.2} parent=39 // pred_check_branch
        %255 = sbr.rel (%p253) target = $region44
      $region43: #{forward.2} parent=39 // pred_region
        %256 = vst [vmem:[#allocation2] sm:$0xff] 0.0
        %257 = vst [vmem:[#allocation2 + $0x8] sm:$0xff] 0.0
        %258 = vst [vmem:[#allocation2 + $0x10] sm:$0xff] 0.0
        %259 = vst [vmem:[#allocation2 + $0x18] sm:$0xff] 0.0
        %260 = vst [vmem:[#allocation2 + $0x20] sm:$0xff] 0.0
        %261 = vst [vmem:[#allocation2 + $0x28] sm:$0xff] 0.0
        %262 = vst [vmem:[#allocation2 + $0x30] sm:$0xff] 0.0
        %263 = vst [vmem:[#allocation2 + $0x38] sm:$0xff] 0.0
        %264 = vst [vmem:[#allocation2 + $0x40] sm:$0xff] 0.0
        %265 = vst [vmem:[#allocation2 + $0x48] sm:$0xff] 0.0
        %266 = vst [vmem:[#allocation2 + $0x50] sm:$0xff] 0.0
        %267 = vst [vmem:[#allocation2 + $0x58] sm:$0xff] 0.0
      $region44: #{forward.2} parent=39 // pred_fallthru
        _
      %v268 = vld [vmem:[%s245] sm:$0xf]
      %v269 = vld [vmem:[%s245 + $0x4] sm:$0xf]
      %v270 = vld [vmem:[%s245 + $0x8] sm:$0xf]
      %v271 = vld [vmem:[%s245 + $0xc] sm:$0xf]
      %v272 = vld [vmem:[%s245 + $0x10] sm:$0xf]
      %v273 = vld [vmem:[%s245 + $0x14] sm:$0xf]
      %v274 = vld [vmem:[%s245 + $0x18] sm:$0xf]
      %v275 = vld [vmem:[%s245 + $0x1c] sm:$0xf]
      %v276 = vld [vmem:[%s245 + $0x20] sm:$0xf]
      %v277 = vld [vmem:[%s245 + $0x24] sm:$0xf]
      %v278 = vld [vmem:[%s245 + $0x28] sm:$0xf]
      %v279 = vld [vmem:[%s245 + $0x2c] sm:$0xf]
      %v280 = vld [vmem:[%s245 + $0x30] sm:$0xf]
      %v281 = vld [vmem:[%s245 + $0x34] sm:$0xf]
      %v282 = vld [vmem:[%s245 + $0x38] sm:$0xf]
      %v283 = vld [vmem:[%s245 + $0x3c] sm:$0xf]
      %v284 = vld [vmem:[%s245 + $0x40] sm:$0xf]
      %v285 = vld [vmem:[%s245 + $0x44] sm:$0xf]
      %v286 = vld [vmem:[%s245 + $0x48] sm:$0xf]
      %v287 = vld [vmem:[%s245 + $0x4c] sm:$0xf]
      %v288 = vld [vmem:[%s245 + $0x50] sm:$0xf]
      %v289 = vld [vmem:[%s245 + $0x54] sm:$0xf]
      %v290 = vld [vmem:[%s245 + $0x58] sm:$0xf]
      %v291 = vld [vmem:[%s245 + $0x5c] sm:$0xf]
      %v292 = vld [vmem:[%s245 + $0x60] sm:$0xf]
      %v293 = vld [vmem:[%s245 + $0x64] sm:$0xf]
      %v294 = vld [vmem:[%s245 + $0x68] sm:$0xf]
      %v295 = vld [vmem:[%s245 + $0x6c] sm:$0xf]
      %v296 = vld [vmem:[%s245 + $0x70] sm:$0xf]
      %v297 = vld [vmem:[%s245 + $0x74] sm:$0xf]
      %v298 = vld [vmem:[%s245 + $0x78] sm:$0xf]
      %v299 = vld [vmem:[%s245 + $0x7c] sm:$0xf]
      %v300 = vld [vmem:[%s1] sm:$0xf]
      %v301 = vld [vmem:[%s1 + $0x4] sm:$0xf]
      %v302 = vld [vmem:[%s1 + $0x8] sm:$0xf]
      %v303 = vld [vmem:[%s1 + $0xc] sm:$0xf]
      %v304 = vld [vmem:[%s2] sm:$0x1]
      %v306 = vlaneseq
      %v307 = vshrl.u32 %v306, 7
      %v308 = vsub.s32 0, %v307
      %v309 = vrot.slane %v304, %v308
      %v343 = vunpack.c.l.b16 %v268
      %v344 = vunpack.c.l.b16 %v269
      %v345 = vunpack.c.l.b16 %v270
      %v346 = vunpack.c.l.b16 %v271
      %v347 = vunpack.c.l.b16 %v272
      %v348 = vunpack.c.l.b16 %v273
      %v349 = vunpack.c.l.b16 %v274
      %v350 = vunpack.c.l.b16 %v275
      %v351 = vunpack.c.l.b16 %v276
      %v352 = vunpack.c.l.b16 %v277
      %v353 = vunpack.c.l.b16 %v278
      %v354 = vunpack.c.l.b16 %v279
      %v355 = vunpack.c.l.b16 %v280
      %v356 = vunpack.c.l.b16 %v281
      %v357 = vunpack.c.l.b16 %v282
      %v358 = vunpack.c.l.b16 %v283
      %v359 = vunpack.c.l.b16 %v284
      %v360 = vunpack.c.l.b16 %v285
      %v361 = vunpack.c.l.b16 %v286
      %v362 = vunpack.c.l.b16 %v287
      %v363 = vunpack.c.l.b16 %v288
      %v364 = vunpack.c.l.b16 %v289
      %v365 = vunpack.c.l.b16 %v290
      %v366 = vunpack.c.l.b16 %v291
      %v367 = vunpack.c.l.b16 %v292
      %v368 = vunpack.c.l.b16 %v293
      %v369 = vunpack.c.l.b16 %v294
      %v370 = vunpack.c.l.b16 %v295
      %v371 = vunpack.c.l.b16 %v296
      %v372 = vunpack.c.l.b16 %v297
      %v373 = vunpack.c.l.b16 %v298
      %v374 = vunpack.c.l.b16 %v299
      %v375 = vpack.c.b16 %v344, %v343
      %v376 = vpack.c.b16 %v346, %v345
      %v377 = vpack.c.b16 %v348, %v347
      %v378 = vpack.c.b16 %v350, %v349
      %v379 = vpack.c.b16 %v352, %v351
      %v380 = vpack.c.b16 %v354, %v353
      %v381 = vpack.c.b16 %v356, %v355
      %v382 = vpack.c.b16 %v358, %v357
      %v383 = vpack.c.b16 %v360, %v359
      %v384 = vpack.c.b16 %v362, %v361
      %v385 = vpack.c.b16 %v364, %v363
      %v386 = vpack.c.b16 %v366, %v365
      %v387 = vpack.c.b16 %v368, %v367
      %v388 = vpack.c.b16 %v370, %v369
      %v389 = vpack.c.b16 %v372, %v371
      %v390 = vpack.c.b16 %v374, %v373
      %v395 = vunpack.c.l.b16 %v300
      %v396 = vunpack.c.l.b16 %v301
      %v397 = vunpack.c.l.b16 %v302
      %v398 = vunpack.c.l.b16 %v303
      %v399 = vpack.c.b16 %v396, %v395
      %v400 = vpack.c.b16 %v398, %v397
      %vm403 = vcmask 261120
      %v405 = vsel %vm403, %v375, 0
      %v408 = vsel %vm403, %v376, 0
      %v411 = vsel %vm403, %v377, 0
      %v414 = vsel %vm403, %v378, 0
      %v417 = vsel %vm403, %v379, 0
      %v420 = vsel %vm403, %v380, 0
      %v423 = vsel %vm403, %v381, 0
      %v426 = vsel %vm403, %v382, 0
      %v429 = vsel %vm403, %v383, 0
      %v432 = vsel %vm403, %v384, 0
      %v435 = vsel %vm403, %v385, 0
      %v438 = vsel %vm403, %v386, 0
      %v441 = vsel %vm403, %v387, 0
      %v444 = vsel %vm403, %v388, 0
      %v447 = vsel %vm403, %v389, 0
      %v450 = vsel %vm403, %v390, 0
      %452 = vmatprep.subr.bf16.mxu0 0
      %453 = vmatpush1.bf16.msra.mxu0 0
      %454 = vmatprep.subr.bf16.mxu0 0
      %455 = vmatpush1.bf16.msra.mxu0 0
      %456 = vmatprep.subr.bf16.mxu0 0
      %457 = vmatpush1.bf16.msra.mxu0 0
      %458 = vmatprep.subr.bf16.mxu0 0
      %459 = vmatpush1.bf16.msra.mxu0 0
      %460 = vmatprep.subr.bf16.mxu0 0
      %461 = vmatpush1.bf16.msra.mxu0 0
      %462 = vmatprep.subr.bf16.mxu0 0
      %463 = vmatpush1.bf16.msra.mxu0 0
      %464 = vmatprep.subr.bf16.mxu0 0
      %465 = vmatpush1.bf16.msra.mxu0 %v400
      %466 = vmatprep.subr.bf16.mxu0 0
      %467 = vmatpush1.bf16.msra.mxu0 %v399
      %468 = vmatprep.subr.bf16.mxu0 0
      %469 = vmatpush2.bf16.msra.mxu0 0
      %470 = vmatprep.subr.bf16.mxu0 0
      %471 = vmatpush2.bf16.msra.mxu0 0
      %472 = vmatprep.subr.bf16.mxu0 0
      %473 = vmatpush2.bf16.msra.mxu0 0
      %474 = vmatprep.subr.bf16.mxu0 0
      %475 = vmatpush2.bf16.msra.mxu0 0
      %476 = vmatprep.subr.bf16.mxu0 0
      %477 = vmatpush2.bf16.msra.mxu0 0
      %478 = vmatprep.subr.bf16.mxu0 0
      %479 = vmatpush2.bf16.msra.mxu0 0
      %480 = vmatprep.subr.bf16.mxu0 0
      %481 = vmatpush2.bf16.msra.mxu0 0
      %482 = vmatprep.subr.bf16.mxu0 0
      %483 = vmatpush2.bf16.msra.mxu0 0
      %484 = vmatprep.mubr.bf16.mxu0 0
      %485 = vmatmul.mubr.bf16.gmra.mxu0 %v405
      %v486 = vpop.f32.mrf.mxu0
      %v487 = vadd.f32 %v309, %v486
      %v488 = vpop.f32.mrf.mxu0
      %v489 = vpop.f32.mrf.mxu0
      %v490 = vadd.f32 %v309, %v489
      %v491 = vpop.f32.mrf.mxu0
      %492 = vmatprep.mubr.bf16.mxu0 0
      %493 = vmatmul.mubr.bf16.gmra.mxu0 %v408
      %v494 = vpop.f32.mrf.mxu0
      %v495 = vadd.f32 %v309, %v494
      %v496 = vpop.f32.mrf.mxu0
      %v497 = vpop.f32.mrf.mxu0
      %v498 = vadd.f32 %v309, %v497
      %v499 = vpop.f32.mrf.mxu0
      %500 = vmatprep.mubr.bf16.mxu0 0
      %501 = vmatmul.mubr.bf16.gmra.mxu0 %v411
      %v502 = vpop.f32.mrf.mxu0
      %v503 = vadd.f32 %v309, %v502
      %v504 = vpop.f32.mrf.mxu0
      %v505 = vpop.f32.mrf.mxu0
      %v506 = vadd.f32 %v309, %v505
      %v507 = vpop.f32.mrf.mxu0
      %508 = vmatprep.mubr.bf16.mxu0 0
      %509 = vmatmul.mubr.bf16.gmra.mxu0 %v414
      %v510 = vpop.f32.mrf.mxu0
      %v511 = vadd.f32 %v309, %v510
      %v512 = vpop.f32.mrf.mxu0
      %v513 = vpop.f32.mrf.mxu0
      %v514 = vadd.f32 %v309, %v513
      %v515 = vpop.f32.mrf.mxu0
      %516 = vmatprep.mubr.bf16.mxu0 0
      %517 = vmatmul.mubr.bf16.gmra.mxu0 %v417
      %v518 = vpop.f32.mrf.mxu0
      %v519 = vadd.f32 %v309, %v518
      %v520 = vpop.f32.mrf.mxu0
      %v521 = vpop.f32.mrf.mxu0
      %v522 = vadd.f32 %v309, %v521
      %v523 = vpop.f32.mrf.mxu0
      %524 = vmatprep.mubr.bf16.mxu0 0
      %525 = vmatmul.mubr.bf16.gmra.mxu0 %v420
      %v526 = vpop.f32.mrf.mxu0
      %v527 = vadd.f32 %v309, %v526
      %v528 = vpop.f32.mrf.mxu0
      %v529 = vpop.f32.mrf.mxu0
      %v530 = vadd.f32 %v309, %v529
      %v531 = vpop.f32.mrf.mxu0
      %532 = vmatprep.mubr.bf16.mxu0 0
      %533 = vmatmul.mubr.bf16.gmra.mxu0 %v423
      %v534 = vpop.f32.mrf.mxu0
      %v535 = vadd.f32 %v309, %v534
      %v536 = vpop.f32.mrf.mxu0
      %v537 = vpop.f32.mrf.mxu0
      %v538 = vadd.f32 %v309, %v537
      %v539 = vpop.f32.mrf.mxu0
      %540 = vmatprep.mubr.bf16.mxu0 0
      %541 = vmatmul.mubr.bf16.gmra.mxu0 %v426
      %v542 = vpop.f32.mrf.mxu0
      %v543 = vadd.f32 %v309, %v542
      %v544 = vpop.f32.mrf.mxu0
      %v545 = vpop.f32.mrf.mxu0
      %v546 = vadd.f32 %v309, %v545
      %v547 = vpop.f32.mrf.mxu0
      %548 = vmatprep.mubr.bf16.mxu0 0
      %549 = vmatmul.mubr.bf16.gmra.mxu0 %v429
      %v550 = vpop.f32.mrf.mxu0
      %v551 = vadd.f32 %v309, %v550
      %v552 = vpop.f32.mrf.mxu0
      %v553 = vpop.f32.mrf.mxu0
      %v554 = vadd.f32 %v309, %v553
      %v555 = vpop.f32.mrf.mxu0
      %556 = vmatprep.mubr.bf16.mxu0 0
      %557 = vmatmul.mubr.bf16.gmra.mxu0 %v432
      %v558 = vpop.f32.mrf.mxu0
      %v559 = vadd.f32 %v309, %v558
      %v560 = vpop.f32.mrf.mxu0
      %v561 = vpop.f32.mrf.mxu0
      %v562 = vadd.f32 %v309, %v561
      %v563 = vpop.f32.mrf.mxu0
      %564 = vmatprep.mubr.bf16.mxu0 0
      %565 = vmatmul.mubr.bf16.gmra.mxu0 %v435
      %v566 = vpop.f32.mrf.mxu0
      %v567 = vadd.f32 %v309, %v566
      %v568 = vpop.f32.mrf.mxu0
      %v569 = vpop.f32.mrf.mxu0
      %v570 = vadd.f32 %v309, %v569
      %v571 = vpop.f32.mrf.mxu0
      %572 = vmatprep.mubr.bf16.mxu0 0
      %573 = vmatmul.mubr.bf16.gmra.mxu0 %v438
      %v574 = vpop.f32.mrf.mxu0
      %v575 = vadd.f32 %v309, %v574
      %v576 = vpop.f32.mrf.mxu0
      %v577 = vpop.f32.mrf.mxu0
      %v578 = vadd.f32 %v309, %v577
      %v579 = vpop.f32.mrf.mxu0
      %580 = vmatprep.mubr.bf16.mxu0 0
      %581 = vmatmul.mubr.bf16.gmra.mxu0 %v441
      %v582 = vpop.f32.mrf.mxu0
      %v583 = vadd.f32 %v309, %v582
      %v584 = vpop.f32.mrf.mxu0
      %v585 = vpop.f32.mrf.mxu0
      %v586 = vadd.f32 %v309, %v585
      %v587 = vpop.f32.mrf.mxu0
      %588 = vmatprep.mubr.bf16.mxu0 0
      %589 = vmatmul.mubr.bf16.gmra.mxu0 %v444
      %v590 = vpop.f32.mrf.mxu0
      %v591 = vadd.f32 %v309, %v590
      %v592 = vpop.f32.mrf.mxu0
      %v593 = vpop.f32.mrf.mxu0
      %v594 = vadd.f32 %v309, %v593
      %v595 = vpop.f32.mrf.mxu0
      %596 = vmatprep.mubr.bf16.mxu0 0
      %597 = vmatmul.mubr.bf16.gmra.mxu0 %v447
      %v598 = vpop.f32.mrf.mxu0
      %v599 = vadd.f32 %v309, %v598
      %v600 = vpop.f32.mrf.mxu0
      %v601 = vpop.f32.mrf.mxu0
      %v602 = vadd.f32 %v309, %v601
      %v603 = vpop.f32.mrf.mxu0
      %604 = vmatprep.mubr.bf16.mxu0 0
      %605 = vmatmul.mubr.bf16.gmra.mxu0 %v450
      %v606 = vpop.f32.mrf.mxu0
      %v607 = vadd.f32 %v309, %v606
      %v608 = vpop.f32.mrf.mxu0
      %v609 = vpop.f32.mrf.mxu0
      %v610 = vadd.f32 %v309, %v609
      %v611 = vpop.f32.mrf.mxu0
      %612 = vdwg.mxu0
      %v613 = vxor.u32 %v487, 2147483648
      %v614 = vxor.u32 %v490, 2147483648
      %v615 = vxor.u32 %v495, 2147483648
      %v616 = vxor.u32 %v498, 2147483648
      %v617 = vxor.u32 %v503, 2147483648
      %v618 = vxor.u32 %v506, 2147483648
      %v619 = vxor.u32 %v511, 2147483648
      %v620 = vxor.u32 %v514, 2147483648
      %v621 = vxor.u32 %v519, 2147483648
      %v622 = vxor.u32 %v522, 2147483648
      %v623 = vxor.u32 %v527, 2147483648
      %v624 = vxor.u32 %v530, 2147483648
      %v625 = vxor.u32 %v535, 2147483648
      %v626 = vxor.u32 %v538, 2147483648
      %v627 = vxor.u32 %v543, 2147483648
      %v628 = vxor.u32 %v546, 2147483648
      %v629 = vxor.u32 %v551, 2147483648
      %v630 = vxor.u32 %v554, 2147483648
      %v631 = vxor.u32 %v559, 2147483648
      %v632 = vxor.u32 %v562, 2147483648
      %v633 = vxor.u32 %v567, 2147483648
      %v634 = vxor.u32 %v570, 2147483648
      %v635 = vxor.u32 %v575, 2147483648
      %v636 = vxor.u32 %v578, 2147483648
      %v637 = vxor.u32 %v583, 2147483648
      %v638 = vxor.u32 %v586, 2147483648
      %v639 = vxor.u32 %v591, 2147483648
      %v640 = vxor.u32 %v594, 2147483648
      %v641 = vxor.u32 %v599, 2147483648
      %v642 = vxor.u32 %v602, 2147483648
      %v643 = vxor.u32 %v607, 2147483648
      %v644 = vxor.u32 %v610, 2147483648
      %v645 = vmul.f32 %v613, 1.442695
      %v646 = vpow.pop %v645
      %v647 = vmul.f32 %v614, 1.442695
      %v648 = vpow.pop %v647
      %v649 = vmul.f32 %v615, 1.442695
      %v650 = vpow.pop %v649
      %v651 = vmul.f32 %v616, 1.442695
      %v652 = vpow.pop %v651
      %v653 = vmul.f32 %v617, 1.442695
      %v654 = vpow.pop %v653
      %v655 = vmul.f32 %v618, 1.442695
      %v656 = vpow.pop %v655
      %v657 = vmul.f32 %v619, 1.442695
      %v658 = vpow.pop %v657
      %v659 = vmul.f32 %v620, 1.442695
      %v660 = vpow.pop %v659
      %v661 = vmul.f32 %v621, 1.442695
      %v662 = vpow.pop %v661
      %v663 = vmul.f32 %v622, 1.442695
      %v664 = vpow.pop %v663
      %v665 = vmul.f32 %v623, 1.442695
      %v666 = vpow.pop %v665
      %v667 = vmul.f32 %v624, 1.442695
      %v668 = vpow.pop %v667
      %v669 = vmul.f32 %v625, 1.442695
      %v670 = vpow.pop %v669
      %v671 = vmul.f32 %v626, 1.442695
      %v672 = vpow.pop %v671
      %v673 = vmul.f32 %v627, 1.442695
      %v674 = vpow.pop %v673
      %v675 = vmul.f32 %v628, 1.442695
      %v676 = vpow.pop %v675
      %v677 = vmul.f32 %v629, 1.442695
      %v678 = vpow.pop %v677
      %v679 = vmul.f32 %v630, 1.442695
      %v680 = vpow.pop %v679
      %v681 = vmul.f32 %v631, 1.442695
      %v682 = vpow.pop %v681
      %v683 = vmul.f32 %v632, 1.442695
      %v684 = vpow.pop %v683
      %v685 = vmul.f32 %v633, 1.442695
      %v686 = vpow.pop %v685
      %v687 = vmul.f32 %v634, 1.442695
      %v688 = vpow.pop %v687
      %v689 = vmul.f32 %v635, 1.442695
      %v690 = vpow.pop %v689
      %v691 = vmul.f32 %v636, 1.442695
      %v692 = vpow.pop %v691
      %v693 = vmul.f32 %v637, 1.442695
      %v694 = vpow.pop %v693
      %v695 = vmul.f32 %v638, 1.442695
      %v696 = vpow.pop %v695
      %v697 = vmul.f32 %v639, 1.442695
      %v698 = vpow.pop %v697
      %v699 = vmul.f32 %v640, 1.442695
      %v700 = vpow.pop %v699
      %v701 = vmul.f32 %v641, 1.442695
      %v702 = vpow.pop %v701
      %v703 = vmul.f32 %v642, 1.442695
      %v704 = vpow.pop %v703
      %v705 = vmul.f32 %v643, 1.442695
      %v706 = vpow.pop %v705
      %v707 = vmul.f32 %v644, 1.442695
      %v708 = vpow.pop %v707
      %v709 = vadd.f32 %v646, 1.0
      %v710 = vadd.f32 %v648, 1.0
      %v711 = vadd.f32 %v650, 1.0
      %v712 = vadd.f32 %v652, 1.0
      %v713 = vadd.f32 %v654, 1.0
      %v714 = vadd.f32 %v656, 1.0
      %v715 = vadd.f32 %v658, 1.0
      %v716 = vadd.f32 %v660, 1.0
      %v717 = vadd.f32 %v662, 1.0
      %v718 = vadd.f32 %v664, 1.0
      %v719 = vadd.f32 %v666, 1.0
      %v720 = vadd.f32 %v668, 1.0
      %v721 = vadd.f32 %v670, 1.0
      %v722 = vadd.f32 %v672, 1.0
      %v723 = vadd.f32 %v674, 1.0
      %v724 = vadd.f32 %v676, 1.0
      %v725 = vadd.f32 %v678, 1.0
      %v726 = vadd.f32 %v680, 1.0
      %v727 = vadd.f32 %v682, 1.0
      %v728 = vadd.f32 %v684, 1.0
      %v729 = vadd.f32 %v686, 1.0
      %v730 = vadd.f32 %v688, 1.0
      %v731 = vadd.f32 %v690, 1.0
      %v732 = vadd.f32 %v692, 1.0
      %v733 = vadd.f32 %v694, 1.0
      %v734 = vadd.f32 %v696, 1.0
      %v735 = vadd.f32 %v698, 1.0
      %v736 = vadd.f32 %v700, 1.0
      %v737 = vadd.f32 %v702, 1.0
      %v738 = vadd.f32 %v704, 1.0
      %v739 = vadd.f32 %v706, 1.0
      %v740 = vadd.f32 %v708, 1.0
      %v741 = vrcp.pop %v709
      %v742 = vmul.f32 1.0, %v741
      %v743 = vrcp.pop %v710
      %v744 = vmul.f32 1.0, %v743
      %v745 = vrcp.pop %v711
      %v746 = vmul.f32 1.0, %v745
      %v747 = vrcp.pop %v712
      %v748 = vmul.f32 1.0, %v747
      %v749 = vrcp.pop %v713
      %v750 = vmul.f32 1.0, %v749
      %v751 = vrcp.pop %v714
      %v752 = vmul.f32 1.0, %v751
      %v753 = vrcp.pop %v715
      %v754 = vmul.f32 1.0, %v753
      %v755 = vrcp.pop %v716
      %v756 = vmul.f32 1.0, %v755
      %v757 = vrcp.pop %v717
      %v758 = vmul.f32 1.0, %v757
      %v759 = vrcp.pop %v718
      %v760 = vmul.f32 1.0, %v759
      %v761 = vrcp.pop %v719
      %v762 = vmul.f32 1.0, %v761
      %v763 = vrcp.pop %v720
      %v764 = vmul.f32 1.0, %v763
      %v765 = vrcp.pop %v721
      %v766 = vmul.f32 1.0, %v765
      %v767 = vrcp.pop %v722
      %v768 = vmul.f32 1.0, %v767
      %v769 = vrcp.pop %v723
      %v770 = vmul.f32 1.0, %v769
      %v771 = vrcp.pop %v724
      %v772 = vmul.f32 1.0, %v771
      %v773 = vrcp.pop %v725
      %v774 = vmul.f32 1.0, %v773
      %v775 = vrcp.pop %v726
      %v776 = vmul.f32 1.0, %v775
      %v777 = vrcp.pop %v727
      %v778 = vmul.f32 1.0, %v777
      %v779 = vrcp.pop %v728
      %v780 = vmul.f32 1.0, %v779
      %v781 = vrcp.pop %v729
      %v782 = vmul.f32 1.0, %v781
      %v783 = vrcp.pop %v730
      %v784 = vmul.f32 1.0, %v783
      %v785 = vrcp.pop %v731
      %v786 = vmul.f32 1.0, %v785
      %v787 = vrcp.pop %v732
      %v788 = vmul.f32 1.0, %v787
      %v789 = vrcp.pop %v733
      %v790 = vmul.f32 1.0, %v789
      %v791 = vrcp.pop %v734
      %v792 = vmul.f32 1.0, %v791
      %v793 = vrcp.pop %v735
      %v794 = vmul.f32 1.0, %v793
      %v795 = vrcp.pop %v736
      %v796 = vmul.f32 1.0, %v795
      %v797 = vrcp.pop %v737
      %v798 = vmul.f32 1.0, %v797
      %v799 = vrcp.pop %v738
      %v800 = vmul.f32 1.0, %v799
      %v801 = vrcp.pop %v739
      %v802 = vmul.f32 1.0, %v801
      %v803 = vrcp.pop %v740
      %v804 = vmul.f32 1.0, %v803
      %v805 = vmul.f32 %v487, %v742
      %v806 = vmul.f32 %v490, %v744
      %v807 = vmul.f32 %v495, %v746
      %v808 = vmul.f32 %v498, %v748
      %v809 = vmul.f32 %v503, %v750
      %v810 = vmul.f32 %v506, %v752
      %v811 = vmul.f32 %v511, %v754
      %v812 = vmul.f32 %v514, %v756
      %v813 = vmul.f32 %v519, %v758
      %v814 = vmul.f32 %v522, %v760
      %v815 = vmul.f32 %v527, %v762
      %v816 = vmul.f32 %v530, %v764
      %v817 = vmul.f32 %v535, %v766
      %v818 = vmul.f32 %v538, %v768
      %v819 = vmul.f32 %v543, %v770
      %v820 = vmul.f32 %v546, %v772
      %v821 = vmul.f32 %v551, %v774
      %v822 = vmul.f32 %v554, %v776
      %v823 = vmul.f32 %v559, %v778
      %v824 = vmul.f32 %v562, %v780
      %v825 = vmul.f32 %v567, %v782
      %v826 = vmul.f32 %v570, %v784
      %v827 = vmul.f32 %v575, %v786
      %v828 = vmul.f32 %v578, %v788
      %v829 = vmul.f32 %v583, %v790
      %v830 = vmul.f32 %v586, %v792
      %v831 = vmul.f32 %v591, %v794
      %v832 = vmul.f32 %v594, %v796
      %v833 = vmul.f32 %v599, %v798
      %v834 = vmul.f32 %v602, %v800
      %v835 = vmul.f32 %v607, %v802
      %v836 = vmul.f32 %v610, %v804
      %v837 = vpack.c.bf16 %v806, %v805
      %v838 = vpack.c.bf16 %v808, %v807
      %v839 = vpack.c.bf16 %v810, %v809
      %v840 = vpack.c.bf16 %v812, %v811
      %v841 = vpack.c.bf16 %v814, %v813
      %v842 = vpack.c.bf16 %v816, %v815
      %v843 = vpack.c.bf16 %v818, %v817
      %v844 = vpack.c.bf16 %v820, %v819
      %v845 = vpack.c.bf16 %v822, %v821
      %v846 = vpack.c.bf16 %v824, %v823
      %v847 = vpack.c.bf16 %v826, %v825
      %v848 = vpack.c.bf16 %v828, %v827
      %v849 = vpack.c.bf16 %v830, %v829
      %v850 = vpack.c.bf16 %v832, %v831
      %v851 = vpack.c.bf16 %v834, %v833
      %v852 = vpack.c.bf16 %v836, %v835
      %v853 = vld [vmem:[%s3] sm:$0xff]
      %v854 = vld [vmem:[%s3 + $0x8] sm:$0xff]
      %v855 = vld [vmem:[%s3 + $0x10] sm:$0xff]
      %v856 = vld [vmem:[%s3 + $0x18] sm:$0xff]
      %v857 = vld [vmem:[%s3 + $0x20] sm:$0xff]
      %v858 = vld [vmem:[%s3 + $0x28] sm:$0xff]
      %v859 = vld [vmem:[%s3 + $0x30] sm:$0xff]
      %v860 = vld [vmem:[%s3 + $0x38] sm:$0xff]
      %v861 = vld [vmem:[%s3 + $0x40] sm:$0xff]
      %v862 = vld [vmem:[%s3 + $0x48] sm:$0xff]
      %v863 = vld [vmem:[%s3 + $0x50] sm:$0xff]
      %v864 = vld [vmem:[%s3 + $0x58] sm:$0xff]
      %v865 = vld [vmem:[%s3 + $0x60] sm:$0xff]
      %v866 = vld [vmem:[%s3 + $0x68] sm:$0xff]
      %v867 = vld [vmem:[%s3 + $0x70] sm:$0xff]
      %v868 = vld [vmem:[%s3 + $0x78] sm:$0xff]
      %v869 = vld [vmem:[%s3 + $0x80] sm:$0xff]
      %v870 = vld [vmem:[%s3 + $0x88] sm:$0xff]
      %v871 = vld [vmem:[%s3 + $0x90] sm:$0xff]
      %v872 = vld [vmem:[%s3 + $0x98] sm:$0xff]
      %v873 = vld [vmem:[%s3 + $0xa0] sm:$0xff]
      %v874 = vld [vmem:[%s3 + $0xa8] sm:$0xff]
      %v875 = vld [vmem:[%s3 + $0xb0] sm:$0xff]
      %v876 = vld [vmem:[%s3 + $0xb8] sm:$0xff]
      %v877 = vld [vmem:[%s3 + $0xc0] sm:$0xff]
      %v878 = vld [vmem:[%s3 + $0xc8] sm:$0xff]
      %v879 = vld [vmem:[%s3 + $0xd0] sm:$0xff]
      %v880 = vld [vmem:[%s3 + $0xd8] sm:$0xff]
      %v881 = vld [vmem:[%s3 + $0xe0] sm:$0xff]
      %v882 = vld [vmem:[%s3 + $0xe8] sm:$0xff]
      %v883 = vld [vmem:[%s3 + $0xf0] sm:$0xff]
      %v884 = vld [vmem:[%s3 + $0xf8] sm:$0xff]
      %v885 = vld [vmem:[%s3 + $0x100] sm:$0xff]
      %v886 = vld [vmem:[%s3 + $0x108] sm:$0xff]
      %v887 = vld [vmem:[%s3 + $0x110] sm:$0xff]
      %v888 = vld [vmem:[%s3 + $0x118] sm:$0xff]
      %v889 = vld [vmem:[%s3 + $0x120] sm:$0xff]
      %v890 = vld [vmem:[%s3 + $0x128] sm:$0xff]
      %v891 = vld [vmem:[%s3 + $0x130] sm:$0xff]
      %v892 = vld [vmem:[%s3 + $0x138] sm:$0xff]
      %v893 = vld [vmem:[%s3 + $0x140] sm:$0xff]
      %v894 = vld [vmem:[%s3 + $0x148] sm:$0xff]
      %v895 = vld [vmem:[%s3 + $0x150] sm:$0xff]
      %v896 = vld [vmem:[%s3 + $0x158] sm:$0xff]
      %v897 = vld [vmem:[%s3 + $0x160] sm:$0xff]
      %v898 = vld [vmem:[%s3 + $0x168] sm:$0xff]
      %v899 = vld [vmem:[%s3 + $0x170] sm:$0xff]
      %v900 = vld [vmem:[%s3 + $0x178] sm:$0xff]
      %v901 = vld [vmem:[%s4] sm:$0xff]
      %v902 = vld [vmem:[%s4 + $0x8] sm:$0xf]
      %v905 = vlaneseq
      %v906 = vshrl.u32 %v905, 7
      %v907 = vsub.s32 0, %v906
      %v908 = vrot.slane %v901, %v907
      %v909 = vlaneseq
      %v910 = vshrl.u32 %v909, 7
      %v911 = vsub.s32 1, %v910
      %v912 = vrot.slane %v901, %v911
      %v913 = vlaneseq
      %v914 = vshrl.u32 %v913, 7
      %v915 = vsub.s32 2, %v914
      %v916 = vrot.slane %v901, %v915
      %v917 = vlaneseq
      %v918 = vshrl.u32 %v917, 7
      %v919 = vsub.s32 3, %v918
      %v920 = vrot.slane %v901, %v919
      %v921 = vlaneseq
      %v922 = vshrl.u32 %v921, 7
      %v923 = vsub.s32 4, %v922
      %v924 = vrot.slane %v901, %v923
      %v925 = vlaneseq
      %v926 = vshrl.u32 %v925, 7
      %v927 = vsub.s32 5, %v926
      %v928 = vrot.slane %v901, %v927
      %v929 = vlaneseq
      %v930 = vshrl.u32 %v929, 7
      %v931 = vsub.s32 6, %v930
      %v932 = vrot.slane %v901, %v931
      %v933 = vlaneseq
      %v934 = vshrl.u32 %v933, 7
      %v935 = vsub.s32 7, %v934
      %v936 = vrot.slane %v901, %v935
      %v937 = vlaneseq
      %v938 = vshrl.u32 %v937, 7
      %v939 = vsub.s32 0, %v938
      %v940 = vrot.slane %v902, %v939
      %v941 = vlaneseq
      %v942 = vshrl.u32 %v941, 7
      %v943 = vsub.s32 1, %v942
      %v944 = vrot.slane %v902, %v943
      %v945 = vlaneseq
      %v946 = vshrl.u32 %v945, 7
      %v947 = vsub.s32 2, %v946
      %v948 = vrot.slane %v902, %v947
      %v949 = vlaneseq
      %v950 = vshrl.u32 %v949, 7
      %v951 = vsub.s32 3, %v950
      %v952 = vrot.slane %v902, %v951
      %v1013 = vunpack.c.l.b16 %v853
      %v1014 = vunpack.c.h.b16 %v853
      %v1015 = vunpack.c.l.b16 %v854
      %v1016 = vunpack.c.h.b16 %v854
      %v1017 = vunpack.c.l.b16 %v855
      %v1018 = vunpack.c.h.b16 %v855
      %v1019 = vunpack.c.l.b16 %v856
      %v1020 = vunpack.c.h.b16 %v856
      %v1021 = vunpack.c.l.b16 %v857
      %v1022 = vunpack.c.h.b16 %v857
      %v1023 = vunpack.c.l.b16 %v858
      %v1024 = vunpack.c.h.b16 %v858
      %v1025 = vunpack.c.l.b16 %v859
      %v1026 = vunpack.c.h.b16 %v859
      %v1027 = vunpack.c.l.b16 %v860
      %v1028 = vunpack.c.h.b16 %v860
      %v1029 = vunpack.c.l.b16 %v861
      %v1030 = vunpack.c.h.b16 %v861
      %v1031 = vunpack.c.l.b16 %v862
      %v1032 = vunpack.c.h.b16 %v862
      %v1033 = vunpack.c.l.b16 %v863
      %v1034 = vunpack.c.h.b16 %v863
      %v1035 = vunpack.c.l.b16 %v864
      %v1036 = vunpack.c.h.b16 %v864
      %v1037 = vunpack.c.l.b16 %v865
      %v1038 = vunpack.c.h.b16 %v865
      %v1039 = vunpack.c.l.b16 %v866
      %v1040 = vunpack.c.h.b16 %v866
      %v1041 = vunpack.c.l.b16 %v867
      %v1042 = vunpack.c.h.b16 %v867
      %v1043 = vunpack.c.l.b16 %v868
      %v1044 = vunpack.c.h.b16 %v868
      %v1045 = vunpack.c.l.b16 %v869
      %v1046 = vunpack.c.h.b16 %v869
      %v1047 = vunpack.c.l.b16 %v870
      %v1048 = vunpack.c.h.b16 %v870
      %v1049 = vunpack.c.l.b16 %v871
      %v1050 = vunpack.c.h.b16 %v871
      %v1051 = vunpack.c.l.b16 %v872
      %v1052 = vunpack.c.h.b16 %v872
      %v1053 = vunpack.c.l.b16 %v873
      %v1054 = vunpack.c.h.b16 %v873
      %v1055 = vunpack.c.l.b16 %v874
      %v1056 = vunpack.c.h.b16 %v874
      %v1057 = vunpack.c.l.b16 %v875
      %v1058 = vunpack.c.h.b16 %v875
      %v1059 = vunpack.c.l.b16 %v876
      %v1060 = vunpack.c.h.b16 %v876
      %v1061 = vunpack.c.l.b16 %v877
      %v1062 = vunpack.c.h.b16 %v877
      %v1063 = vunpack.c.l.b16 %v878
      %v1064 = vunpack.c.h.b16 %v878
      %v1065 = vunpack.c.l.b16 %v879
      %v1066 = vunpack.c.h.b16 %v879
      %v1067 = vunpack.c.l.b16 %v880
      %v1068 = vunpack.c.h.b16 %v880
      %v1069 = vunpack.c.l.b16 %v881
      %v1070 = vunpack.c.h.b16 %v881
      %v1071 = vunpack.c.l.b16 %v882
      %v1072 = vunpack.c.h.b16 %v882
      %v1073 = vunpack.c.l.b16 %v883
      %v1074 = vunpack.c.h.b16 %v883
      %v1075 = vunpack.c.l.b16 %v884
      %v1076 = vunpack.c.h.b16 %v884
      %v1077 = vunpack.c.l.b16 %v885
      %v1078 = vunpack.c.h.b16 %v885
      %v1079 = vunpack.c.l.b16 %v886
      %v1080 = vunpack.c.h.b16 %v886
      %v1081 = vunpack.c.l.b16 %v887
      %v1082 = vunpack.c.h.b16 %v887
      %v1083 = vunpack.c.l.b16 %v888
      %v1084 = vunpack.c.h.b16 %v888
      %v1085 = vunpack.c.l.b16 %v889
      %v1086 = vunpack.c.h.b16 %v889
      %v1087 = vunpack.c.l.b16 %v890
      %v1088 = vunpack.c.h.b16 %v890
      %v1089 = vunpack.c.l.b16 %v891
      %v1090 = vunpack.c.h.b16 %v891
      %v1091 = vunpack.c.l.b16 %v892
      %v1092 = vunpack.c.h.b16 %v892
      %v1093 = vunpack.c.l.b16 %v893
      %v1094 = vunpack.c.h.b16 %v893
      %v1095 = vunpack.c.l.b16 %v894
      %v1096 = vunpack.c.h.b16 %v894
      %v1097 = vunpack.c.l.b16 %v895
      %v1098 = vunpack.c.h.b16 %v895
      %v1099 = vunpack.c.l.b16 %v896
      %v1100 = vunpack.c.h.b16 %v896
      %v1101 = vunpack.c.l.b16 %v897
      %v1102 = vunpack.c.h.b16 %v897
      %v1103 = vunpack.c.l.b16 %v898
      %v1104 = vunpack.c.h.b16 %v898
      %v1105 = vunpack.c.l.b16 %v899
      %v1106 = vunpack.c.h.b16 %v899
      %v1107 = vunpack.c.l.b16 %v900
      %v1108 = vunpack.c.h.b16 %v900
      %v1109 = vpack.c.b16 %v1025, %v1013
      %v1110 = vpack.c.b16 %v1026, %v1014
      %v1111 = vpack.c.b16 %v1027, %v1015
      %v1112 = vpack.c.b16 %v1028, %v1016
      %v1113 = vpack.c.b16 %v1029, %v1017
      %v1114 = vpack.c.b16 %v1030, %v1018
      %v1115 = vpack.c.b16 %v1031, %v1019
      %v1116 = vpack.c.b16 %v1032, %v1020
      %v1117 = vpack.c.b16 %v1033, %v1021
      %v1118 = vpack.c.b16 %v1034, %v1022
      %v1119 = vpack.c.b16 %v1035, %v1023
      %v1120 = vpack.c.b16 %v1036, %v1024
      %v1121 = vpack.c.b16 %v1049, %v1037
      %v1122 = vpack.c.b16 %v1050, %v1038
      %v1123 = vpack.c.b16 %v1051, %v1039
      %v1124 = vpack.c.b16 %v1052, %v1040
      %v1125 = vpack.c.b16 %v1053, %v1041
      %v1126 = vpack.c.b16 %v1054, %v1042
      %v1127 = vpack.c.b16 %v1055, %v1043
      %v1128 = vpack.c.b16 %v1056, %v1044
      %v1129 = vpack.c.b16 %v1057, %v1045
      %v1130 = vpack.c.b16 %v1058, %v1046
      %v1131 = vpack.c.b16 %v1059, %v1047
      %v1132 = vpack.c.b16 %v1060, %v1048
      %v1133 = vpack.c.b16 %v1073, %v1061
      %v1134 = vpack.c.b16 %v1074, %v1062
      %v1135 = vpack.c.b16 %v1075, %v1063
      %v1136 = vpack.c.b16 %v1076, %v1064
      %v1137 = vpack.c.b16 %v1077, %v1065
      %v1138 = vpack.c.b16 %v1078, %v1066
      %v1139 = vpack.c.b16 %v1079, %v1067
      %v1140 = vpack.c.b16 %v1080, %v1068
      %v1141 = vpack.c.b16 %v1081, %v1069
      %v1142 = vpack.c.b16 %v1082, %v1070
      %v1143 = vpack.c.b16 %v1083, %v1071
      %v1144 = vpack.c.b16 %v1084, %v1072
      %v1145 = vpack.c.b16 %v1097, %v1085
      %v1146 = vpack.c.b16 %v1098, %v1086
      %v1147 = vpack.c.b16 %v1099, %v1087
      %v1148 = vpack.c.b16 %v1100, %v1088
      %v1149 = vpack.c.b16 %v1101, %v1089
      %v1150 = vpack.c.b16 %v1102, %v1090
      %v1151 = vpack.c.b16 %v1103, %v1091
      %v1152 = vpack.c.b16 %v1104, %v1092
      %v1153 = vpack.c.b16 %v1105, %v1093
      %v1154 = vpack.c.b16 %v1106, %v1094
      %v1155 = vpack.c.b16 %v1107, %v1095
      %v1156 = vpack.c.b16 %v1108, %v1096
      %vm1205 = vcmask 523264
      %v1207 = vsel %vm1205, %v837, 0
      %v1210 = vsel %vm1205, %v838, 0
      %v1213 = vsel %vm1205, %v839, 0
      %v1216 = vsel %vm1205, %v840, 0
      %v1219 = vsel %vm1205, %v841, 0
      %v1222 = vsel %vm1205, %v842, 0
      %v1225 = vsel %vm1205, %v843, 0
      %v1228 = vsel %vm1205, %v844, 0
      %v1231 = vsel %vm1205, %v845, 0
      %v1234 = vsel %vm1205, %v846, 0
      %v1237 = vsel %vm1205, %v847, 0
      %v1240 = vsel %vm1205, %v848, 0
      %v1243 = vsel %vm1205, %v849, 0
      %v1246 = vsel %vm1205, %v850, 0
      %v1249 = vsel %vm1205, %v851, 0
      %v1252 = vsel %vm1205, %v852, 0
      %1254 = vmatprep.subr.bf16.mxu0 0
      %1255 = vmatpush1.bf16.msra.mxu0 0
      %1256 = vmatprep.subr.bf16.mxu0 0
      %1257 = vmatpush1.bf16.msra.mxu0 0
      %1258 = vmatprep.subr.bf16.mxu0 0
      %1259 = vmatpush1.bf16.msra.mxu0 0
      %1260 = vmatprep.subr.bf16.mxu0 0
      %1261 = vmatpush1.bf16.msra.mxu0 0
      %1262 = vmatprep.subr.bf16.mxu0 %v1146
      %1263 = vmatpush1.bf16.msra.mxu0 %v1145
      %1264 = vmatprep.subr.bf16.mxu0 %v1134
      %1265 = vmatpush1.bf16.msra.mxu0 %v1133
      %1266 = vmatprep.subr.bf16.mxu0 %v1122
      %1267 = vmatpush1.bf16.msra.mxu0 %v1121
      %1268 = vmatprep.subr.bf16.mxu0 %v1110
      %1269 = vmatpush1.bf16.msra.mxu0 %v1109
      %1270 = vmatprep.subr.bf16.mxu0 0
      %1271 = vmatpush2.bf16.msra.mxu0 0
      %1272 = vmatprep.subr.bf16.mxu0 0
      %1273 = vmatpush2.bf16.msra.mxu0 0
      %1274 = vmatprep.subr.bf16.mxu0 0
      %1275 = vmatpush2.bf16.msra.mxu0 0
      %1276 = vmatprep.subr.bf16.mxu0 0
      %1277 = vmatpush2.bf16.msra.mxu0 0
      %1278 = vmatprep.subr.bf16.mxu0 0
      %1279 = vmatpush2.bf16.msra.mxu0 0
      %1280 = vmatprep.subr.bf16.mxu0 0
      %1281 = vmatpush2.bf16.msra.mxu0 0
      %1282 = vmatprep.subr.bf16.mxu0 0
      %1283 = vmatpush2.bf16.msra.mxu0 0
      %1284 = vmatprep.subr.bf16.mxu0 0
      %1285 = vmatpush2.bf16.msra.mxu0 0
      %1286 = vmatprep.mubr.bf16.mxu0 0
      %1287 = vmatmul.mubr.bf16.gmra.mxu0 %v1207
      %v1288 = vpop.f32.mrf.mxu0
      %v1289 = vadd.f32 %v908, %v1288
      %v1290 = vpop.f32.mrf.mxu0
      %v1291 = vadd.f32 %v912, %v1290
      %v1292 = vpop.f32.mrf.mxu0
      %v1293 = vadd.f32 %v908, %v1292
      %v1294 = vpop.f32.mrf.mxu0
      %v1295 = vadd.f32 %v912, %v1294
      %1296 = vmatprep.mubr.bf16.mxu0 0
      %1297 = vmatmul.mubr.bf16.gmra.mxu0 %v1210
      %v1298 = vpop.f32.mrf.mxu0
      %v1299 = vadd.f32 %v908, %v1298
      %v1300 = vpop.f32.mrf.mxu0
      %v1301 = vadd.f32 %v912, %v1300
      %v1302 = vpop.f32.mrf.mxu0
      %v1303 = vadd.f32 %v908, %v1302
      %v1304 = vpop.f32.mrf.mxu0
      %v1305 = vadd.f32 %v912, %v1304
      %1306 = vmatprep.mubr.bf16.mxu0 0
      %1307 = vmatmul.mubr.bf16.gmra.mxu0 %v1213
      %v1308 = vpop.f32.mrf.mxu0
      %v1309 = vadd.f32 %v908, %v1308
      %v1310 = vpop.f32.mrf.mxu0
      %v1311 = vadd.f32 %v912, %v1310
      %v1312 = vpop.f32.mrf.mxu0
      %v1313 = vadd.f32 %v908, %v1312
      %v1314 = vpop.f32.mrf.mxu0
      %v1315 = vadd.f32 %v912, %v1314
      %1316 = vmatprep.mubr.bf16.mxu0 0
      %1317 = vmatmul.mubr.bf16.gmra.mxu0 %v1216
      %v1318 = vpop.f32.mrf.mxu0
      %v1319 = vadd.f32 %v908, %v1318
      %v1320 = vpop.f32.mrf.mxu0
      %v1321 = vadd.f32 %v912, %v1320
      %v1322 = vpop.f32.mrf.mxu0
      %v1323 = vadd.f32 %v908, %v1322
      %v1324 = vpop.f32.mrf.mxu0
      %v1325 = vadd.f32 %v912, %v1324
      %1326 = vmatprep.mubr.bf16.mxu0 0
      %1327 = vmatmul.mubr.bf16.gmra.mxu0 %v1219
      %v1328 = vpop.f32.mrf.mxu0
      %v1329 = vadd.f32 %v908, %v1328
      %v1330 = vpop.f32.mrf.mxu0
      %v1331 = vadd.f32 %v912, %v1330
      %v1332 = vpop.f32.mrf.mxu0
      %v1333 = vadd.f32 %v908, %v1332
      %v1334 = vpop.f32.mrf.mxu0
      %v1335 = vadd.f32 %v912, %v1334
      %1336 = vmatprep.mubr.bf16.mxu0 0
      %1337 = vmatmul.mubr.bf16.gmra.mxu0 %v1222
      %v1338 = vpop.f32.mrf.mxu0
      %v1339 = vadd.f32 %v908, %v1338
      %v1340 = vpop.f32.mrf.mxu0
      %v1341 = vadd.f32 %v912, %v1340
      %v1342 = vpop.f32.mrf.mxu0
      %v1343 = vadd.f32 %v908, %v1342
      %v1344 = vpop.f32.mrf.mxu0
      %v1345 = vadd.f32 %v912, %v1344
      %1346 = vmatprep.mubr.bf16.mxu0 0
      %1347 = vmatmul.mubr.bf16.gmra.mxu0 %v1225
      %v1348 = vpop.f32.mrf.mxu0
      %v1349 = vadd.f32 %v908, %v1348
      %v1350 = vpop.f32.mrf.mxu0
      %v1351 = vadd.f32 %v912, %v1350
      %v1352 = vpop.f32.mrf.mxu0
      %v1353 = vadd.f32 %v908, %v1352
      %v1354 = vpop.f32.mrf.mxu0
      %v1355 = vadd.f32 %v912, %v1354
      %1356 = vmatprep.mubr.bf16.mxu0 0
      %1357 = vmatmul.mubr.bf16.gmra.mxu0 %v1228
      %v1358 = vpop.f32.mrf.mxu0
      %v1359 = vadd.f32 %v908, %v1358
      %v1360 = vpop.f32.mrf.mxu0
      %v1361 = vadd.f32 %v912, %v1360
      %v1362 = vpop.f32.mrf.mxu0
      %v1363 = vadd.f32 %v908, %v1362
      %v1364 = vpop.f32.mrf.mxu0
      %v1365 = vadd.f32 %v912, %v1364
      %1366 = vmatprep.mubr.bf16.mxu0 0
      %1367 = vmatmul.mubr.bf16.gmra.mxu0 %v1231
      %v1368 = vpop.f32.mrf.mxu0
      %v1369 = vadd.f32 %v908, %v1368
      %v1370 = vpop.f32.mrf.mxu0
      %v1371 = vadd.f32 %v912, %v1370
      %v1372 = vpop.f32.mrf.mxu0
      %v1373 = vadd.f32 %v908, %v1372
      %v1374 = vpop.f32.mrf.mxu0
      %v1375 = vadd.f32 %v912, %v1374
      %1376 = vmatprep.mubr.bf16.mxu0 0
      %1377 = vmatmul.mubr.bf16.gmra.mxu0 %v1234
      %v1378 = vpop.f32.mrf.mxu0
      %v1379 = vadd.f32 %v908, %v1378
      %v1380 = vpop.f32.mrf.mxu0
      %v1381 = vadd.f32 %v912, %v1380
      %v1382 = vpop.f32.mrf.mxu0
      %v1383 = vadd.f32 %v908, %v1382
      %v1384 = vpop.f32.mrf.mxu0
      %v1385 = vadd.f32 %v912, %v1384
      %1386 = vmatprep.mubr.bf16.mxu0 0
      %1387 = vmatmul.mubr.bf16.gmra.mxu0 %v1237
      %v1388 = vpop.f32.mrf.mxu0
      %v1389 = vadd.f32 %v908, %v1388
      %v1390 = vpop.f32.mrf.mxu0
      %v1391 = vadd.f32 %v912, %v1390
      %v1392 = vpop.f32.mrf.mxu0
      %v1393 = vadd.f32 %v908, %v1392
      %v1394 = vpop.f32.mrf.mxu0
      %v1395 = vadd.f32 %v912, %v1394
      %1396 = vmatprep.mubr.bf16.mxu0 0
      %1397 = vmatmul.mubr.bf16.gmra.mxu0 %v1240
      %v1398 = vpop.f32.mrf.mxu0
      %v1399 = vadd.f32 %v908, %v1398
      %v1400 = vpop.f32.mrf.mxu0
      %v1401 = vadd.f32 %v912, %v1400
      %v1402 = vpop.f32.mrf.mxu0
      %v1403 = vadd.f32 %v908, %v1402
      %v1404 = vpop.f32.mrf.mxu0
      %v1405 = vadd.f32 %v912, %v1404
      %1406 = vmatprep.mubr.bf16.mxu0 0
      %1407 = vmatmul.mubr.bf16.gmra.mxu0 %v1243
      %v1408 = vpop.f32.mrf.mxu0
      %v1409 = vadd.f32 %v908, %v1408
      %v1410 = vpop.f32.mrf.mxu0
      %v1411 = vadd.f32 %v912, %v1410
      %v1412 = vpop.f32.mrf.mxu0
      %v1413 = vadd.f32 %v908, %v1412
      %v1414 = vpop.f32.mrf.mxu0
      %v1415 = vadd.f32 %v912, %v1414
      %1416 = vmatprep.mubr.bf16.mxu0 0
      %1417 = vmatmul.mubr.bf16.gmra.mxu0 %v1246
      %v1418 = vpop.f32.mrf.mxu0
      %v1419 = vadd.f32 %v908, %v1418
      %v1420 = vpop.f32.mrf.mxu0
      %v1421 = vadd.f32 %v912, %v1420
      %v1422 = vpop.f32.mrf.mxu0
      %v1423 = vadd.f32 %v908, %v1422
      %v1424 = vpop.f32.mrf.mxu0
      %v1425 = vadd.f32 %v912, %v1424
      %1426 = vmatprep.mubr.bf16.mxu0 0
      %1427 = vmatmul.mubr.bf16.gmra.mxu0 %v1249
      %v1428 = vpop.f32.mrf.mxu0
      %v1429 = vadd.f32 %v908, %v1428
      %v1430 = vpop.f32.mrf.mxu0
      %v1431 = vadd.f32 %v912, %v1430
      %v1432 = vpop.f32.mrf.mxu0
      %v1433 = vadd.f32 %v908, %v1432
      %v1434 = vpop.f32.mrf.mxu0
      %v1435 = vadd.f32 %v912, %v1434
      %1436 = vmatprep.mubr.bf16.mxu0 0
      %1437 = vmatmul.mubr.bf16.gmra.mxu0 %v1252
      %v1438 = vpop.f32.mrf.mxu0
      %v1439 = vadd.f32 %v908, %v1438
      %v1440 = vpop.f32.mrf.mxu0
      %v1441 = vadd.f32 %v912, %v1440
      %v1442 = vpop.f32.mrf.mxu0
      %v1443 = vadd.f32 %v908, %v1442
      %v1444 = vpop.f32.mrf.mxu0
      %v1445 = vadd.f32 %v912, %v1444
      %1446 = vdwg.mxu0
      %1447 = vmatprep.subr.bf16.mxu0 0
      %1448 = vmatpush1.bf16.msra.mxu0 0
      %1449 = vmatprep.subr.bf16.mxu0 0
      %1450 = vmatpush1.bf16.msra.mxu0 0
      %1451 = vmatprep.subr.bf16.mxu0 0
      %1452 = vmatpush1.bf16.msra.mxu0 0
      %1453 = vmatprep.subr.bf16.mxu0 0
      %1454 = vmatpush1.bf16.msra.mxu0 0
      %1455 = vmatprep.subr.bf16.mxu0 %v1148
      %1456 = vmatpush1.bf16.msra.mxu0 %v1147
      %1457 = vmatprep.subr.bf16.mxu0 %v1136
      %1458 = vmatpush1.bf16.msra.mxu0 %v1135
      %1459 = vmatprep.subr.bf16.mxu0 %v1124
      %1460 = vmatpush1.bf16.msra.mxu0 %v1123
      %1461 = vmatprep.subr.bf16.mxu0 %v1112
      %1462 = vmatpush1.bf16.msra.mxu0 %v1111
      %1463 = vmatprep.subr.bf16.mxu0 0
      %1464 = vmatpush2.bf16.msra.mxu0 0
      %1465 = vmatprep.subr.bf16.mxu0 0
      %1466 = vmatpush2.bf16.msra.mxu0 0
      %1467 = vmatprep.subr.bf16.mxu0 0
      %1468 = vmatpush2.bf16.msra.mxu0 0
      %1469 = vmatprep.subr.bf16.mxu0 0
      %1470 = vmatpush2.bf16.msra.mxu0 0
      %1471 = vmatprep.subr.bf16.mxu0 0
      %1472 = vmatpush2.bf16.msra.mxu0 0
      %1473 = vmatprep.subr.bf16.mxu0 0
      %1474 = vmatpush2.bf16.msra.mxu0 0
      %1475 = vmatprep.subr.bf16.mxu0 0
      %1476 = vmatpush2.bf16.msra.mxu0 0
      %1477 = vmatprep.subr.bf16.mxu0 0
      %1478 = vmatpush2.bf16.msra.mxu0 0
      %1479 = vmatprep.mubr.bf16.mxu0 0
      %1480 = vmatmul.mubr.bf16.gmra.mxu0 %v1207
      %v1481 = vpop.f32.mrf.mxu0
      %v1482 = vadd.f32 %v916, %v1481
      %v1483 = vpop.f32.mrf.mxu0
      %v1484 = vadd.f32 %v920, %v1483
      %v1485 = vpop.f32.mrf.mxu0
      %v1486 = vadd.f32 %v916, %v1485
      %v1487 = vpop.f32.mrf.mxu0
      %v1488 = vadd.f32 %v920, %v1487
      %1489 = vmatprep.mubr.bf16.mxu0 0
      %1490 = vmatmul.mubr.bf16.gmra.mxu0 %v1210
      %v1491 = vpop.f32.mrf.mxu0
      %v1492 = vadd.f32 %v916, %v1491
      %v1493 = vpop.f32.mrf.mxu0
      %v1494 = vadd.f32 %v920, %v1493
      %v1495 = vpop.f32.mrf.mxu0
      %v1496 = vadd.f32 %v916, %v1495
      %v1497 = vpop.f32.mrf.mxu0
      %v1498 = vadd.f32 %v920, %v1497
      %1499 = vmatprep.mubr.bf16.mxu0 0
      %1500 = vmatmul.mubr.bf16.gmra.mxu0 %v1213
      %v1501 = vpop.f32.mrf.mxu0
      %v1502 = vadd.f32 %v916, %v1501
      %v1503 = vpop.f32.mrf.mxu0
      %v1504 = vadd.f32 %v920, %v1503
      %v1505 = vpop.f32.mrf.mxu0
      %v1506 = vadd.f32 %v916, %v1505
      %v1507 = vpop.f32.mrf.mxu0
      %v1508 = vadd.f32 %v920, %v1507
      %1509 = vmatprep.mubr.bf16.mxu0 0
      %1510 = vmatmul.mubr.bf16.gmra.mxu0 %v1216
      %v1511 = vpop.f32.mrf.mxu0
      %v1512 = vadd.f32 %v916, %v1511
      %v1513 = vpop.f32.mrf.mxu0
      %v1514 = vadd.f32 %v920, %v1513
      %v1515 = vpop.f32.mrf.mxu0
      %v1516 = vadd.f32 %v916, %v1515
      %v1517 = vpop.f32.mrf.mxu0
      %v1518 = vadd.f32 %v920, %v1517
      %1519 = vmatprep.mubr.bf16.mxu0 0
      %1520 = vmatmul.mubr.bf16.gmra.mxu0 %v1219
      %v1521 = vpop.f32.mrf.mxu0
      %v1522 = vadd.f32 %v916, %v1521
      %v1523 = vpop.f32.mrf.mxu0
      %v1524 = vadd.f32 %v920, %v1523
      %v1525 = vpop.f32.mrf.mxu0
      %v1526 = vadd.f32 %v916, %v1525
      %v1527 = vpop.f32.mrf.mxu0
      %v1528 = vadd.f32 %v920, %v1527
      %1529 = vmatprep.mubr.bf16.mxu0 0
      %1530 = vmatmul.mubr.bf16.gmra.mxu0 %v1222
      %v1531 = vpop.f32.mrf.mxu0
      %v1532 = vadd.f32 %v916, %v1531
      %v1533 = vpop.f32.mrf.mxu0
      %v1534 = vadd.f32 %v920, %v1533
      %v1535 = vpop.f32.mrf.mxu0
      %v1536 = vadd.f32 %v916, %v1535
      %v1537 = vpop.f32.mrf.mxu0
      %v1538 = vadd.f32 %v920, %v1537
      %1539 = vmatprep.mubr.bf16.mxu0 0
      %1540 = vmatmul.mubr.bf16.gmra.mxu0 %v1225
      %v1541 = vpop.f32.mrf.mxu0
      %v1542 = vadd.f32 %v916, %v1541
      %v1543 = vpop.f32.mrf.mxu0
      %v1544 = vadd.f32 %v920, %v1543
      %v1545 = vpop.f32.mrf.mxu0
      %v1546 = vadd.f32 %v916, %v1545
      %v1547 = vpop.f32.mrf.mxu0
      %v1548 = vadd.f32 %v920, %v1547
      %1549 = vmatprep.mubr.bf16.mxu0 0
      %1550 = vmatmul.mubr.bf16.gmra.mxu0 %v1228
      %v1551 = vpop.f32.mrf.mxu0
      %v1552 = vadd.f32 %v916, %v1551
      %v1553 = vpop.f32.mrf.mxu0
      %v1554 = vadd.f32 %v920, %v1553
      %v1555 = vpop.f32.mrf.mxu0
      %v1556 = vadd.f32 %v916, %v1555
      %v1557 = vpop.f32.mrf.mxu0
      %v1558 = vadd.f32 %v920, %v1557
      %1559 = vmatprep.mubr.bf16.mxu0 0
      %1560 = vmatmul.mubr.bf16.gmra.mxu0 %v1231
      %v1561 = vpop.f32.mrf.mxu0
      %v1562 = vadd.f32 %v916, %v1561
      %v1563 = vpop.f32.mrf.mxu0
      %v1564 = vadd.f32 %v920, %v1563
      %v1565 = vpop.f32.mrf.mxu0
      %v1566 = vadd.f32 %v916, %v1565
      %v1567 = vpop.f32.mrf.mxu0
      %v1568 = vadd.f32 %v920, %v1567
      %1569 = vmatprep.mubr.bf16.mxu0 0
      %1570 = vmatmul.mubr.bf16.gmra.mxu0 %v1234
      %v1571 = vpop.f32.mrf.mxu0
      %v1572 = vadd.f32 %v916, %v1571
      %v1573 = vpop.f32.mrf.mxu0
      %v1574 = vadd.f32 %v920, %v1573
      %v1575 = vpop.f32.mrf.mxu0
      %v1576 = vadd.f32 %v916, %v1575
      %v1577 = vpop.f32.mrf.mxu0
      %v1578 = vadd.f32 %v920, %v1577
      %1579 = vmatprep.mubr.bf16.mxu0 0
      %1580 = vmatmul.mubr.bf16.gmra.mxu0 %v1237
      %v1581 = vpop.f32.mrf.mxu0
      %v1582 = vadd.f32 %v916, %v1581
      %v1583 = vpop.f32.mrf.mxu0
      %v1584 = vadd.f32 %v920, %v1583
      %v1585 = vpop.f32.mrf.mxu0
      %v1586 = vadd.f32 %v916, %v1585
      %v1587 = vpop.f32.mrf.mxu0
      %v1588 = vadd.f32 %v920, %v1587
      %1589 = vmatprep.mubr.bf16.mxu0 0
      %1590 = vmatmul.mubr.bf16.gmra.mxu0 %v1240
      %v1591 = vpop.f32.mrf.mxu0
      %v1592 = vadd.f32 %v916, %v1591
      %v1593 = vpop.f32.mrf.mxu0
      %v1594 = vadd.f32 %v920, %v1593
      %v1595 = vpop.f32.mrf.mxu0
      %v1596 = vadd.f32 %v916, %v1595
      %v1597 = vpop.f32.mrf.mxu0
      %v1598 = vadd.f32 %v920, %v1597
      %1599 = vmatprep.mubr.bf16.mxu0 0
      %1600 = vmatmul.mubr.bf16.gmra.mxu0 %v1243
      %v1601 = vpop.f32.mrf.mxu0
      %v1602 = vadd.f32 %v916, %v1601
      %v1603 = vpop.f32.mrf.mxu0
      %v1604 = vadd.f32 %v920, %v1603
      %v1605 = vpop.f32.mrf.mxu0
      %v1606 = vadd.f32 %v916, %v1605
      %v1607 = vpop.f32.mrf.mxu0
      %v1608 = vadd.f32 %v920, %v1607
      %1609 = vmatprep.mubr.bf16.mxu0 0
      %1610 = vmatmul.mubr.bf16.gmra.mxu0 %v1246
      %v1611 = vpop.f32.mrf.mxu0
      %v1612 = vadd.f32 %v916, %v1611
      %v1613 = vpop.f32.mrf.mxu0
      %v1614 = vadd.f32 %v920, %v1613
      %v1615 = vpop.f32.mrf.mxu0
      %v1616 = vadd.f32 %v916, %v1615
      %v1617 = vpop.f32.mrf.mxu0
      %v1618 = vadd.f32 %v920, %v1617
      %1619 = vmatprep.mubr.bf16.mxu0 0
      %1620 = vmatmul.mubr.bf16.gmra.mxu0 %v1249
      %v1621 = vpop.f32.mrf.mxu0
      %v1622 = vadd.f32 %v916, %v1621
      %v1623 = vpop.f32.mrf.mxu0
      %v1624 = vadd.f32 %v920, %v1623
      %v1625 = vpop.f32.mrf.mxu0
      %v1626 = vadd.f32 %v916, %v1625
      %v1627 = vpop.f32.mrf.mxu0
      %v1628 = vadd.f32 %v920, %v1627
      %1629 = vmatprep.mubr.bf16.mxu0 0
      %1630 = vmatmul.mubr.bf16.gmra.mxu0 %v1252
      %v1631 = vpop.f32.mrf.mxu0
      %v1632 = vadd.f32 %v916, %v1631
      %v1633 = vpop.f32.mrf.mxu0
      %v1634 = vadd.f32 %v920, %v1633
      %v1635 = vpop.f32.mrf.mxu0
      %v1636 = vadd.f32 %v916, %v1635
      %v1637 = vpop.f32.mrf.mxu0
      %v1638 = vadd.f32 %v920, %v1637
      %1639 = vdwg.mxu0
      %1640 = vmatprep.subr.bf16.mxu0 0
      %1641 = vmatpush1.bf16.msra.mxu0 0
      %1642 = vmatprep.subr.bf16.mxu0 0
      %1643 = vmatpush1.bf16.msra.mxu0 0
      %1644 = vmatprep.subr.bf16.mxu0 0
      %1645 = vmatpush1.bf16.msra.mxu0 0
      %1646 = vmatprep.subr.bf16.mxu0 0
      %1647 = vmatpush1.bf16.msra.mxu0 0
      %1648 = vmatprep.subr.bf16.mxu0 %v1150
      %1649 = vmatpush1.bf16.msra.mxu0 %v1149
      %1650 = vmatprep.subr.bf16.mxu0 %v1138
      %1651 = vmatpush1.bf16.msra.mxu0 %v1137
      %1652 = vmatprep.subr.bf16.mxu0 %v1126
      %1653 = vmatpush1.bf16.msra.mxu0 %v1125
      %1654 = vmatprep.subr.bf16.mxu0 %v1114
      %1655 = vmatpush1.bf16.msra.mxu0 %v1113
      %1656 = vmatprep.subr.bf16.mxu0 0
      %1657 = vmatpush2.bf16.msra.mxu0 0
      %1658 = vmatprep.subr.bf16.mxu0 0
      %1659 = vmatpush2.bf16.msra.mxu0 0
      %1660 = vmatprep.subr.bf16.mxu0 0
      %1661 = vmatpush2.bf16.msra.mxu0 0
      %1662 = vmatprep.subr.bf16.mxu0 0
      %1663 = vmatpush2.bf16.msra.mxu0 0
      %1664 = vmatprep.subr.bf16.mxu0 0
      %1665 = vmatpush2.bf16.msra.mxu0 0
      %1666 = vmatprep.subr.bf16.mxu0 0
      %1667 = vmatpush2.bf16.msra.mxu0 0
      %1668 = vmatprep.subr.bf16.mxu0 0
      %1669 = vmatpush2.bf16.msra.mxu0 0
      %1670 = vmatprep.subr.bf16.mxu0 0
      %1671 = vmatpush2.bf16.msra.mxu0 0
      %1672 = vmatprep.mubr.bf16.mxu0 0
      %1673 = vmatmul.mubr.bf16.gmra.mxu0 %v1207
      %v1674 = vpop.f32.mrf.mxu0
      %v1675 = vadd.f32 %v924, %v1674
      %v1676 = vpop.f32.mrf.mxu0
      %v1677 = vadd.f32 %v928, %v1676
      %v1678 = vpop.f32.mrf.mxu0
      %v1679 = vadd.f32 %v924, %v1678
      %v1680 = vpop.f32.mrf.mxu0
      %v1681 = vadd.f32 %v928, %v1680
      %1682 = vmatprep.mubr.bf16.mxu0 0
      %1683 = vmatmul.mubr.bf16.gmra.mxu0 %v1210
      %v1684 = vpop.f32.mrf.mxu0
      %v1685 = vadd.f32 %v924, %v1684
      %v1686 = vpop.f32.mrf.mxu0
      %v1687 = vadd.f32 %v928, %v1686
      %v1688 = vpop.f32.mrf.mxu0
      %v1689 = vadd.f32 %v924, %v1688
      %v1690 = vpop.f32.mrf.mxu0
      %v1691 = vadd.f32 %v928, %v1690
      %1692 = vmatprep.mubr.bf16.mxu0 0
      %1693 = vmatmul.mubr.bf16.gmra.mxu0 %v1213
      %v1694 = vpop.f32.mrf.mxu0
      %v1695 = vadd.f32 %v924, %v1694
      %v1696 = vpop.f32.mrf.mxu0
      %v1697 = vadd.f32 %v928, %v1696
      %v1698 = vpop.f32.mrf.mxu0
      %v1699 = vadd.f32 %v924, %v1698
      %v1700 = vpop.f32.mrf.mxu0
      %v1701 = vadd.f32 %v928, %v1700
      %1702 = vmatprep.mubr.bf16.mxu0 0
      %1703 = vmatmul.mubr.bf16.gmra.mxu0 %v1216
      %v1704 = vpop.f32.mrf.mxu0
      %v1705 = vadd.f32 %v924, %v1704
      %v1706 = vpop.f32.mrf.mxu0
      %v1707 = vadd.f32 %v928, %v1706
      %v1708 = vpop.f32.mrf.mxu0
      %v1709 = vadd.f32 %v924, %v1708
      %v1710 = vpop.f32.mrf.mxu0
      %v1711 = vadd.f32 %v928, %v1710
      %1712 = vmatprep.mubr.bf16.mxu0 0
      %1713 = vmatmul.mubr.bf16.gmra.mxu0 %v1219
      %v1714 = vpop.f32.mrf.mxu0
      %v1715 = vadd.f32 %v924, %v1714
      %v1716 = vpop.f32.mrf.mxu0
      %v1717 = vadd.f32 %v928, %v1716
      %v1718 = vpop.f32.mrf.mxu0
      %v1719 = vadd.f32 %v924, %v1718
      %v1720 = vpop.f32.mrf.mxu0
      %v1721 = vadd.f32 %v928, %v1720
      %1722 = vmatprep.mubr.bf16.mxu0 0
      %1723 = vmatmul.mubr.bf16.gmra.mxu0 %v1222
      %v1724 = vpop.f32.mrf.mxu0
      %v1725 = vadd.f32 %v924, %v1724
      %v1726 = vpop.f32.mrf.mxu0
      %v1727 = vadd.f32 %v928, %v1726
      %v1728 = vpop.f32.mrf.mxu0
      %v1729 = vadd.f32 %v924, %v1728
      %v1730 = vpop.f32.mrf.mxu0
      %v1731 = vadd.f32 %v928, %v1730
      %1732 = vmatprep.mubr.bf16.mxu0 0
      %1733 = vmatmul.mubr.bf16.gmra.mxu0 %v1225
      %v1734 = vpop.f32.mrf.mxu0
      %v1735 = vadd.f32 %v924, %v1734
      %v1736 = vpop.f32.mrf.mxu0
      %v1737 = vadd.f32 %v928, %v1736
      %v1738 = vpop.f32.mrf.mxu0
      %v1739 = vadd.f32 %v924, %v1738
      %v1740 = vpop.f32.mrf.mxu0
      %v1741 = vadd.f32 %v928, %v1740
      %1742 = vmatprep.mubr.bf16.mxu0 0
      %1743 = vmatmul.mubr.bf16.gmra.mxu0 %v1228
      %v1744 = vpop.f32.mrf.mxu0
      %v1745 = vadd.f32 %v924, %v1744
      %v1746 = vpop.f32.mrf.mxu0
      %v1747 = vadd.f32 %v928, %v1746
      %v1748 = vpop.f32.mrf.mxu0
      %v1749 = vadd.f32 %v924, %v1748
      %v1750 = vpop.f32.mrf.mxu0
      %v1751 = vadd.f32 %v928, %v1750
      %1752 = vmatprep.mubr.bf16.mxu0 0
      %1753 = vmatmul.mubr.bf16.gmra.mxu0 %v1231
      %v1754 = vpop.f32.mrf.mxu0
      %v1755 = vadd.f32 %v924, %v1754
      %v1756 = vpop.f32.mrf.mxu0
      %v1757 = vadd.f32 %v928, %v1756
      %v1758 = vpop.f32.mrf.mxu0
      %v1759 = vadd.f32 %v924, %v1758
      %v1760 = vpop.f32.mrf.mxu0
      %v1761 = vadd.f32 %v928, %v1760
      %1762 = vmatprep.mubr.bf16.mxu0 0
      %1763 = vmatmul.mubr.bf16.gmra.mxu0 %v1234
      %v1764 = vpop.f32.mrf.mxu0
      %v1765 = vadd.f32 %v924, %v1764
      %v1766 = vpop.f32.mrf.mxu0
      %v1767 = vadd.f32 %v928, %v1766
      %v1768 = vpop.f32.mrf.mxu0
      %v1769 = vadd.f32 %v924, %v1768
      %v1770 = vpop.f32.mrf.mxu0
      %v1771 = vadd.f32 %v928, %v1770
      %1772 = vmatprep.mubr.bf16.mxu0 0
      %1773 = vmatmul.mubr.bf16.gmra.mxu0 %v1237
      %v1774 = vpop.f32.mrf.mxu0
      %v1775 = vadd.f32 %v924, %v1774
      %v1776 = vpop.f32.mrf.mxu0
      %v1777 = vadd.f32 %v928, %v1776
      %v1778 = vpop.f32.mrf.mxu0
      %v1779 = vadd.f32 %v924, %v1778
      %v1780 = vpop.f32.mrf.mxu0
      %v1781 = vadd.f32 %v928, %v1780
      %1782 = vmatprep.mubr.bf16.mxu0 0
      %1783 = vmatmul.mubr.bf16.gmra.mxu0 %v1240
      %v1784 = vpop.f32.mrf.mxu0
      %v1785 = vadd.f32 %v924, %v1784
      %v1786 = vpop.f32.mrf.mxu0
      %v1787 = vadd.f32 %v928, %v1786
      %v1788 = vpop.f32.mrf.mxu0
      %v1789 = vadd.f32 %v924, %v1788
      %v1790 = vpop.f32.mrf.mxu0
      %v1791 = vadd.f32 %v928, %v1790
      %1792 = vmatprep.mubr.bf16.mxu0 0
      %1793 = vmatmul.mubr.bf16.gmra.mxu0 %v1243
      %v1794 = vpop.f32.mrf.mxu0
      %v1795 = vadd.f32 %v924, %v1794
      %v1796 = vpop.f32.mrf.mxu0
      %v1797 = vadd.f32 %v928, %v1796
      %v1798 = vpop.f32.mrf.mxu0
      %v1799 = vadd.f32 %v924, %v1798
      %v1800 = vpop.f32.mrf.mxu0
      %v1801 = vadd.f32 %v928, %v1800
      %1802 = vmatprep.mubr.bf16.mxu0 0
      %1803 = vmatmul.mubr.bf16.gmra.mxu0 %v1246
      %v1804 = vpop.f32.mrf.mxu0
      %v1805 = vadd.f32 %v924, %v1804
      %v1806 = vpop.f32.mrf.mxu0
      %v1807 = vadd.f32 %v928, %v1806
      %v1808 = vpop.f32.mrf.mxu0
      %v1809 = vadd.f32 %v924, %v1808
      %v1810 = vpop.f32.mrf.mxu0
      %v1811 = vadd.f32 %v928, %v1810
      %1812 = vmatprep.mubr.bf16.mxu0 0
      %1813 = vmatmul.mubr.bf16.gmra.mxu0 %v1249
      %v1814 = vpop.f32.mrf.mxu0
      %v1815 = vadd.f32 %v924, %v1814
      %v1816 = vpop.f32.mrf.mxu0
      %v1817 = vadd.f32 %v928, %v1816
      %v1818 = vpop.f32.mrf.mxu0
      %v1819 = vadd.f32 %v924, %v1818
      %v1820 = vpop.f32.mrf.mxu0
      %v1821 = vadd.f32 %v928, %v1820
      %1822 = vmatprep.mubr.bf16.mxu0 0
      %1823 = vmatmul.mubr.bf16.gmra.mxu0 %v1252
      %v1824 = vpop.f32.mrf.mxu0
      %v1825 = vadd.f32 %v924, %v1824
      %v1826 = vpop.f32.mrf.mxu0
      %v1827 = vadd.f32 %v928, %v1826
      %v1828 = vpop.f32.mrf.mxu0
      %v1829 = vadd.f32 %v924, %v1828
      %v1830 = vpop.f32.mrf.mxu0
      %v1831 = vadd.f32 %v928, %v1830
      %1832 = vdwg.mxu0
      %1833 = vmatprep.subr.bf16.mxu0 0
      %1834 = vmatpush1.bf16.msra.mxu0 0
      %1835 = vmatprep.subr.bf16.mxu0 0
      %1836 = vmatpush1.bf16.msra.mxu0 0
      %1837 = vmatprep.subr.bf16.mxu0 0
      %1838 = vmatpush1.bf16.msra.mxu0 0
      %1839 = vmatprep.subr.bf16.mxu0 0
      %1840 = vmatpush1.bf16.msra.mxu0 0
      %1841 = vmatprep.subr.bf16.mxu0 %v1152
      %1842 = vmatpush1.bf16.msra.mxu0 %v1151
      %1843 = vmatprep.subr.bf16.mxu0 %v1140
      %1844 = vmatpush1.bf16.msra.mxu0 %v1139
      %1845 = vmatprep.subr.bf16.mxu0 %v1128
      %1846 = vmatpush1.bf16.msra.mxu0 %v1127
      %1847 = vmatprep.subr.bf16.mxu0 %v1116
      %1848 = vmatpush1.bf16.msra.mxu0 %v1115
      %1849 = vmatprep.subr.bf16.mxu0 0
      %1850 = vmatpush2.bf16.msra.mxu0 0
      %1851 = vmatprep.subr.bf16.mxu0 0
      %1852 = vmatpush2.bf16.msra.mxu0 0
      %1853 = vmatprep.subr.bf16.mxu0 0
      %1854 = vmatpush2.bf16.msra.mxu0 0
      %1855 = vmatprep.subr.bf16.mxu0 0
      %1856 = vmatpush2.bf16.msra.mxu0 0
      %1857 = vmatprep.subr.bf16.mxu0 0
      %1858 = vmatpush2.bf16.msra.mxu0 0
      %1859 = vmatprep.subr.bf16.mxu0 0
      %1860 = vmatpush2.bf16.msra.mxu0 0
      %1861 = vmatprep.subr.bf16.mxu0 0
      %1862 = vmatpush2.bf16.msra.mxu0 0
      %1863 = vmatprep.subr.bf16.mxu0 0
      %1864 = vmatpush2.bf16.msra.mxu0 0
      %1865 = vmatprep.mubr.bf16.mxu0 0
      %1866 = vmatmul.mubr.bf16.gmra.mxu0 %v1207
      %v1867 = vpop.f32.mrf.mxu0
      %v1868 = vadd.f32 %v932, %v1867
      %v1869 = vpop.f32.mrf.mxu0
      %v1870 = vadd.f32 %v936, %v1869
      %v1871 = vpop.f32.mrf.mxu0
      %v1872 = vadd.f32 %v932, %v1871
      %v1873 = vpop.f32.mrf.mxu0
      %v1874 = vadd.f32 %v936, %v1873
      %1875 = vmatprep.mubr.bf16.mxu0 0
      %1876 = vmatmul.mubr.bf16.gmra.mxu0 %v1210
      %v1877 = vpop.f32.mrf.mxu0
      %v1878 = vadd.f32 %v932, %v1877
      %v1879 = vpop.f32.mrf.mxu0
      %v1880 = vadd.f32 %v936, %v1879
      %v1881 = vpop.f32.mrf.mxu0
      %v1882 = vadd.f32 %v932, %v1881
      %v1883 = vpop.f32.mrf.mxu0
      %v1884 = vadd.f32 %v936, %v1883
      %1885 = vmatprep.mubr.bf16.mxu0 0
      %1886 = vmatmul.mubr.bf16.gmra.mxu0 %v1213
      %v1887 = vpop.f32.mrf.mxu0
      %v1888 = vadd.f32 %v932, %v1887
      %v1889 = vpop.f32.mrf.mxu0
      %v1890 = vadd.f32 %v936, %v1889
      %v1891 = vpop.f32.mrf.mxu0
      %v1892 = vadd.f32 %v932, %v1891
      %v1893 = vpop.f32.mrf.mxu0
      %v1894 = vadd.f32 %v936, %v1893
      %1895 = vmatprep.mubr.bf16.mxu0 0
      %1896 = vmatmul.mubr.bf16.gmra.mxu0 %v1216
      %v1897 = vpop.f32.mrf.mxu0
      %v1898 = vadd.f32 %v932, %v1897
      %v1899 = vpop.f32.mrf.mxu0
      %v1900 = vadd.f32 %v936, %v1899
      %v1901 = vpop.f32.mrf.mxu0
      %v1902 = vadd.f32 %v932, %v1901
      %v1903 = vpop.f32.mrf.mxu0
      %v1904 = vadd.f32 %v936, %v1903
      %1905 = vmatprep.mubr.bf16.mxu0 0
      %1906 = vmatmul.mubr.bf16.gmra.mxu0 %v1219
      %v1907 = vpop.f32.mrf.mxu0
      %v1908 = vadd.f32 %v932, %v1907
      %v1909 = vpop.f32.mrf.mxu0
      %v1910 = vadd.f32 %v936, %v1909
      %v1911 = vpop.f32.mrf.mxu0
      %v1912 = vadd.f32 %v932, %v1911
      %v1913 = vpop.f32.mrf.mxu0
      %v1914 = vadd.f32 %v936, %v1913
      %1915 = vmatprep.mubr.bf16.mxu0 0
      %1916 = vmatmul.mubr.bf16.gmra.mxu0 %v1222
      %v1917 = vpop.f32.mrf.mxu0
      %v1918 = vadd.f32 %v932, %v1917
      %v1919 = vpop.f32.mrf.mxu0
      %v1920 = vadd.f32 %v936, %v1919
      %v1921 = vpop.f32.mrf.mxu0
      %v1922 = vadd.f32 %v932, %v1921
      %v1923 = vpop.f32.mrf.mxu0
      %v1924 = vadd.f32 %v936, %v1923
      %1925 = vmatprep.mubr.bf16.mxu0 0
      %1926 = vmatmul.mubr.bf16.gmra.mxu0 %v1225
      %v1927 = vpop.f32.mrf.mxu0
      %v1928 = vadd.f32 %v932, %v1927
      %v1929 = vpop.f32.mrf.mxu0
      %v1930 = vadd.f32 %v936, %v1929
      %v1931 = vpop.f32.mrf.mxu0
      %v1932 = vadd.f32 %v932, %v1931
      %v1933 = vpop.f32.mrf.mxu0
      %v1934 = vadd.f32 %v936, %v1933
      %1935 = vmatprep.mubr.bf16.mxu0 0
      %1936 = vmatmul.mubr.bf16.gmra.mxu0 %v1228
      %v1937 = vpop.f32.mrf.mxu0
      %v1938 = vadd.f32 %v932, %v1937
      %v1939 = vpop.f32.mrf.mxu0
      %v1940 = vadd.f32 %v936, %v1939
      %v1941 = vpop.f32.mrf.mxu0
      %v1942 = vadd.f32 %v932, %v1941
      %v1943 = vpop.f32.mrf.mxu0
      %v1944 = vadd.f32 %v936, %v1943
      %1945 = vmatprep.mubr.bf16.mxu0 0
      %1946 = vmatmul.mubr.bf16.gmra.mxu0 %v1231
      %v1947 = vpop.f32.mrf.mxu0
      %v1948 = vadd.f32 %v932, %v1947
      %v1949 = vpop.f32.mrf.mxu0
      %v1950 = vadd.f32 %v936, %v1949
      %v1951 = vpop.f32.mrf.mxu0
      %v1952 = vadd.f32 %v932, %v1951
      %v1953 = vpop.f32.mrf.mxu0
      %v1954 = vadd.f32 %v936, %v1953
      %1955 = vmatprep.mubr.bf16.mxu0 0
      %1956 = vmatmul.mubr.bf16.gmra.mxu0 %v1234
      %v1957 = vpop.f32.mrf.mxu0
      %v1958 = vadd.f32 %v932, %v1957
      %v1959 = vpop.f32.mrf.mxu0
      %v1960 = vadd.f32 %v936, %v1959
      %v1961 = vpop.f32.mrf.mxu0
      %v1962 = vadd.f32 %v932, %v1961
      %v1963 = vpop.f32.mrf.mxu0
      %v1964 = vadd.f32 %v936, %v1963
      %1965 = vmatprep.mubr.bf16.mxu0 0
      %1966 = vmatmul.mubr.bf16.gmra.mxu0 %v1237
      %v1967 = vpop.f32.mrf.mxu0
      %v1968 = vadd.f32 %v932, %v1967
      %v1969 = vpop.f32.mrf.mxu0
      %v1970 = vadd.f32 %v936, %v1969
      %v1971 = vpop.f32.mrf.mxu0
      %v1972 = vadd.f32 %v932, %v1971
      %v1973 = vpop.f32.mrf.mxu0
      %v1974 = vadd.f32 %v936, %v1973
      %1975 = vmatprep.mubr.bf16.mxu0 0
      %1976 = vmatmul.mubr.bf16.gmra.mxu0 %v1240
      %v1977 = vpop.f32.mrf.mxu0
      %v1978 = vadd.f32 %v932, %v1977
      %v1979 = vpop.f32.mrf.mxu0
      %v1980 = vadd.f32 %v936, %v1979
      %v1981 = vpop.f32.mrf.mxu0
      %v1982 = vadd.f32 %v932, %v1981
      %v1983 = vpop.f32.mrf.mxu0
      %v1984 = vadd.f32 %v936, %v1983
      %1985 = vmatprep.mubr.bf16.mxu0 0
      %1986 = vmatmul.mubr.bf16.gmra.mxu0 %v1243
      %v1987 = vpop.f32.mrf.mxu0
      %v1988 = vadd.f32 %v932, %v1987
      %v1989 = vpop.f32.mrf.mxu0
      %v1990 = vadd.f32 %v936, %v1989
      %v1991 = vpop.f32.mrf.mxu0
      %v1992 = vadd.f32 %v932, %v1991
      %v1993 = vpop.f32.mrf.mxu0
      %v1994 = vadd.f32 %v936, %v1993
      %1995 = vmatprep.mubr.bf16.mxu0 0
      %1996 = vmatmul.mubr.bf16.gmra.mxu0 %v1246
      %v1997 = vpop.f32.mrf.mxu0
      %v1998 = vadd.f32 %v932, %v1997
      %v1999 = vpop.f32.mrf.mxu0
      %v2000 = vadd.f32 %v936, %v1999
      %v2001 = vpop.f32.mrf.mxu0
      %v2002 = vadd.f32 %v932, %v2001
      %v2003 = vpop.f32.mrf.mxu0
      %v2004 = vadd.f32 %v936, %v2003
      %2005 = vmatprep.mubr.bf16.mxu0 0
      %2006 = vmatmul.mubr.bf16.gmra.mxu0 %v1249
      %v2007 = vpop.f32.mrf.mxu0
      %v2008 = vadd.f32 %v932, %v2007
      %v2009 = vpop.f32.mrf.mxu0
      %v2010 = vadd.f32 %v936, %v2009
      %v2011 = vpop.f32.mrf.mxu0
      %v2012 = vadd.f32 %v932, %v2011
      %v2013 = vpop.f32.mrf.mxu0
      %v2014 = vadd.f32 %v936, %v2013
      %2015 = vmatprep.mubr.bf16.mxu0 0
      %2016 = vmatmul.mubr.bf16.gmra.mxu0 %v1252
      %v2017 = vpop.f32.mrf.mxu0
      %v2018 = vadd.f32 %v932, %v2017
      %v2019 = vpop.f32.mrf.mxu0
      %v2020 = vadd.f32 %v936, %v2019
      %v2021 = vpop.f32.mrf.mxu0
      %v2022 = vadd.f32 %v932, %v2021
      %v2023 = vpop.f32.mrf.mxu0
      %v2024 = vadd.f32 %v936, %v2023
      %2025 = vdwg.mxu0
      %2026 = vmatprep.subr.bf16.mxu0 0
      %2027 = vmatpush1.bf16.msra.mxu0 0
      %2028 = vmatprep.subr.bf16.mxu0 0
      %2029 = vmatpush1.bf16.msra.mxu0 0
      %2030 = vmatprep.subr.bf16.mxu0 0
      %2031 = vmatpush1.bf16.msra.mxu0 0
      %2032 = vmatprep.subr.bf16.mxu0 0
      %2033 = vmatpush1.bf16.msra.mxu0 0
      %2034 = vmatprep.subr.bf16.mxu0 %v1154
      %2035 = vmatpush1.bf16.msra.mxu0 %v1153
      %2036 = vmatprep.subr.bf16.mxu0 %v1142
      %2037 = vmatpush1.bf16.msra.mxu0 %v1141
      %2038 = vmatprep.subr.bf16.mxu0 %v1130
      %2039 = vmatpush1.bf16.msra.mxu0 %v1129
      %2040 = vmatprep.subr.bf16.mxu0 %v1118
      %2041 = vmatpush1.bf16.msra.mxu0 %v1117
      %2042 = vmatprep.subr.bf16.mxu0 0
      %2043 = vmatpush2.bf16.msra.mxu0 0
      %2044 = vmatprep.subr.bf16.mxu0 0
      %2045 = vmatpush2.bf16.msra.mxu0 0
      %2046 = vmatprep.subr.bf16.mxu0 0
      %2047 = vmatpush2.bf16.msra.mxu0 0
      %2048 = vmatprep.subr.bf16.mxu0 0
      %2049 = vmatpush2.bf16.msra.mxu0 0
      %2050 = vmatprep.subr.bf16.mxu0 0
      %2051 = vmatpush2.bf16.msra.mxu0 0
      %2052 = vmatprep.subr.bf16.mxu0 0
      %2053 = vmatpush2.bf16.msra.mxu0 0
      %2054 = vmatprep.subr.bf16.mxu0 0
      %2055 = vmatpush2.bf16.msra.mxu0 0
      %2056 = vmatprep.subr.bf16.mxu0 0
      %2057 = vmatpush2.bf16.msra.mxu0 0
      %2058 = vmatprep.mubr.bf16.mxu0 0
      %2059 = vmatmul.mubr.bf16.gmra.mxu0 %v1207
      %v2060 = vpop.f32.mrf.mxu0
      %v2061 = vadd.f32 %v940, %v2060
      %v2062 = vpop.f32.mrf.mxu0
      %v2063 = vadd.f32 %v944, %v2062
      %v2064 = vpop.f32.mrf.mxu0
      %v2065 = vadd.f32 %v940, %v2064
      %v2066 = vpop.f32.mrf.mxu0
      %v2067 = vadd.f32 %v944, %v2066
      %2068 = vmatprep.mubr.bf16.mxu0 0
      %2069 = vmatmul.mubr.bf16.gmra.mxu0 %v1210
      %v2070 = vpop.f32.mrf.mxu0
      %v2071 = vadd.f32 %v940, %v2070
      %v2072 = vpop.f32.mrf.mxu0
      %v2073 = vadd.f32 %v944, %v2072
      %v2074 = vpop.f32.mrf.mxu0
      %v2075 = vadd.f32 %v940, %v2074
      %v2076 = vpop.f32.mrf.mxu0
      %v2077 = vadd.f32 %v944, %v2076
      %2078 = vmatprep.mubr.bf16.mxu0 0
      %2079 = vmatmul.mubr.bf16.gmra.mxu0 %v1213
      %v2080 = vpop.f32.mrf.mxu0
      %v2081 = vadd.f32 %v940, %v2080
      %v2082 = vpop.f32.mrf.mxu0
      %v2083 = vadd.f32 %v944, %v2082
      %v2084 = vpop.f32.mrf.mxu0
      %v2085 = vadd.f32 %v940, %v2084
      %v2086 = vpop.f32.mrf.mxu0
      %v2087 = vadd.f32 %v944, %v2086
      %2088 = vmatprep.mubr.bf16.mxu0 0
      %2089 = vmatmul.mubr.bf16.gmra.mxu0 %v1216
      %v2090 = vpop.f32.mrf.mxu0
      %v2091 = vadd.f32 %v940, %v2090
      %v2092 = vpop.f32.mrf.mxu0
      %v2093 = vadd.f32 %v944, %v2092
      %v2094 = vpop.f32.mrf.mxu0
      %v2095 = vadd.f32 %v940, %v2094
      %v2096 = vpop.f32.mrf.mxu0
      %v2097 = vadd.f32 %v944, %v2096
      %2098 = vmatprep.mubr.bf16.mxu0 0
      %2099 = vmatmul.mubr.bf16.gmra.mxu0 %v1219
      %v2100 = vpop.f32.mrf.mxu0
      %v2101 = vadd.f32 %v940, %v2100
      %v2102 = vpop.f32.mrf.mxu0
      %v2103 = vadd.f32 %v944, %v2102
      %v2104 = vpop.f32.mrf.mxu0
      %v2105 = vadd.f32 %v940, %v2104
      %v2106 = vpop.f32.mrf.mxu0
      %v2107 = vadd.f32 %v944, %v2106
      %2108 = vmatprep.mubr.bf16.mxu0 0
      %2109 = vmatmul.mubr.bf16.gmra.mxu0 %v1222
      %v2110 = vpop.f32.mrf.mxu0
      %v2111 = vadd.f32 %v940, %v2110
      %v2112 = vpop.f32.mrf.mxu0
      %v2113 = vadd.f32 %v944, %v2112
      %v2114 = vpop.f32.mrf.mxu0
      %v2115 = vadd.f32 %v940, %v2114
      %v2116 = vpop.f32.mrf.mxu0
      %v2117 = vadd.f32 %v944, %v2116
      %2118 = vmatprep.mubr.bf16.mxu0 0
      %2119 = vmatmul.mubr.bf16.gmra.mxu0 %v1225
      %v2120 = vpop.f32.mrf.mxu0
      %v2121 = vadd.f32 %v940, %v2120
      %v2122 = vpop.f32.mrf.mxu0
      %v2123 = vadd.f32 %v944, %v2122
      %v2124 = vpop.f32.mrf.mxu0
      %v2125 = vadd.f32 %v940, %v2124
      %v2126 = vpop.f32.mrf.mxu0
      %v2127 = vadd.f32 %v944, %v2126
      %2128 = vmatprep.mubr.bf16.mxu0 0
      %2129 = vmatmul.mubr.bf16.gmra.mxu0 %v1228
      %v2130 = vpop.f32.mrf.mxu0
      %v2131 = vadd.f32 %v940, %v2130
      %v2132 = vpop.f32.mrf.mxu0
      %v2133 = vadd.f32 %v944, %v2132
      %v2134 = vpop.f32.mrf.mxu0
      %v2135 = vadd.f32 %v940, %v2134
      %v2136 = vpop.f32.mrf.mxu0
      %v2137 = vadd.f32 %v944, %v2136
      %2138 = vmatprep.mubr.bf16.mxu0 0
      %2139 = vmatmul.mubr.bf16.gmra.mxu0 %v1231
      %v2140 = vpop.f32.mrf.mxu0
      %v2141 = vadd.f32 %v940, %v2140
      %v2142 = vpop.f32.mrf.mxu0
      %v2143 = vadd.f32 %v944, %v2142
      %v2144 = vpop.f32.mrf.mxu0
      %v2145 = vadd.f32 %v940, %v2144
      %v2146 = vpop.f32.mrf.mxu0
      %v2147 = vadd.f32 %v944, %v2146
      %2148 = vmatprep.mubr.bf16.mxu0 0
      %2149 = vmatmul.mubr.bf16.gmra.mxu0 %v1234
      %v2150 = vpop.f32.mrf.mxu0
      %v2151 = vadd.f32 %v940, %v2150
      %v2152 = vpop.f32.mrf.mxu0
      %v2153 = vadd.f32 %v944, %v2152
      %v2154 = vpop.f32.mrf.mxu0
      %v2155 = vadd.f32 %v940, %v2154
      %v2156 = vpop.f32.mrf.mxu0
      %v2157 = vadd.f32 %v944, %v2156
      %2158 = vmatprep.mubr.bf16.mxu0 0
      %2159 = vmatmul.mubr.bf16.gmra.mxu0 %v1237
      %v2160 = vpop.f32.mrf.mxu0
      %v2161 = vadd.f32 %v940, %v2160
      %v2162 = vpop.f32.mrf.mxu0
      %v2163 = vadd.f32 %v944, %v2162
      %v2164 = vpop.f32.mrf.mxu0
      %v2165 = vadd.f32 %v940, %v2164
      %v2166 = vpop.f32.mrf.mxu0
      %v2167 = vadd.f32 %v944, %v2166
      %2168 = vmatprep.mubr.bf16.mxu0 0
      %2169 = vmatmul.mubr.bf16.gmra.mxu0 %v1240
      %v2170 = vpop.f32.mrf.mxu0
      %v2171 = vadd.f32 %v940, %v2170
      %v2172 = vpop.f32.mrf.mxu0
      %v2173 = vadd.f32 %v944, %v2172
      %v2174 = vpop.f32.mrf.mxu0
      %v2175 = vadd.f32 %v940, %v2174
      %v2176 = vpop.f32.mrf.mxu0
      %v2177 = vadd.f32 %v944, %v2176
      %2178 = vmatprep.mubr.bf16.mxu0 0
      %2179 = vmatmul.mubr.bf16.gmra.mxu0 %v1243
      %v2180 = vpop.f32.mrf.mxu0
      %v2181 = vadd.f32 %v940, %v2180
      %v2182 = vpop.f32.mrf.mxu0
      %v2183 = vadd.f32 %v944, %v2182
      %v2184 = vpop.f32.mrf.mxu0
      %v2185 = vadd.f32 %v940, %v2184
      %v2186 = vpop.f32.mrf.mxu0
      %v2187 = vadd.f32 %v944, %v2186
      %2188 = vmatprep.mubr.bf16.mxu0 0
      %2189 = vmatmul.mubr.bf16.gmra.mxu0 %v1246
      %v2190 = vpop.f32.mrf.mxu0
      %v2191 = vadd.f32 %v940, %v2190
      %v2192 = vpop.f32.mrf.mxu0
      %v2193 = vadd.f32 %v944, %v2192
      %v2194 = vpop.f32.mrf.mxu0
      %v2195 = vadd.f32 %v940, %v2194
      %v2196 = vpop.f32.mrf.mxu0
      %v2197 = vadd.f32 %v944, %v2196
      %2198 = vmatprep.mubr.bf16.mxu0 0
      %2199 = vmatmul.mubr.bf16.gmra.mxu0 %v1249
      %v2200 = vpop.f32.mrf.mxu0
      %v2201 = vadd.f32 %v940, %v2200
      %v2202 = vpop.f32.mrf.mxu0
      %v2203 = vadd.f32 %v944, %v2202
      %v2204 = vpop.f32.mrf.mxu0
      %v2205 = vadd.f32 %v940, %v2204
      %v2206 = vpop.f32.mrf.mxu0
      %v2207 = vadd.f32 %v944, %v2206
      %2208 = vmatprep.mubr.bf16.mxu0 0
      %2209 = vmatmul.mubr.bf16.gmra.mxu0 %v1252
      %v2210 = vpop.f32.mrf.mxu0
      %v2211 = vadd.f32 %v940, %v2210
      %v2212 = vpop.f32.mrf.mxu0
      %v2213 = vadd.f32 %v944, %v2212
      %v2214 = vpop.f32.mrf.mxu0
      %v2215 = vadd.f32 %v940, %v2214
      %v2216 = vpop.f32.mrf.mxu0
      %v2217 = vadd.f32 %v944, %v2216
      %2218 = vdwg.mxu0
      %2219 = vmatprep.subr.bf16.mxu0 0
      %2220 = vmatpush1.bf16.msra.mxu0 0
      %2221 = vmatprep.subr.bf16.mxu0 0
      %2222 = vmatpush1.bf16.msra.mxu0 0
      %2223 = vmatprep.subr.bf16.mxu0 0
      %2224 = vmatpush1.bf16.msra.mxu0 0
      %2225 = vmatprep.subr.bf16.mxu0 0
      %2226 = vmatpush1.bf16.msra.mxu0 0
      %2227 = vmatprep.subr.bf16.mxu0 %v1156
      %2228 = vmatpush1.bf16.msra.mxu0 %v1155
      %2229 = vmatprep.subr.bf16.mxu0 %v1144
      %2230 = vmatpush1.bf16.msra.mxu0 %v1143
      %2231 = vmatprep.subr.bf16.mxu0 %v1132
      %2232 = vmatpush1.bf16.msra.mxu0 %v1131
      %2233 = vmatprep.subr.bf16.mxu0 %v1120
      %2234 = vmatpush1.bf16.msra.mxu0 %v1119
      %2235 = vmatprep.subr.bf16.mxu0 0
      %2236 = vmatpush2.bf16.msra.mxu0 0
      %2237 = vmatprep.subr.bf16.mxu0 0
      %2238 = vmatpush2.bf16.msra.mxu0 0
      %2239 = vmatprep.subr.bf16.mxu0 0
      %2240 = vmatpush2.bf16.msra.mxu0 0
      %2241 = vmatprep.subr.bf16.mxu0 0
      %2242 = vmatpush2.bf16.msra.mxu0 0
      %2243 = vmatprep.subr.bf16.mxu0 0
      %2244 = vmatpush2.bf16.msra.mxu0 0
      %2245 = vmatprep.subr.bf16.mxu0 0
      %2246 = vmatpush2.bf16.msra.mxu0 0
      %2247 = vmatprep.subr.bf16.mxu0 0
      %2248 = vmatpush2.bf16.msra.mxu0 0
      %2249 = vmatprep.subr.bf16.mxu0 0
      %2250 = vmatpush2.bf16.msra.mxu0 0
      %2251 = vmatprep.mubr.bf16.mxu0 0
      %2252 = vmatmul.mubr.bf16.gmra.mxu0 %v1207
      %v2253 = vpop.f32.mrf.mxu0
      %v2254 = vadd.f32 %v948, %v2253
      %v2255 = vpop.f32.mrf.mxu0
      %v2256 = vadd.f32 %v952, %v2255
      %v2257 = vpop.f32.mrf.mxu0
      %v2258 = vadd.f32 %v948, %v2257
      %v2259 = vpop.f32.mrf.mxu0
      %v2260 = vadd.f32 %v952, %v2259
      %2261 = vmatprep.mubr.bf16.mxu0 0
      %2262 = vmatmul.mubr.bf16.gmra.mxu0 %v1210
      %v2263 = vpop.f32.mrf.mxu0
      %v2264 = vadd.f32 %v948, %v2263
      %v2265 = vpop.f32.mrf.mxu0
      %v2266 = vadd.f32 %v952, %v2265
      %v2267 = vpop.f32.mrf.mxu0
      %v2268 = vadd.f32 %v948, %v2267
      %v2269 = vpop.f32.mrf.mxu0
      %v2270 = vadd.f32 %v952, %v2269
      %2271 = vmatprep.mubr.bf16.mxu0 0
      %2272 = vmatmul.mubr.bf16.gmra.mxu0 %v1213
      %v2273 = vpop.f32.mrf.mxu0
      %v2274 = vadd.f32 %v948, %v2273
      %v2275 = vpop.f32.mrf.mxu0
      %v2276 = vadd.f32 %v952, %v2275
      %v2277 = vpop.f32.mrf.mxu0
      %v2278 = vadd.f32 %v948, %v2277
      %v2279 = vpop.f32.mrf.mxu0
      %v2280 = vadd.f32 %v952, %v2279
      %2281 = vmatprep.mubr.bf16.mxu0 0
      %2282 = vmatmul.mubr.bf16.gmra.mxu0 %v1216
      %v2283 = vpop.f32.mrf.mxu0
      %v2284 = vadd.f32 %v948, %v2283
      %v2285 = vpop.f32.mrf.mxu0
      %v2286 = vadd.f32 %v952, %v2285
      %v2287 = vpop.f32.mrf.mxu0
      %v2288 = vadd.f32 %v948, %v2287
      %v2289 = vpop.f32.mrf.mxu0
      %v2290 = vadd.f32 %v952, %v2289
      %2291 = vmatprep.mubr.bf16.mxu0 0
      %2292 = vmatmul.mubr.bf16.gmra.mxu0 %v1219
      %v2293 = vpop.f32.mrf.mxu0
      %v2294 = vadd.f32 %v948, %v2293
      %v2295 = vpop.f32.mrf.mxu0
      %v2296 = vadd.f32 %v952, %v2295
      %v2297 = vpop.f32.mrf.mxu0
      %v2298 = vadd.f32 %v948, %v2297
      %v2299 = vpop.f32.mrf.mxu0
      %v2300 = vadd.f32 %v952, %v2299
      %2301 = vmatprep.mubr.bf16.mxu0 0
      %2302 = vmatmul.mubr.bf16.gmra.mxu0 %v1222
      %v2303 = vpop.f32.mrf.mxu0
      %v2304 = vadd.f32 %v948, %v2303
      %v2305 = vpop.f32.mrf.mxu0
      %v2306 = vadd.f32 %v952, %v2305
      %v2307 = vpop.f32.mrf.mxu0
      %v2308 = vadd.f32 %v948, %v2307
      %v2309 = vpop.f32.mrf.mxu0
      %v2310 = vadd.f32 %v952, %v2309
      %2311 = vmatprep.mubr.bf16.mxu0 0
      %2312 = vmatmul.mubr.bf16.gmra.mxu0 %v1225
      %v2313 = vpop.f32.mrf.mxu0
      %v2314 = vadd.f32 %v948, %v2313
      %v2315 = vpop.f32.mrf.mxu0
      %v2316 = vadd.f32 %v952, %v2315
      %v2317 = vpop.f32.mrf.mxu0
      %v2318 = vadd.f32 %v948, %v2317
      %v2319 = vpop.f32.mrf.mxu0
      %v2320 = vadd.f32 %v952, %v2319
      %2321 = vmatprep.mubr.bf16.mxu0 0
      %2322 = vmatmul.mubr.bf16.gmra.mxu0 %v1228
      %v2323 = vpop.f32.mrf.mxu0
      %v2324 = vadd.f32 %v948, %v2323
      %v2325 = vpop.f32.mrf.mxu0
      %v2326 = vadd.f32 %v952, %v2325
      %v2327 = vpop.f32.mrf.mxu0
      %v2328 = vadd.f32 %v948, %v2327
      %v2329 = vpop.f32.mrf.mxu0
      %v2330 = vadd.f32 %v952, %v2329
      %2331 = vmatprep.mubr.bf16.mxu0 0
      %2332 = vmatmul.mubr.bf16.gmra.mxu0 %v1231
      %v2333 = vpop.f32.mrf.mxu0
      %v2334 = vadd.f32 %v948, %v2333
      %v2335 = vpop.f32.mrf.mxu0
      %v2336 = vadd.f32 %v952, %v2335
      %v2337 = vpop.f32.mrf.mxu0
      %v2338 = vadd.f32 %v948, %v2337
      %v2339 = vpop.f32.mrf.mxu0
      %v2340 = vadd.f32 %v952, %v2339
      %2341 = vmatprep.mubr.bf16.mxu0 0
      %2342 = vmatmul.mubr.bf16.gmra.mxu0 %v1234
      %v2343 = vpop.f32.mrf.mxu0
      %v2344 = vadd.f32 %v948, %v2343
      %v2345 = vpop.f32.mrf.mxu0
      %v2346 = vadd.f32 %v952, %v2345
      %v2347 = vpop.f32.mrf.mxu0
      %v2348 = vadd.f32 %v948, %v2347
      %v2349 = vpop.f32.mrf.mxu0
      %v2350 = vadd.f32 %v952, %v2349
      %2351 = vmatprep.mubr.bf16.mxu0 0
      %2352 = vmatmul.mubr.bf16.gmra.mxu0 %v1237
      %v2353 = vpop.f32.mrf.mxu0
      %v2354 = vadd.f32 %v948, %v2353
      %v2355 = vpop.f32.mrf.mxu0
      %v2356 = vadd.f32 %v952, %v2355
      %v2357 = vpop.f32.mrf.mxu0
      %v2358 = vadd.f32 %v948, %v2357
      %v2359 = vpop.f32.mrf.mxu0
      %v2360 = vadd.f32 %v952, %v2359
      %2361 = vmatprep.mubr.bf16.mxu0 0
      %2362 = vmatmul.mubr.bf16.gmra.mxu0 %v1240
      %v2363 = vpop.f32.mrf.mxu0
      %v2364 = vadd.f32 %v948, %v2363
      %v2365 = vpop.f32.mrf.mxu0
      %v2366 = vadd.f32 %v952, %v2365
      %v2367 = vpop.f32.mrf.mxu0
      %v2368 = vadd.f32 %v948, %v2367
      %v2369 = vpop.f32.mrf.mxu0
      %v2370 = vadd.f32 %v952, %v2369
      %2371 = vmatprep.mubr.bf16.mxu0 0
      %2372 = vmatmul.mubr.bf16.gmra.mxu0 %v1243
      %v2373 = vpop.f32.mrf.mxu0
      %v2374 = vadd.f32 %v948, %v2373
      %v2375 = vpop.f32.mrf.mxu0
      %v2376 = vadd.f32 %v952, %v2375
      %v2377 = vpop.f32.mrf.mxu0
      %v2378 = vadd.f32 %v948, %v2377
      %v2379 = vpop.f32.mrf.mxu0
      %v2380 = vadd.f32 %v952, %v2379
      %2381 = vmatprep.mubr.bf16.mxu0 0
      %2382 = vmatmul.mubr.bf16.gmra.mxu0 %v1246
      %v2383 = vpop.f32.mrf.mxu0
      %v2384 = vadd.f32 %v948, %v2383
      %v2385 = vpop.f32.mrf.mxu0
      %v2386 = vadd.f32 %v952, %v2385
      %v2387 = vpop.f32.mrf.mxu0
      %v2388 = vadd.f32 %v948, %v2387
      %v2389 = vpop.f32.mrf.mxu0
      %v2390 = vadd.f32 %v952, %v2389
      %2391 = vmatprep.mubr.bf16.mxu0 0
      %2392 = vmatmul.mubr.bf16.gmra.mxu0 %v1249
      %v2393 = vpop.f32.mrf.mxu0
      %v2394 = vadd.f32 %v948, %v2393
      %v2395 = vpop.f32.mrf.mxu0
      %v2396 = vadd.f32 %v952, %v2395
      %v2397 = vpop.f32.mrf.mxu0
      %v2398 = vadd.f32 %v948, %v2397
      %v2399 = vpop.f32.mrf.mxu0
      %v2400 = vadd.f32 %v952, %v2399
      %2401 = vmatprep.mubr.bf16.mxu0 0
      %2402 = vmatmul.mubr.bf16.gmra.mxu0 %v1252
      %v2403 = vpop.f32.mrf.mxu0
      %v2404 = vadd.f32 %v948, %v2403
      %v2405 = vpop.f32.mrf.mxu0
      %v2406 = vadd.f32 %v952, %v2405
      %v2407 = vpop.f32.mrf.mxu0
      %v2408 = vadd.f32 %v948, %v2407
      %v2409 = vpop.f32.mrf.mxu0
      %v2410 = vadd.f32 %v952, %v2409
      %2411 = vdwg.mxu0
      %v2412 = vxor.u32 %v1289, 2147483648
      %v2413 = vxor.u32 %v1291, 2147483648
      %v2414 = vxor.u32 %v1482, 2147483648
      %v2415 = vxor.u32 %v1484, 2147483648
      %v2416 = vxor.u32 %v1675, 2147483648
      %v2417 = vxor.u32 %v1677, 2147483648
      %v2418 = vxor.u32 %v1868, 2147483648
      %v2419 = vxor.u32 %v1870, 2147483648
      %v2420 = vxor.u32 %v2061, 2147483648
      %v2421 = vxor.u32 %v2063, 2147483648
      %v2422 = vxor.u32 %v2254, 2147483648
      %v2423 = vxor.u32 %v2256, 2147483648
      %v2424 = vxor.u32 %v1293, 2147483648
      %v2425 = vxor.u32 %v1295, 2147483648
      %v2426 = vxor.u32 %v1486, 2147483648
      %v2427 = vxor.u32 %v1488, 2147483648
      %v2428 = vxor.u32 %v1679, 2147483648
      %v2429 = vxor.u32 %v1681, 2147483648
      %v2430 = vxor.u32 %v1872, 2147483648
      %v2431 = vxor.u32 %v1874, 2147483648
      %v2432 = vxor.u32 %v2065, 2147483648
      %v2433 = vxor.u32 %v2067, 2147483648
      %v2434 = vxor.u32 %v2258, 2147483648
      %v2435 = vxor.u32 %v2260, 2147483648
      %v2436 = vxor.u32 %v1299, 2147483648
      %v2437 = vxor.u32 %v1301, 2147483648
      %v2438 = vxor.u32 %v1492, 2147483648
      %v2439 = vxor.u32 %v1494, 2147483648
      %v2440 = vxor.u32 %v1685, 2147483648
      %v2441 = vxor.u32 %v1687, 2147483648
      %v2442 = vxor.u32 %v1878, 2147483648
      %v2443 = vxor.u32 %v1880, 2147483648
      %v2444 = vxor.u32 %v2071, 2147483648
      %v2445 = vxor.u32 %v2073, 2147483648
      %v2446 = vxor.u32 %v2264, 2147483648
      %v2447 = vxor.u32 %v2266, 2147483648
      %v2448 = vxor.u32 %v1303, 2147483648
      %v2449 = vxor.u32 %v1305, 2147483648
      %v2450 = vxor.u32 %v1496, 2147483648
      %v2451 = vxor.u32 %v1498, 2147483648
      %v2452 = vxor.u32 %v1689, 2147483648
      %v2453 = vxor.u32 %v1691, 2147483648
      %v2454 = vxor.u32 %v1882, 2147483648
      %v2455 = vxor.u32 %v1884, 2147483648
      %v2456 = vxor.u32 %v2075, 2147483648
      %v2457 = vxor.u32 %v2077, 2147483648
      %v2458 = vxor.u32 %v2268, 2147483648
      %v2459 = vxor.u32 %v2270, 2147483648
      %v2460 = vxor.u32 %v1309, 2147483648
      %v2461 = vxor.u32 %v1311, 2147483648
      %v2462 = vxor.u32 %v1502, 2147483648
      %v2463 = vxor.u32 %v1504, 2147483648
      %v2464 = vxor.u32 %v1695, 2147483648
      %v2465 = vxor.u32 %v1697, 2147483648
      %v2466 = vxor.u32 %v1888, 2147483648
      %v2467 = vxor.u32 %v1890, 2147483648
      %v2468 = vxor.u32 %v2081, 2147483648
      %v2469 = vxor.u32 %v2083, 2147483648
      %v2470 = vxor.u32 %v2274, 2147483648
      %v2471 = vxor.u32 %v2276, 2147483648
      %v2472 = vxor.u32 %v1313, 2147483648
      %v2473 = vxor.u32 %v1315, 2147483648
      %v2474 = vxor.u32 %v1506, 2147483648
      %v2475 = vxor.u32 %v1508, 2147483648
      %v2476 = vxor.u32 %v1699, 2147483648
      %v2477 = vxor.u32 %v1701, 2147483648
      %v2478 = vxor.u32 %v1892, 2147483648
      %v2479 = vxor.u32 %v1894, 2147483648
      %v2480 = vxor.u32 %v2085, 2147483648
      %v2481 = vxor.u32 %v2087, 2147483648
      %v2482 = vxor.u32 %v2278, 2147483648
      %v2483 = vxor.u32 %v2280, 2147483648
      %v2484 = vxor.u32 %v1319, 2147483648
      %v2485 = vxor.u32 %v1321, 2147483648
      %v2486 = vxor.u32 %v1512, 2147483648
      %v2487 = vxor.u32 %v1514, 2147483648
      %v2488 = vxor.u32 %v1705, 2147483648
      %v2489 = vxor.u32 %v1707, 2147483648
      %v2490 = vxor.u32 %v1898, 2147483648
      %v2491 = vxor.u32 %v1900, 2147483648
      %v2492 = vxor.u32 %v2091, 2147483648
      %v2493 = vxor.u32 %v2093, 2147483648
      %v2494 = vxor.u32 %v2284, 2147483648
      %v2495 = vxor.u32 %v2286, 2147483648
      %v2496 = vxor.u32 %v1323, 2147483648
      %v2497 = vxor.u32 %v1325, 2147483648
      %v2498 = vxor.u32 %v1516, 2147483648
      %v2499 = vxor.u32 %v1518, 2147483648
      %v2500 = vxor.u32 %v1709, 2147483648
      %v2501 = vxor.u32 %v1711, 2147483648
      %v2502 = vxor.u32 %v1902, 2147483648
      %v2503 = vxor.u32 %v1904, 2147483648
      %v2504 = vxor.u32 %v2095, 2147483648
      %v2505 = vxor.u32 %v2097, 2147483648
      %v2506 = vxor.u32 %v2288, 2147483648
      %v2507 = vxor.u32 %v2290, 2147483648
      %v2508 = vxor.u32 %v1329, 2147483648
      %v2509 = vxor.u32 %v1331, 2147483648
      %v2510 = vxor.u32 %v1522, 2147483648
      %v2511 = vxor.u32 %v1524, 2147483648
      %v2512 = vxor.u32 %v1715, 2147483648
      %v2513 = vxor.u32 %v1717, 2147483648
      %v2514 = vxor.u32 %v1908, 2147483648
      %v2515 = vxor.u32 %v1910, 2147483648
      %v2516 = vxor.u32 %v2101, 2147483648
      %v2517 = vxor.u32 %v2103, 2147483648
      %v2518 = vxor.u32 %v2294, 2147483648
      %v2519 = vxor.u32 %v2296, 2147483648
      %v2520 = vxor.u32 %v1333, 2147483648
      %v2521 = vxor.u32 %v1335, 2147483648
      %v2522 = vxor.u32 %v1526, 2147483648
      %v2523 = vxor.u32 %v1528, 2147483648
      %v2524 = vxor.u32 %v1719, 2147483648
      %v2525 = vxor.u32 %v1721, 2147483648
      %v2526 = vxor.u32 %v1912, 2147483648
      %v2527 = vxor.u32 %v1914, 2147483648
      %v2528 = vxor.u32 %v2105, 2147483648
      %v2529 = vxor.u32 %v2107, 2147483648
      %v2530 = vxor.u32 %v2298, 2147483648
      %v2531 = vxor.u32 %v2300, 2147483648
      %v2532 = vxor.u32 %v1339, 2147483648
      %v2533 = vxor.u32 %v1341, 2147483648
      %v2534 = vxor.u32 %v1532, 2147483648
      %v2535 = vxor.u32 %v1534, 2147483648
      %v2536 = vxor.u32 %v1725, 2147483648
      %v2537 = vxor.u32 %v1727, 2147483648
      %v2538 = vxor.u32 %v1918, 2147483648
      %v2539 = vxor.u32 %v1920, 2147483648
      %v2540 = vxor.u32 %v2111, 2147483648
      %v2541 = vxor.u32 %v2113, 2147483648
      %v2542 = vxor.u32 %v2304, 2147483648
      %v2543 = vxor.u32 %v2306, 2147483648
      %v2544 = vxor.u32 %v1343, 2147483648
      %v2545 = vxor.u32 %v1345, 2147483648
      %v2546 = vxor.u32 %v1536, 2147483648
      %v2547 = vxor.u32 %v1538, 2147483648
      %v2548 = vxor.u32 %v1729, 2147483648
      %v2549 = vxor.u32 %v1731, 2147483648
      %v2550 = vxor.u32 %v1922, 2147483648
      %v2551 = vxor.u32 %v1924, 2147483648
      %v2552 = vxor.u32 %v2115, 2147483648
      %v2553 = vxor.u32 %v2117, 2147483648
      %v2554 = vxor.u32 %v2308, 2147483648
      %v2555 = vxor.u32 %v2310, 2147483648
      %v2556 = vxor.u32 %v1349, 2147483648
      %v2557 = vxor.u32 %v1351, 2147483648
      %v2558 = vxor.u32 %v1542, 2147483648
      %v2559 = vxor.u32 %v1544, 2147483648
      %v2560 = vxor.u32 %v1735, 2147483648
      %v2561 = vxor.u32 %v1737, 2147483648
      %v2562 = vxor.u32 %v1928, 2147483648
      %v2563 = vxor.u32 %v1930, 2147483648
      %v2564 = vxor.u32 %v2121, 2147483648
      %v2565 = vxor.u32 %v2123, 2147483648
      %v2566 = vxor.u32 %v2314, 2147483648
      %v2567 = vxor.u32 %v2316, 2147483648
      %v2568 = vxor.u32 %v1353, 2147483648
      %v2569 = vxor.u32 %v1355, 2147483648
      %v2570 = vxor.u32 %v1546, 2147483648
      %v2571 = vxor.u32 %v1548, 2147483648
      %v2572 = vxor.u32 %v1739, 2147483648
      %v2573 = vxor.u32 %v1741, 2147483648
      %v2574 = vxor.u32 %v1932, 2147483648
      %v2575 = vxor.u32 %v1934, 2147483648
      %v2576 = vxor.u32 %v2125, 2147483648
      %v2577 = vxor.u32 %v2127, 2147483648
      %v2578 = vxor.u32 %v2318, 2147483648
      %v2579 = vxor.u32 %v2320, 2147483648
      %v2580 = vxor.u32 %v1359, 2147483648
      %v2581 = vxor.u32 %v1361, 2147483648
      %v2582 = vxor.u32 %v1552, 2147483648
      %v2583 = vxor.u32 %v1554, 2147483648
      %v2584 = vxor.u32 %v1745, 2147483648
      %v2585 = vxor.u32 %v1747, 2147483648
      %v2586 = vxor.u32 %v1938, 2147483648
      %v2587 = vxor.u32 %v1940, 2147483648
      %v2588 = vxor.u32 %v2131, 2147483648
      %v2589 = vxor.u32 %v2133, 2147483648
      %v2590 = vxor.u32 %v2324, 2147483648
      %v2591 = vxor.u32 %v2326, 2147483648
      %v2592 = vxor.u32 %v1363, 2147483648
      %v2593 = vxor.u32 %v1365, 2147483648
      %v2594 = vxor.u32 %v1556, 2147483648
      %v2595 = vxor.u32 %v1558, 2147483648
      %v2596 = vxor.u32 %v1749, 2147483648
      %v2597 = vxor.u32 %v1751, 2147483648
      %v2598 = vxor.u32 %v1942, 2147483648
      %v2599 = vxor.u32 %v1944, 2147483648
      %v2600 = vxor.u32 %v2135, 2147483648
      %v2601 = vxor.u32 %v2137, 2147483648
      %v2602 = vxor.u32 %v2328, 2147483648
      %v2603 = vxor.u32 %v2330, 2147483648
      %v2604 = vxor.u32 %v1369, 2147483648
      %v2605 = vxor.u32 %v1371, 2147483648
      %v2606 = vxor.u32 %v1562, 2147483648
      %v2607 = vxor.u32 %v1564, 2147483648
      %v2608 = vxor.u32 %v1755, 2147483648
      %v2609 = vxor.u32 %v1757, 2147483648
      %v2610 = vxor.u32 %v1948, 2147483648
      %v2611 = vxor.u32 %v1950, 2147483648
      %v2612 = vxor.u32 %v2141, 2147483648
      %v2613 = vxor.u32 %v2143, 2147483648
      %v2614 = vxor.u32 %v2334, 2147483648
      %v2615 = vxor.u32 %v2336, 2147483648
      %v2616 = vxor.u32 %v1373, 2147483648
      %v2617 = vxor.u32 %v1375, 2147483648
      %v2618 = vxor.u32 %v1566, 2147483648
      %v2619 = vxor.u32 %v1568, 2147483648
      %v2620 = vxor.u32 %v1759, 2147483648
      %v2621 = vxor.u32 %v1761, 2147483648
      %v2622 = vxor.u32 %v1952, 2147483648
      %v2623 = vxor.u32 %v1954, 2147483648
      %v2624 = vxor.u32 %v2145, 2147483648
      %v2625 = vxor.u32 %v2147, 2147483648
      %v2626 = vxor.u32 %v2338, 2147483648
      %v2627 = vxor.u32 %v2340, 2147483648
      %v2628 = vxor.u32 %v1379, 2147483648
      %v2629 = vxor.u32 %v1381, 2147483648
      %v2630 = vxor.u32 %v1572, 2147483648
      %v2631 = vxor.u32 %v1574, 2147483648
      %v2632 = vxor.u32 %v1765, 2147483648
      %v2633 = vxor.u32 %v1767, 2147483648
      %v2634 = vxor.u32 %v1958, 2147483648
      %v2635 = vxor.u32 %v1960, 2147483648
      %v2636 = vxor.u32 %v2151, 2147483648
      %v2637 = vxor.u32 %v2153, 2147483648
      %v2638 = vxor.u32 %v2344, 2147483648
      %v2639 = vxor.u32 %v2346, 2147483648
      %v2640 = vxor.u32 %v1383, 2147483648
      %v2641 = vxor.u32 %v1385, 2147483648
      %v2642 = vxor.u32 %v1576, 2147483648
      %v2643 = vxor.u32 %v1578, 2147483648
      %v2644 = vxor.u32 %v1769, 2147483648
      %v2645 = vxor.u32 %v1771, 2147483648
      %v2646 = vxor.u32 %v1962, 2147483648
      %v2647 = vxor.u32 %v1964, 2147483648
      %v2648 = vxor.u32 %v2155, 2147483648
      %v2649 = vxor.u32 %v2157, 2147483648
      %v2650 = vxor.u32 %v2348, 2147483648
      %v2651 = vxor.u32 %v2350, 2147483648
      %v2652 = vxor.u32 %v1389, 2147483648
      %v2653 = vxor.u32 %v1391, 2147483648
      %v2654 = vxor.u32 %v1582, 2147483648
      %v2655 = vxor.u32 %v1584, 2147483648
      %v2656 = vxor.u32 %v1775, 2147483648
      %v2657 = vxor.u32 %v1777, 2147483648
      %v2658 = vxor.u32 %v1968, 2147483648
      %v2659 = vxor.u32 %v1970, 2147483648
      %v2660 = vxor.u32 %v2161, 2147483648
      %v2661 = vxor.u32 %v2163, 2147483648
      %v2662 = vxor.u32 %v2354, 2147483648
      %v2663 = vxor.u32 %v2356, 2147483648
      %v2664 = vxor.u32 %v1393, 2147483648
      %v2665 = vxor.u32 %v1395, 2147483648
      %v2666 = vxor.u32 %v1586, 2147483648
      %v2667 = vxor.u32 %v1588, 2147483648
      %v2668 = vxor.u32 %v1779, 2147483648
      %v2669 = vxor.u32 %v1781, 2147483648
      %v2670 = vxor.u32 %v1972, 2147483648
      %v2671 = vxor.u32 %v1974, 2147483648
      %v2672 = vxor.u32 %v2165, 2147483648
      %v2673 = vxor.u32 %v2167, 2147483648
      %v2674 = vxor.u32 %v2358, 2147483648
      %v2675 = vxor.u32 %v2360, 2147483648
      %v2676 = vxor.u32 %v1399, 2147483648
      %v2677 = vxor.u32 %v1401, 2147483648
      %v2678 = vxor.u32 %v1592, 2147483648
      %v2679 = vxor.u32 %v1594, 2147483648
      %v2680 = vxor.u32 %v1785, 2147483648
      %v2681 = vxor.u32 %v1787, 2147483648
      %v2682 = vxor.u32 %v1978, 2147483648
      %v2683 = vxor.u32 %v1980, 2147483648
      %v2684 = vxor.u32 %v2171, 2147483648
      %v2685 = vxor.u32 %v2173, 2147483648
      %v2686 = vxor.u32 %v2364, 2147483648
      %v2687 = vxor.u32 %v2366, 2147483648
      %v2688 = vxor.u32 %v1403, 2147483648
      %v2689 = vxor.u32 %v1405, 2147483648
      %v2690 = vxor.u32 %v1596, 2147483648
      %v2691 = vxor.u32 %v1598, 2147483648
      %v2692 = vxor.u32 %v1789, 2147483648
      %v2693 = vxor.u32 %v1791, 2147483648
      %v2694 = vxor.u32 %v1982, 2147483648
      %v2695 = vxor.u32 %v1984, 2147483648
      %v2696 = vxor.u32 %v2175, 2147483648
      %v2697 = vxor.u32 %v2177, 2147483648
      %v2698 = vxor.u32 %v2368, 2147483648
      %v2699 = vxor.u32 %v2370, 2147483648
      %v2700 = vxor.u32 %v1409, 2147483648
      %v2701 = vxor.u32 %v1411, 2147483648
      %v2702 = vxor.u32 %v1602, 2147483648
      %v2703 = vxor.u32 %v1604, 2147483648
      %v2704 = vxor.u32 %v1795, 2147483648
      %v2705 = vxor.u32 %v1797, 2147483648
      %v2706 = vxor.u32 %v1988, 2147483648
      %v2707 = vxor.u32 %v1990, 2147483648
      %v2708 = vxor.u32 %v2181, 2147483648
      %v2709 = vxor.u32 %v2183, 2147483648
      %v2710 = vxor.u32 %v2374, 2147483648
      %v2711 = vxor.u32 %v2376, 2147483648
      %v2712 = vxor.u32 %v1413, 2147483648
      %v2713 = vxor.u32 %v1415, 2147483648
      %v2714 = vxor.u32 %v1606, 2147483648
      %v2715 = vxor.u32 %v1608, 2147483648
      %v2716 = vxor.u32 %v1799, 2147483648
      %v2717 = vxor.u32 %v1801, 2147483648
      %v2718 = vxor.u32 %v1992, 2147483648
      %v2719 = vxor.u32 %v1994, 2147483648
      %v2720 = vxor.u32 %v2185, 2147483648
      %v2721 = vxor.u32 %v2187, 2147483648
      %v2722 = vxor.u32 %v2378, 2147483648
      %v2723 = vxor.u32 %v2380, 2147483648
      %v2724 = vxor.u32 %v1419, 2147483648
      %v2725 = vxor.u32 %v1421, 2147483648
      %v2726 = vxor.u32 %v1612, 2147483648
      %v2727 = vxor.u32 %v1614, 2147483648
      %v2728 = vxor.u32 %v1805, 2147483648
      %v2729 = vxor.u32 %v1807, 2147483648
      %v2730 = vxor.u32 %v1998, 2147483648
      %v2731 = vxor.u32 %v2000, 2147483648
      %v2732 = vxor.u32 %v2191, 2147483648
      %v2733 = vxor.u32 %v2193, 2147483648
      %v2734 = vxor.u32 %v2384, 2147483648
      %v2735 = vxor.u32 %v2386, 2147483648
      %v2736 = vxor.u32 %v1423, 2147483648
      %v2737 = vxor.u32 %v1425, 2147483648
      %v2738 = vxor.u32 %v1616, 2147483648
      %v2739 = vxor.u32 %v1618, 2147483648
      %v2740 = vxor.u32 %v1809, 2147483648
      %v2741 = vxor.u32 %v1811, 2147483648
      %v2742 = vxor.u32 %v2002, 2147483648
      %v2743 = vxor.u32 %v2004, 2147483648
      %v2744 = vxor.u32 %v2195, 2147483648
      %v2745 = vxor.u32 %v2197, 2147483648
      %v2746 = vxor.u32 %v2388, 2147483648
      %v2747 = vxor.u32 %v2390, 2147483648
      %v2748 = vxor.u32 %v1429, 2147483648
      %v2749 = vxor.u32 %v1431, 2147483648
      %v2750 = vxor.u32 %v1622, 2147483648
      %v2751 = vxor.u32 %v1624, 2147483648
      %v2752 = vxor.u32 %v1815, 2147483648
      %v2753 = vxor.u32 %v1817, 2147483648
      %v2754 = vxor.u32 %v2008, 2147483648
      %v2755 = vxor.u32 %v2010, 2147483648
      %v2756 = vxor.u32 %v2201, 2147483648
      %v2757 = vxor.u32 %v2203, 2147483648
      %v2758 = vxor.u32 %v2394, 2147483648
      %v2759 = vxor.u32 %v2396, 2147483648
      %v2760 = vxor.u32 %v1433, 2147483648
      %v2761 = vxor.u32 %v1435, 2147483648
      %v2762 = vxor.u32 %v1626, 2147483648
      %v2763 = vxor.u32 %v1628, 2147483648
      %v2764 = vxor.u32 %v1819, 2147483648
      %v2765 = vxor.u32 %v1821, 2147483648
      %v2766 = vxor.u32 %v2012, 2147483648
      %v2767 = vxor.u32 %v2014, 2147483648
      %v2768 = vxor.u32 %v2205, 2147483648
      %v2769 = vxor.u32 %v2207, 2147483648
      %v2770 = vxor.u32 %v2398, 2147483648
      %v2771 = vxor.u32 %v2400, 2147483648
      %v2772 = vxor.u32 %v1439, 2147483648
      %v2773 = vxor.u32 %v1441, 2147483648
      %v2774 = vxor.u32 %v1632, 2147483648
      %v2775 = vxor.u32 %v1634, 2147483648
      %v2776 = vxor.u32 %v1825, 2147483648
      %v2777 = vxor.u32 %v1827, 2147483648
      %v2778 = vxor.u32 %v2018, 2147483648
      %v2779 = vxor.u32 %v2020, 2147483648
      %v2780 = vxor.u32 %v2211, 2147483648
      %v2781 = vxor.u32 %v2213, 2147483648
      %v2782 = vxor.u32 %v2404, 2147483648
      %v2783 = vxor.u32 %v2406, 2147483648
      %v2784 = vxor.u32 %v1443, 2147483648
      %v2785 = vxor.u32 %v1445, 2147483648
      %v2786 = vxor.u32 %v1636, 2147483648
      %v2787 = vxor.u32 %v1638, 2147483648
      %v2788 = vxor.u32 %v1829, 2147483648
      %v2789 = vxor.u32 %v1831, 2147483648
      %v2790 = vxor.u32 %v2022, 2147483648
      %v2791 = vxor.u32 %v2024, 2147483648
      %v2792 = vxor.u32 %v2215, 2147483648
      %v2793 = vxor.u32 %v2217, 2147483648
      %v2794 = vxor.u32 %v2408, 2147483648
      %v2795 = vxor.u32 %v2410, 2147483648
      %v2796 = vmul.f32 %v2412, 1.442695
      %v2797 = vpow.pop %v2796
      %v2798 = vmul.f32 %v2413, 1.442695
      %v2799 = vpow.pop %v2798
      %v2800 = vmul.f32 %v2414, 1.442695
      %v2801 = vpow.pop %v2800
      %v2802 = vmul.f32 %v2415, 1.442695
      %v2803 = vpow.pop %v2802
      %v2804 = vmul.f32 %v2416, 1.442695
      %v2805 = vpow.pop %v2804
      %v2806 = vmul.f32 %v2417, 1.442695
      %v2807 = vpow.pop %v2806
      %v2808 = vmul.f32 %v2418, 1.442695
      %v2809 = vpow.pop %v2808
      %v2810 = vmul.f32 %v2419, 1.442695
      %v2811 = vpow.pop %v2810
      %v2812 = vmul.f32 %v2420, 1.442695
      %v2813 = vpow.pop %v2812
      %v2814 = vmul.f32 %v2421, 1.442695
      %v2815 = vpow.pop %v2814
      %v2816 = vmul.f32 %v2422, 1.442695
      %v2817 = vpow.pop %v2816
      %v2818 = vmul.f32 %v2423, 1.442695
      %v2819 = vpow.pop %v2818
      %v2820 = vmul.f32 %v2424, 1.442695
      %v2821 = vpow.pop %v2820
      %v2822 = vmul.f32 %v2425, 1.442695
      %v2823 = vpow.pop %v2822
      %v2824 = vmul.f32 %v2426, 1.442695
      %v2825 = vpow.pop %v2824
      %v2826 = vmul.f32 %v2427, 1.442695
      %v2827 = vpow.pop %v2826
      %v2828 = vmul.f32 %v2428, 1.442695
      %v2829 = vpow.pop %v2828
      %v2830 = vmul.f32 %v2429, 1.442695
      %v2831 = vpow.pop %v2830
      %v2832 = vmul.f32 %v2430, 1.442695
      %v2833 = vpow.pop %v2832
      %v2834 = vmul.f32 %v2431, 1.442695
      %v2835 = vpow.pop %v2834
      %v2836 = vmul.f32 %v2432, 1.442695
      %v2837 = vpow.pop %v2836
      %v2838 = vmul.f32 %v2433, 1.442695
      %v2839 = vpow.pop %v2838
      %v2840 = vmul.f32 %v2434, 1.442695
      %v2841 = vpow.pop %v2840
      %v2842 = vmul.f32 %v2435, 1.442695
      %v2843 = vpow.pop %v2842
      %v2844 = vmul.f32 %v2436, 1.442695
      %v2845 = vpow.pop %v2844
      %v2846 = vmul.f32 %v2437, 1.442695
      %v2847 = vpow.pop %v2846
      %v2848 = vmul.f32 %v2438, 1.442695
      %v2849 = vpow.pop %v2848
      %v2850 = vmul.f32 %v2439, 1.442695
      %v2851 = vpow.pop %v2850
      %v2852 = vmul.f32 %v2440, 1.442695
      %v2853 = vpow.pop %v2852
      %v2854 = vmul.f32 %v2441, 1.442695
      %v2855 = vpow.pop %v2854
      %v2856 = vmul.f32 %v2442, 1.442695
      %v2857 = vpow.pop %v2856
      %v2858 = vmul.f32 %v2443, 1.442695
      %v2859 = vpow.pop %v2858
      %v2860 = vmul.f32 %v2444, 1.442695
      %v2861 = vpow.pop %v2860
      %v2862 = vmul.f32 %v2445, 1.442695
      %v2863 = vpow.pop %v2862
      %v2864 = vmul.f32 %v2446, 1.442695
      %v2865 = vpow.pop %v2864
      %v2866 = vmul.f32 %v2447, 1.442695
      %v2867 = vpow.pop %v2866
      %v2868 = vmul.f32 %v2448, 1.442695
      %v2869 = vpow.pop %v2868
      %v2870 = vmul.f32 %v2449, 1.442695
      %v2871 = vpow.pop %v2870
      %v2872 = vmul.f32 %v2450, 1.442695
      %v2873 = vpow.pop %v2872
      %v2874 = vmul.f32 %v2451, 1.442695
      %v2875 = vpow.pop %v2874
      %v2876 = vmul.f32 %v2452, 1.442695
      %v2877 = vpow.pop %v2876
      %v2878 = vmul.f32 %v2453, 1.442695
      %v2879 = vpow.pop %v2878
      %v2880 = vmul.f32 %v2454, 1.442695
      %v2881 = vpow.pop %v2880
      %v2882 = vmul.f32 %v2455, 1.442695
      %v2883 = vpow.pop %v2882
      %v2884 = vmul.f32 %v2456, 1.442695
      %v2885 = vpow.pop %v2884
      %v2886 = vmul.f32 %v2457, 1.442695
      %v2887 = vpow.pop %v2886
      %v2888 = vmul.f32 %v2458, 1.442695
      %v2889 = vpow.pop %v2888
      %v2890 = vmul.f32 %v2459, 1.442695
      %v2891 = vpow.pop %v2890
      %v2892 = vmul.f32 %v2460, 1.442695
      %v2893 = vpow.pop %v2892
      %v2894 = vmul.f32 %v2461, 1.442695
      %v2895 = vpow.pop %v2894
      %v2896 = vmul.f32 %v2462, 1.442695
      %v2897 = vpow.pop %v2896
      %v2898 = vmul.f32 %v2463, 1.442695
      %v2899 = vpow.pop %v2898
      %v2900 = vmul.f32 %v2464, 1.442695
      %v2901 = vpow.pop %v2900
      %v2902 = vmul.f32 %v2465, 1.442695
      %v2903 = vpow.pop %v2902
      %v2904 = vmul.f32 %v2466, 1.442695
      %v2905 = vpow.pop %v2904
      %v2906 = vmul.f32 %v2467, 1.442695
      %v2907 = vpow.pop %v2906
      %v2908 = vmul.f32 %v2468, 1.442695
      %v2909 = vpow.pop %v2908
      %v2910 = vmul.f32 %v2469, 1.442695
      %v2911 = vpow.pop %v2910
      %v2912 = vmul.f32 %v2470, 1.442695
      %v2913 = vpow.pop %v2912
      %v2914 = vmul.f32 %v2471, 1.442695
      %v2915 = vpow.pop %v2914
      %v2916 = vmul.f32 %v2472, 1.442695
      %v2917 = vpow.pop %v2916
      %v2918 = vmul.f32 %v2473, 1.442695
      %v2919 = vpow.pop %v2918
      %v2920 = vmul.f32 %v2474, 1.442695
      %v2921 = vpow.pop %v2920
      %v2922 = vmul.f32 %v2475, 1.442695
      %v2923 = vpow.pop %v2922
      %v2924 = vmul.f32 %v2476, 1.442695
      %v2925 = vpow.pop %v2924
      %v2926 = vmul.f32 %v2477, 1.442695
      %v2927 = vpow.pop %v2926
      %v2928 = vmul.f32 %v2478, 1.442695
      %v2929 = vpow.pop %v2928
      %v2930 = vmul.f32 %v2479, 1.442695
      %v2931 = vpow.pop %v2930
      %v2932 = vmul.f32 %v2480, 1.442695
      %v2933 = vpow.pop %v2932
      %v2934 = vmul.f32 %v2481, 1.442695
      %v2935 = vpow.pop %v2934
      %v2936 = vmul.f32 %v2482, 1.442695
      %v2937 = vpow.pop %v2936
      %v2938 = vmul.f32 %v2483, 1.442695
      %v2939 = vpow.pop %v2938
      %v2940 = vmul.f32 %v2484, 1.442695
      %v2941 = vpow.pop %v2940
      %v2942 = vmul.f32 %v2485, 1.442695
      %v2943 = vpow.pop %v2942
      %v2944 = vmul.f32 %v2486, 1.442695
      %v2945 = vpow.pop %v2944
      %v2946 = vmul.f32 %v2487, 1.442695
      %v2947 = vpow.pop %v2946
      %v2948 = vmul.f32 %v2488, 1.442695
      %v2949 = vpow.pop %v2948
      %v2950 = vmul.f32 %v2489, 1.442695
      %v2951 = vpow.pop %v2950
      %v2952 = vmul.f32 %v2490, 1.442695
      %v2953 = vpow.pop %v2952
      %v2954 = vmul.f32 %v2491, 1.442695
      %v2955 = vpow.pop %v2954
      %v2956 = vmul.f32 %v2492, 1.442695
      %v2957 = vpow.pop %v2956
      %v2958 = vmul.f32 %v2493, 1.442695
      %v2959 = vpow.pop %v2958
      %v2960 = vmul.f32 %v2494, 1.442695
      %v2961 = vpow.pop %v2960
      %v2962 = vmul.f32 %v2495, 1.442695
      %v2963 = vpow.pop %v2962
      %v2964 = vmul.f32 %v2496, 1.442695
      %v2965 = vpow.pop %v2964
      %v2966 = vmul.f32 %v2497, 1.442695
      %v2967 = vpow.pop %v2966
      %v2968 = vmul.f32 %v2498, 1.442695
      %v2969 = vpow.pop %v2968
      %v2970 = vmul.f32 %v2499, 1.442695
      %v2971 = vpow.pop %v2970
      %v2972 = vmul.f32 %v2500, 1.442695
      %v2973 = vpow.pop %v2972
      %v2974 = vmul.f32 %v2501, 1.442695
      %v2975 = vpow.pop %v2974
      %v2976 = vmul.f32 %v2502, 1.442695
      %v2977 = vpow.pop %v2976
      %v2978 = vmul.f32 %v2503, 1.442695
      %v2979 = vpow.pop %v2978
      %v2980 = vmul.f32 %v2504, 1.442695
      %v2981 = vpow.pop %v2980
      %v2982 = vmul.f32 %v2505, 1.442695
      %v2983 = vpow.pop %v2982
      %v2984 = vmul.f32 %v2506, 1.442695
      %v2985 = vpow.pop %v2984
      %v2986 = vmul.f32 %v2507, 1.442695
      %v2987 = vpow.pop %v2986
      %v2988 = vmul.f32 %v2508, 1.442695
      %v2989 = vpow.pop %v2988
      %v2990 = vmul.f32 %v2509, 1.442695
      %v2991 = vpow.pop %v2990
      %v2992 = vmul.f32 %v2510, 1.442695
      %v2993 = vpow.pop %v2992
      %v2994 = vmul.f32 %v2511, 1.442695
      %v2995 = vpow.pop %v2994
      %v2996 = vmul.f32 %v2512, 1.442695
      %v2997 = vpow.pop %v2996
      %v2998 = vmul.f32 %v2513, 1.442695
      %v2999 = vpow.pop %v2998
      %v3000 = vmul.f32 %v2514, 1.442695
      %v3001 = vpow.pop %v3000
      %v3002 = vmul.f32 %v2515, 1.442695
      %v3003 = vpow.pop %v3002
      %v3004 = vmul.f32 %v2516, 1.442695
      %v3005 = vpow.pop %v3004
      %v3006 = vmul.f32 %v2517, 1.442695
      %v3007 = vpow.pop %v3006
      %v3008 = vmul.f32 %v2518, 1.442695
      %v3009 = vpow.pop %v3008
      %v3010 = vmul.f32 %v2519, 1.442695
      %v3011 = vpow.pop %v3010
      %v3012 = vmul.f32 %v2520, 1.442695
      %v3013 = vpow.pop %v3012
      %v3014 = vmul.f32 %v2521, 1.442695
      %v3015 = vpow.pop %v3014
      %v3016 = vmul.f32 %v2522, 1.442695
      %v3017 = vpow.pop %v3016
      %v3018 = vmul.f32 %v2523, 1.442695
      %v3019 = vpow.pop %v3018
      %v3020 = vmul.f32 %v2524, 1.442695
      %v3021 = vpow.pop %v3020
      %v3022 = vmul.f32 %v2525, 1.442695
      %v3023 = vpow.pop %v3022
      %v3024 = vmul.f32 %v2526, 1.442695
      %v3025 = vpow.pop %v3024
      %v3026 = vmul.f32 %v2527, 1.442695
      %v3027 = vpow.pop %v3026
      %v3028 = vmul.f32 %v2528, 1.442695
      %v3029 = vpow.pop %v3028
      %v3030 = vmul.f32 %v2529, 1.442695
      %v3031 = vpow.pop %v3030
      %v3032 = vmul.f32 %v2530, 1.442695
      %v3033 = vpow.pop %v3032
      %v3034 = vmul.f32 %v2531, 1.442695
      %v3035 = vpow.pop %v3034
      %v3036 = vmul.f32 %v2532, 1.442695
      %v3037 = vpow.pop %v3036
      %v3038 = vmul.f32 %v2533, 1.442695
      %v3039 = vpow.pop %v3038
      %v3040 = vmul.f32 %v2534, 1.442695
      %v3041 = vpow.pop %v3040
      %v3042 = vmul.f32 %v2535, 1.442695
      %v3043 = vpow.pop %v3042
      %v3044 = vmul.f32 %v2536, 1.442695
      %v3045 = vpow.pop %v3044
      %v3046 = vmul.f32 %v2537, 1.442695
      %v3047 = vpow.pop %v3046
      %v3048 = vmul.f32 %v2538, 1.442695
      %v3049 = vpow.pop %v3048
      %v3050 = vmul.f32 %v2539, 1.442695
      %v3051 = vpow.pop %v3050
      %v3052 = vmul.f32 %v2540, 1.442695
      %v3053 = vpow.pop %v3052
      %v3054 = vmul.f32 %v2541, 1.442695
      %v3055 = vpow.pop %v3054
      %v3056 = vmul.f32 %v2542, 1.442695
      %v3057 = vpow.pop %v3056
      %v3058 = vmul.f32 %v2543, 1.442695
      %v3059 = vpow.pop %v3058
      %v3060 = vmul.f32 %v2544, 1.442695
      %v3061 = vpow.pop %v3060
      %v3062 = vmul.f32 %v2545, 1.442695
      %v3063 = vpow.pop %v3062
      %v3064 = vmul.f32 %v2546, 1.442695
      %v3065 = vpow.pop %v3064
      %v3066 = vmul.f32 %v2547, 1.442695
      %v3067 = vpow.pop %v3066
      %v3068 = vmul.f32 %v2548, 1.442695
      %v3069 = vpow.pop %v3068
      %v3070 = vmul.f32 %v2549, 1.442695
      %v3071 = vpow.pop %v3070
      %v3072 = vmul.f32 %v2550, 1.442695
      %v3073 = vpow.pop %v3072
      %v3074 = vmul.f32 %v2551, 1.442695
      %v3075 = vpow.pop %v3074
      %v3076 = vmul.f32 %v2552, 1.442695
      %v3077 = vpow.pop %v3076
      %v3078 = vmul.f32 %v2553, 1.442695
      %v3079 = vpow.pop %v3078
      %v3080 = vmul.f32 %v2554, 1.442695
      %v3081 = vpow.pop %v3080
      %v3082 = vmul.f32 %v2555, 1.442695
      %v3083 = vpow.pop %v3082
      %v3084 = vmul.f32 %v2556, 1.442695
      %v3085 = vpow.pop %v3084
      %v3086 = vmul.f32 %v2557, 1.442695
      %v3087 = vpow.pop %v3086
      %v3088 = vmul.f32 %v2558, 1.442695
      %v3089 = vpow.pop %v3088
      %v3090 = vmul.f32 %v2559, 1.442695
      %v3091 = vpow.pop %v3090
      %v3092 = vmul.f32 %v2560, 1.442695
      %v3093 = vpow.pop %v3092
      %v3094 = vmul.f32 %v2561, 1.442695
      %v3095 = vpow.pop %v3094
      %v3096 = vmul.f32 %v2562, 1.442695
      %v3097 = vpow.pop %v3096
      %v3098 = vmul.f32 %v2563, 1.442695
      %v3099 = vpow.pop %v3098
      %v3100 = vmul.f32 %v2564, 1.442695
      %v3101 = vpow.pop %v3100
      %v3102 = vmul.f32 %v2565, 1.442695
      %v3103 = vpow.pop %v3102
      %v3104 = vmul.f32 %v2566, 1.442695
      %v3105 = vpow.pop %v3104
      %v3106 = vmul.f32 %v2567, 1.442695
      %v3107 = vpow.pop %v3106
      %v3108 = vmul.f32 %v2568, 1.442695
      %v3109 = vpow.pop %v3108
      %v3110 = vmul.f32 %v2569, 1.442695
      %v3111 = vpow.pop %v3110
      %v3112 = vmul.f32 %v2570, 1.442695
      %v3113 = vpow.pop %v3112
      %v3114 = vmul.f32 %v2571, 1.442695
      %v3115 = vpow.pop %v3114
      %v3116 = vmul.f32 %v2572, 1.442695
      %v3117 = vpow.pop %v3116
      %v3118 = vmul.f32 %v2573, 1.442695
      %v3119 = vpow.pop %v3118
      %v3120 = vmul.f32 %v2574, 1.442695
      %v3121 = vpow.pop %v3120
      %v3122 = vmul.f32 %v2575, 1.442695
      %v3123 = vpow.pop %v3122
      %v3124 = vmul.f32 %v2576, 1.442695
      %v3125 = vpow.pop %v3124
      %v3126 = vmul.f32 %v2577, 1.442695
      %v3127 = vpow.pop %v3126
      %v3128 = vmul.f32 %v2578, 1.442695
      %v3129 = vpow.pop %v3128
      %v3130 = vmul.f32 %v2579, 1.442695
      %v3131 = vpow.pop %v3130
      %v3132 = vmul.f32 %v2580, 1.442695
      %v3133 = vpow.pop %v3132
      %v3134 = vmul.f32 %v2581, 1.442695
      %v3135 = vpow.pop %v3134
      %v3136 = vmul.f32 %v2582, 1.442695
      %v3137 = vpow.pop %v3136
      %v3138 = vmul.f32 %v2583, 1.442695
      %v3139 = vpow.pop %v3138
      %v3140 = vmul.f32 %v2584, 1.442695
      %v3141 = vpow.pop %v3140
      %v3142 = vmul.f32 %v2585, 1.442695
      %v3143 = vpow.pop %v3142
      %v3144 = vmul.f32 %v2586, 1.442695
      %v3145 = vpow.pop %v3144
      %v3146 = vmul.f32 %v2587, 1.442695
      %v3147 = vpow.pop %v3146
      %v3148 = vmul.f32 %v2588, 1.442695
      %v3149 = vpow.pop %v3148
      %v3150 = vmul.f32 %v2589, 1.442695
      %v3151 = vpow.pop %v3150
      %v3152 = vmul.f32 %v2590, 1.442695
      %v3153 = vpow.pop %v3152
      %v3154 = vmul.f32 %v2591, 1.442695
      %v3155 = vpow.pop %v3154
      %v3156 = vmul.f32 %v2592, 1.442695
      %v3157 = vpow.pop %v3156
      %v3158 = vmul.f32 %v2593, 1.442695
      %v3159 = vpow.pop %v3158
      %v3160 = vmul.f32 %v2594, 1.442695
      %v3161 = vpow.pop %v3160
      %v3162 = vmul.f32 %v2595, 1.442695
      %v3163 = vpow.pop %v3162
      %v3164 = vmul.f32 %v2596, 1.442695
      %v3165 = vpow.pop %v3164
      %v3166 = vmul.f32 %v2597, 1.442695
      %v3167 = vpow.pop %v3166
      %v3168 = vmul.f32 %v2598, 1.442695
      %v3169 = vpow.pop %v3168
      %v3170 = vmul.f32 %v2599, 1.442695
      %v3171 = vpow.pop %v3170
      %v3172 = vmul.f32 %v2600, 1.442695
      %v3173 = vpow.pop %v3172
      %v3174 = vmul.f32 %v2601, 1.442695
      %v3175 = vpow.pop %v3174
      %v3176 = vmul.f32 %v2602, 1.442695
      %v3177 = vpow.pop %v3176
      %v3178 = vmul.f32 %v2603, 1.442695
      %v3179 = vpow.pop %v3178
      %v3180 = vmul.f32 %v2604, 1.442695
      %v3181 = vpow.pop %v3180
      %v3182 = vmul.f32 %v2605, 1.442695
      %v3183 = vpow.pop %v3182
      %v3184 = vmul.f32 %v2606, 1.442695
      %v3185 = vpow.pop %v3184
      %v3186 = vmul.f32 %v2607, 1.442695
      %v3187 = vpow.pop %v3186
      %v3188 = vmul.f32 %v2608, 1.442695
      %v3189 = vpow.pop %v3188
      %v3190 = vmul.f32 %v2609, 1.442695
      %v3191 = vpow.pop %v3190
      %v3192 = vmul.f32 %v2610, 1.442695
      %v3193 = vpow.pop %v3192
      %v3194 = vmul.f32 %v2611, 1.442695
      %v3195 = vpow.pop %v3194
      %v3196 = vmul.f32 %v2612, 1.442695
      %v3197 = vpow.pop %v3196
      %v3198 = vmul.f32 %v2613, 1.442695
      %v3199 = vpow.pop %v3198
      %v3200 = vmul.f32 %v2614, 1.442695
      %v3201 = vpow.pop %v3200
      %v3202 = vmul.f32 %v2615, 1.442695
      %v3203 = vpow.pop %v3202
      %v3204 = vmul.f32 %v2616, 1.442695
      %v3205 = vpow.pop %v3204
      %v3206 = vmul.f32 %v2617, 1.442695
      %v3207 = vpow.pop %v3206
      %v3208 = vmul.f32 %v2618, 1.442695
      %v3209 = vpow.pop %v3208
      %v3210 = vmul.f32 %v2619, 1.442695
      %v3211 = vpow.pop %v3210
      %v3212 = vmul.f32 %v2620, 1.442695
      %v3213 = vpow.pop %v3212
      %v3214 = vmul.f32 %v2621, 1.442695
      %v3215 = vpow.pop %v3214
      %v3216 = vmul.f32 %v2622, 1.442695
      %v3217 = vpow.pop %v3216
      %v3218 = vmul.f32 %v2623, 1.442695
      %v3219 = vpow.pop %v3218
      %v3220 = vmul.f32 %v2624, 1.442695
      %v3221 = vpow.pop %v3220
      %v3222 = vmul.f32 %v2625, 1.442695
      %v3223 = vpow.pop %v3222
      %v3224 = vmul.f32 %v2626, 1.442695
      %v3225 = vpow.pop %v3224
      %v3226 = vmul.f32 %v2627, 1.442695
      %v3227 = vpow.pop %v3226
      %v3228 = vmul.f32 %v2628, 1.442695
      %v3229 = vpow.pop %v3228
      %v3230 = vmul.f32 %v2629, 1.442695
      %v3231 = vpow.pop %v3230
      %v3232 = vmul.f32 %v2630, 1.442695
      %v3233 = vpow.pop %v3232
      %v3234 = vmul.f32 %v2631, 1.442695
      %v3235 = vpow.pop %v3234
      %v3236 = vmul.f32 %v2632, 1.442695
      %v3237 = vpow.pop %v3236
      %v3238 = vmul.f32 %v2633, 1.442695
      %v3239 = vpow.pop %v3238
      %v3240 = vmul.f32 %v2634, 1.442695
      %v3241 = vpow.pop %v3240
      %v3242 = vmul.f32 %v2635, 1.442695
      %v3243 = vpow.pop %v3242
      %v3244 = vmul.f32 %v2636, 1.442695
      %v3245 = vpow.pop %v3244
      %v3246 = vmul.f32 %v2637, 1.442695
      %v3247 = vpow.pop %v3246
      %v3248 = vmul.f32 %v2638, 1.442695
      %v3249 = vpow.pop %v3248
      %v3250 = vmul.f32 %v2639, 1.442695
      %v3251 = vpow.pop %v3250
      %v3252 = vmul.f32 %v2640, 1.442695
      %v3253 = vpow.pop %v3252
      %v3254 = vmul.f32 %v2641, 1.442695
      %v3255 = vpow.pop %v3254
      %v3256 = vmul.f32 %v2642, 1.442695
      %v3257 = vpow.pop %v3256
      %v3258 = vmul.f32 %v2643, 1.442695
      %v3259 = vpow.pop %v3258
      %v3260 = vmul.f32 %v2644, 1.442695
      %v3261 = vpow.pop %v3260
      %v3262 = vmul.f32 %v2645, 1.442695
      %v3263 = vpow.pop %v3262
      %v3264 = vmul.f32 %v2646, 1.442695
      %v3265 = vpow.pop %v3264
      %v3266 = vmul.f32 %v2647, 1.442695
      %v3267 = vpow.pop %v3266
      %v3268 = vmul.f32 %v2648, 1.442695
      %v3269 = vpow.pop %v3268
      %v3270 = vmul.f32 %v2649, 1.442695
      %v3271 = vpow.pop %v3270
      %v3272 = vmul.f32 %v2650, 1.442695
      %v3273 = vpow.pop %v3272
      %v3274 = vmul.f32 %v2651, 1.442695
      %v3275 = vpow.pop %v3274
      %v3276 = vmul.f32 %v2652, 1.442695
      %v3277 = vpow.pop %v3276
      %v3278 = vmul.f32 %v2653, 1.442695
      %v3279 = vpow.pop %v3278
      %v3280 = vmul.f32 %v2654, 1.442695
      %v3281 = vpow.pop %v3280
      %v3282 = vmul.f32 %v2655, 1.442695
      %v3283 = vpow.pop %v3282
      %v3284 = vmul.f32 %v2656, 1.442695
      %v3285 = vpow.pop %v3284
      %v3286 = vmul.f32 %v2657, 1.442695
      %v3287 = vpow.pop %v3286
      %v3288 = vmul.f32 %v2658, 1.442695
      %v3289 = vpow.pop %v3288
      %v3290 = vmul.f32 %v2659, 1.442695
      %v3291 = vpow.pop %v3290
      %v3292 = vmul.f32 %v2660, 1.442695
      %v3293 = vpow.pop %v3292
      %v3294 = vmul.f32 %v2661, 1.442695
      %v3295 = vpow.pop %v3294
      %v3296 = vmul.f32 %v2662, 1.442695
      %v3297 = vpow.pop %v3296
      %v3298 = vmul.f32 %v2663, 1.442695
      %v3299 = vpow.pop %v3298
      %v3300 = vmul.f32 %v2664, 1.442695
      %v3301 = vpow.pop %v3300
      %v3302 = vmul.f32 %v2665, 1.442695
      %v3303 = vpow.pop %v3302
      %v3304 = vmul.f32 %v2666, 1.442695
      %v3305 = vpow.pop %v3304
      %v3306 = vmul.f32 %v2667, 1.442695
      %v3307 = vpow.pop %v3306
      %v3308 = vmul.f32 %v2668, 1.442695
      %v3309 = vpow.pop %v3308
      %v3310 = vmul.f32 %v2669, 1.442695
      %v3311 = vpow.pop %v3310
      %v3312 = vmul.f32 %v2670, 1.442695
      %v3313 = vpow.pop %v3312
      %v3314 = vmul.f32 %v2671, 1.442695
      %v3315 = vpow.pop %v3314
      %v3316 = vmul.f32 %v2672, 1.442695
      %v3317 = vpow.pop %v3316
      %v3318 = vmul.f32 %v2673, 1.442695
      %v3319 = vpow.pop %v3318
      %v3320 = vmul.f32 %v2674, 1.442695
      %v3321 = vpow.pop %v3320
      %v3322 = vmul.f32 %v2675, 1.442695
      %v3323 = vpow.pop %v3322
      %v3324 = vmul.f32 %v2676, 1.442695
      %v3325 = vpow.pop %v3324
      %v3326 = vmul.f32 %v2677, 1.442695
      %v3327 = vpow.pop %v3326
      %v3328 = vmul.f32 %v2678, 1.442695
      %v3329 = vpow.pop %v3328
      %v3330 = vmul.f32 %v2679, 1.442695
      %v3331 = vpow.pop %v3330
      %v3332 = vmul.f32 %v2680, 1.442695
      %v3333 = vpow.pop %v3332
      %v3334 = vmul.f32 %v2681, 1.442695
      %v3335 = vpow.pop %v3334
      %v3336 = vmul.f32 %v2682, 1.442695
      %v3337 = vpow.pop %v3336
      %v3338 = vmul.f32 %v2683, 1.442695
      %v3339 = vpow.pop %v3338
      %v3340 = vmul.f32 %v2684, 1.442695
      %v3341 = vpow.pop %v3340
      %v3342 = vmul.f32 %v2685, 1.442695
      %v3343 = vpow.pop %v3342
      %v3344 = vmul.f32 %v2686, 1.442695
      %v3345 = vpow.pop %v3344
      %v3346 = vmul.f32 %v2687, 1.442695
      %v3347 = vpow.pop %v3346
      %v3348 = vmul.f32 %v2688, 1.442695
      %v3349 = vpow.pop %v3348
      %v3350 = vmul.f32 %v2689, 1.442695
      %v3351 = vpow.pop %v3350
      %v3352 = vmul.f32 %v2690, 1.442695
      %v3353 = vpow.pop %v3352
      %v3354 = vmul.f32 %v2691, 1.442695
      %v3355 = vpow.pop %v3354
      %v3356 = vmul.f32 %v2692, 1.442695
      %v3357 = vpow.pop %v3356
      %v3358 = vmul.f32 %v2693, 1.442695
      %v3359 = vpow.pop %v3358
      %v3360 = vmul.f32 %v2694, 1.442695
      %v3361 = vpow.pop %v3360
      %v3362 = vmul.f32 %v2695, 1.442695
      %v3363 = vpow.pop %v3362
      %v3364 = vmul.f32 %v2696, 1.442695
      %v3365 = vpow.pop %v3364
      %v3366 = vmul.f32 %v2697, 1.442695
      %v3367 = vpow.pop %v3366
      %v3368 = vmul.f32 %v2698, 1.442695
      %v3369 = vpow.pop %v3368
      %v3370 = vmul.f32 %v2699, 1.442695
      %v3371 = vpow.pop %v3370
      %v3372 = vmul.f32 %v2700, 1.442695
      %v3373 = vpow.pop %v3372
      %v3374 = vmul.f32 %v2701, 1.442695
      %v3375 = vpow.pop %v3374
      %v3376 = vmul.f32 %v2702, 1.442695
      %v3377 = vpow.pop %v3376
      %v3378 = vmul.f32 %v2703, 1.442695
      %v3379 = vpow.pop %v3378
      %v3380 = vmul.f32 %v2704, 1.442695
      %v3381 = vpow.pop %v3380
      %v3382 = vmul.f32 %v2705, 1.442695
      %v3383 = vpow.pop %v3382
      %v3384 = vmul.f32 %v2706, 1.442695
      %v3385 = vpow.pop %v3384
      %v3386 = vmul.f32 %v2707, 1.442695
      %v3387 = vpow.pop %v3386
      %v3388 = vmul.f32 %v2708, 1.442695
      %v3389 = vpow.pop %v3388
      %v3390 = vmul.f32 %v2709, 1.442695
      %v3391 = vpow.pop %v3390
      %v3392 = vmul.f32 %v2710, 1.442695
      %v3393 = vpow.pop %v3392
      %v3394 = vmul.f32 %v2711, 1.442695
      %v3395 = vpow.pop %v3394
      %v3396 = vmul.f32 %v2712, 1.442695
      %v3397 = vpow.pop %v3396
      %v3398 = vmul.f32 %v2713, 1.442695
      %v3399 = vpow.pop %v3398
      %v3400 = vmul.f32 %v2714, 1.442695
      %v3401 = vpow.pop %v3400
      %v3402 = vmul.f32 %v2715, 1.442695
      %v3403 = vpow.pop %v3402
      %v3404 = vmul.f32 %v2716, 1.442695
      %v3405 = vpow.pop %v3404
      %v3406 = vmul.f32 %v2717, 1.442695
      %v3407 = vpow.pop %v3406
      %v3408 = vmul.f32 %v2718, 1.442695
      %v3409 = vpow.pop %v3408
      %v3410 = vmul.f32 %v2719, 1.442695
      %v3411 = vpow.pop %v3410
      %v3412 = vmul.f32 %v2720, 1.442695
      %v3413 = vpow.pop %v3412
      %v3414 = vmul.f32 %v2721, 1.442695
      %v3415 = vpow.pop %v3414
      %v3416 = vmul.f32 %v2722, 1.442695
      %v3417 = vpow.pop %v3416
      %v3418 = vmul.f32 %v2723, 1.442695
      %v3419 = vpow.pop %v3418
      %v3420 = vmul.f32 %v2724, 1.442695
      %v3421 = vpow.pop %v3420
      %v3422 = vmul.f32 %v2725, 1.442695
      %v3423 = vpow.pop %v3422
      %v3424 = vmul.f32 %v2726, 1.442695
      %v3425 = vpow.pop %v3424
      %v3426 = vmul.f32 %v2727, 1.442695
      %v3427 = vpow.pop %v3426
      %v3428 = vmul.f32 %v2728, 1.442695
      %v3429 = vpow.pop %v3428
      %v3430 = vmul.f32 %v2729, 1.442695
      %v3431 = vpow.pop %v3430
      %v3432 = vmul.f32 %v2730, 1.442695
      %v3433 = vpow.pop %v3432
      %v3434 = vmul.f32 %v2731, 1.442695
      %v3435 = vpow.pop %v3434
      %v3436 = vmul.f32 %v2732, 1.442695
      %v3437 = vpow.pop %v3436
      %v3438 = vmul.f32 %v2733, 1.442695
      %v3439 = vpow.pop %v3438
      %v3440 = vmul.f32 %v2734, 1.442695
      %v3441 = vpow.pop %v3440
      %v3442 = vmul.f32 %v2735, 1.442695
      %v3443 = vpow.pop %v3442
      %v3444 = vmul.f32 %v2736, 1.442695
      %v3445 = vpow.pop %v3444
      %v3446 = vmul.f32 %v2737, 1.442695
      %v3447 = vpow.pop %v3446
      %v3448 = vmul.f32 %v2738, 1.442695
      %v3449 = vpow.pop %v3448
      %v3450 = vmul.f32 %v2739, 1.442695
      %v3451 = vpow.pop %v3450
      %v3452 = vmul.f32 %v2740, 1.442695
      %v3453 = vpow.pop %v3452
      %v3454 = vmul.f32 %v2741, 1.442695
      %v3455 = vpow.pop %v3454
      %v3456 = vmul.f32 %v2742, 1.442695
      %v3457 = vpow.pop %v3456
      %v3458 = vmul.f32 %v2743, 1.442695
      %v3459 = vpow.pop %v3458
      %v3460 = vmul.f32 %v2744, 1.442695
      %v3461 = vpow.pop %v3460
      %v3462 = vmul.f32 %v2745, 1.442695
      %v3463 = vpow.pop %v3462
      %v3464 = vmul.f32 %v2746, 1.442695
      %v3465 = vpow.pop %v3464
      %v3466 = vmul.f32 %v2747, 1.442695
      %v3467 = vpow.pop %v3466
      %v3468 = vmul.f32 %v2748, 1.442695
      %v3469 = vpow.pop %v3468
      %v3470 = vmul.f32 %v2749, 1.442695
      %v3471 = vpow.pop %v3470
      %v3472 = vmul.f32 %v2750, 1.442695
      %v3473 = vpow.pop %v3472
      %v3474 = vmul.f32 %v2751, 1.442695
      %v3475 = vpow.pop %v3474
      %v3476 = vmul.f32 %v2752, 1.442695
      %v3477 = vpow.pop %v3476
      %v3478 = vmul.f32 %v2753, 1.442695
      %v3479 = vpow.pop %v3478
      %v3480 = vmul.f32 %v2754, 1.442695
      %v3481 = vpow.pop %v3480
      %v3482 = vmul.f32 %v2755, 1.442695
      %v3483 = vpow.pop %v3482
      %v3484 = vmul.f32 %v2756, 1.442695
      %v3485 = vpow.pop %v3484
      %v3486 = vmul.f32 %v2757, 1.442695
      %v3487 = vpow.pop %v3486
      %v3488 = vmul.f32 %v2758, 1.442695
      %v3489 = vpow.pop %v3488
      %v3490 = vmul.f32 %v2759, 1.442695
      %v3491 = vpow.pop %v3490
      %v3492 = vmul.f32 %v2760, 1.442695
      %v3493 = vpow.pop %v3492
      %v3494 = vmul.f32 %v2761, 1.442695
      %v3495 = vpow.pop %v3494
      %v3496 = vmul.f32 %v2762, 1.442695
      %v3497 = vpow.pop %v3496
      %v3498 = vmul.f32 %v2763, 1.442695
      %v3499 = vpow.pop %v3498
      %v3500 = vmul.f32 %v2764, 1.442695
      %v3501 = vpow.pop %v3500
      %v3502 = vmul.f32 %v2765, 1.442695
      %v3503 = vpow.pop %v3502
      %v3504 = vmul.f32 %v2766, 1.442695
      %v3505 = vpow.pop %v3504
      %v3506 = vmul.f32 %v2767, 1.442695
      %v3507 = vpow.pop %v3506
      %v3508 = vmul.f32 %v2768, 1.442695
      %v3509 = vpow.pop %v3508
      %v3510 = vmul.f32 %v2769, 1.442695
      %v3511 = vpow.pop %v3510
      %v3512 = vmul.f32 %v2770, 1.442695
      %v3513 = vpow.pop %v3512
      %v3514 = vmul.f32 %v2771, 1.442695
      %v3515 = vpow.pop %v3514
      %v3516 = vmul.f32 %v2772, 1.442695
      %v3517 = vpow.pop %v3516
      %v3518 = vmul.f32 %v2773, 1.442695
      %v3519 = vpow.pop %v3518
      %v3520 = vmul.f32 %v2774, 1.442695
      %v3521 = vpow.pop %v3520
      %v3522 = vmul.f32 %v2775, 1.442695
      %v3523 = vpow.pop %v3522
      %v3524 = vmul.f32 %v2776, 1.442695
      %v3525 = vpow.pop %v3524
      %v3526 = vmul.f32 %v2777, 1.442695
      %v3527 = vpow.pop %v3526
      %v3528 = vmul.f32 %v2778, 1.442695
      %v3529 = vpow.pop %v3528
      %v3530 = vmul.f32 %v2779, 1.442695
      %v3531 = vpow.pop %v3530
      %v3532 = vmul.f32 %v2780, 1.442695
      %v3533 = vpow.pop %v3532
      %v3534 = vmul.f32 %v2781, 1.442695
      %v3535 = vpow.pop %v3534
      %v3536 = vmul.f32 %v2782, 1.442695
      %v3537 = vpow.pop %v3536
      %v3538 = vmul.f32 %v2783, 1.442695
      %v3539 = vpow.pop %v3538
      %v3540 = vmul.f32 %v2784, 1.442695
      %v3541 = vpow.pop %v3540
      %v3542 = vmul.f32 %v2785, 1.442695
      %v3543 = vpow.pop %v3542
      %v3544 = vmul.f32 %v2786, 1.442695
      %v3545 = vpow.pop %v3544
      %v3546 = vmul.f32 %v2787, 1.442695
      %v3547 = vpow.pop %v3546
      %v3548 = vmul.f32 %v2788, 1.442695
      %v3549 = vpow.pop %v3548
      %v3550 = vmul.f32 %v2789, 1.442695
      %v3551 = vpow.pop %v3550
      %v3552 = vmul.f32 %v2790, 1.442695
      %v3553 = vpow.pop %v3552
      %v3554 = vmul.f32 %v2791, 1.442695
      %v3555 = vpow.pop %v3554
      %v3556 = vmul.f32 %v2792, 1.442695
      %v3557 = vpow.pop %v3556
      %v3558 = vmul.f32 %v2793, 1.442695
      %v3559 = vpow.pop %v3558
      %v3560 = vmul.f32 %v2794, 1.442695
      %v3561 = vpow.pop %v3560
      %v3562 = vmul.f32 %v2795, 1.442695
      %v3563 = vpow.pop %v3562
      %v3564 = vadd.f32 %v2797, 1.0
      %v3565 = vadd.f32 %v2799, 1.0
      %v3566 = vadd.f32 %v2801, 1.0
      %v3567 = vadd.f32 %v2803, 1.0
      %v3568 = vadd.f32 %v2805, 1.0
      %v3569 = vadd.f32 %v2807, 1.0
      %v3570 = vadd.f32 %v2809, 1.0
      %v3571 = vadd.f32 %v2811, 1.0
      %v3572 = vadd.f32 %v2813, 1.0
      %v3573 = vadd.f32 %v2815, 1.0
      %v3574 = vadd.f32 %v2817, 1.0
      %v3575 = vadd.f32 %v2819, 1.0
      %v3576 = vadd.f32 %v2821, 1.0
      %v3577 = vadd.f32 %v2823, 1.0
      %v3578 = vadd.f32 %v2825, 1.0
      %v3579 = vadd.f32 %v2827, 1.0
      %v3580 = vadd.f32 %v2829, 1.0
      %v3581 = vadd.f32 %v2831, 1.0
      %v3582 = vadd.f32 %v2833, 1.0
      %v3583 = vadd.f32 %v2835, 1.0
      %v3584 = vadd.f32 %v2837, 1.0
      %v3585 = vadd.f32 %v2839, 1.0
      %v3586 = vadd.f32 %v2841, 1.0
      %v3587 = vadd.f32 %v2843, 1.0
      %v3588 = vadd.f32 %v2845, 1.0
      %v3589 = vadd.f32 %v2847, 1.0
      %v3590 = vadd.f32 %v2849, 1.0
      %v3591 = vadd.f32 %v2851, 1.0
      %v3592 = vadd.f32 %v2853, 1.0
      %v3593 = vadd.f32 %v2855, 1.0
      %v3594 = vadd.f32 %v2857, 1.0
      %v3595 = vadd.f32 %v2859, 1.0
      %v3596 = vadd.f32 %v2861, 1.0
      %v3597 = vadd.f32 %v2863, 1.0
      %v3598 = vadd.f32 %v2865, 1.0
      %v3599 = vadd.f32 %v2867, 1.0
      %v3600 = vadd.f32 %v2869, 1.0
      %v3601 = vadd.f32 %v2871, 1.0
      %v3602 = vadd.f32 %v2873, 1.0
      %v3603 = vadd.f32 %v2875, 1.0
      %v3604 = vadd.f32 %v2877, 1.0
      %v3605 = vadd.f32 %v2879, 1.0
      %v3606 = vadd.f32 %v2881, 1.0
      %v3607 = vadd.f32 %v2883, 1.0
      %v3608 = vadd.f32 %v2885, 1.0
      %v3609 = vadd.f32 %v2887, 1.0
      %v3610 = vadd.f32 %v2889, 1.0
      %v3611 = vadd.f32 %v2891, 1.0
      %v3612 = vadd.f32 %v2893, 1.0
      %v3613 = vadd.f32 %v2895, 1.0
      %v3614 = vadd.f32 %v2897, 1.0
      %v3615 = vadd.f32 %v2899, 1.0
      %v3616 = vadd.f32 %v2901, 1.0
      %v3617 = vadd.f32 %v2903, 1.0
      %v3618 = vadd.f32 %v2905, 1.0
      %v3619 = vadd.f32 %v2907, 1.0
      %v3620 = vadd.f32 %v2909, 1.0
      %v3621 = vadd.f32 %v2911, 1.0
      %v3622 = vadd.f32 %v2913, 1.0
      %v3623 = vadd.f32 %v2915, 1.0
      %v3624 = vadd.f32 %v2917, 1.0
      %v3625 = vadd.f32 %v2919, 1.0
      %v3626 = vadd.f32 %v2921, 1.0
      %v3627 = vadd.f32 %v2923, 1.0
      %v3628 = vadd.f32 %v2925, 1.0
      %v3629 = vadd.f32 %v2927, 1.0
      %v3630 = vadd.f32 %v2929, 1.0
      %v3631 = vadd.f32 %v2931, 1.0
      %v3632 = vadd.f32 %v2933, 1.0
      %v3633 = vadd.f32 %v2935, 1.0
      %v3634 = vadd.f32 %v2937, 1.0
      %v3635 = vadd.f32 %v2939, 1.0
      %v3636 = vadd.f32 %v2941, 1.0
      %v3637 = vadd.f32 %v2943, 1.0
      %v3638 = vadd.f32 %v2945, 1.0
      %v3639 = vadd.f32 %v2947, 1.0
      %v3640 = vadd.f32 %v2949, 1.0
      %v3641 = vadd.f32 %v2951, 1.0
      %v3642 = vadd.f32 %v2953, 1.0
      %v3643 = vadd.f32 %v2955, 1.0
      %v3644 = vadd.f32 %v2957, 1.0
      %v3645 = vadd.f32 %v2959, 1.0
      %v3646 = vadd.f32 %v2961, 1.0
      %v3647 = vadd.f32 %v2963, 1.0
      %v3648 = vadd.f32 %v2965, 1.0
      %v3649 = vadd.f32 %v2967, 1.0
      %v3650 = vadd.f32 %v2969, 1.0
      %v3651 = vadd.f32 %v2971, 1.0
      %v3652 = vadd.f32 %v2973, 1.0
      %v3653 = vadd.f32 %v2975, 1.0
      %v3654 = vadd.f32 %v2977, 1.0
      %v3655 = vadd.f32 %v2979, 1.0
      %v3656 = vadd.f32 %v2981, 1.0
      %v3657 = vadd.f32 %v2983, 1.0
      %v3658 = vadd.f32 %v2985, 1.0
      %v3659 = vadd.f32 %v2987, 1.0
      %v3660 = vadd.f32 %v2989, 1.0
      %v3661 = vadd.f32 %v2991, 1.0
      %v3662 = vadd.f32 %v2993, 1.0
      %v3663 = vadd.f32 %v2995, 1.0
      %v3664 = vadd.f32 %v2997, 1.0
      %v3665 = vadd.f32 %v2999, 1.0
      %v3666 = vadd.f32 %v3001, 1.0
      %v3667 = vadd.f32 %v3003, 1.0
      %v3668 = vadd.f32 %v3005, 1.0
      %v3669 = vadd.f32 %v3007, 1.0
      %v3670 = vadd.f32 %v3009, 1.0
      %v3671 = vadd.f32 %v3011, 1.0
      %v3672 = vadd.f32 %v3013, 1.0
      %v3673 = vadd.f32 %v3015, 1.0
      %v3674 = vadd.f32 %v3017, 1.0
      %v3675 = vadd.f32 %v3019, 1.0
      %v3676 = vadd.f32 %v3021, 1.0
      %v3677 = vadd.f32 %v3023, 1.0
      %v3678 = vadd.f32 %v3025, 1.0
      %v3679 = vadd.f32 %v3027, 1.0
      %v3680 = vadd.f32 %v3029, 1.0
      %v3681 = vadd.f32 %v3031, 1.0
      %v3682 = vadd.f32 %v3033, 1.0
      %v3683 = vadd.f32 %v3035, 1.0
      %v3684 = vadd.f32 %v3037, 1.0
      %v3685 = vadd.f32 %v3039, 1.0
      %v3686 = vadd.f32 %v3041, 1.0
      %v3687 = vadd.f32 %v3043, 1.0
      %v3688 = vadd.f32 %v3045, 1.0
      %v3689 = vadd.f32 %v3047, 1.0
      %v3690 = vadd.f32 %v3049, 1.0
      %v3691 = vadd.f32 %v3051, 1.0
      %v3692 = vadd.f32 %v3053, 1.0
      %v3693 = vadd.f32 %v3055, 1.0
      %v3694 = vadd.f32 %v3057, 1.0
      %v3695 = vadd.f32 %v3059, 1.0
      %v3696 = vadd.f32 %v3061, 1.0
      %v3697 = vadd.f32 %v3063, 1.0
      %v3698 = vadd.f32 %v3065, 1.0
      %v3699 = vadd.f32 %v3067, 1.0
      %v3700 = vadd.f32 %v3069, 1.0
      %v3701 = vadd.f32 %v3071, 1.0
      %v3702 = vadd.f32 %v3073, 1.0
      %v3703 = vadd.f32 %v3075, 1.0
      %v3704 = vadd.f32 %v3077, 1.0
      %v3705 = vadd.f32 %v3079, 1.0
      %v3706 = vadd.f32 %v3081, 1.0
      %v3707 = vadd.f32 %v3083, 1.0
      %v3708 = vadd.f32 %v3085, 1.0
      %v3709 = vadd.f32 %v3087, 1.0
      %v3710 = vadd.f32 %v3089, 1.0
      %v3711 = vadd.f32 %v3091, 1.0
      %v3712 = vadd.f32 %v3093, 1.0
      %v3713 = vadd.f32 %v3095, 1.0
      %v3714 = vadd.f32 %v3097, 1.0
      %v3715 = vadd.f32 %v3099, 1.0
      %v3716 = vadd.f32 %v3101, 1.0
      %v3717 = vadd.f32 %v3103, 1.0
      %v3718 = vadd.f32 %v3105, 1.0
      %v3719 = vadd.f32 %v3107, 1.0
      %v3720 = vadd.f32 %v3109, 1.0
      %v3721 = vadd.f32 %v3111, 1.0
      %v3722 = vadd.f32 %v3113, 1.0
      %v3723 = vadd.f32 %v3115, 1.0
      %v3724 = vadd.f32 %v3117, 1.0
      %v3725 = vadd.f32 %v3119, 1.0
      %v3726 = vadd.f32 %v3121, 1.0
      %v3727 = vadd.f32 %v3123, 1.0
      %v3728 = vadd.f32 %v3125, 1.0
      %v3729 = vadd.f32 %v3127, 1.0
      %v3730 = vadd.f32 %v3129, 1.0
      %v3731 = vadd.f32 %v3131, 1.0
      %v3732 = vadd.f32 %v3133, 1.0
      %v3733 = vadd.f32 %v3135, 1.0
      %v3734 = vadd.f32 %v3137, 1.0
      %v3735 = vadd.f32 %v3139, 1.0
      %v3736 = vadd.f32 %v3141, 1.0
      %v3737 = vadd.f32 %v3143, 1.0
      %v3738 = vadd.f32 %v3145, 1.0
      %v3739 = vadd.f32 %v3147, 1.0
      %v3740 = vadd.f32 %v3149, 1.0
      %v3741 = vadd.f32 %v3151, 1.0
      %v3742 = vadd.f32 %v3153, 1.0
      %v3743 = vadd.f32 %v3155, 1.0
      %v3744 = vadd.f32 %v3157, 1.0
      %v3745 = vadd.f32 %v3159, 1.0
      %v3746 = vadd.f32 %v3161, 1.0
      %v3747 = vadd.f32 %v3163, 1.0
      %v3748 = vadd.f32 %v3165, 1.0
      %v3749 = vadd.f32 %v3167, 1.0
      %v3750 = vadd.f32 %v3169, 1.0
      %v3751 = vadd.f32 %v3171, 1.0
      %v3752 = vadd.f32 %v3173, 1.0
      %v3753 = vadd.f32 %v3175, 1.0
      %v3754 = vadd.f32 %v3177, 1.0
      %v3755 = vadd.f32 %v3179, 1.0
      %v3756 = vadd.f32 %v3181, 1.0
      %v3757 = vadd.f32 %v3183, 1.0
      %v3758 = vadd.f32 %v3185, 1.0
      %v3759 = vadd.f32 %v3187, 1.0
      %v3760 = vadd.f32 %v3189, 1.0
      %v3761 = vadd.f32 %v3191, 1.0
      %v3762 = vadd.f32 %v3193, 1.0
      %v3763 = vadd.f32 %v3195, 1.0
      %v3764 = vadd.f32 %v3197, 1.0
      %v3765 = vadd.f32 %v3199, 1.0
      %v3766 = vadd.f32 %v3201, 1.0
      %v3767 = vadd.f32 %v3203, 1.0
      %v3768 = vadd.f32 %v3205, 1.0
      %v3769 = vadd.f32 %v3207, 1.0
      %v3770 = vadd.f32 %v3209, 1.0
      %v3771 = vadd.f32 %v3211, 1.0
      %v3772 = vadd.f32 %v3213, 1.0
      %v3773 = vadd.f32 %v3215, 1.0
      %v3774 = vadd.f32 %v3217, 1.0
      %v3775 = vadd.f32 %v3219, 1.0
      %v3776 = vadd.f32 %v3221, 1.0
      %v3777 = vadd.f32 %v3223, 1.0
      %v3778 = vadd.f32 %v3225, 1.0
      %v3779 = vadd.f32 %v3227, 1.0
      %v3780 = vadd.f32 %v3229, 1.0
      %v3781 = vadd.f32 %v3231, 1.0
      %v3782 = vadd.f32 %v3233, 1.0
      %v3783 = vadd.f32 %v3235, 1.0
      %v3784 = vadd.f32 %v3237, 1.0
      %v3785 = vadd.f32 %v3239, 1.0
      %v3786 = vadd.f32 %v3241, 1.0
      %v3787 = vadd.f32 %v3243, 1.0
      %v3788 = vadd.f32 %v3245, 1.0
      %v3789 = vadd.f32 %v3247, 1.0
      %v3790 = vadd.f32 %v3249, 1.0
      %v3791 = vadd.f32 %v3251, 1.0
      %v3792 = vadd.f32 %v3253, 1.0
      %v3793 = vadd.f32 %v3255, 1.0
      %v3794 = vadd.f32 %v3257, 1.0
      %v3795 = vadd.f32 %v3259, 1.0
      %v3796 = vadd.f32 %v3261, 1.0
      %v3797 = vadd.f32 %v3263, 1.0
      %v3798 = vadd.f32 %v3265, 1.0
      %v3799 = vadd.f32 %v3267, 1.0
      %v3800 = vadd.f32 %v3269, 1.0
      %v3801 = vadd.f32 %v3271, 1.0
      %v3802 = vadd.f32 %v3273, 1.0
      %v3803 = vadd.f32 %v3275, 1.0
      %v3804 = vadd.f32 %v3277, 1.0
      %v3805 = vadd.f32 %v3279, 1.0
      %v3806 = vadd.f32 %v3281, 1.0
      %v3807 = vadd.f32 %v3283, 1.0
      %v3808 = vadd.f32 %v3285, 1.0
      %v3809 = vadd.f32 %v3287, 1.0
      %v3810 = vadd.f32 %v3289, 1.0
      %v3811 = vadd.f32 %v3291, 1.0
      %v3812 = vadd.f32 %v3293, 1.0
      %v3813 = vadd.f32 %v3295, 1.0
      %v3814 = vadd.f32 %v3297, 1.0
      %v3815 = vadd.f32 %v3299, 1.0
      %v3816 = vadd.f32 %v3301, 1.0
      %v3817 = vadd.f32 %v3303, 1.0
      %v3818 = vadd.f32 %v3305, 1.0
      %v3819 = vadd.f32 %v3307, 1.0
      %v3820 = vadd.f32 %v3309, 1.0
      %v3821 = vadd.f32 %v3311, 1.0
      %v3822 = vadd.f32 %v3313, 1.0
      %v3823 = vadd.f32 %v3315, 1.0
      %v3824 = vadd.f32 %v3317, 1.0
      %v3825 = vadd.f32 %v3319, 1.0
      %v3826 = vadd.f32 %v3321, 1.0
      %v3827 = vadd.f32 %v3323, 1.0
      %v3828 = vadd.f32 %v3325, 1.0
      %v3829 = vadd.f32 %v3327, 1.0
      %v3830 = vadd.f32 %v3329, 1.0
      %v3831 = vadd.f32 %v3331, 1.0
      %v3832 = vadd.f32 %v3333, 1.0
      %v3833 = vadd.f32 %v3335, 1.0
      %v3834 = vadd.f32 %v3337, 1.0
      %v3835 = vadd.f32 %v3339, 1.0
      %v3836 = vadd.f32 %v3341, 1.0
      %v3837 = vadd.f32 %v3343, 1.0
      %v3838 = vadd.f32 %v3345, 1.0
      %v3839 = vadd.f32 %v3347, 1.0
      %v3840 = vadd.f32 %v3349, 1.0
      %v3841 = vadd.f32 %v3351, 1.0
      %v3842 = vadd.f32 %v3353, 1.0
      %v3843 = vadd.f32 %v3355, 1.0
      %v3844 = vadd.f32 %v3357, 1.0
      %v3845 = vadd.f32 %v3359, 1.0
      %v3846 = vadd.f32 %v3361, 1.0
      %v3847 = vadd.f32 %v3363, 1.0
      %v3848 = vadd.f32 %v3365, 1.0
      %v3849 = vadd.f32 %v3367, 1.0
      %v3850 = vadd.f32 %v3369, 1.0
      %v3851 = vadd.f32 %v3371, 1.0
      %v3852 = vadd.f32 %v3373, 1.0
      %v3853 = vadd.f32 %v3375, 1.0
      %v3854 = vadd.f32 %v3377, 1.0
      %v3855 = vadd.f32 %v3379, 1.0
      %v3856 = vadd.f32 %v3381, 1.0
      %v3857 = vadd.f32 %v3383, 1.0
      %v3858 = vadd.f32 %v3385, 1.0
      %v3859 = vadd.f32 %v3387, 1.0
      %v3860 = vadd.f32 %v3389, 1.0
      %v3861 = vadd.f32 %v3391, 1.0
      %v3862 = vadd.f32 %v3393, 1.0
      %v3863 = vadd.f32 %v3395, 1.0
      %v3864 = vadd.f32 %v3397, 1.0
      %v3865 = vadd.f32 %v3399, 1.0
      %v3866 = vadd.f32 %v3401, 1.0
      %v3867 = vadd.f32 %v3403, 1.0
      %v3868 = vadd.f32 %v3405, 1.0
      %v3869 = vadd.f32 %v3407, 1.0
      %v3870 = vadd.f32 %v3409, 1.0
      %v3871 = vadd.f32 %v3411, 1.0
      %v3872 = vadd.f32 %v3413, 1.0
      %v3873 = vadd.f32 %v3415, 1.0
      %v3874 = vadd.f32 %v3417, 1.0
      %v3875 = vadd.f32 %v3419, 1.0
      %v3876 = vadd.f32 %v3421, 1.0
      %v3877 = vadd.f32 %v3423, 1.0
      %v3878 = vadd.f32 %v3425, 1.0
      %v3879 = vadd.f32 %v3427, 1.0
      %v3880 = vadd.f32 %v3429, 1.0
      %v3881 = vadd.f32 %v3431, 1.0
      %v3882 = vadd.f32 %v3433, 1.0
      %v3883 = vadd.f32 %v3435, 1.0
      %v3884 = vadd.f32 %v3437, 1.0
      %v3885 = vadd.f32 %v3439, 1.0
      %v3886 = vadd.f32 %v3441, 1.0
      %v3887 = vadd.f32 %v3443, 1.0
      %v3888 = vadd.f32 %v3445, 1.0
      %v3889 = vadd.f32 %v3447, 1.0
      %v3890 = vadd.f32 %v3449, 1.0
      %v3891 = vadd.f32 %v3451, 1.0
      %v3892 = vadd.f32 %v3453, 1.0
      %v3893 = vadd.f32 %v3455, 1.0
      %v3894 = vadd.f32 %v3457, 1.0
      %v3895 = vadd.f32 %v3459, 1.0
      %v3896 = vadd.f32 %v3461, 1.0
      %v3897 = vadd.f32 %v3463, 1.0
      %v3898 = vadd.f32 %v3465, 1.0
      %v3899 = vadd.f32 %v3467, 1.0
      %v3900 = vadd.f32 %v3469, 1.0
      %v3901 = vadd.f32 %v3471, 1.0
      %v3902 = vadd.f32 %v3473, 1.0
      %v3903 = vadd.f32 %v3475, 1.0
      %v3904 = vadd.f32 %v3477, 1.0
      %v3905 = vadd.f32 %v3479, 1.0
      %v3906 = vadd.f32 %v3481, 1.0
      %v3907 = vadd.f32 %v3483, 1.0
      %v3908 = vadd.f32 %v3485, 1.0
      %v3909 = vadd.f32 %v3487, 1.0
      %v3910 = vadd.f32 %v3489, 1.0
      %v3911 = vadd.f32 %v3491, 1.0
      %v3912 = vadd.f32 %v3493, 1.0
      %v3913 = vadd.f32 %v3495, 1.0
      %v3914 = vadd.f32 %v3497, 1.0
      %v3915 = vadd.f32 %v3499, 1.0
      %v3916 = vadd.f32 %v3501, 1.0
      %v3917 = vadd.f32 %v3503, 1.0
      %v3918 = vadd.f32 %v3505, 1.0
      %v3919 = vadd.f32 %v3507, 1.0
      %v3920 = vadd.f32 %v3509, 1.0
      %v3921 = vadd.f32 %v3511, 1.0
      %v3922 = vadd.f32 %v3513, 1.0
      %v3923 = vadd.f32 %v3515, 1.0
      %v3924 = vadd.f32 %v3517, 1.0
      %v3925 = vadd.f32 %v3519, 1.0
      %v3926 = vadd.f32 %v3521, 1.0
      %v3927 = vadd.f32 %v3523, 1.0
      %v3928 = vadd.f32 %v3525, 1.0
      %v3929 = vadd.f32 %v3527, 1.0
      %v3930 = vadd.f32 %v3529, 1.0
      %v3931 = vadd.f32 %v3531, 1.0
      %v3932 = vadd.f32 %v3533, 1.0
      %v3933 = vadd.f32 %v3535, 1.0
      %v3934 = vadd.f32 %v3537, 1.0
      %v3935 = vadd.f32 %v3539, 1.0
      %v3936 = vadd.f32 %v3541, 1.0
      %v3937 = vadd.f32 %v3543, 1.0
      %v3938 = vadd.f32 %v3545, 1.0
      %v3939 = vadd.f32 %v3547, 1.0
      %v3940 = vadd.f32 %v3549, 1.0
      %v3941 = vadd.f32 %v3551, 1.0
      %v3942 = vadd.f32 %v3553, 1.0
      %v3943 = vadd.f32 %v3555, 1.0
      %v3944 = vadd.f32 %v3557, 1.0
      %v3945 = vadd.f32 %v3559, 1.0
      %v3946 = vadd.f32 %v3561, 1.0
      %v3947 = vadd.f32 %v3563, 1.0
      %v3948 = vrcp.pop %v3564
      %v3949 = vmul.f32 1.0, %v3948
      %v3950 = vrcp.pop %v3565
      %v3951 = vmul.f32 1.0, %v3950
      %v3952 = vrcp.pop %v3566
      %v3953 = vmul.f32 1.0, %v3952
      %v3954 = vrcp.pop %v3567
      %v3955 = vmul.f32 1.0, %v3954
      %v3956 = vrcp.pop %v3568
      %v3957 = vmul.f32 1.0, %v3956
      %v3958 = vrcp.pop %v3569
      %v3959 = vmul.f32 1.0, %v3958
      %v3960 = vrcp.pop %v3570
      %v3961 = vmul.f32 1.0, %v3960
      %v3962 = vrcp.pop %v3571
      %v3963 = vmul.f32 1.0, %v3962
      %v3964 = vrcp.pop %v3572
      %v3965 = vmul.f32 1.0, %v3964
      %v3966 = vrcp.pop %v3573
      %v3967 = vmul.f32 1.0, %v3966
      %v3968 = vrcp.pop %v3574
      %v3969 = vmul.f32 1.0, %v3968
      %v3970 = vrcp.pop %v3575
      %v3971 = vmul.f32 1.0, %v3970
      %v3972 = vrcp.pop %v3576
      %v3973 = vmul.f32 1.0, %v3972
      %v3974 = vrcp.pop %v3577
      %v3975 = vmul.f32 1.0, %v3974
      %v3976 = vrcp.pop %v3578
      %v3977 = vmul.f32 1.0, %v3976
      %v3978 = vrcp.pop %v3579
      %v3979 = vmul.f32 1.0, %v3978
      %v3980 = vrcp.pop %v3580
      %v3981 = vmul.f32 1.0, %v3980
      %v3982 = vrcp.pop %v3581
      %v3983 = vmul.f32 1.0, %v3982
      %v3984 = vrcp.pop %v3582
      %v3985 = vmul.f32 1.0, %v3984
      %v3986 = vrcp.pop %v3583
      %v3987 = vmul.f32 1.0, %v3986
      %v3988 = vrcp.pop %v3584
      %v3989 = vmul.f32 1.0, %v3988
      %v3990 = vrcp.pop %v3585
      %v3991 = vmul.f32 1.0, %v3990
      %v3992 = vrcp.pop %v3586
      %v3993 = vmul.f32 1.0, %v3992
      %v3994 = vrcp.pop %v3587
      %v3995 = vmul.f32 1.0, %v3994
      %v3996 = vrcp.pop %v3588
      %v3997 = vmul.f32 1.0, %v3996
      %v3998 = vrcp.pop %v3589
      %v3999 = vmul.f32 1.0, %v3998
      %v4000 = vrcp.pop %v3590
      %v4001 = vmul.f32 1.0, %v4000
      %v4002 = vrcp.pop %v3591
      %v4003 = vmul.f32 1.0, %v4002
      %v4004 = vrcp.pop %v3592
      %v4005 = vmul.f32 1.0, %v4004
      %v4006 = vrcp.pop %v3593
      %v4007 = vmul.f32 1.0, %v4006
      %v4008 = vrcp.pop %v3594
      %v4009 = vmul.f32 1.0, %v4008
      %v4010 = vrcp.pop %v3595
      %v4011 = vmul.f32 1.0, %v4010
      %v4012 = vrcp.pop %v3596
      %v4013 = vmul.f32 1.0, %v4012
      %v4014 = vrcp.pop %v3597
      %v4015 = vmul.f32 1.0, %v4014
      %v4016 = vrcp.pop %v3598
      %v4017 = vmul.f32 1.0, %v4016
      %v4018 = vrcp.pop %v3599
      %v4019 = vmul.f32 1.0, %v4018
      %v4020 = vrcp.pop %v3600
      %v4021 = vmul.f32 1.0, %v4020
      %v4022 = vrcp.pop %v3601
      %v4023 = vmul.f32 1.0, %v4022
      %v4024 = vrcp.pop %v3602
      %v4025 = vmul.f32 1.0, %v4024
      %v4026 = vrcp.pop %v3603
      %v4027 = vmul.f32 1.0, %v4026
      %v4028 = vrcp.pop %v3604
      %v4029 = vmul.f32 1.0, %v4028
      %v4030 = vrcp.pop %v3605
      %v4031 = vmul.f32 1.0, %v4030
      %v4032 = vrcp.pop %v3606
      %v4033 = vmul.f32 1.0, %v4032
      %v4034 = vrcp.pop %v3607
      %v4035 = vmul.f32 1.0, %v4034
      %v4036 = vrcp.pop %v3608
      %v4037 = vmul.f32 1.0, %v4036
      %v4038 = vrcp.pop %v3609
      %v4039 = vmul.f32 1.0, %v4038
      %v4040 = vrcp.pop %v3610
      %v4041 = vmul.f32 1.0, %v4040
      %v4042 = vrcp.pop %v3611
      %v4043 = vmul.f32 1.0, %v4042
      %v4044 = vrcp.pop %v3612
      %v4045 = vmul.f32 1.0, %v4044
      %v4046 = vrcp.pop %v3613
      %v4047 = vmul.f32 1.0, %v4046
      %v4048 = vrcp.pop %v3614
      %v4049 = vmul.f32 1.0, %v4048
      %v4050 = vrcp.pop %v3615
      %v4051 = vmul.f32 1.0, %v4050
      %v4052 = vrcp.pop %v3616
      %v4053 = vmul.f32 1.0, %v4052
      %v4054 = vrcp.pop %v3617
      %v4055 = vmul.f32 1.0, %v4054
      %v4056 = vrcp.pop %v3618
      %v4057 = vmul.f32 1.0, %v4056
      %v4058 = vrcp.pop %v3619
      %v4059 = vmul.f32 1.0, %v4058
      %v4060 = vrcp.pop %v3620
      %v4061 = vmul.f32 1.0, %v4060
      %v4062 = vrcp.pop %v3621
      %v4063 = vmul.f32 1.0, %v4062
      %v4064 = vrcp.pop %v3622
      %v4065 = vmul.f32 1.0, %v4064
      %v4066 = vrcp.pop %v3623
      %v4067 = vmul.f32 1.0, %v4066
      %v4068 = vrcp.pop %v3624
      %v4069 = vmul.f32 1.0, %v4068
      %v4070 = vrcp.pop %v3625
      %v4071 = vmul.f32 1.0, %v4070
      %v4072 = vrcp.pop %v3626
      %v4073 = vmul.f32 1.0, %v4072
      %v4074 = vrcp.pop %v3627
      %v4075 = vmul.f32 1.0, %v4074
      %v4076 = vrcp.pop %v3628
      %v4077 = vmul.f32 1.0, %v4076
      %v4078 = vrcp.pop %v3629
      %v4079 = vmul.f32 1.0, %v4078
      %v4080 = vrcp.pop %v3630
      %v4081 = vmul.f32 1.0, %v4080
      %v4082 = vrcp.pop %v3631
      %v4083 = vmul.f32 1.0, %v4082
      %v4084 = vrcp.pop %v3632
      %v4085 = vmul.f32 1.0, %v4084
      %v4086 = vrcp.pop %v3633
      %v4087 = vmul.f32 1.0, %v4086
      %v4088 = vrcp.pop %v3634
      %v4089 = vmul.f32 1.0, %v4088
      %v4090 = vrcp.pop %v3635
      %v4091 = vmul.f32 1.0, %v4090
      %v4092 = vrcp.pop %v3636
      %v4093 = vmul.f32 1.0, %v4092
      %v4094 = vrcp.pop %v3637
      %v4095 = vmul.f32 1.0, %v4094
      %v4096 = vrcp.pop %v3638
      %v4097 = vmul.f32 1.0, %v4096
      %v4098 = vrcp.pop %v3639
      %v4099 = vmul.f32 1.0, %v4098
      %v4100 = vrcp.pop %v3640
      %v4101 = vmul.f32 1.0, %v4100
      %v4102 = vrcp.pop %v3641
      %v4103 = vmul.f32 1.0, %v4102
      %v4104 = vrcp.pop %v3642
      %v4105 = vmul.f32 1.0, %v4104
      %v4106 = vrcp.pop %v3643
      %v4107 = vmul.f32 1.0, %v4106
      %v4108 = vrcp.pop %v3644
      %v4109 = vmul.f32 1.0, %v4108
      %v4110 = vrcp.pop %v3645
      %v4111 = vmul.f32 1.0, %v4110
      %v4112 = vrcp.pop %v3646
      %v4113 = vmul.f32 1.0, %v4112
      %v4114 = vrcp.pop %v3647
      %v4115 = vmul.f32 1.0, %v4114
      %v4116 = vrcp.pop %v3648
      %v4117 = vmul.f32 1.0, %v4116
      %v4118 = vrcp.pop %v3649
      %v4119 = vmul.f32 1.0, %v4118
      %v4120 = vrcp.pop %v3650
      %v4121 = vmul.f32 1.0, %v4120
      %v4122 = vrcp.pop %v3651
      %v4123 = vmul.f32 1.0, %v4122
      %v4124 = vrcp.pop %v3652
      %v4125 = vmul.f32 1.0, %v4124
      %v4126 = vrcp.pop %v3653
      %v4127 = vmul.f32 1.0, %v4126
      %v4128 = vrcp.pop %v3654
      %v4129 = vmul.f32 1.0, %v4128
      %v4130 = vrcp.pop %v3655
      %v4131 = vmul.f32 1.0, %v4130
      %v4132 = vrcp.pop %v3656
      %v4133 = vmul.f32 1.0, %v4132
      %v4134 = vrcp.pop %v3657
      %v4135 = vmul.f32 1.0, %v4134
      %v4136 = vrcp.pop %v3658
      %v4137 = vmul.f32 1.0, %v4136
      %v4138 = vrcp.pop %v3659
      %v4139 = vmul.f32 1.0, %v4138
      %v4140 = vrcp.pop %v3660
      %v4141 = vmul.f32 1.0, %v4140
      %v4142 = vrcp.pop %v3661
      %v4143 = vmul.f32 1.0, %v4142
      %v4144 = vrcp.pop %v3662
      %v4145 = vmul.f32 1.0, %v4144
      %v4146 = vrcp.pop %v3663
      %v4147 = vmul.f32 1.0, %v4146
      %v4148 = vrcp.pop %v3664
      %v4149 = vmul.f32 1.0, %v4148
      %v4150 = vrcp.pop %v3665
      %v4151 = vmul.f32 1.0, %v4150
      %v4152 = vrcp.pop %v3666
      %v4153 = vmul.f32 1.0, %v4152
      %v4154 = vrcp.pop %v3667
      %v4155 = vmul.f32 1.0, %v4154
      %v4156 = vrcp.pop %v3668
      %v4157 = vmul.f32 1.0, %v4156
      %v4158 = vrcp.pop %v3669
      %v4159 = vmul.f32 1.0, %v4158
      %v4160 = vrcp.pop %v3670
      %v4161 = vmul.f32 1.0, %v4160
      %v4162 = vrcp.pop %v3671
      %v4163 = vmul.f32 1.0, %v4162
      %v4164 = vrcp.pop %v3672
      %v4165 = vmul.f32 1.0, %v4164
      %v4166 = vrcp.pop %v3673
      %v4167 = vmul.f32 1.0, %v4166
      %v4168 = vrcp.pop %v3674
      %v4169 = vmul.f32 1.0, %v4168
      %v4170 = vrcp.pop %v3675
      %v4171 = vmul.f32 1.0, %v4170
      %v4172 = vrcp.pop %v3676
      %v4173 = vmul.f32 1.0, %v4172
      %v4174 = vrcp.pop %v3677
      %v4175 = vmul.f32 1.0, %v4174
      %v4176 = vrcp.pop %v3678
      %v4177 = vmul.f32 1.0, %v4176
      %v4178 = vrcp.pop %v3679
      %v4179 = vmul.f32 1.0, %v4178
      %v4180 = vrcp.pop %v3680
      %v4181 = vmul.f32 1.0, %v4180
      %v4182 = vrcp.pop %v3681
      %v4183 = vmul.f32 1.0, %v4182
      %v4184 = vrcp.pop %v3682
      %v4185 = vmul.f32 1.0, %v4184
      %v4186 = vrcp.pop %v3683
      %v4187 = vmul.f32 1.0, %v4186
      %v4188 = vrcp.pop %v3684
      %v4189 = vmul.f32 1.0, %v4188
      %v4190 = vrcp.pop %v3685
      %v4191 = vmul.f32 1.0, %v4190
      %v4192 = vrcp.pop %v3686
      %v4193 = vmul.f32 1.0, %v4192
      %v4194 = vrcp.pop %v3687
      %v4195 = vmul.f32 1.0, %v4194
      %v4196 = vrcp.pop %v3688
      %v4197 = vmul.f32 1.0, %v4196
      %v4198 = vrcp.pop %v3689
      %v4199 = vmul.f32 1.0, %v4198
      %v4200 = vrcp.pop %v3690
      %v4201 = vmul.f32 1.0, %v4200
      %v4202 = vrcp.pop %v3691
      %v4203 = vmul.f32 1.0, %v4202
      %v4204 = vrcp.pop %v3692
      %v4205 = vmul.f32 1.0, %v4204
      %v4206 = vrcp.pop %v3693
      %v4207 = vmul.f32 1.0, %v4206
      %v4208 = vrcp.pop %v3694
      %v4209 = vmul.f32 1.0, %v4208
      %v4210 = vrcp.pop %v3695
      %v4211 = vmul.f32 1.0, %v4210
      %v4212 = vrcp.pop %v3696
      %v4213 = vmul.f32 1.0, %v4212
      %v4214 = vrcp.pop %v3697
      %v4215 = vmul.f32 1.0, %v4214
      %v4216 = vrcp.pop %v3698
      %v4217 = vmul.f32 1.0, %v4216
      %v4218 = vrcp.pop %v3699
      %v4219 = vmul.f32 1.0, %v4218
      %v4220 = vrcp.pop %v3700
      %v4221 = vmul.f32 1.0, %v4220
      %v4222 = vrcp.pop %v3701
      %v4223 = vmul.f32 1.0, %v4222
      %v4224 = vrcp.pop %v3702
      %v4225 = vmul.f32 1.0, %v4224
      %v4226 = vrcp.pop %v3703
      %v4227 = vmul.f32 1.0, %v4226
      %v4228 = vrcp.pop %v3704
      %v4229 = vmul.f32 1.0, %v4228
      %v4230 = vrcp.pop %v3705
      %v4231 = vmul.f32 1.0, %v4230
      %v4232 = vrcp.pop %v3706
      %v4233 = vmul.f32 1.0, %v4232
      %v4234 = vrcp.pop %v3707
      %v4235 = vmul.f32 1.0, %v4234
      %v4236 = vrcp.pop %v3708
      %v4237 = vmul.f32 1.0, %v4236
      %v4238 = vrcp.pop %v3709
      %v4239 = vmul.f32 1.0, %v4238
      %v4240 = vrcp.pop %v3710
      %v4241 = vmul.f32 1.0, %v4240
      %v4242 = vrcp.pop %v3711
      %v4243 = vmul.f32 1.0, %v4242
      %v4244 = vrcp.pop %v3712
      %v4245 = vmul.f32 1.0, %v4244
      %v4246 = vrcp.pop %v3713
      %v4247 = vmul.f32 1.0, %v4246
      %v4248 = vrcp.pop %v3714
      %v4249 = vmul.f32 1.0, %v4248
      %v4250 = vrcp.pop %v3715
      %v4251 = vmul.f32 1.0, %v4250
      %v4252 = vrcp.pop %v3716
      %v4253 = vmul.f32 1.0, %v4252
      %v4254 = vrcp.pop %v3717
      %v4255 = vmul.f32 1.0, %v4254
      %v4256 = vrcp.pop %v3718
      %v4257 = vmul.f32 1.0, %v4256
      %v4258 = vrcp.pop %v3719
      %v4259 = vmul.f32 1.0, %v4258
      %v4260 = vrcp.pop %v3720
      %v4261 = vmul.f32 1.0, %v4260
      %v4262 = vrcp.pop %v3721
      %v4263 = vmul.f32 1.0, %v4262
      %v4264 = vrcp.pop %v3722
      %v4265 = vmul.f32 1.0, %v4264
      %v4266 = vrcp.pop %v3723
      %v4267 = vmul.f32 1.0, %v4266
      %v4268 = vrcp.pop %v3724
      %v4269 = vmul.f32 1.0, %v4268
      %v4270 = vrcp.pop %v3725
      %v4271 = vmul.f32 1.0, %v4270
      %v4272 = vrcp.pop %v3726
      %v4273 = vmul.f32 1.0, %v4272
      %v4274 = vrcp.pop %v3727
      %v4275 = vmul.f32 1.0, %v4274
      %v4276 = vrcp.pop %v3728
      %v4277 = vmul.f32 1.0, %v4276
      %v4278 = vrcp.pop %v3729
      %v4279 = vmul.f32 1.0, %v4278
      %v4280 = vrcp.pop %v3730
      %v4281 = vmul.f32 1.0, %v4280
      %v4282 = vrcp.pop %v3731
      %v4283 = vmul.f32 1.0, %v4282
      %v4284 = vrcp.pop %v3732
      %v4285 = vmul.f32 1.0, %v4284
      %v4286 = vrcp.pop %v3733
      %v4287 = vmul.f32 1.0, %v4286
      %v4288 = vrcp.pop %v3734
      %v4289 = vmul.f32 1.0, %v4288
      %v4290 = vrcp.pop %v3735
      %v4291 = vmul.f32 1.0, %v4290
      %v4292 = vrcp.pop %v3736
      %v4293 = vmul.f32 1.0, %v4292
      %v4294 = vrcp.pop %v3737
      %v4295 = vmul.f32 1.0, %v4294
      %v4296 = vrcp.pop %v3738
      %v4297 = vmul.f32 1.0, %v4296
      %v4298 = vrcp.pop %v3739
      %v4299 = vmul.f32 1.0, %v4298
      %v4300 = vrcp.pop %v3740
      %v4301 = vmul.f32 1.0, %v4300
      %v4302 = vrcp.pop %v3741
      %v4303 = vmul.f32 1.0, %v4302
      %v4304 = vrcp.pop %v3742
      %v4305 = vmul.f32 1.0, %v4304
      %v4306 = vrcp.pop %v3743
      %v4307 = vmul.f32 1.0, %v4306
      %v4308 = vrcp.pop %v3744
      %v4309 = vmul.f32 1.0, %v4308
      %v4310 = vrcp.pop %v3745
      %v4311 = vmul.f32 1.0, %v4310
      %v4312 = vrcp.pop %v3746
      %v4313 = vmul.f32 1.0, %v4312
      %v4314 = vrcp.pop %v3747
      %v4315 = vmul.f32 1.0, %v4314
      %v4316 = vrcp.pop %v3748
      %v4317 = vmul.f32 1.0, %v4316
      %v4318 = vrcp.pop %v3749
      %v4319 = vmul.f32 1.0, %v4318
      %v4320 = vrcp.pop %v3750
      %v4321 = vmul.f32 1.0, %v4320
      %v4322 = vrcp.pop %v3751
      %v4323 = vmul.f32 1.0, %v4322
      %v4324 = vrcp.pop %v3752
      %v4325 = vmul.f32 1.0, %v4324
      %v4326 = vrcp.pop %v3753
      %v4327 = vmul.f32 1.0, %v4326
      %v4328 = vrcp.pop %v3754
      %v4329 = vmul.f32 1.0, %v4328
      %v4330 = vrcp.pop %v3755
      %v4331 = vmul.f32 1.0, %v4330
      %v4332 = vrcp.pop %v3756
      %v4333 = vmul.f32 1.0, %v4332
      %v4334 = vrcp.pop %v3757
      %v4335 = vmul.f32 1.0, %v4334
      %v4336 = vrcp.pop %v3758
      %v4337 = vmul.f32 1.0, %v4336
      %v4338 = vrcp.pop %v3759
      %v4339 = vmul.f32 1.0, %v4338
      %v4340 = vrcp.pop %v3760
      %v4341 = vmul.f32 1.0, %v4340
      %v4342 = vrcp.pop %v3761
      %v4343 = vmul.f32 1.0, %v4342
      %v4344 = vrcp.pop %v3762
      %v4345 = vmul.f32 1.0, %v4344
      %v4346 = vrcp.pop %v3763
      %v4347 = vmul.f32 1.0, %v4346
      %v4348 = vrcp.pop %v3764
      %v4349 = vmul.f32 1.0, %v4348
      %v4350 = vrcp.pop %v3765
      %v4351 = vmul.f32 1.0, %v4350
      %v4352 = vrcp.pop %v3766
      %v4353 = vmul.f32 1.0, %v4352
      %v4354 = vrcp.pop %v3767
      %v4355 = vmul.f32 1.0, %v4354
      %v4356 = vrcp.pop %v3768
      %v4357 = vmul.f32 1.0, %v4356
      %v4358 = vrcp.pop %v3769
      %v4359 = vmul.f32 1.0, %v4358
      %v4360 = vrcp.pop %v3770
      %v4361 = vmul.f32 1.0, %v4360
      %v4362 = vrcp.pop %v3771
      %v4363 = vmul.f32 1.0, %v4362
      %v4364 = vrcp.pop %v3772
      %v4365 = vmul.f32 1.0, %v4364
      %v4366 = vrcp.pop %v3773
      %v4367 = vmul.f32 1.0, %v4366
      %v4368 = vrcp.pop %v3774
      %v4369 = vmul.f32 1.0, %v4368
      %v4370 = vrcp.pop %v3775
      %v4371 = vmul.f32 1.0, %v4370
      %v4372 = vrcp.pop %v3776
      %v4373 = vmul.f32 1.0, %v4372
      %v4374 = vrcp.pop %v3777
      %v4375 = vmul.f32 1.0, %v4374
      %v4376 = vrcp.pop %v3778
      %v4377 = vmul.f32 1.0, %v4376
      %v4378 = vrcp.pop %v3779
      %v4379 = vmul.f32 1.0, %v4378
      %v4380 = vrcp.pop %v3780
      %v4381 = vmul.f32 1.0, %v4380
      %v4382 = vrcp.pop %v3781
      %v4383 = vmul.f32 1.0, %v4382
      %v4384 = vrcp.pop %v3782
      %v4385 = vmul.f32 1.0, %v4384
      %v4386 = vrcp.pop %v3783
      %v4387 = vmul.f32 1.0, %v4386
      %v4388 = vrcp.pop %v3784
      %v4389 = vmul.f32 1.0, %v4388
      %v4390 = vrcp.pop %v3785
      %v4391 = vmul.f32 1.0, %v4390
      %v4392 = vrcp.pop %v3786
      %v4393 = vmul.f32 1.0, %v4392
      %v4394 = vrcp.pop %v3787
      %v4395 = vmul.f32 1.0, %v4394
      %v4396 = vrcp.pop %v3788
      %v4397 = vmul.f32 1.0, %v4396
      %v4398 = vrcp.pop %v3789
      %v4399 = vmul.f32 1.0, %v4398
      %v4400 = vrcp.pop %v3790
      %v4401 = vmul.f32 1.0, %v4400
      %v4402 = vrcp.pop %v3791
      %v4403 = vmul.f32 1.0, %v4402
      %v4404 = vrcp.pop %v3792
      %v4405 = vmul.f32 1.0, %v4404
      %v4406 = vrcp.pop %v3793
      %v4407 = vmul.f32 1.0, %v4406
      %v4408 = vrcp.pop %v3794
      %v4409 = vmul.f32 1.0, %v4408
      %v4410 = vrcp.pop %v3795
      %v4411 = vmul.f32 1.0, %v4410
      %v4412 = vrcp.pop %v3796
      %v4413 = vmul.f32 1.0, %v4412
      %v4414 = vrcp.pop %v3797
      %v4415 = vmul.f32 1.0, %v4414
      %v4416 = vrcp.pop %v3798
      %v4417 = vmul.f32 1.0, %v4416
      %v4418 = vrcp.pop %v3799
      %v4419 = vmul.f32 1.0, %v4418
      %v4420 = vrcp.pop %v3800
      %v4421 = vmul.f32 1.0, %v4420
      %v4422 = vrcp.pop %v3801
      %v4423 = vmul.f32 1.0, %v4422
      %v4424 = vrcp.pop %v3802
      %v4425 = vmul.f32 1.0, %v4424
      %v4426 = vrcp.pop %v3803
      %v4427 = vmul.f32 1.0, %v4426
      %v4428 = vrcp.pop %v3804
      %v4429 = vmul.f32 1.0, %v4428
      %v4430 = vrcp.pop %v3805
      %v4431 = vmul.f32 1.0, %v4430
      %v4432 = vrcp.pop %v3806
      %v4433 = vmul.f32 1.0, %v4432
      %v4434 = vrcp.pop %v3807
      %v4435 = vmul.f32 1.0, %v4434
      %v4436 = vrcp.pop %v3808
      %v4437 = vmul.f32 1.0, %v4436
      %v4438 = vrcp.pop %v3809
      %v4439 = vmul.f32 1.0, %v4438
      %v4440 = vrcp.pop %v3810
      %v4441 = vmul.f32 1.0, %v4440
      %v4442 = vrcp.pop %v3811
      %v4443 = vmul.f32 1.0, %v4442
      %v4444 = vrcp.pop %v3812
      %v4445 = vmul.f32 1.0, %v4444
      %v4446 = vrcp.pop %v3813
      %v4447 = vmul.f32 1.0, %v4446
      %v4448 = vrcp.pop %v3814
      %v4449 = vmul.f32 1.0, %v4448
      %v4450 = vrcp.pop %v3815
      %v4451 = vmul.f32 1.0, %v4450
      %v4452 = vrcp.pop %v3816
      %v4453 = vmul.f32 1.0, %v4452
      %v4454 = vrcp.pop %v3817
      %v4455 = vmul.f32 1.0, %v4454
      %v4456 = vrcp.pop %v3818
      %v4457 = vmul.f32 1.0, %v4456
      %v4458 = vrcp.pop %v3819
      %v4459 = vmul.f32 1.0, %v4458
      %v4460 = vrcp.pop %v3820
      %v4461 = vmul.f32 1.0, %v4460
      %v4462 = vrcp.pop %v3821
      %v4463 = vmul.f32 1.0, %v4462
      %v4464 = vrcp.pop %v3822
      %v4465 = vmul.f32 1.0, %v4464
      %v4466 = vrcp.pop %v3823
      %v4467 = vmul.f32 1.0, %v4466
      %v4468 = vrcp.pop %v3824
      %v4469 = vmul.f32 1.0, %v4468
      %v4470 = vrcp.pop %v3825
      %v4471 = vmul.f32 1.0, %v4470
      %v4472 = vrcp.pop %v3826
      %v4473 = vmul.f32 1.0, %v4472
      %v4474 = vrcp.pop %v3827
      %v4475 = vmul.f32 1.0, %v4474
      %v4476 = vrcp.pop %v3828
      %v4477 = vmul.f32 1.0, %v4476
      %v4478 = vrcp.pop %v3829
      %v4479 = vmul.f32 1.0, %v4478
      %v4480 = vrcp.pop %v3830
      %v4481 = vmul.f32 1.0, %v4480
      %v4482 = vrcp.pop %v3831
      %v4483 = vmul.f32 1.0, %v4482
      %v4484 = vrcp.pop %v3832
      %v4485 = vmul.f32 1.0, %v4484
      %v4486 = vrcp.pop %v3833
      %v4487 = vmul.f32 1.0, %v4486
      %v4488 = vrcp.pop %v3834
      %v4489 = vmul.f32 1.0, %v4488
      %v4490 = vrcp.pop %v3835
      %v4491 = vmul.f32 1.0, %v4490
      %v4492 = vrcp.pop %v3836
      %v4493 = vmul.f32 1.0, %v4492
      %v4494 = vrcp.pop %v3837
      %v4495 = vmul.f32 1.0, %v4494
      %v4496 = vrcp.pop %v3838
      %v4497 = vmul.f32 1.0, %v4496
      %v4498 = vrcp.pop %v3839
      %v4499 = vmul.f32 1.0, %v4498
      %v4500 = vrcp.pop %v3840
      %v4501 = vmul.f32 1.0, %v4500
      %v4502 = vrcp.pop %v3841
      %v4503 = vmul.f32 1.0, %v4502
      %v4504 = vrcp.pop %v3842
      %v4505 = vmul.f32 1.0, %v4504
      %v4506 = vrcp.pop %v3843
      %v4507 = vmul.f32 1.0, %v4506
      %v4508 = vrcp.pop %v3844
      %v4509 = vmul.f32 1.0, %v4508
      %v4510 = vrcp.pop %v3845
      %v4511 = vmul.f32 1.0, %v4510
      %v4512 = vrcp.pop %v3846
      %v4513 = vmul.f32 1.0, %v4512
      %v4514 = vrcp.pop %v3847
      %v4515 = vmul.f32 1.0, %v4514
      %v4516 = vrcp.pop %v3848
      %v4517 = vmul.f32 1.0, %v4516
      %v4518 = vrcp.pop %v3849
      %v4519 = vmul.f32 1.0, %v4518
      %v4520 = vrcp.pop %v3850
      %v4521 = vmul.f32 1.0, %v4520
      %v4522 = vrcp.pop %v3851
      %v4523 = vmul.f32 1.0, %v4522
      %v4524 = vrcp.pop %v3852
      %v4525 = vmul.f32 1.0, %v4524
      %v4526 = vrcp.pop %v3853
      %v4527 = vmul.f32 1.0, %v4526
      %v4528 = vrcp.pop %v3854
      %v4529 = vmul.f32 1.0, %v4528
      %v4530 = vrcp.pop %v3855
      %v4531 = vmul.f32 1.0, %v4530
      %v4532 = vrcp.pop %v3856
      %v4533 = vmul.f32 1.0, %v4532
      %v4534 = vrcp.pop %v3857
      %v4535 = vmul.f32 1.0, %v4534
      %v4536 = vrcp.pop %v3858
      %v4537 = vmul.f32 1.0, %v4536
      %v4538 = vrcp.pop %v3859
      %v4539 = vmul.f32 1.0, %v4538
      %v4540 = vrcp.pop %v3860
      %v4541 = vmul.f32 1.0, %v4540
      %v4542 = vrcp.pop %v3861
      %v4543 = vmul.f32 1.0, %v4542
      %v4544 = vrcp.pop %v3862
      %v4545 = vmul.f32 1.0, %v4544
      %v4546 = vrcp.pop %v3863
      %v4547 = vmul.f32 1.0, %v4546
      %v4548 = vrcp.pop %v3864
      %v4549 = vmul.f32 1.0, %v4548
      %v4550 = vrcp.pop %v3865
      %v4551 = vmul.f32 1.0, %v4550
      %v4552 = vrcp.pop %v3866
      %v4553 = vmul.f32 1.0, %v4552
      %v4554 = vrcp.pop %v3867
      %v4555 = vmul.f32 1.0, %v4554
      %v4556 = vrcp.pop %v3868
      %v4557 = vmul.f32 1.0, %v4556
      %v4558 = vrcp.pop %v3869
      %v4559 = vmul.f32 1.0, %v4558
      %v4560 = vrcp.pop %v3870
      %v4561 = vmul.f32 1.0, %v4560
      %v4562 = vrcp.pop %v3871
      %v4563 = vmul.f32 1.0, %v4562
      %v4564 = vrcp.pop %v3872
      %v4565 = vmul.f32 1.0, %v4564
      %v4566 = vrcp.pop %v3873
      %v4567 = vmul.f32 1.0, %v4566
      %v4568 = vrcp.pop %v3874
      %v4569 = vmul.f32 1.0, %v4568
      %v4570 = vrcp.pop %v3875
      %v4571 = vmul.f32 1.0, %v4570
      %v4572 = vrcp.pop %v3876
      %v4573 = vmul.f32 1.0, %v4572
      %v4574 = vrcp.pop %v3877
      %v4575 = vmul.f32 1.0, %v4574
      %v4576 = vrcp.pop %v3878
      %v4577 = vmul.f32 1.0, %v4576
      %v4578 = vrcp.pop %v3879
      %v4579 = vmul.f32 1.0, %v4578
      %v4580 = vrcp.pop %v3880
      %v4581 = vmul.f32 1.0, %v4580
      %v4582 = vrcp.pop %v3881
      %v4583 = vmul.f32 1.0, %v4582
      %v4584 = vrcp.pop %v3882
      %v4585 = vmul.f32 1.0, %v4584
      %v4586 = vrcp.pop %v3883
      %v4587 = vmul.f32 1.0, %v4586
      %v4588 = vrcp.pop %v3884
      %v4589 = vmul.f32 1.0, %v4588
      %v4590 = vrcp.pop %v3885
      %v4591 = vmul.f32 1.0, %v4590
      %v4592 = vrcp.pop %v3886
      %v4593 = vmul.f32 1.0, %v4592
      %v4594 = vrcp.pop %v3887
      %v4595 = vmul.f32 1.0, %v4594
      %v4596 = vrcp.pop %v3888
      %v4597 = vmul.f32 1.0, %v4596
      %v4598 = vrcp.pop %v3889
      %v4599 = vmul.f32 1.0, %v4598
      %v4600 = vrcp.pop %v3890
      %v4601 = vmul.f32 1.0, %v4600
      %v4602 = vrcp.pop %v3891
      %v4603 = vmul.f32 1.0, %v4602
      %v4604 = vrcp.pop %v3892
      %v4605 = vmul.f32 1.0, %v4604
      %v4606 = vrcp.pop %v3893
      %v4607 = vmul.f32 1.0, %v4606
      %v4608 = vrcp.pop %v3894
      %v4609 = vmul.f32 1.0, %v4608
      %v4610 = vrcp.pop %v3895
      %v4611 = vmul.f32 1.0, %v4610
      %v4612 = vrcp.pop %v3896
      %v4613 = vmul.f32 1.0, %v4612
      %v4614 = vrcp.pop %v3897
      %v4615 = vmul.f32 1.0, %v4614
      %v4616 = vrcp.pop %v3898
      %v4617 = vmul.f32 1.0, %v4616
      %v4618 = vrcp.pop %v3899
      %v4619 = vmul.f32 1.0, %v4618
      %v4620 = vrcp.pop %v3900
      %v4621 = vmul.f32 1.0, %v4620
      %v4622 = vrcp.pop %v3901
      %v4623 = vmul.f32 1.0, %v4622
      %v4624 = vrcp.pop %v3902
      %v4625 = vmul.f32 1.0, %v4624
      %v4626 = vrcp.pop %v3903
      %v4627 = vmul.f32 1.0, %v4626
      %v4628 = vrcp.pop %v3904
      %v4629 = vmul.f32 1.0, %v4628
      %v4630 = vrcp.pop %v3905
      %v4631 = vmul.f32 1.0, %v4630
      %v4632 = vrcp.pop %v3906
      %v4633 = vmul.f32 1.0, %v4632
      %v4634 = vrcp.pop %v3907
      %v4635 = vmul.f32 1.0, %v4634
      %v4636 = vrcp.pop %v3908
      %v4637 = vmul.f32 1.0, %v4636
      %v4638 = vrcp.pop %v3909
      %v4639 = vmul.f32 1.0, %v4638
      %v4640 = vrcp.pop %v3910
      %v4641 = vmul.f32 1.0, %v4640
      %v4642 = vrcp.pop %v3911
      %v4643 = vmul.f32 1.0, %v4642
      %v4644 = vrcp.pop %v3912
      %v4645 = vmul.f32 1.0, %v4644
      %v4646 = vrcp.pop %v3913
      %v4647 = vmul.f32 1.0, %v4646
      %v4648 = vrcp.pop %v3914
      %v4649 = vmul.f32 1.0, %v4648
      %v4650 = vrcp.pop %v3915
      %v4651 = vmul.f32 1.0, %v4650
      %v4652 = vrcp.pop %v3916
      %v4653 = vmul.f32 1.0, %v4652
      %v4654 = vrcp.pop %v3917
      %v4655 = vmul.f32 1.0, %v4654
      %v4656 = vrcp.pop %v3918
      %v4657 = vmul.f32 1.0, %v4656
      %v4658 = vrcp.pop %v3919
      %v4659 = vmul.f32 1.0, %v4658
      %v4660 = vrcp.pop %v3920
      %v4661 = vmul.f32 1.0, %v4660
      %v4662 = vrcp.pop %v3921
      %v4663 = vmul.f32 1.0, %v4662
      %v4664 = vrcp.pop %v3922
      %v4665 = vmul.f32 1.0, %v4664
      %v4666 = vrcp.pop %v3923
      %v4667 = vmul.f32 1.0, %v4666
      %v4668 = vrcp.pop %v3924
      %v4669 = vmul.f32 1.0, %v4668
      %v4670 = vrcp.pop %v3925
      %v4671 = vmul.f32 1.0, %v4670
      %v4672 = vrcp.pop %v3926
      %v4673 = vmul.f32 1.0, %v4672
      %v4674 = vrcp.pop %v3927
      %v4675 = vmul.f32 1.0, %v4674
      %v4676 = vrcp.pop %v3928
      %v4677 = vmul.f32 1.0, %v4676
      %v4678 = vrcp.pop %v3929
      %v4679 = vmul.f32 1.0, %v4678
      %v4680 = vrcp.pop %v3930
      %v4681 = vmul.f32 1.0, %v4680
      %v4682 = vrcp.pop %v3931
      %v4683 = vmul.f32 1.0, %v4682
      %v4684 = vrcp.pop %v3932
      %v4685 = vmul.f32 1.0, %v4684
      %v4686 = vrcp.pop %v3933
      %v4687 = vmul.f32 1.0, %v4686
      %v4688 = vrcp.pop %v3934
      %v4689 = vmul.f32 1.0, %v4688
      %v4690 = vrcp.pop %v3935
      %v4691 = vmul.f32 1.0, %v4690
      %v4692 = vrcp.pop %v3936
      %v4693 = vmul.f32 1.0, %v4692
      %v4694 = vrcp.pop %v3937
      %v4695 = vmul.f32 1.0, %v4694
      %v4696 = vrcp.pop %v3938
      %v4697 = vmul.f32 1.0, %v4696
      %v4698 = vrcp.pop %v3939
      %v4699 = vmul.f32 1.0, %v4698
      %v4700 = vrcp.pop %v3940
      %v4701 = vmul.f32 1.0, %v4700
      %v4702 = vrcp.pop %v3941
      %v4703 = vmul.f32 1.0, %v4702
      %v4704 = vrcp.pop %v3942
      %v4705 = vmul.f32 1.0, %v4704
      %v4706 = vrcp.pop %v3943
      %v4707 = vmul.f32 1.0, %v4706
      %v4708 = vrcp.pop %v3944
      %v4709 = vmul.f32 1.0, %v4708
      %v4710 = vrcp.pop %v3945
      %v4711 = vmul.f32 1.0, %v4710
      %v4712 = vrcp.pop %v3946
      %v4713 = vmul.f32 1.0, %v4712
      %v4714 = vrcp.pop %v3947
      %v4715 = vmul.f32 1.0, %v4714
      %v4716 = vmul.f32 %v1289, %v3949
      %v4717 = vmul.f32 %v1291, %v3951
      %v4718 = vmul.f32 %v1482, %v3953
      %v4719 = vmul.f32 %v1484, %v3955
      %v4720 = vmul.f32 %v1675, %v3957
      %v4721 = vmul.f32 %v1677, %v3959
      %v4722 = vmul.f32 %v1868, %v3961
      %v4723 = vmul.f32 %v1870, %v3963
      %v4724 = vmul.f32 %v2061, %v3965
      %v4725 = vmul.f32 %v2063, %v3967
      %v4726 = vmul.f32 %v2254, %v3969
      %v4727 = vmul.f32 %v2256, %v3971
      %v4728 = vmul.f32 %v1293, %v3973
      %v4729 = vmul.f32 %v1295, %v3975
      %v4730 = vmul.f32 %v1486, %v3977
      %v4731 = vmul.f32 %v1488, %v3979
      %v4732 = vmul.f32 %v1679, %v3981
      %v4733 = vmul.f32 %v1681, %v3983
      %v4734 = vmul.f32 %v1872, %v3985
      %v4735 = vmul.f32 %v1874, %v3987
      %v4736 = vmul.f32 %v2065, %v3989
      %v4737 = vmul.f32 %v2067, %v3991
      %v4738 = vmul.f32 %v2258, %v3993
      %v4739 = vmul.f32 %v2260, %v3995
      %v4740 = vmul.f32 %v1299, %v3997
      %v4741 = vmul.f32 %v1301, %v3999
      %v4742 = vmul.f32 %v1492, %v4001
      %v4743 = vmul.f32 %v1494, %v4003
      %v4744 = vmul.f32 %v1685, %v4005
      %v4745 = vmul.f32 %v1687, %v4007
      %v4746 = vmul.f32 %v1878, %v4009
      %v4747 = vmul.f32 %v1880, %v4011
      %v4748 = vmul.f32 %v2071, %v4013
      %v4749 = vmul.f32 %v2073, %v4015
      %v4750 = vmul.f32 %v2264, %v4017
      %v4751 = vmul.f32 %v2266, %v4019
      %v4752 = vmul.f32 %v1303, %v4021
      %v4753 = vmul.f32 %v1305, %v4023
      %v4754 = vmul.f32 %v1496, %v4025
      %v4755 = vmul.f32 %v1498, %v4027
      %v4756 = vmul.f32 %v1689, %v4029
      %v4757 = vmul.f32 %v1691, %v4031
      %v4758 = vmul.f32 %v1882, %v4033
      %v4759 = vmul.f32 %v1884, %v4035
      %v4760 = vmul.f32 %v2075, %v4037
      %v4761 = vmul.f32 %v2077, %v4039
      %v4762 = vmul.f32 %v2268, %v4041
      %v4763 = vmul.f32 %v2270, %v4043
      %v4764 = vmul.f32 %v1309, %v4045
      %v4765 = vmul.f32 %v1311, %v4047
      %v4766 = vmul.f32 %v1502, %v4049
      %v4767 = vmul.f32 %v1504, %v4051
      %v4768 = vmul.f32 %v1695, %v4053
      %v4769 = vmul.f32 %v1697, %v4055
      %v4770 = vmul.f32 %v1888, %v4057
      %v4771 = vmul.f32 %v1890, %v4059
      %v4772 = vmul.f32 %v2081, %v4061
      %v4773 = vmul.f32 %v2083, %v4063
      %v4774 = vmul.f32 %v2274, %v4065
      %v4775 = vmul.f32 %v2276, %v4067
      %v4776 = vmul.f32 %v1313, %v4069
      %v4777 = vmul.f32 %v1315, %v4071
      %v4778 = vmul.f32 %v1506, %v4073
      %v4779 = vmul.f32 %v1508, %v4075
      %v4780 = vmul.f32 %v1699, %v4077
      %v4781 = vmul.f32 %v1701, %v4079
      %v4782 = vmul.f32 %v1892, %v4081
      %v4783 = vmul.f32 %v1894, %v4083
      %v4784 = vmul.f32 %v2085, %v4085
      %v4785 = vmul.f32 %v2087, %v4087
      %v4786 = vmul.f32 %v2278, %v4089
      %v4787 = vmul.f32 %v2280, %v4091
      %v4788 = vmul.f32 %v1319, %v4093
      %v4789 = vmul.f32 %v1321, %v4095
      %v4790 = vmul.f32 %v1512, %v4097
      %v4791 = vmul.f32 %v1514, %v4099
      %v4792 = vmul.f32 %v1705, %v4101
      %v4793 = vmul.f32 %v1707, %v4103
      %v4794 = vmul.f32 %v1898, %v4105
      %v4795 = vmul.f32 %v1900, %v4107
      %v4796 = vmul.f32 %v2091, %v4109
      %v4797 = vmul.f32 %v2093, %v4111
      %v4798 = vmul.f32 %v2284, %v4113
      %v4799 = vmul.f32 %v2286, %v4115
      %v4800 = vmul.f32 %v1323, %v4117
      %v4801 = vmul.f32 %v1325, %v4119
      %v4802 = vmul.f32 %v1516, %v4121
      %v4803 = vmul.f32 %v1518, %v4123
      %v4804 = vmul.f32 %v1709, %v4125
      %v4805 = vmul.f32 %v1711, %v4127
      %v4806 = vmul.f32 %v1902, %v4129
      %v4807 = vmul.f32 %v1904, %v4131
      %v4808 = vmul.f32 %v2095, %v4133
      %v4809 = vmul.f32 %v2097, %v4135
      %v4810 = vmul.f32 %v2288, %v4137
      %v4811 = vmul.f32 %v2290, %v4139
      %v4812 = vmul.f32 %v1329, %v4141
      %v4813 = vmul.f32 %v1331, %v4143
      %v4814 = vmul.f32 %v1522, %v4145
      %v4815 = vmul.f32 %v1524, %v4147
      %v4816 = vmul.f32 %v1715, %v4149
      %v4817 = vmul.f32 %v1717, %v4151
      %v4818 = vmul.f32 %v1908, %v4153
      %v4819 = vmul.f32 %v1910, %v4155
      %v4820 = vmul.f32 %v2101, %v4157
      %v4821 = vmul.f32 %v2103, %v4159
      %v4822 = vmul.f32 %v2294, %v4161
      %v4823 = vmul.f32 %v2296, %v4163
      %v4824 = vmul.f32 %v1333, %v4165
      %v4825 = vmul.f32 %v1335, %v4167
      %v4826 = vmul.f32 %v1526, %v4169
      %v4827 = vmul.f32 %v1528, %v4171
      %v4828 = vmul.f32 %v1719, %v4173
      %v4829 = vmul.f32 %v1721, %v4175
      %v4830 = vmul.f32 %v1912, %v4177
      %v4831 = vmul.f32 %v1914, %v4179
      %v4832 = vmul.f32 %v2105, %v4181
      %v4833 = vmul.f32 %v2107, %v4183
      %v4834 = vmul.f32 %v2298, %v4185
      %v4835 = vmul.f32 %v2300, %v4187
      %v4836 = vmul.f32 %v1339, %v4189
      %v4837 = vmul.f32 %v1341, %v4191
      %v4838 = vmul.f32 %v1532, %v4193
      %v4839 = vmul.f32 %v1534, %v4195
      %v4840 = vmul.f32 %v1725, %v4197
      %v4841 = vmul.f32 %v1727, %v4199
      %v4842 = vmul.f32 %v1918, %v4201
      %v4843 = vmul.f32 %v1920, %v4203
      %v4844 = vmul.f32 %v2111, %v4205
      %v4845 = vmul.f32 %v2113, %v4207
      %v4846 = vmul.f32 %v2304, %v4209
      %v4847 = vmul.f32 %v2306, %v4211
      %v4848 = vmul.f32 %v1343, %v4213
      %v4849 = vmul.f32 %v1345, %v4215
      %v4850 = vmul.f32 %v1536, %v4217
      %v4851 = vmul.f32 %v1538, %v4219
      %v4852 = vmul.f32 %v1729, %v4221
      %v4853 = vmul.f32 %v1731, %v4223
      %v4854 = vmul.f32 %v1922, %v4225
      %v4855 = vmul.f32 %v1924, %v4227
      %v4856 = vmul.f32 %v2115, %v4229
      %v4857 = vmul.f32 %v2117, %v4231
      %v4858 = vmul.f32 %v2308, %v4233
      %v4859 = vmul.f32 %v2310, %v4235
      %v4860 = vmul.f32 %v1349, %v4237
      %v4861 = vmul.f32 %v1351, %v4239
      %v4862 = vmul.f32 %v1542, %v4241
      %v4863 = vmul.f32 %v1544, %v4243
      %v4864 = vmul.f32 %v1735, %v4245
      %v4865 = vmul.f32 %v1737, %v4247
      %v4866 = vmul.f32 %v1928, %v4249
      %v4867 = vmul.f32 %v1930, %v4251
      %v4868 = vmul.f32 %v2121, %v4253
      %v4869 = vmul.f32 %v2123, %v4255
      %v4870 = vmul.f32 %v2314, %v4257
      %v4871 = vmul.f32 %v2316, %v4259
      %v4872 = vmul.f32 %v1353, %v4261
      %v4873 = vmul.f32 %v1355, %v4263
      %v4874 = vmul.f32 %v1546, %v4265
      %v4875 = vmul.f32 %v1548, %v4267
      %v4876 = vmul.f32 %v1739, %v4269
      %v4877 = vmul.f32 %v1741, %v4271
      %v4878 = vmul.f32 %v1932, %v4273
      %v4879 = vmul.f32 %v1934, %v4275
      %v4880 = vmul.f32 %v2125, %v4277
      %v4881 = vmul.f32 %v2127, %v4279
      %v4882 = vmul.f32 %v2318, %v4281
      %v4883 = vmul.f32 %v2320, %v4283
      %v4884 = vmul.f32 %v1359, %v4285
      %v4885 = vmul.f32 %v1361, %v4287
      %v4886 = vmul.f32 %v1552, %v4289
      %v4887 = vmul.f32 %v1554, %v4291
      %v4888 = vmul.f32 %v1745, %v4293
      %v4889 = vmul.f32 %v1747, %v4295
      %v4890 = vmul.f32 %v1938, %v4297
      %v4891 = vmul.f32 %v1940, %v4299
      %v4892 = vmul.f32 %v2131, %v4301
      %v4893 = vmul.f32 %v2133, %v4303
      %v4894 = vmul.f32 %v2324, %v4305
      %v4895 = vmul.f32 %v2326, %v4307
      %v4896 = vmul.f32 %v1363, %v4309
      %v4897 = vmul.f32 %v1365, %v4311
      %v4898 = vmul.f32 %v1556, %v4313
      %v4899 = vmul.f32 %v1558, %v4315
      %v4900 = vmul.f32 %v1749, %v4317
      %v4901 = vmul.f32 %v1751, %v4319
      %v4902 = vmul.f32 %v1942, %v4321
      %v4903 = vmul.f32 %v1944, %v4323
      %v4904 = vmul.f32 %v2135, %v4325
      %v4905 = vmul.f32 %v2137, %v4327
      %v4906 = vmul.f32 %v2328, %v4329
      %v4907 = vmul.f32 %v2330, %v4331
      %v4908 = vmul.f32 %v1369, %v4333
      %v4909 = vmul.f32 %v1371, %v4335
      %v4910 = vmul.f32 %v1562, %v4337
      %v4911 = vmul.f32 %v1564, %v4339
      %v4912 = vmul.f32 %v1755, %v4341
      %v4913 = vmul.f32 %v1757, %v4343
      %v4914 = vmul.f32 %v1948, %v4345
      %v4915 = vmul.f32 %v1950, %v4347
      %v4916 = vmul.f32 %v2141, %v4349
      %v4917 = vmul.f32 %v2143, %v4351
      %v4918 = vmul.f32 %v2334, %v4353
      %v4919 = vmul.f32 %v2336, %v4355
      %v4920 = vmul.f32 %v1373, %v4357
      %v4921 = vmul.f32 %v1375, %v4359
      %v4922 = vmul.f32 %v1566, %v4361
      %v4923 = vmul.f32 %v1568, %v4363
      %v4924 = vmul.f32 %v1759, %v4365
      %v4925 = vmul.f32 %v1761, %v4367
      %v4926 = vmul.f32 %v1952, %v4369
      %v4927 = vmul.f32 %v1954, %v4371
      %v4928 = vmul.f32 %v2145, %v4373
      %v4929 = vmul.f32 %v2147, %v4375
      %v4930 = vmul.f32 %v2338, %v4377
      %v4931 = vmul.f32 %v2340, %v4379
      %v4932 = vmul.f32 %v1379, %v4381
      %v4933 = vmul.f32 %v1381, %v4383
      %v4934 = vmul.f32 %v1572, %v4385
      %v4935 = vmul.f32 %v1574, %v4387
      %v4936 = vmul.f32 %v1765, %v4389
      %v4937 = vmul.f32 %v1767, %v4391
      %v4938 = vmul.f32 %v1958, %v4393
      %v4939 = vmul.f32 %v1960, %v4395
      %v4940 = vmul.f32 %v2151, %v4397
      %v4941 = vmul.f32 %v2153, %v4399
      %v4942 = vmul.f32 %v2344, %v4401
      %v4943 = vmul.f32 %v2346, %v4403
      %v4944 = vmul.f32 %v1383, %v4405
      %v4945 = vmul.f32 %v1385, %v4407
      %v4946 = vmul.f32 %v1576, %v4409
      %v4947 = vmul.f32 %v1578, %v4411
      %v4948 = vmul.f32 %v1769, %v4413
      %v4949 = vmul.f32 %v1771, %v4415
      %v4950 = vmul.f32 %v1962, %v4417
      %v4951 = vmul.f32 %v1964, %v4419
      %v4952 = vmul.f32 %v2155, %v4421
      %v4953 = vmul.f32 %v2157, %v4423
      %v4954 = vmul.f32 %v2348, %v4425
      %v4955 = vmul.f32 %v2350, %v4427
      %v4956 = vmul.f32 %v1389, %v4429
      %v4957 = vmul.f32 %v1391, %v4431
      %v4958 = vmul.f32 %v1582, %v4433
      %v4959 = vmul.f32 %v1584, %v4435
      %v4960 = vmul.f32 %v1775, %v4437
      %v4961 = vmul.f32 %v1777, %v4439
      %v4962 = vmul.f32 %v1968, %v4441
      %v4963 = vmul.f32 %v1970, %v4443
      %v4964 = vmul.f32 %v2161, %v4445
      %v4965 = vmul.f32 %v2163, %v4447
      %v4966 = vmul.f32 %v2354, %v4449
      %v4967 = vmul.f32 %v2356, %v4451
      %v4968 = vmul.f32 %v1393, %v4453
      %v4969 = vmul.f32 %v1395, %v4455
      %v4970 = vmul.f32 %v1586, %v4457
      %v4971 = vmul.f32 %v1588, %v4459
      %v4972 = vmul.f32 %v1779, %v4461
      %v4973 = vmul.f32 %v1781, %v4463
      %v4974 = vmul.f32 %v1972, %v4465
      %v4975 = vmul.f32 %v1974, %v4467
      %v4976 = vmul.f32 %v2165, %v4469
      %v4977 = vmul.f32 %v2167, %v4471
      %v4978 = vmul.f32 %v2358, %v4473
      %v4979 = vmul.f32 %v2360, %v4475
      %v4980 = vmul.f32 %v1399, %v4477
      %v4981 = vmul.f32 %v1401, %v4479
      %v4982 = vmul.f32 %v1592, %v4481
      %v4983 = vmul.f32 %v1594, %v4483
      %v4984 = vmul.f32 %v1785, %v4485
      %v4985 = vmul.f32 %v1787, %v4487
      %v4986 = vmul.f32 %v1978, %v4489
      %v4987 = vmul.f32 %v1980, %v4491
      %v4988 = vmul.f32 %v2171, %v4493
      %v4989 = vmul.f32 %v2173, %v4495
      %v4990 = vmul.f32 %v2364, %v4497
      %v4991 = vmul.f32 %v2366, %v4499
      %v4992 = vmul.f32 %v1403, %v4501
      %v4993 = vmul.f32 %v1405, %v4503
      %v4994 = vmul.f32 %v1596, %v4505
      %v4995 = vmul.f32 %v1598, %v4507
      %v4996 = vmul.f32 %v1789, %v4509
      %v4997 = vmul.f32 %v1791, %v4511
      %v4998 = vmul.f32 %v1982, %v4513
      %v4999 = vmul.f32 %v1984, %v4515
      %v5000 = vmul.f32 %v2175, %v4517
      %v5001 = vmul.f32 %v2177, %v4519
      %v5002 = vmul.f32 %v2368, %v4521
      %v5003 = vmul.f32 %v2370, %v4523
      %v5004 = vmul.f32 %v1409, %v4525
      %v5005 = vmul.f32 %v1411, %v4527
      %v5006 = vmul.f32 %v1602, %v4529
      %v5007 = vmul.f32 %v1604, %v4531
      %v5008 = vmul.f32 %v1795, %v4533
      %v5009 = vmul.f32 %v1797, %v4535
      %v5010 = vmul.f32 %v1988, %v4537
      %v5011 = vmul.f32 %v1990, %v4539
      %v5012 = vmul.f32 %v2181, %v4541
      %v5013 = vmul.f32 %v2183, %v4543
      %v5014 = vmul.f32 %v2374, %v4545
      %v5015 = vmul.f32 %v2376, %v4547
      %v5016 = vmul.f32 %v1413, %v4549
      %v5017 = vmul.f32 %v1415, %v4551
      %v5018 = vmul.f32 %v1606, %v4553
      %v5019 = vmul.f32 %v1608, %v4555
      %v5020 = vmul.f32 %v1799, %v4557
      %v5021 = vmul.f32 %v1801, %v4559
      %v5022 = vmul.f32 %v1992, %v4561
      %v5023 = vmul.f32 %v1994, %v4563
      %v5024 = vmul.f32 %v2185, %v4565
      %v5025 = vmul.f32 %v2187, %v4567
      %v5026 = vmul.f32 %v2378, %v4569
      %v5027 = vmul.f32 %v2380, %v4571
      %v5028 = vmul.f32 %v1419, %v4573
      %v5029 = vmul.f32 %v1421, %v4575
      %v5030 = vmul.f32 %v1612, %v4577
      %v5031 = vmul.f32 %v1614, %v4579
      %v5032 = vmul.f32 %v1805, %v4581
      %v5033 = vmul.f32 %v1807, %v4583
      %v5034 = vmul.f32 %v1998, %v4585
      %v5035 = vmul.f32 %v2000, %v4587
      %v5036 = vmul.f32 %v2191, %v4589
      %v5037 = vmul.f32 %v2193, %v4591
      %v5038 = vmul.f32 %v2384, %v4593
      %v5039 = vmul.f32 %v2386, %v4595
      %v5040 = vmul.f32 %v1423, %v4597
      %v5041 = vmul.f32 %v1425, %v4599
      %v5042 = vmul.f32 %v1616, %v4601
      %v5043 = vmul.f32 %v1618, %v4603
      %v5044 = vmul.f32 %v1809, %v4605
      %v5045 = vmul.f32 %v1811, %v4607
      %v5046 = vmul.f32 %v2002, %v4609
      %v5047 = vmul.f32 %v2004, %v4611
      %v5048 = vmul.f32 %v2195, %v4613
      %v5049 = vmul.f32 %v2197, %v4615
      %v5050 = vmul.f32 %v2388, %v4617
      %v5051 = vmul.f32 %v2390, %v4619
      %v5052 = vmul.f32 %v1429, %v4621
      %v5053 = vmul.f32 %v1431, %v4623
      %v5054 = vmul.f32 %v1622, %v4625
      %v5055 = vmul.f32 %v1624, %v4627
      %v5056 = vmul.f32 %v1815, %v4629
      %v5057 = vmul.f32 %v1817, %v4631
      %v5058 = vmul.f32 %v2008, %v4633
      %v5059 = vmul.f32 %v2010, %v4635
      %v5060 = vmul.f32 %v2201, %v4637
      %v5061 = vmul.f32 %v2203, %v4639
      %v5062 = vmul.f32 %v2394, %v4641
      %v5063 = vmul.f32 %v2396, %v4643
      %v5064 = vmul.f32 %v1433, %v4645
      %v5065 = vmul.f32 %v1435, %v4647
      %v5066 = vmul.f32 %v1626, %v4649
      %v5067 = vmul.f32 %v1628, %v4651
      %v5068 = vmul.f32 %v1819, %v4653
      %v5069 = vmul.f32 %v1821, %v4655
      %v5070 = vmul.f32 %v2012, %v4657
      %v5071 = vmul.f32 %v2014, %v4659
      %v5072 = vmul.f32 %v2205, %v4661
      %v5073 = vmul.f32 %v2207, %v4663
      %v5074 = vmul.f32 %v2398, %v4665
      %v5075 = vmul.f32 %v2400, %v4667
      %v5076 = vmul.f32 %v1439, %v4669
      %v5077 = vmul.f32 %v1441, %v4671
      %v5078 = vmul.f32 %v1632, %v4673
      %v5079 = vmul.f32 %v1634, %v4675
      %v5080 = vmul.f32 %v1825, %v4677
      %v5081 = vmul.f32 %v1827, %v4679
      %v5082 = vmul.f32 %v2018, %v4681
      %v5083 = vmul.f32 %v2020, %v4683
      %v5084 = vmul.f32 %v2211, %v4685
      %v5085 = vmul.f32 %v2213, %v4687
      %v5086 = vmul.f32 %v2404, %v4689
      %v5087 = vmul.f32 %v2406, %v4691
      %v5088 = vmul.f32 %v1443, %v4693
      %v5089 = vmul.f32 %v1445, %v4695
      %v5090 = vmul.f32 %v1636, %v4697
      %v5091 = vmul.f32 %v1638, %v4699
      %v5092 = vmul.f32 %v1829, %v4701
      %v5093 = vmul.f32 %v1831, %v4703
      %v5094 = vmul.f32 %v2022, %v4705
      %v5095 = vmul.f32 %v2024, %v4707
      %v5096 = vmul.f32 %v2215, %v4709
      %v5097 = vmul.f32 %v2217, %v4711
      %v5098 = vmul.f32 %v2408, %v4713
      %v5099 = vmul.f32 %v2410, %v4715
      %v5100 = vld [vmem:[#allocation2] sm:$0xff]
      %v5101 = vld [vmem:[#allocation2 + $0x8] sm:$0xff]
      %v5102 = vld [vmem:[#allocation2 + $0x10] sm:$0xff]
      %v5103 = vld [vmem:[#allocation2 + $0x18] sm:$0xff]
      %v5104 = vld [vmem:[#allocation2 + $0x20] sm:$0xff]
      %v5105 = vld [vmem:[#allocation2 + $0x28] sm:$0xff]
      %v5106 = vld [vmem:[#allocation2 + $0x30] sm:$0xff]
      %v5107 = vld [vmem:[#allocation2 + $0x38] sm:$0xff]
      %v5108 = vld [vmem:[#allocation2 + $0x40] sm:$0xff]
      %v5109 = vld [vmem:[#allocation2 + $0x48] sm:$0xff]
      %v5110 = vld [vmem:[#allocation2 + $0x50] sm:$0xff]
      %v5111 = vld [vmem:[#allocation2 + $0x58] sm:$0xff]
      %v5112 = vadd.f32 %v4716, %v4728
      %v5113 = vadd.f32 %v5112, %v4740
      %v5114 = vadd.f32 %v5113, %v4752
      %v5115 = vadd.f32 %v5114, %v4764
      %v5116 = vadd.f32 %v5115, %v4776
      %v5117 = vadd.f32 %v5116, %v4788
      %v5118 = vadd.f32 %v5117, %v4800
      %v5119 = vadd.f32 %v5118, %v4812
      %v5120 = vadd.f32 %v5119, %v4824
      %v5121 = vadd.f32 %v5120, %v4836
      %v5122 = vadd.f32 %v5121, %v4848
      %v5123 = vadd.f32 %v5122, %v4860
      %v5124 = vadd.f32 %v5123, %v4872
      %v5125 = vadd.f32 %v5124, %v4884
      %v5126 = vadd.f32 %v5125, %v4896
      %v5127 = vadd.f32 %v5126, %v4908
      %v5128 = vadd.f32 %v5127, %v4920
      %v5129 = vadd.f32 %v5128, %v4932
      %v5130 = vadd.f32 %v5129, %v4944
      %v5131 = vadd.f32 %v5130, %v4956
      %v5132 = vadd.f32 %v5131, %v4968
      %v5133 = vadd.f32 %v5132, %v4980
      %v5134 = vadd.f32 %v5133, %v4992
      %v5135 = vadd.f32 %v5134, %v5004
      %v5136 = vadd.f32 %v5135, %v5016
      %v5137 = vadd.f32 %v5136, %v5028
      %v5138 = vadd.f32 %v5137, %v5040
      %v5139 = vadd.f32 %v5138, %v5052
      %v5140 = vadd.f32 %v5139, %v5064
      %v5141 = vadd.f32 %v5140, %v5076
      %v5142 = vadd.f32 %v5141, %v5088
      %v5143 = vadd.f32 %v4717, %v4729
      %v5144 = vadd.f32 %v5143, %v4741
      %v5145 = vadd.f32 %v5144, %v4753
      %v5146 = vadd.f32 %v5145, %v4765
      %v5147 = vadd.f32 %v5146, %v4777
      %v5148 = vadd.f32 %v5147, %v4789
      %v5149 = vadd.f32 %v5148, %v4801
      %v5150 = vadd.f32 %v5149, %v4813
      %v5151 = vadd.f32 %v5150, %v4825
      %v5152 = vadd.f32 %v5151, %v4837
      %v5153 = vadd.f32 %v5152, %v4849
      %v5154 = vadd.f32 %v5153, %v4861
      %v5155 = vadd.f32 %v5154, %v4873
      %v5156 = vadd.f32 %v5155, %v4885
      %v5157 = vadd.f32 %v5156, %v4897
      %v5158 = vadd.f32 %v5157, %v4909
      %v5159 = vadd.f32 %v5158, %v4921
      %v5160 = vadd.f32 %v5159, %v4933
      %v5161 = vadd.f32 %v5160, %v4945
      %v5162 = vadd.f32 %v5161, %v4957
      %v5163 = vadd.f32 %v5162, %v4969
      %v5164 = vadd.f32 %v5163, %v4981
      %v5165 = vadd.f32 %v5164, %v4993
      %v5166 = vadd.f32 %v5165, %v5005
      %v5167 = vadd.f32 %v5166, %v5017
      %v5168 = vadd.f32 %v5167, %v5029
      %v5169 = vadd.f32 %v5168, %v5041
      %v5170 = vadd.f32 %v5169, %v5053
      %v5171 = vadd.f32 %v5170, %v5065
      %v5172 = vadd.f32 %v5171, %v5077
      %v5173 = vadd.f32 %v5172, %v5089
      %v5174 = vadd.f32 %v4718, %v4730
      %v5175 = vadd.f32 %v5174, %v4742
      %v5176 = vadd.f32 %v5175, %v4754
      %v5177 = vadd.f32 %v5176, %v4766
      %v5178 = vadd.f32 %v5177, %v4778
      %v5179 = vadd.f32 %v5178, %v4790
      %v5180 = vadd.f32 %v5179, %v4802
      %v5181 = vadd.f32 %v5180, %v4814
      %v5182 = vadd.f32 %v5181, %v4826
      %v5183 = vadd.f32 %v5182, %v4838
      %v5184 = vadd.f32 %v5183, %v4850
      %v5185 = vadd.f32 %v5184, %v4862
      %v5186 = vadd.f32 %v5185, %v4874
      %v5187 = vadd.f32 %v5186, %v4886
      %v5188 = vadd.f32 %v5187, %v4898
      %v5189 = vadd.f32 %v5188, %v4910
      %v5190 = vadd.f32 %v5189, %v4922
      %v5191 = vadd.f32 %v5190, %v4934
      %v5192 = vadd.f32 %v5191, %v4946
      %v5193 = vadd.f32 %v5192, %v4958
      %v5194 = vadd.f32 %v5193, %v4970
      %v5195 = vadd.f32 %v5194, %v4982
      %v5196 = vadd.f32 %v5195, %v4994
      %v5197 = vadd.f32 %v5196, %v5006
      %v5198 = vadd.f32 %v5197, %v5018
      %v5199 = vadd.f32 %v5198, %v5030
      %v5200 = vadd.f32 %v5199, %v5042
      %v5201 = vadd.f32 %v5200, %v5054
      %v5202 = vadd.f32 %v5201, %v5066
      %v5203 = vadd.f32 %v5202, %v5078
      %v5204 = vadd.f32 %v5203, %v5090
      %v5205 = vadd.f32 %v4719, %v4731
      %v5206 = vadd.f32 %v5205, %v4743
      %v5207 = vadd.f32 %v5206, %v4755
      %v5208 = vadd.f32 %v5207, %v4767
      %v5209 = vadd.f32 %v5208, %v4779
      %v5210 = vadd.f32 %v5209, %v4791
      %v5211 = vadd.f32 %v5210, %v4803
      %v5212 = vadd.f32 %v5211, %v4815
      %v5213 = vadd.f32 %v5212, %v4827
      %v5214 = vadd.f32 %v5213, %v4839
      %v5215 = vadd.f32 %v5214, %v4851
      %v5216 = vadd.f32 %v5215, %v4863
      %v5217 = vadd.f32 %v5216, %v4875
      %v5218 = vadd.f32 %v5217, %v4887
      %v5219 = vadd.f32 %v5218, %v4899
      %v5220 = vadd.f32 %v5219, %v4911
      %v5221 = vadd.f32 %v5220, %v4923
      %v5222 = vadd.f32 %v5221, %v4935
      %v5223 = vadd.f32 %v5222, %v4947
      %v5224 = vadd.f32 %v5223, %v4959
      %v5225 = vadd.f32 %v5224, %v4971
      %v5226 = vadd.f32 %v5225, %v4983
      %v5227 = vadd.f32 %v5226, %v4995
      %v5228 = vadd.f32 %v5227, %v5007
      %v5229 = vadd.f32 %v5228, %v5019
      %v5230 = vadd.f32 %v5229, %v5031
      %v5231 = vadd.f32 %v5230, %v5043
      %v5232 = vadd.f32 %v5231, %v5055
      %v5233 = vadd.f32 %v5232, %v5067
      %v5234 = vadd.f32 %v5233, %v5079
      %v5235 = vadd.f32 %v5234, %v5091
      %v5236 = vadd.f32 %v4720, %v4732
      %v5237 = vadd.f32 %v5236, %v4744
      %v5238 = vadd.f32 %v5237, %v4756
      %v5239 = vadd.f32 %v5238, %v4768
      %v5240 = vadd.f32 %v5239, %v4780
      %v5241 = vadd.f32 %v5240, %v4792
      %v5242 = vadd.f32 %v5241, %v4804
      %v5243 = vadd.f32 %v5242, %v4816
      %v5244 = vadd.f32 %v5243, %v4828
      %v5245 = vadd.f32 %v5244, %v4840
      %v5246 = vadd.f32 %v5245, %v4852
      %v5247 = vadd.f32 %v5246, %v4864
      %v5248 = vadd.f32 %v5247, %v4876
      %v5249 = vadd.f32 %v5248, %v4888
      %v5250 = vadd.f32 %v5249, %v4900
      %v5251 = vadd.f32 %v5250, %v4912
      %v5252 = vadd.f32 %v5251, %v4924
      %v5253 = vadd.f32 %v5252, %v4936
      %v5254 = vadd.f32 %v5253, %v4948
      %v5255 = vadd.f32 %v5254, %v4960
      %v5256 = vadd.f32 %v5255, %v4972
      %v5257 = vadd.f32 %v5256, %v4984
      %v5258 = vadd.f32 %v5257, %v4996
      %v5259 = vadd.f32 %v5258, %v5008
      %v5260 = vadd.f32 %v5259, %v5020
      %v5261 = vadd.f32 %v5260, %v5032
      %v5262 = vadd.f32 %v5261, %v5044
      %v5263 = vadd.f32 %v5262, %v5056
      %v5264 = vadd.f32 %v5263, %v5068
      %v5265 = vadd.f32 %v5264, %v5080
      %v5266 = vadd.f32 %v5265, %v5092
      %v5267 = vadd.f32 %v4721, %v4733
      %v5268 = vadd.f32 %v5267, %v4745
      %v5269 = vadd.f32 %v5268, %v4757
      %v5270 = vadd.f32 %v5269, %v4769
      %v5271 = vadd.f32 %v5270, %v4781
      %v5272 = vadd.f32 %v5271, %v4793
      %v5273 = vadd.f32 %v5272, %v4805
      %v5274 = vadd.f32 %v5273, %v4817
      %v5275 = vadd.f32 %v5274, %v4829
      %v5276 = vadd.f32 %v5275, %v4841
      %v5277 = vadd.f32 %v5276, %v4853
      %v5278 = vadd.f32 %v5277, %v4865
      %v5279 = vadd.f32 %v5278, %v4877
      %v5280 = vadd.f32 %v5279, %v4889
      %v5281 = vadd.f32 %v5280, %v4901
      %v5282 = vadd.f32 %v5281, %v4913
      %v5283 = vadd.f32 %v5282, %v4925
      %v5284 = vadd.f32 %v5283, %v4937
      %v5285 = vadd.f32 %v5284, %v4949
      %v5286 = vadd.f32 %v5285, %v4961
      %v5287 = vadd.f32 %v5286, %v4973
      %v5288 = vadd.f32 %v5287, %v4985
      %v5289 = vadd.f32 %v5288, %v4997
      %v5290 = vadd.f32 %v5289, %v5009
      %v5291 = vadd.f32 %v5290, %v5021
      %v5292 = vadd.f32 %v5291, %v5033
      %v5293 = vadd.f32 %v5292, %v5045
      %v5294 = vadd.f32 %v5293, %v5057
      %v5295 = vadd.f32 %v5294, %v5069
      %v5296 = vadd.f32 %v5295, %v5081
      %v5297 = vadd.f32 %v5296, %v5093
      %v5298 = vadd.f32 %v4722, %v4734
      %v5299 = vadd.f32 %v5298, %v4746
      %v5300 = vadd.f32 %v5299, %v4758
      %v5301 = vadd.f32 %v5300, %v4770
      %v5302 = vadd.f32 %v5301, %v4782
      %v5303 = vadd.f32 %v5302, %v4794
      %v5304 = vadd.f32 %v5303, %v4806
      %v5305 = vadd.f32 %v5304, %v4818
      %v5306 = vadd.f32 %v5305, %v4830
      %v5307 = vadd.f32 %v5306, %v4842
      %v5308 = vadd.f32 %v5307, %v4854
      %v5309 = vadd.f32 %v5308, %v4866
      %v5310 = vadd.f32 %v5309, %v4878
      %v5311 = vadd.f32 %v5310, %v4890
      %v5312 = vadd.f32 %v5311, %v4902
      %v5313 = vadd.f32 %v5312, %v4914
      %v5314 = vadd.f32 %v5313, %v4926
      %v5315 = vadd.f32 %v5314, %v4938
      %v5316 = vadd.f32 %v5315, %v4950
      %v5317 = vadd.f32 %v5316, %v4962
      %v5318 = vadd.f32 %v5317, %v4974
      %v5319 = vadd.f32 %v5318, %v4986
      %v5320 = vadd.f32 %v5319, %v4998
      %v5321 = vadd.f32 %v5320, %v5010
      %v5322 = vadd.f32 %v5321, %v5022
      %v5323 = vadd.f32 %v5322, %v5034
      %v5324 = vadd.f32 %v5323, %v5046
      %v5325 = vadd.f32 %v5324, %v5058
      %v5326 = vadd.f32 %v5325, %v5070
      %v5327 = vadd.f32 %v5326, %v5082
      %v5328 = vadd.f32 %v5327, %v5094
      %v5329 = vadd.f32 %v4723, %v4735
      %v5330 = vadd.f32 %v5329, %v4747
      %v5331 = vadd.f32 %v5330, %v4759
      %v5332 = vadd.f32 %v5331, %v4771
      %v5333 = vadd.f32 %v5332, %v4783
      %v5334 = vadd.f32 %v5333, %v4795
      %v5335 = vadd.f32 %v5334, %v4807
      %v5336 = vadd.f32 %v5335, %v4819
      %v5337 = vadd.f32 %v5336, %v4831
      %v5338 = vadd.f32 %v5337, %v4843
      %v5339 = vadd.f32 %v5338, %v4855
      %v5340 = vadd.f32 %v5339, %v4867
      %v5341 = vadd.f32 %v5340, %v4879
      %v5342 = vadd.f32 %v5341, %v4891
      %v5343 = vadd.f32 %v5342, %v4903
      %v5344 = vadd.f32 %v5343, %v4915
      %v5345 = vadd.f32 %v5344, %v4927
      %v5346 = vadd.f32 %v5345, %v4939
      %v5347 = vadd.f32 %v5346, %v4951
      %v5348 = vadd.f32 %v5347, %v4963
      %v5349 = vadd.f32 %v5348, %v4975
      %v5350 = vadd.f32 %v5349, %v4987
      %v5351 = vadd.f32 %v5350, %v4999
      %v5352 = vadd.f32 %v5351, %v5011
      %v5353 = vadd.f32 %v5352, %v5023
      %v5354 = vadd.f32 %v5353, %v5035
      %v5355 = vadd.f32 %v5354, %v5047
      %v5356 = vadd.f32 %v5355, %v5059
      %v5357 = vadd.f32 %v5356, %v5071
      %v5358 = vadd.f32 %v5357, %v5083
      %v5359 = vadd.f32 %v5358, %v5095
      %v5360 = vadd.f32 %v4724, %v4736
      %v5361 = vadd.f32 %v5360, %v4748
      %v5362 = vadd.f32 %v5361, %v4760
      %v5363 = vadd.f32 %v5362, %v4772
      %v5364 = vadd.f32 %v5363, %v4784
      %v5365 = vadd.f32 %v5364, %v4796
      %v5366 = vadd.f32 %v5365, %v4808
      %v5367 = vadd.f32 %v5366, %v4820
      %v5368 = vadd.f32 %v5367, %v4832
      %v5369 = vadd.f32 %v5368, %v4844
      %v5370 = vadd.f32 %v5369, %v4856
      %v5371 = vadd.f32 %v5370, %v4868
      %v5372 = vadd.f32 %v5371, %v4880
      %v5373 = vadd.f32 %v5372, %v4892
      %v5374 = vadd.f32 %v5373, %v4904
      %v5375 = vadd.f32 %v5374, %v4916
      %v5376 = vadd.f32 %v5375, %v4928
      %v5377 = vadd.f32 %v5376, %v4940
      %v5378 = vadd.f32 %v5377, %v4952
      %v5379 = vadd.f32 %v5378, %v4964
      %v5380 = vadd.f32 %v5379, %v4976
      %v5381 = vadd.f32 %v5380, %v4988
      %v5382 = vadd.f32 %v5381, %v5000
      %v5383 = vadd.f32 %v5382, %v5012
      %v5384 = vadd.f32 %v5383, %v5024
      %v5385 = vadd.f32 %v5384, %v5036
      %v5386 = vadd.f32 %v5385, %v5048
      %v5387 = vadd.f32 %v5386, %v5060
      %v5388 = vadd.f32 %v5387, %v5072
      %v5389 = vadd.f32 %v5388, %v5084
      %v5390 = vadd.f32 %v5389, %v5096
      %v5391 = vadd.f32 %v4725, %v4737
      %v5392 = vadd.f32 %v5391, %v4749
      %v5393 = vadd.f32 %v5392, %v4761
      %v5394 = vadd.f32 %v5393, %v4773
      %v5395 = vadd.f32 %v5394, %v4785
      %v5396 = vadd.f32 %v5395, %v4797
      %v5397 = vadd.f32 %v5396, %v4809
      %v5398 = vadd.f32 %v5397, %v4821
      %v5399 = vadd.f32 %v5398, %v4833
      %v5400 = vadd.f32 %v5399, %v4845
      %v5401 = vadd.f32 %v5400, %v4857
      %v5402 = vadd.f32 %v5401, %v4869
      %v5403 = vadd.f32 %v5402, %v4881
      %v5404 = vadd.f32 %v5403, %v4893
      %v5405 = vadd.f32 %v5404, %v4905
      %v5406 = vadd.f32 %v5405, %v4917
      %v5407 = vadd.f32 %v5406, %v4929
      %v5408 = vadd.f32 %v5407, %v4941
      %v5409 = vadd.f32 %v5408, %v4953
      %v5410 = vadd.f32 %v5409, %v4965
      %v5411 = vadd.f32 %v5410, %v4977
      %v5412 = vadd.f32 %v5411, %v4989
      %v5413 = vadd.f32 %v5412, %v5001
      %v5414 = vadd.f32 %v5413, %v5013
      %v5415 = vadd.f32 %v5414, %v5025
      %v5416 = vadd.f32 %v5415, %v5037
      %v5417 = vadd.f32 %v5416, %v5049
      %v5418 = vadd.f32 %v5417, %v5061
      %v5419 = vadd.f32 %v5418, %v5073
      %v5420 = vadd.f32 %v5419, %v5085
      %v5421 = vadd.f32 %v5420, %v5097
      %v5422 = vadd.f32 %v4726, %v4738
      %v5423 = vadd.f32 %v5422, %v4750
      %v5424 = vadd.f32 %v5423, %v4762
      %v5425 = vadd.f32 %v5424, %v4774
      %v5426 = vadd.f32 %v5425, %v4786
      %v5427 = vadd.f32 %v5426, %v4798
      %v5428 = vadd.f32 %v5427, %v4810
      %v5429 = vadd.f32 %v5428, %v4822
      %v5430 = vadd.f32 %v5429, %v4834
      %v5431 = vadd.f32 %v5430, %v4846
      %v5432 = vadd.f32 %v5431, %v4858
      %v5433 = vadd.f32 %v5432, %v4870
      %v5434 = vadd.f32 %v5433, %v4882
      %v5435 = vadd.f32 %v5434, %v4894
      %v5436 = vadd.f32 %v5435, %v4906
      %v5437 = vadd.f32 %v5436, %v4918
      %v5438 = vadd.f32 %v5437, %v4930
      %v5439 = vadd.f32 %v5438, %v4942
      %v5440 = vadd.f32 %v5439, %v4954
      %v5441 = vadd.f32 %v5440, %v4966
      %v5442 = vadd.f32 %v5441, %v4978
      %v5443 = vadd.f32 %v5442, %v4990
      %v5444 = vadd.f32 %v5443, %v5002
      %v5445 = vadd.f32 %v5444, %v5014
      %v5446 = vadd.f32 %v5445, %v5026
      %v5447 = vadd.f32 %v5446, %v5038
      %v5448 = vadd.f32 %v5447, %v5050
      %v5449 = vadd.f32 %v5448, %v5062
      %v5450 = vadd.f32 %v5449, %v5074
      %v5451 = vadd.f32 %v5450, %v5086
      %v5452 = vadd.f32 %v5451, %v5098
      %v5453 = vadd.f32 %v4727, %v4739
      %v5454 = vadd.f32 %v5453, %v4751
      %v5455 = vadd.f32 %v5454, %v4763
      %v5456 = vadd.f32 %v5455, %v4775
      %v5457 = vadd.f32 %v5456, %v4787
      %v5458 = vadd.f32 %v5457, %v4799
      %v5459 = vadd.f32 %v5458, %v4811
      %v5460 = vadd.f32 %v5459, %v4823
      %v5461 = vadd.f32 %v5460, %v4835
      %v5462 = vadd.f32 %v5461, %v4847
      %v5463 = vadd.f32 %v5462, %v4859
      %v5464 = vadd.f32 %v5463, %v4871
      %v5465 = vadd.f32 %v5464, %v4883
      %v5466 = vadd.f32 %v5465, %v4895
      %v5467 = vadd.f32 %v5466, %v4907
      %v5468 = vadd.f32 %v5467, %v4919
      %v5469 = vadd.f32 %v5468, %v4931
      %v5470 = vadd.f32 %v5469, %v4943
      %v5471 = vadd.f32 %v5470, %v4955
      %v5472 = vadd.f32 %v5471, %v4967
      %v5473 = vadd.f32 %v5472, %v4979
      %v5474 = vadd.f32 %v5473, %v4991
      %v5475 = vadd.f32 %v5474, %v5003
      %v5476 = vadd.f32 %v5475, %v5015
      %v5477 = vadd.f32 %v5476, %v5027
      %v5478 = vadd.f32 %v5477, %v5039
      %v5479 = vadd.f32 %v5478, %v5051
      %v5480 = vadd.f32 %v5479, %v5063
      %v5481 = vadd.f32 %v5480, %v5075
      %v5482 = vadd.f32 %v5481, %v5087
      %v5483 = vadd.f32 %v5482, %v5099
      %v5484 = vadd.f32 %v5100, %v5142
      %v5485 = vadd.f32 %v5101, %v5173
      %v5486 = vadd.f32 %v5102, %v5204
      %v5487 = vadd.f32 %v5103, %v5235
      %v5488 = vadd.f32 %v5104, %v5266
      %v5489 = vadd.f32 %v5105, %v5297
      %v5490 = vadd.f32 %v5106, %v5328
      %v5491 = vadd.f32 %v5107, %v5359
      %v5492 = vadd.f32 %v5108, %v5390
      %v5493 = vadd.f32 %v5109, %v5421
      %v5494 = vadd.f32 %v5110, %v5452
      %v5495 = vadd.f32 %v5111, %v5483
      %5496 = vst [vmem:[#allocation2] sm:$0xff] %v5484
      %5497 = vst [vmem:[#allocation2 + $0x8] sm:$0xff] %v5485
      %5498 = vst [vmem:[#allocation2 + $0x10] sm:$0xff] %v5486
      %5499 = vst [vmem:[#allocation2 + $0x18] sm:$0xff] %v5487
      %5500 = vst [vmem:[#allocation2 + $0x20] sm:$0xff] %v5488
      %5501 = vst [vmem:[#allocation2 + $0x28] sm:$0xff] %v5489
      %5502 = vst [vmem:[#allocation2 + $0x30] sm:$0xff] %v5490
      %5503 = vst [vmem:[#allocation2 + $0x38] sm:$0xff] %v5491
      %5504 = vst [vmem:[#allocation2 + $0x40] sm:$0xff] %v5492
      %5505 = vst [vmem:[#allocation2 + $0x48] sm:$0xff] %v5493
      %5506 = vst [vmem:[#allocation2 + $0x50] sm:$0xff] %v5494
      %5507 = vst [vmem:[#allocation2 + $0x58] sm:$0xff] %v5495
      // Predicated region
      $region45: #{forward.2} parent=39 // pred_check
        %p5508 = pneg %p252
      $region46: #{forward.2} parent=39 // pred_check_branch
        %5510 = sbr.rel (%p5508) target = $region48
      $region47: #{forward.2} parent=39 // pred_region
        %v5511 = vld [vmem:[#allocation2] sm:$0xff]
        %v5512 = vld [vmem:[#allocation2 + $0x8] sm:$0xff]
        %v5513 = vld [vmem:[#allocation2 + $0x10] sm:$0xff]
        %v5514 = vld [vmem:[#allocation2 + $0x18] sm:$0xff]
        %v5515 = vld [vmem:[#allocation2 + $0x20] sm:$0xff]
        %v5516 = vld [vmem:[#allocation2 + $0x28] sm:$0xff]
        %v5517 = vld [vmem:[#allocation2 + $0x30] sm:$0xff]
        %v5518 = vld [vmem:[#allocation2 + $0x38] sm:$0xff]
        %v5519 = vld [vmem:[#allocation2 + $0x40] sm:$0xff]
        %v5520 = vld [vmem:[#allocation2 + $0x48] sm:$0xff]
        %v5521 = vld [vmem:[#allocation2 + $0x50] sm:$0xff]
        %v5522 = vld [vmem:[#allocation2 + $0x58] sm:$0xff]
        %v5523 = vrot.slane %v5511, 4
        %v5524 = vadd.f32 %v5511, %v5523
        %v5525 = vrot.slane %v5524, 2
        %v5526 = vadd.f32 %v5524, %v5525
        %v5527 = vrot.slane %v5526, 1
        %v5528 = vadd.f32 %v5526, %v5527
        %v5529 = vrot.slane %v5512, 4
        %v5530 = vadd.f32 %v5512, %v5529
        %v5531 = vrot.slane %v5530, 2
        %v5532 = vadd.f32 %v5530, %v5531
        %v5533 = vrot.slane %v5532, 1
        %v5534 = vadd.f32 %v5532, %v5533
        %v5535 = vrot.slane %v5513, 4
        %v5536 = vadd.f32 %v5513, %v5535
        %v5537 = vrot.slane %v5536, 2
        %v5538 = vadd.f32 %v5536, %v5537
        %v5539 = vrot.slane %v5538, 1
        %v5540 = vadd.f32 %v5538, %v5539
        %v5541 = vrot.slane %v5514, 4
        %v5542 = vadd.f32 %v5514, %v5541
        %v5543 = vrot.slane %v5542, 2
        %v5544 = vadd.f32 %v5542, %v5543
        %v5545 = vrot.slane %v5544, 1
        %v5546 = vadd.f32 %v5544, %v5545
        %v5547 = vrot.slane %v5515, 4
        %v5548 = vadd.f32 %v5515, %v5547
        %v5549 = vrot.slane %v5548, 2
        %v5550 = vadd.f32 %v5548, %v5549
        %v5551 = vrot.slane %v5550, 1
        %v5552 = vadd.f32 %v5550, %v5551
        %v5553 = vrot.slane %v5516, 4
        %v5554 = vadd.f32 %v5516, %v5553
        %v5555 = vrot.slane %v5554, 2
        %v5556 = vadd.f32 %v5554, %v5555
        %v5557 = vrot.slane %v5556, 1
        %v5558 = vadd.f32 %v5556, %v5557
        %v5559 = vrot.slane %v5517, 4
        %v5560 = vadd.f32 %v5517, %v5559
        %v5561 = vrot.slane %v5560, 2
        %v5562 = vadd.f32 %v5560, %v5561
        %v5563 = vrot.slane %v5562, 1
        %v5564 = vadd.f32 %v5562, %v5563
        %v5565 = vrot.slane %v5518, 4
        %v5566 = vadd.f32 %v5518, %v5565
        %v5567 = vrot.slane %v5566, 2
        %v5568 = vadd.f32 %v5566, %v5567
        %v5569 = vrot.slane %v5568, 1
        %v5570 = vadd.f32 %v5568, %v5569
        %v5571 = vrot.slane %v5519, 4
        %v5572 = vadd.f32 %v5519, %v5571
        %v5573 = vrot.slane %v5572, 2
        %v5574 = vadd.f32 %v5572, %v5573
        %v5575 = vrot.slane %v5574, 1
        %v5576 = vadd.f32 %v5574, %v5575
        %v5577 = vrot.slane %v5520, 4
        %v5578 = vadd.f32 %v5520, %v5577
        %v5579 = vrot.slane %v5578, 2
        %v5580 = vadd.f32 %v5578, %v5579
        %v5581 = vrot.slane %v5580, 1
        %v5582 = vadd.f32 %v5580, %v5581
        %v5583 = vrot.slane %v5521, 4
        %v5584 = vadd.f32 %v5521, %v5583
        %v5585 = vrot.slane %v5584, 2
        %v5586 = vadd.f32 %v5584, %v5585
        %v5587 = vrot.slane %v5586, 1
        %v5588 = vadd.f32 %v5586, %v5587
        %v5589 = vrot.slane %v5522, 4
        %v5590 = vadd.f32 %v5522, %v5589
        %v5591 = vrot.slane %v5590, 2
        %v5592 = vadd.f32 %v5590, %v5591
        %v5593 = vrot.slane %v5592, 1
        %v5594 = vadd.f32 %v5592, %v5593
        %v5595 = vmul.f32 %v5528, 0.00390625
        %v5596 = vmul.f32 %v5534, 0.00390625
        %v5597 = vmul.f32 %v5540, 0.00390625
        %v5598 = vmul.f32 %v5546, 0.00390625
        %v5599 = vmul.f32 %v5552, 0.00390625
        %v5600 = vmul.f32 %v5558, 0.00390625
        %v5601 = vmul.f32 %v5564, 0.00390625
        %v5602 = vmul.f32 %v5570, 0.00390625
        %v5603 = vmul.f32 %v5576, 0.00390625
        %v5604 = vmul.f32 %v5582, 0.00390625
        %v5605 = vmul.f32 %v5588, 0.00390625
        %v5606 = vmul.f32 %v5594, 0.00390625
        %v5619 = vcombine.low %v5595, %v5596
        %v5620 = vcombine.low %v5597, %v5598
        %v5621 = vcombine.low %v5599, %v5600
        %v5622 = vcombine.low %v5601, %v5602
        %v5624 = vunpack.c.l.s4 1966171168
        %v5625 = vunpack.c.0.s8 %v5624
        %v5626 = vlaneseq
        %v5627 = vshrl.u32 %v5626, 7
        %v5628 = vsub.s32 %v5625, %v5627
        %v5629 = vrot.slane %v5619, %v5628
        %v5631 = vunpack.c.l.s4 1966171168
        %v5632 = vunpack.c.0.s8 %v5631
        %v5633 = vlaneseq
        %v5634 = vshrl.u32 %v5633, 7
        %v5635 = vsub.s32 %v5632, %v5634
        %v5636 = vrot.slane %v5620, %v5635
        %v5638 = vunpack.c.l.s4 1966171168
        %v5639 = vunpack.c.0.s8 %v5638
        %v5640 = vlaneseq
        %v5641 = vshrl.u32 %v5640, 7
        %v5642 = vsub.s32 %v5639, %v5641
        %v5643 = vrot.slane %v5621, %v5642
        %v5645 = vunpack.c.l.s4 1966171168
        %v5646 = vunpack.c.0.s8 %v5645
        %v5647 = vlaneseq
        %v5648 = vshrl.u32 %v5647, 7
        %v5649 = vsub.s32 %v5646, %v5648
        %v5650 = vrot.slane %v5622, %v5649
        %v5651 = vcombine.low %v5629, %v5636
        %v5652 = vcombine.low %v5643, %v5650
        %v5654 = vunpack.c.l.s4 1966171168
        %v5655 = vunpack.c.0.s8 %v5654
        %v5656 = vlaneseq
        %v5657 = vshrl.u32 %v5656, 7
        %v5658 = vsub.s32 %v5655, %v5657
        %v5659 = vrot.slane %v5651, %v5658
        %v5661 = vunpack.c.l.s4 1966171168
        %v5662 = vunpack.c.0.s8 %v5661
        %v5663 = vlaneseq
        %v5664 = vshrl.u32 %v5663, 7
        %v5665 = vsub.s32 %v5662, %v5664
        %v5666 = vrot.slane %v5652, %v5665
        %v5667 = vcombine.low %v5659, %v5666
        %v5668 = vcombine.low %v5603, %v5604
        %v5669 = vcombine.low %v5605, %v5606
        %v5671 = vunpack.c.l.s4 1966171168
        %v5672 = vunpack.c.0.s8 %v5671
        %v5673 = vlaneseq
        %v5674 = vshrl.u32 %v5673, 7
        %v5675 = vsub.s32 %v5672, %v5674
        %v5676 = vrot.slane %v5668, %v5675
        %v5678 = vunpack.c.l.s4 1966171168
        %v5679 = vunpack.c.0.s8 %v5678
        %v5680 = vlaneseq
        %v5681 = vshrl.u32 %v5680, 7
        %v5682 = vsub.s32 %v5679, %v5681
        %v5683 = vrot.slane %v5669, %v5682
        %v5684 = vcombine.low %v5676, %v5683
        %v5686 = vunpack.c.l.s4 1966171168
        %v5687 = vunpack.c.0.s8 %v5686
        %v5688 = vlaneseq
        %v5689 = vshrl.u32 %v5688, 7
        %v5690 = vsub.s32 %v5687, %v5689
        %v5691 = vrot.slane %v5684, %v5690
        %5694 = vst [vmem:[%s250] sm:$0xff] %v5667
        %v5695 = vlaneseq
        %vm5696 = vcmp.ge.s32.totalorder %v5695, 0
        %vm5697 = vcmp.lt.s32.totalorder %v5695, 512
        %vm5698 = vmand %vm5696, %vm5697
        %5699 = vst.msk [vmem:[%s250 + $0x8] sm:$0xf] %vm5698, %v5691
      $region48: #{forward.2} parent=39 // pred_fallthru
        _
      %p5700 = scmp.lt.s32.totalorder %s20, 1
      %s5701 = scalar_select %p5700, %s20, 1
      %s5702 = smul.addr %s5701, 12
      %s5703 = scalar_lea.vmem %s5, %s5702
      // Predicated region
      $region49: #{forward.2} parent=39 // pred_check
        %p5704 = pneg %p158
      $region50: #{forward.2} parent=39 // pred_check_branch
        %5706 = sbr.rel (%p5704) target = $region52
      $region51: #{forward.2} parent=39 // pred_region
        _
      $region52: #{forward.2} parent=39 // pred_fallthru
        _
    $region40: #{forward.2} parent=5 // pred_fallthru
      _
    %p5707 = scmp.le.s32.totalorder 2, %s11
    // Predicated region
    $region53: #{forward.2} parent=5 // pred_check
      %p5708 = pneg %p5707
    $region54: #{forward.2} parent=5 // pred_check_branch
      %5710 = sbr.rel (%p5708) target = $region56
    $region55: #{forward.2} parent=5 // pred_region
      %s5711 = ssub.s32 %s11, 2
      // Predicated region
      $region57: #{forward.2} parent=55 // pred_check
        %p5712 = pneg %p164
      $region58: #{forward.2} parent=55 // pred_check_branch
        %5714 = sbr.rel (%p5712) target = $region60
      $region59: #{forward.2} parent=55 // pred_region
        %p5715 = scmp.lt.s32.totalorder %s22, 1
        %s5716 = scalar_select %p5715, %s22, 1
        %s5717 = smul.addr %s5716, 12
        %s5718 = scalar_lea.vmem %s5, %s5717
      $region60: #{forward.2} parent=55 // pred_fallthru
        _
    $region56: #{forward.2} parent=5 // pred_fallthru
      _
  $region6: #{forward.2} parent=0 // loop_footer
    %s15 = sadd.s32 1, %s11
  $region7: #{forward.2} parent=0 // loop_footer_branch
    %10 = sbr.rel target = $region3
  $region8: #{forward.2} parent=0 // loop_exit
    _

// kernel: forward.3
$region0: #{forward.3}
  #allocation0 [shape = 'u32[]', space=smem, size = 0x4, offset = 0x4, fixed_abs, tag = 'smem constant byte address 0x4 - core index']
  #allocation1 [shape = 'u32[144,128]{1,0:T(1,128)}', space=vmem, size = 0x12000, scoped, tag = 'internal scratch']
  %s0 = inlined_call_operand.vmem [shape: bf16[8,1536], index: 0, kind: input, shape index: {}]
  %s1 = inlined_call_operand.vmem [shape: bf16[1536,512], index: 1, kind: input, shape index: {}]
  %s2 = inlined_call_operand.vmem [shape: f32[1,512], index: 2, kind: input, shape index: {}]
  %s3 = inlined_call_operand.vmem [shape: bf16[512,256], index: 3, kind: input, shape index: {}]
  %s4 = inlined_call_operand.vmem [shape: f32[1,256], index: 4, kind: input, shape index: {}]
  %s5 = inlined_call_operand.vmem [shape: bf16[256,128], index: 5, kind: input, shape index: {}]
  %s6 = inlined_call_operand.vmem [shape: f32[1,128], index: 6, kind: input, shape index: {}]
  %s7 = inlined_call_operand.vmem [shape: f32[8,128], index: 7, kind: output, shape index: {}]
  %s8 = sld [smem:[#allocation0]]
  $region38: #{forward.3} parent=0
    _
  %s10 = ssub.s32 1, %s8
  %s11 = scalar_select 0, %s10, %s8
  // Predicated region
  $region2: #{forward.3} parent=0 // pred_check
    _
  $region3: #{forward.3} parent=0 // pred_check_branch
    %13 = sbr.rel (0) target = $region5
  $region4: #{forward.3} parent=0 // pred_region
    _
  $region5: #{forward.3} parent=0 // pred_fallthru
    _
  // Predicated region
  $region6: #{forward.3} parent=0 // pred_check
    _
  $region7: #{forward.3} parent=0 // pred_check_branch
    %15 = sbr.rel (0) target = $region9
  $region8: #{forward.3} parent=0 // pred_region
    _
  $region9: #{forward.3} parent=0 // pred_fallthru
    _
  // Predicated region
  $region10: #{forward.3} parent=0 // pred_check
    _
  $region11: #{forward.3} parent=0 // pred_check_branch
    %17 = sbr.rel (0) target = $region13
  $region12: #{forward.3} parent=0 // pred_region
    _
  $region13: #{forward.3} parent=0 // pred_fallthru
    _
  // Predicated region
  $region14: #{forward.3} parent=0 // pred_check
    _
  $region15: #{forward.3} parent=0 // pred_check_branch
    %19 = sbr.rel (0) target = $region17
  $region16: #{forward.3} parent=0 // pred_region
    _
  $region17: #{forward.3} parent=0 // pred_fallthru
    _
  // Predicated region
  $region18: #{forward.3} parent=0 // pred_check
    _
  $region19: #{forward.3} parent=0 // pred_check_branch
    %21 = sbr.rel (0) target = $region21
  $region20: #{forward.3} parent=0 // pred_region
    _
  $region21: #{forward.3} parent=0 // pred_fallthru
    _
  // Predicated region
  $region22: #{forward.3} parent=0 // pred_check
    _
  $region23: #{forward.3} parent=0 // pred_check_branch
    %23 = sbr.rel (0) target = $region25
  $region24: #{forward.3} parent=0 // pred_region
    _
  $region25: #{forward.3} parent=0 // pred_fallthru
    _
  // Predicated region
  $region26: #{forward.3} parent=0 // pred_check
    _
  $region27: #{forward.3} parent=0 // pred_check_branch
    %25 = sbr.rel (0) target = $region29
  $region28: #{forward.3} parent=0 // pred_region
    _
  $region29: #{forward.3} parent=0 // pred_fallthru
    _
  %v27 = vld [vmem:[%s0] sm:$0xff]
  %v28 = vld [vmem:[%s0 + $0x8] sm:$0xff]
  %v29 = vld [vmem:[%s0 + $0x10] sm:$0xff]
  %v30 = vld [vmem:[%s0 + $0x18] sm:$0xff]
  %v31 = vld [vmem:[%s0 + $0x20] sm:$0xff]
  %v32 = vld [vmem:[%s0 + $0x28] sm:$0xff]
  %v33 = vld [vmem:[%s1] sm:$0xff]
  %v34 = vld [vmem:[%s1 + $0x8] sm:$0xff]
  %v35 = vld [vmem:[%s1 + $0x10] sm:$0xff]
  %v36 = vld [vmem:[%s1 + $0x18] sm:$0xff]
  %v37 = vld [vmem:[%s1 + $0x20] sm:$0xff]
  %v38 = vld [vmem:[%s1 + $0x28] sm:$0xff]
  %v39 = vld [vmem:[%s1 + $0x30] sm:$0xff]
  %v40 = vld [vmem:[%s1 + $0x38] sm:$0xff]
  %v41 = vld [vmem:[%s1 + $0x40] sm:$0xff]
  %v42 = vld [vmem:[%s1 + $0x48] sm:$0xff]
  %v43 = vld [vmem:[%s1 + $0x50] sm:$0xff]
  %v44 = vld [vmem:[%s1 + $0x58] sm:$0xff]
  %v45 = vld [vmem:[%s1 + $0x60] sm:$0xff]
  %v46 = vld [vmem:[%s1 + $0x68] sm:$0xff]
  %v47 = vld [vmem:[%s1 + $0x70] sm:$0xff]
  %v48 = vld [vmem:[%s1 + $0x78] sm:$0xff]
  %v49 = vld [vmem:[%s1 + $0x80] sm:$0xff]
  %v50 = vld [vmem:[%s1 + $0x88] sm:$0xff]
  %v51 = vld [vmem:[%s1 + $0x90] sm:$0xff]
  %v52 = vld [vmem:[%s1 + $0x98] sm:$0xff]
  %v53 = vld [vmem:[%s1 + $0xa0] sm:$0xff]
  %v54 = vld [vmem:[%s1 + $0xa8] sm:$0xff]
  %v55 = vld [vmem:[%s1 + $0xb0] sm:$0xff]
  %v56 = vld [vmem:[%s1 + $0xb8] sm:$0xff]
  %v57 = vld [vmem:[%s1 + $0xc0] sm:$0xff]
  %v58 = vld [vmem:[%s1 + $0xc8] sm:$0xff]
  %v59 = vld [vmem:[%s1 + $0xd0] sm:$0xff]
  %v60 = vld [vmem:[%s1 + $0xd8] sm:$0xff]
  %v61 = vld [vmem:[%s1 + $0xe0] sm:$0xff]
  %v62 = vld [vmem:[%s1 + $0xe8] sm:$0xff]
  %v63 = vld [vmem:[%s1 + $0xf0] sm:$0xff]
  %v64 = vld [vmem:[%s1 + $0xf8] sm:$0xff]
  %v65 = vld [vmem:[%s1 + $0x100] sm:$0xff]
  %v66 = vld [vmem:[%s1 + $0x108] sm:$0xff]
  %v67 = vld [vmem:[%s1 + $0x110] sm:$0xff]
  %v68 = vld [vmem:[%s1 + $0x118] sm:$0xff]
  %v69 = vld [vmem:[%s1 + $0x120] sm:$0xff]
  %v70 = vld [vmem:[%s1 + $0x128] sm:$0xff]
  %v71 = vld [vmem:[%s1 + $0x130] sm:$0xff]
  %v72 = vld [vmem:[%s1 + $0x138] sm:$0xff]
  %v73 = vld [vmem:[%s1 + $0x140] sm:$0xff]
  %v74 = vld [vmem:[%s1 + $0x148] sm:$0xff]
  %v75 = vld [vmem:[%s1 + $0x150] sm:$0xff]
  %v76 = vld [vmem:[%s1 + $0x158] sm:$0xff]
  %v77 = vld [vmem:[%s1 + $0x160] sm:$0xff]
  %v78 = vld [vmem:[%s1 + $0x168] sm:$0xff]
  %v79 = vld [vmem:[%s1 + $0x170] sm:$0xff]
  %v80 = vld [vmem:[%s1 + $0x178] sm:$0xff]
  %v81 = vld [vmem:[%s1 + $0x180] sm:$0xff]
  %v82 = vld [vmem:[%s1 + $0x188] sm:$0xff]
  %v83 = vld [vmem:[%s1 + $0x190] sm:$0xff]
  %v84 = vld [vmem:[%s1 + $0x198] sm:$0xff]
  %v85 = vld [vmem:[%s1 + $0x1a0] sm:$0xff]
  %v86 = vld [vmem:[%s1 + $0x1a8] sm:$0xff]
  %v87 = vld [vmem:[%s1 + $0x1b0] sm:$0xff]
  %v88 = vld [vmem:[%s1 + $0x1b8] sm:$0xff]
  %v89 = vld [vmem:[%s1 + $0x1c0] sm:$0xff]
  %v90 = vld [vmem:[%s1 + $0x1c8] sm:$0xff]
  %v91 = vld [vmem:[%s1 + $0x1d0] sm:$0xff]
  %v92 = vld [vmem:[%s1 + $0x1d8] sm:$0xff]
  %v93 = vld [vmem:[%s1 + $0x1e0] sm:$0xff]
  %v94 = vld [vmem:[%s1 + $0x1e8] sm:$0xff]
  %v95 = vld [vmem:[%s1 + $0x1f0] sm:$0xff]
  %v96 = vld [vmem:[%s1 + $0x1f8] sm:$0xff]
  %v97 = vld [vmem:[%s1 + $0x200] sm:$0xff]
  %v98 = vld [vmem:[%s1 + $0x208] sm:$0xff]
  %v99 = vld [vmem:[%s1 + $0x210] sm:$0xff]
  %v100 = vld [vmem:[%s1 + $0x218] sm:$0xff]
  %v101 = vld [vmem:[%s1 + $0x220] sm:$0xff]
  %v102 = vld [vmem:[%s1 + $0x228] sm:$0xff]
  %v103 = vld [vmem:[%s1 + $0x230] sm:$0xff]
  %v104 = vld [vmem:[%s1 + $0x238] sm:$0xff]
  %v105 = vld [vmem:[%s1 + $0x240] sm:$0xff]
  %v106 = vld [vmem:[%s1 + $0x248] sm:$0xff]
  %v107 = vld [vmem:[%s1 + $0x250] sm:$0xff]
  %v108 = vld [vmem:[%s1 + $0x258] sm:$0xff]
  %v109 = vld [vmem:[%s1 + $0x260] sm:$0xff]
  %v110 = vld [vmem:[%s1 + $0x268] sm:$0xff]
  %v111 = vld [vmem:[%s1 + $0x270] sm:$0xff]
  %v112 = vld [vmem:[%s1 + $0x278] sm:$0xff]
  %v113 = vld [vmem:[%s1 + $0x280] sm:$0xff]
  %v114 = vld [vmem:[%s1 + $0x288] sm:$0xff]
  %v115 = vld [vmem:[%s1 + $0x290] sm:$0xff]
  %v116 = vld [vmem:[%s1 + $0x298] sm:$0xff]
  %v117 = vld [vmem:[%s1 + $0x2a0] sm:$0xff]
  %v118 = vld [vmem:[%s1 + $0x2a8] sm:$0xff]
  %v119 = vld [vmem:[%s1 + $0x2b0] sm:$0xff]
  %v120 = vld [vmem:[%s1 + $0x2b8] sm:$0xff]
  %v121 = vld [vmem:[%s1 + $0x2c0] sm:$0xff]
  %v122 = vld [vmem:[%s1 + $0x2c8] sm:$0xff]
  %v123 = vld [vmem:[%s1 + $0x2d0] sm:$0xff]
  %v124 = vld [vmem:[%s1 + $0x2d8] sm:$0xff]
  %v125 = vld [vmem:[%s1 + $0x2e0] sm:$0xff]
  %v126 = vld [vmem:[%s1 + $0x2e8] sm:$0xff]
  %v127 = vld [vmem:[%s1 + $0x2f0] sm:$0xff]
  %v128 = vld [vmem:[%s1 + $0x2f8] sm:$0xff]
  %v129 = vld [vmem:[%s1 + $0x300] sm:$0xff]
  %v130 = vld [vmem:[%s1 + $0x308] sm:$0xff]
  %v131 = vld [vmem:[%s1 + $0x310] sm:$0xff]
  %v132 = vld [vmem:[%s1 + $0x318] sm:$0xff]
  %v133 = vld [vmem:[%s1 + $0x320] sm:$0xff]
  %v134 = vld [vmem:[%s1 + $0x328] sm:$0xff]
  %v135 = vld [vmem:[%s1 + $0x330] sm:$0xff]
  %v136 = vld [vmem:[%s1 + $0x338] sm:$0xff]
  %v137 = vld [vmem:[%s1 + $0x340] sm:$0xff]
  %v138 = vld [vmem:[%s1 + $0x348] sm:$0xff]
  %v139 = vld [vmem:[%s1 + $0x350] sm:$0xff]
  %v140 = vld [vmem:[%s1 + $0x358] sm:$0xff]
  %v141 = vld [vmem:[%s1 + $0x360] sm:$0xff]
  %v142 = vld [vmem:[%s1 + $0x368] sm:$0xff]
  %v143 = vld [vmem:[%s1 + $0x370] sm:$0xff]
  %v144 = vld [vmem:[%s1 + $0x378] sm:$0xff]
  %v145 = vld [vmem:[%s1 + $0x380] sm:$0xff]
  %v146 = vld [vmem:[%s1 + $0x388] sm:$0xff]
  %v147 = vld [vmem:[%s1 + $0x390] sm:$0xff]
  %v148 = vld [vmem:[%s1 + $0x398] sm:$0xff]
  %v149 = vld [vmem:[%s1 + $0x3a0] sm:$0xff]
  %v150 = vld [vmem:[%s1 + $0x3a8] sm:$0xff]
  %v151 = vld [vmem:[%s1 + $0x3b0] sm:$0xff]
  %v152 = vld [vmem:[%s1 + $0x3b8] sm:$0xff]
  %v153 = vld [vmem:[%s1 + $0x3c0] sm:$0xff]
  %v154 = vld [vmem:[%s1 + $0x3c8] sm:$0xff]
  %v155 = vld [vmem:[%s1 + $0x3d0] sm:$0xff]
  %v156 = vld [vmem:[%s1 + $0x3d8] sm:$0xff]
  %v157 = vld [vmem:[%s1 + $0x3e0] sm:$0xff]
  %v158 = vld [vmem:[%s1 + $0x3e8] sm:$0xff]
  %v159 = vld [vmem:[%s1 + $0x3f0] sm:$0xff]
  %v160 = vld [vmem:[%s1 + $0x3f8] sm:$0xff]
  %v161 = vld [vmem:[%s1 + $0x400] sm:$0xff]
  %v162 = vld [vmem:[%s1 + $0x408] sm:$0xff]
  %v163 = vld [vmem:[%s1 + $0x410] sm:$0xff]
  %v164 = vld [vmem:[%s1 + $0x418] sm:$0xff]
  %v165 = vld [vmem:[%s1 + $0x420] sm:$0xff]
  %v166 = vld [vmem:[%s1 + $0x428] sm:$0xff]
  %v167 = vld [vmem:[%s1 + $0x430] sm:$0xff]
  %v168 = vld [vmem:[%s1 + $0x438] sm:$0xff]
  %v169 = vld [vmem:[%s1 + $0x440] sm:$0xff]
  %v170 = vld [vmem:[%s1 + $0x448] sm:$0xff]
  %v171 = vld [vmem:[%s1 + $0x450] sm:$0xff]
  %v172 = vld [vmem:[%s1 + $0x458] sm:$0xff]
  %v173 = vld [vmem:[%s1 + $0x460] sm:$0xff]
  %v174 = vld [vmem:[%s1 + $0x468] sm:$0xff]
  %v175 = vld [vmem:[%s1 + $0x470] sm:$0xff]
  %v176 = vld [vmem:[%s1 + $0x478] sm:$0xff]
  %v177 = vld [vmem:[%s1 + $0x480] sm:$0xff]
  %v178 = vld [vmem:[%s1 + $0x488] sm:$0xff]
  %v179 = vld [vmem:[%s1 + $0x490] sm:$0xff]
  %v180 = vld [vmem:[%s1 + $0x498] sm:$0xff]
  %v181 = vld [vmem:[%s1 + $0x4a0] sm:$0xff]
  %v182 = vld [vmem:[%s1 + $0x4a8] sm:$0xff]
  %v183 = vld [vmem:[%s1 + $0x4b0] sm:$0xff]
  %v184 = vld [vmem:[%s1 + $0x4b8] sm:$0xff]
  %v185 = vld [vmem:[%s1 + $0x4c0] sm:$0xff]
  %v186 = vld [vmem:[%s1 + $0x4c8] sm:$0xff]
  %v187 = vld [vmem:[%s1 + $0x4d0] sm:$0xff]
  %v188 = vld [vmem:[%s1 + $0x4d8] sm:$0xff]
  %v189 = vld [vmem:[%s1 + $0x4e0] sm:$0xff]
  %v190 = vld [vmem:[%s1 + $0x4e8] sm:$0xff]
  %v191 = vld [vmem:[%s1 + $0x4f0] sm:$0xff]
  %v192 = vld [vmem:[%s1 + $0x4f8] sm:$0xff]
  %v193 = vld [vmem:[%s1 + $0x500] sm:$0xff]
  %v194 = vld [vmem:[%s1 + $0x508] sm:$0xff]
  %v195 = vld [vmem:[%s1 + $0x510] sm:$0xff]
  %v196 = vld [vmem:[%s1 + $0x518] sm:$0xff]
  %v197 = vld [vmem:[%s1 + $0x520] sm:$0xff]
  %v198 = vld [vmem:[%s1 + $0x528] sm:$0xff]
  %v199 = vld [vmem:[%s1 + $0x530] sm:$0xff]
  %v200 = vld [vmem:[%s1 + $0x538] sm:$0xff]
  %v201 = vld [vmem:[%s1 + $0x540] sm:$0xff]
  %v202 = vld [vmem:[%s1 + $0x548] sm:$0xff]
  %v203 = vld [vmem:[%s1 + $0x550] sm:$0xff]
  %v204 = vld [vmem:[%s1 + $0x558] sm:$0xff]
  %v205 = vld [vmem:[%s1 + $0x560] sm:$0xff]
  %v206 = vld [vmem:[%s1 + $0x568] sm:$0xff]
  %v207 = vld [vmem:[%s1 + $0x570] sm:$0xff]
  %v208 = vld [vmem:[%s1 + $0x578] sm:$0xff]
  %v209 = vld [vmem:[%s1 + $0x580] sm:$0xff]
  %v210 = vld [vmem:[%s1 + $0x588] sm:$0xff]
  %v211 = vld [vmem:[%s1 + $0x590] sm:$0xff]
  %v212 = vld [vmem:[%s1 + $0x598] sm:$0xff]
  %v213 = vld [vmem:[%s1 + $0x5a0] sm:$0xff]
  %v214 = vld [vmem:[%s1 + $0x5a8] sm:$0xff]
  %v215 = vld [vmem:[%s1 + $0x5b0] sm:$0xff]
  %v216 = vld [vmem:[%s1 + $0x5b8] sm:$0xff]
  %v217 = vld [vmem:[%s1 + $0x5c0] sm:$0xff]
  %v218 = vld [vmem:[%s1 + $0x5c8] sm:$0xff]
  %v219 = vld [vmem:[%s1 + $0x5d0] sm:$0xff]
  %v220 = vld [vmem:[%s1 + $0x5d8] sm:$0xff]
  %v221 = vld [vmem:[%s1 + $0x5e0] sm:$0xff]
  %v222 = vld [vmem:[%s1 + $0x5e8] sm:$0xff]
  %v223 = vld [vmem:[%s1 + $0x5f0] sm:$0xff]
  %v224 = vld [vmem:[%s1 + $0x5f8] sm:$0xff]
  %v225 = vld [vmem:[%s1 + $0x600] sm:$0xff]
  %v226 = vld [vmem:[%s1 + $0x608] sm:$0xff]
  %v227 = vld [vmem:[%s1 + $0x610] sm:$0xff]
  %v228 = vld [vmem:[%s1 + $0x618] sm:$0xff]
  %v229 = vld [vmem:[%s1 + $0x620] sm:$0xff]
  %v230 = vld [vmem:[%s1 + $0x628] sm:$0xff]
  %v231 = vld [vmem:[%s1 + $0x630] sm:$0xff]
  %v232 = vld [vmem:[%s1 + $0x638] sm:$0xff]
  %v233 = vld [vmem:[%s1 + $0x640] sm:$0xff]
  %v234 = vld [vmem:[%s1 + $0x648] sm:$0xff]
  %v235 = vld [vmem:[%s1 + $0x650] sm:$0xff]
  %v236 = vld [vmem:[%s1 + $0x658] sm:$0xff]
  %v237 = vld [vmem:[%s1 + $0x660] sm:$0xff]
  %v238 = vld [vmem:[%s1 + $0x668] sm:$0xff]
  %v239 = vld [vmem:[%s1 + $0x670] sm:$0xff]
  %v240 = vld [vmem:[%s1 + $0x678] sm:$0xff]
  %v241 = vld [vmem:[%s1 + $0x680] sm:$0xff]
  %v242 = vld [vmem:[%s1 + $0x688] sm:$0xff]
  %v243 = vld [vmem:[%s1 + $0x690] sm:$0xff]
  %v244 = vld [vmem:[%s1 + $0x698] sm:$0xff]
  %v245 = vld [vmem:[%s1 + $0x6a0] sm:$0xff]
  %v246 = vld [vmem:[%s1 + $0x6a8] sm:$0xff]
  %v247 = vld [vmem:[%s1 + $0x6b0] sm:$0xff]
  %v248 = vld [vmem:[%s1 + $0x6b8] sm:$0xff]
  %v249 = vld [vmem:[%s1 + $0x6c0] sm:$0xff]
  %v250 = vld [vmem:[%s1 + $0x6c8] sm:$0xff]
  %v251 = vld [vmem:[%s1 + $0x6d0] sm:$0xff]
  %v252 = vld [vmem:[%s1 + $0x6d8] sm:$0xff]
  %v253 = vld [vmem:[%s1 + $0x6e0] sm:$0xff]
  %v254 = vld [vmem:[%s1 + $0x6e8] sm:$0xff]
  %v255 = vld [vmem:[%s1 + $0x6f0] sm:$0xff]
  %v256 = vld [vmem:[%s1 + $0x6f8] sm:$0xff]
  %v257 = vld [vmem:[%s1 + $0x700] sm:$0xff]
  %v258 = vld [vmem:[%s1 + $0x708] sm:$0xff]
  %v259 = vld [vmem:[%s1 + $0x710] sm:$0xff]
  %v260 = vld [vmem:[%s1 + $0x718] sm:$0xff]
  %v261 = vld [vmem:[%s1 + $0x720] sm:$0xff]
  %v262 = vld [vmem:[%s1 + $0x728] sm:$0xff]
  %v263 = vld [vmem:[%s1 + $0x730] sm:$0xff]
  %v264 = vld [vmem:[%s1 + $0x738] sm:$0xff]
  %v265 = vld [vmem:[%s1 + $0x740] sm:$0xff]
  %v266 = vld [vmem:[%s1 + $0x748] sm:$0xff]
  %v267 = vld [vmem:[%s1 + $0x750] sm:$0xff]
  %v268 = vld [vmem:[%s1 + $0x758] sm:$0xff]
  %v269 = vld [vmem:[%s1 + $0x760] sm:$0xff]
  %v270 = vld [vmem:[%s1 + $0x768] sm:$0xff]
  %v271 = vld [vmem:[%s1 + $0x770] sm:$0xff]
  %v272 = vld [vmem:[%s1 + $0x778] sm:$0xff]
  %v273 = vld [vmem:[%s1 + $0x780] sm:$0xff]
  %v274 = vld [vmem:[%s1 + $0x788] sm:$0xff]
  %v275 = vld [vmem:[%s1 + $0x790] sm:$0xff]
  %v276 = vld [vmem:[%s1 + $0x798] sm:$0xff]
  %v277 = vld [vmem:[%s1 + $0x7a0] sm:$0xff]
  %v278 = vld [vmem:[%s1 + $0x7a8] sm:$0xff]
  %v279 = vld [vmem:[%s1 + $0x7b0] sm:$0xff]
  %v280 = vld [vmem:[%s1 + $0x7b8] sm:$0xff]
  %v281 = vld [vmem:[%s1 + $0x7c0] sm:$0xff]
  %v282 = vld [vmem:[%s1 + $0x7c8] sm:$0xff]
  %v283 = vld [vmem:[%s1 + $0x7d0] sm:$0xff]
  %v284 = vld [vmem:[%s1 + $0x7d8] sm:$0xff]
  %v285 = vld [vmem:[%s1 + $0x7e0] sm:$0xff]
  %v286 = vld [vmem:[%s1 + $0x7e8] sm:$0xff]
  %v287 = vld [vmem:[%s1 + $0x7f0] sm:$0xff]
  %v288 = vld [vmem:[%s1 + $0x7f8] sm:$0xff]
  %v289 = vld [vmem:[%s1 + $0x800] sm:$0xff]
  %v290 = vld [vmem:[%s1 + $0x808] sm:$0xff]
  %v291 = vld [vmem:[%s1 + $0x810] sm:$0xff]
  %v292 = vld [vmem:[%s1 + $0x818] sm:$0xff]
  %v293 = vld [vmem:[%s1 + $0x820] sm:$0xff]
  %v294 = vld [vmem:[%s1 + $0x828] sm:$0xff]
  %v295 = vld [vmem:[%s1 + $0x830] sm:$0xff]
  %v296 = vld [vmem:[%s1 + $0x838] sm:$0xff]
  %v297 = vld [vmem:[%s1 + $0x840] sm:$0xff]
  %v298 = vld [vmem:[%s1 + $0x848] sm:$0xff]
  %v299 = vld [vmem:[%s1 + $0x850] sm:$0xff]
  %v300 = vld [vmem:[%s1 + $0x858] sm:$0xff]
  %v301 = vld [vmem:[%s1 + $0x860] sm:$0xff]
  %v302 = vld [vmem:[%s1 + $0x868] sm:$0xff]
  %v303 = vld [vmem:[%s1 + $0x870] sm:$0xff]
  %v304 = vld [vmem:[%s1 + $0x878] sm:$0xff]
  %v305 = vld [vmem:[%s1 + $0x880] sm:$0xff]
  %v306 = vld [vmem:[%s1 + $0x888] sm:$0xff]
  %v307 = vld [vmem:[%s1 + $0x890] sm:$0xff]
  %v308 = vld [vmem:[%s1 + $0x898] sm:$0xff]
  %v309 = vld [vmem:[%s1 + $0x8a0] sm:$0xff]
  %v310 = vld [vmem:[%s1 + $0x8a8] sm:$0xff]
  %v311 = vld [vmem:[%s1 + $0x8b0] sm:$0xff]
  %v312 = vld [vmem:[%s1 + $0x8b8] sm:$0xff]
  %v313 = vld [vmem:[%s1 + $0x8c0] sm:$0xff]
  %v314 = vld [vmem:[%s1 + $0x8c8] sm:$0xff]
  %v315 = vld [vmem:[%s1 + $0x8d0] sm:$0xff]
  %v316 = vld [vmem:[%s1 + $0x8d8] sm:$0xff]
  %v317 = vld [vmem:[%s1 + $0x8e0] sm:$0xff]
  %v318 = vld [vmem:[%s1 + $0x8e8] sm:$0xff]
  %v319 = vld [vmem:[%s1 + $0x8f0] sm:$0xff]
  %v320 = vld [vmem:[%s1 + $0x8f8] sm:$0xff]
  %v321 = vld [vmem:[%s1 + $0x900] sm:$0xff]
  %v322 = vld [vmem:[%s1 + $0x908] sm:$0xff]
  %v323 = vld [vmem:[%s1 + $0x910] sm:$0xff]
  %v324 = vld [vmem:[%s1 + $0x918] sm:$0xff]
  %v325 = vld [vmem:[%s1 + $0x920] sm:$0xff]
  %v326 = vld [vmem:[%s1 + $0x928] sm:$0xff]
  %v327 = vld [vmem:[%s1 + $0x930] sm:$0xff]
  %v328 = vld [vmem:[%s1 + $0x938] sm:$0xff]
  %v329 = vld [vmem:[%s1 + $0x940] sm:$0xff]
  %v330 = vld [vmem:[%s1 + $0x948] sm:$0xff]
  %v331 = vld [vmem:[%s1 + $0x950] sm:$0xff]
  %v332 = vld [vmem:[%s1 + $0x958] sm:$0xff]
  %v333 = vld [vmem:[%s1 + $0x960] sm:$0xff]
  %v334 = vld [vmem:[%s1 + $0x968] sm:$0xff]
  %v335 = vld [vmem:[%s1 + $0x970] sm:$0xff]
  %v336 = vld [vmem:[%s1 + $0x978] sm:$0xff]
  %v337 = vld [vmem:[%s1 + $0x980] sm:$0xff]
  %v338 = vld [vmem:[%s1 + $0x988] sm:$0xff]
  %v339 = vld [vmem:[%s1 + $0x990] sm:$0xff]
  %v340 = vld [vmem:[%s1 + $0x998] sm:$0xff]
  %v341 = vld [vmem:[%s1 + $0x9a0] sm:$0xff]
  %v342 = vld [vmem:[%s1 + $0x9a8] sm:$0xff]
  %v343 = vld [vmem:[%s1 + $0x9b0] sm:$0xff]
  %v344 = vld [vmem:[%s1 + $0x9b8] sm:$0xff]
  %v345 = vld [vmem:[%s1 + $0x9c0] sm:$0xff]
  %v346 = vld [vmem:[%s1 + $0x9c8] sm:$0xff]
  %v347 = vld [vmem:[%s1 + $0x9d0] sm:$0xff]
  %v348 = vld [vmem:[%s1 + $0x9d8] sm:$0xff]
  %v349 = vld [vmem:[%s1 + $0x9e0] sm:$0xff]
  %v350 = vld [vmem:[%s1 + $0x9e8] sm:$0xff]
  %v351 = vld [vmem:[%s1 + $0x9f0] sm:$0xff]
  %v352 = vld [vmem:[%s1 + $0x9f8] sm:$0xff]
  %v353 = vld [vmem:[%s1 + $0xa00] sm:$0xff]
  %v354 = vld [vmem:[%s1 + $0xa08] sm:$0xff]
  %v355 = vld [vmem:[%s1 + $0xa10] sm:$0xff]
  %v356 = vld [vmem:[%s1 + $0xa18] sm:$0xff]
  %v357 = vld [vmem:[%s1 + $0xa20] sm:$0xff]
  %v358 = vld [vmem:[%s1 + $0xa28] sm:$0xff]
  %v359 = vld [vmem:[%s1 + $0xa30] sm:$0xff]
  %v360 = vld [vmem:[%s1 + $0xa38] sm:$0xff]
  %v361 = vld [vmem:[%s1 + $0xa40] sm:$0xff]
  %v362 = vld [vmem:[%s1 + $0xa48] sm:$0xff]
  %v363 = vld [vmem:[%s1 + $0xa50] sm:$0xff]
  %v364 = vld [vmem:[%s1 + $0xa58] sm:$0xff]
  %v365 = vld [vmem:[%s1 + $0xa60] sm:$0xff]
  %v366 = vld [vmem:[%s1 + $0xa68] sm:$0xff]
  %v367 = vld [vmem:[%s1 + $0xa70] sm:$0xff]
  %v368 = vld [vmem:[%s1 + $0xa78] sm:$0xff]
  %v369 = vld [vmem:[%s1 + $0xa80] sm:$0xff]
  %v370 = vld [vmem:[%s1 + $0xa88] sm:$0xff]
  %v371 = vld [vmem:[%s1 + $0xa90] sm:$0xff]
  %v372 = vld [vmem:[%s1 + $0xa98] sm:$0xff]
  %v373 = vld [vmem:[%s1 + $0xaa0] sm:$0xff]
  %v374 = vld [vmem:[%s1 + $0xaa8] sm:$0xff]
  %v375 = vld [vmem:[%s1 + $0xab0] sm:$0xff]
  %v376 = vld [vmem:[%s1 + $0xab8] sm:$0xff]
  %v377 = vld [vmem:[%s1 + $0xac0] sm:$0xff]
  %v378 = vld [vmem:[%s1 + $0xac8] sm:$0xff]
  %v379 = vld [vmem:[%s1 + $0xad0] sm:$0xff]
  %v380 = vld [vmem:[%s1 + $0xad8] sm:$0xff]
  %v381 = vld [vmem:[%s1 + $0xae0] sm:$0xff]
  %v382 = vld [vmem:[%s1 + $0xae8] sm:$0xff]
  %v383 = vld [vmem:[%s1 + $0xaf0] sm:$0xff]
  %v384 = vld [vmem:[%s1 + $0xaf8] sm:$0xff]
  %v385 = vld [vmem:[%s1 + $0xb00] sm:$0xff]
  %v386 = vld [vmem:[%s1 + $0xb08] sm:$0xff]
  %v387 = vld [vmem:[%s1 + $0xb10] sm:$0xff]
  %v388 = vld [vmem:[%s1 + $0xb18] sm:$0xff]
  %v389 = vld [vmem:[%s1 + $0xb20] sm:$0xff]
  %v390 = vld [vmem:[%s1 + $0xb28] sm:$0xff]
  %v391 = vld [vmem:[%s1 + $0xb30] sm:$0xff]
  %v392 = vld [vmem:[%s1 + $0xb38] sm:$0xff]
  %v393 = vld [vmem:[%s1 + $0xb40] sm:$0xff]
  %v394 = vld [vmem:[%s1 + $0xb48] sm:$0xff]
  %v395 = vld [vmem:[%s1 + $0xb50] sm:$0xff]
  %v396 = vld [vmem:[%s1 + $0xb58] sm:$0xff]
  %v397 = vld [vmem:[%s1 + $0xb60] sm:$0xff]
  %v398 = vld [vmem:[%s1 + $0xb68] sm:$0xff]
  %v399 = vld [vmem:[%s1 + $0xb70] sm:$0xff]
  %v400 = vld [vmem:[%s1 + $0xb78] sm:$0xff]
  %v401 = vld [vmem:[%s1 + $0xb80] sm:$0xff]
  %v402 = vld [vmem:[%s1 + $0xb88] sm:$0xff]
  %v403 = vld [vmem:[%s1 + $0xb90] sm:$0xff]
  %v404 = vld [vmem:[%s1 + $0xb98] sm:$0xff]
  %v405 = vld [vmem:[%s1 + $0xba0] sm:$0xff]
  %v406 = vld [vmem:[%s1 + $0xba8] sm:$0xff]
  %v407 = vld [vmem:[%s1 + $0xbb0] sm:$0xff]
  %v408 = vld [vmem:[%s1 + $0xbb8] sm:$0xff]
  %v409 = vld [vmem:[%s1 + $0xbc0] sm:$0xff]
  %v410 = vld [vmem:[%s1 + $0xbc8] sm:$0xff]
  %v411 = vld [vmem:[%s1 + $0xbd0] sm:$0xff]
  %v412 = vld [vmem:[%s1 + $0xbd8] sm:$0xff]
  %v413 = vld [vmem:[%s1 + $0xbe0] sm:$0xff]
  %v414 = vld [vmem:[%s1 + $0xbe8] sm:$0xff]
  %v415 = vld [vmem:[%s1 + $0xbf0] sm:$0xff]
  %v416 = vld [vmem:[%s1 + $0xbf8] sm:$0xff]
  %v417 = vld [vmem:[%s2] sm:$0xf]
  %v419 = vlaneseq
  %v420 = vshrl.u32 %v419, 7
  %v421 = vsub.s32 0, %v420
  %v422 = vrot.slane %v417, %v421
  %v423 = vlaneseq
  %v424 = vshrl.u32 %v423, 7
  %v425 = vsub.s32 1, %v424
  %v426 = vrot.slane %v417, %v425
  %v427 = vlaneseq
  %v428 = vshrl.u32 %v427, 7
  %v429 = vsub.s32 2, %v428
  %v430 = vrot.slane %v417, %v429
  %v431 = vlaneseq
  %v432 = vshrl.u32 %v431, 7
  %v433 = vsub.s32 3, %v432
  %v434 = vrot.slane %v417, %v433
  %v445 = vunpack.c.l.b16 %v27
  %v446 = vunpack.c.h.b16 %v27
  %v447 = vunpack.c.l.b16 %v28
  %v448 = vunpack.c.h.b16 %v28
  %v449 = vunpack.c.l.b16 %v29
  %v450 = vunpack.c.h.b16 %v29
  %v451 = vunpack.c.l.b16 %v30
  %v452 = vunpack.c.h.b16 %v30
  %v453 = vunpack.c.l.b16 %v31
  %v454 = vunpack.c.h.b16 %v31
  %v455 = vunpack.c.l.b16 %v32
  %v456 = vunpack.c.h.b16 %v32
  %v457 = vpack.c.b16 %v445, %v445
  %v458 = vpack.c.b16 %v446, %v446
  %v459 = vpack.c.b16 %v447, %v447
  %v460 = vpack.c.b16 %v448, %v448
  %v461 = vpack.c.b16 %v449, %v449
  %v462 = vpack.c.b16 %v450, %v450
  %v463 = vpack.c.b16 %v451, %v451
  %v464 = vpack.c.b16 %v452, %v452
  %v465 = vpack.c.b16 %v453, %v453
  %v466 = vpack.c.b16 %v454, %v454
  %v467 = vpack.c.b16 %v455, %v455
  %v468 = vpack.c.b16 %v456, %v456
  %v865 = vunpack.c.l.b16 %v33
  %v866 = vunpack.c.h.b16 %v33
  %v867 = vunpack.c.l.b16 %v34
  %v868 = vunpack.c.h.b16 %v34
  %v869 = vunpack.c.l.b16 %v35
  %v870 = vunpack.c.h.b16 %v35
  %v871 = vunpack.c.l.b16 %v36
  %v872 = vunpack.c.h.b16 %v36
  %v873 = vunpack.c.l.b16 %v37
  %v874 = vunpack.c.h.b16 %v37
  %v875 = vunpack.c.l.b16 %v38
  %v876 = vunpack.c.h.b16 %v38
  %v877 = vunpack.c.l.b16 %v39
  %v878 = vunpack.c.h.b16 %v39
  %v879 = vunpack.c.l.b16 %v40
  %v880 = vunpack.c.h.b16 %v40
  %v881 = vunpack.c.l.b16 %v41
  %v882 = vunpack.c.h.b16 %v41
  %v883 = vunpack.c.l.b16 %v42
  %v884 = vunpack.c.h.b16 %v42
  %v885 = vunpack.c.l.b16 %v43
  %v886 = vunpack.c.h.b16 %v43
  %v887 = vunpack.c.l.b16 %v44
  %v888 = vunpack.c.h.b16 %v44
  %v889 = vunpack.c.l.b16 %v45
  %v890 = vunpack.c.h.b16 %v45
  %v891 = vunpack.c.l.b16 %v46
  %v892 = vunpack.c.h.b16 %v46
  %v893 = vunpack.c.l.b16 %v47
  %v894 = vunpack.c.h.b16 %v47
  %v895 = vunpack.c.l.b16 %v48
  %v896 = vunpack.c.h.b16 %v48
  %v897 = vunpack.c.l.b16 %v49
  %v898 = vunpack.c.h.b16 %v49
  %v899 = vunpack.c.l.b16 %v50
  %v900 = vunpack.c.h.b16 %v50
  %v901 = vunpack.c.l.b16 %v51
  %v902 = vunpack.c.h.b16 %v51
  %v903 = vunpack.c.l.b16 %v52
  %v904 = vunpack.c.h.b16 %v52
  %v905 = vunpack.c.l.b16 %v53
  %v906 = vunpack.c.h.b16 %v53
  %v907 = vunpack.c.l.b16 %v54
  %v908 = vunpack.c.h.b16 %v54
  %v909 = vunpack.c.l.b16 %v55
  %v910 = vunpack.c.h.b16 %v55
  %v911 = vunpack.c.l.b16 %v56
  %v912 = vunpack.c.h.b16 %v56
  %v913 = vunpack.c.l.b16 %v57
  %v914 = vunpack.c.h.b16 %v57
  %v915 = vunpack.c.l.b16 %v58
  %v916 = vunpack.c.h.b16 %v58
  %v917 = vunpack.c.l.b16 %v59
  %v918 = vunpack.c.h.b16 %v59
  %v919 = vunpack.c.l.b16 %v60
  %v920 = vunpack.c.h.b16 %v60
  %v921 = vunpack.c.l.b16 %v61
  %v922 = vunpack.c.h.b16 %v61
  %v923 = vunpack.c.l.b16 %v62
  %v924 = vunpack.c.h.b16 %v62
  %v925 = vunpack.c.l.b16 %v63
  %v926 = vunpack.c.h.b16 %v63
  %v927 = vunpack.c.l.b16 %v64
  %v928 = vunpack.c.h.b16 %v64
  %v929 = vunpack.c.l.b16 %v65
  %v930 = vunpack.c.h.b16 %v65
  %v931 = vunpack.c.l.b16 %v66
  %v932 = vunpack.c.h.b16 %v66
  %v933 = vunpack.c.l.b16 %v67
  %v934 = vunpack.c.h.b16 %v67
  %v935 = vunpack.c.l.b16 %v68
  %v936 = vunpack.c.h.b16 %v68
  %v937 = vunpack.c.l.b16 %v69
  %v938 = vunpack.c.h.b16 %v69
  %v939 = vunpack.c.l.b16 %v70
  %v940 = vunpack.c.h.b16 %v70
  %v941 = vunpack.c.l.b16 %v71
  %v942 = vunpack.c.h.b16 %v71
  %v943 = vunpack.c.l.b16 %v72
  %v944 = vunpack.c.h.b16 %v72
  %v945 = vunpack.c.l.b16 %v73
  %v946 = vunpack.c.h.b16 %v73
  %v947 = vunpack.c.l.b16 %v74
  %v948 = vunpack.c.h.b16 %v74
  %v949 = vunpack.c.l.b16 %v75
  %v950 = vunpack.c.h.b16 %v75
  %v951 = vunpack.c.l.b16 %v76
  %v952 = vunpack.c.h.b16 %v76
  %v953 = vunpack.c.l.b16 %v77
  %v954 = vunpack.c.h.b16 %v77
  %v955 = vunpack.c.l.b16 %v78
  %v956 = vunpack.c.h.b16 %v78
  %v957 = vunpack.c.l.b16 %v79
  %v958 = vunpack.c.h.b16 %v79
  %v959 = vunpack.c.l.b16 %v80
  %v960 = vunpack.c.h.b16 %v80
  %v961 = vunpack.c.l.b16 %v81
  %v962 = vunpack.c.h.b16 %v81
  %v963 = vunpack.c.l.b16 %v82
  %v964 = vunpack.c.h.b16 %v82
  %v965 = vunpack.c.l.b16 %v83
  %v966 = vunpack.c.h.b16 %v83
  %v967 = vunpack.c.l.b16 %v84
  %v968 = vunpack.c.h.b16 %v84
  %v969 = vunpack.c.l.b16 %v85
  %v970 = vunpack.c.h.b16 %v85
  %v971 = vunpack.c.l.b16 %v86
  %v972 = vunpack.c.h.b16 %v86
  %v973 = vunpack.c.l.b16 %v87
  %v974 = vunpack.c.h.b16 %v87
  %v975 = vunpack.c.l.b16 %v88
  %v976 = vunpack.c.h.b16 %v88
  %v977 = vunpack.c.l.b16 %v89
  %v978 = vunpack.c.h.b16 %v89
  %v979 = vunpack.c.l.b16 %v90
  %v980 = vunpack.c.h.b16 %v90
  %v981 = vunpack.c.l.b16 %v91
  %v982 = vunpack.c.h.b16 %v91
  %v983 = vunpack.c.l.b16 %v92
  %v984 = vunpack.c.h.b16 %v92
  %v985 = vunpack.c.l.b16 %v93
  %v986 = vunpack.c.h.b16 %v93
  %v987 = vunpack.c.l.b16 %v94
  %v988 = vunpack.c.h.b16 %v94
  %v989 = vunpack.c.l.b16 %v95
  %v990 = vunpack.c.h.b16 %v95
  %v991 = vunpack.c.l.b16 %v96
  %v992 = vunpack.c.h.b16 %v96
  %v993 = vunpack.c.l.b16 %v97
  %v994 = vunpack.c.h.b16 %v97
  %v995 = vunpack.c.l.b16 %v98
  %v996 = vunpack.c.h.b16 %v98
  %v997 = vunpack.c.l.b16 %v99
  %v998 = vunpack.c.h.b16 %v99
  %v999 = vunpack.c.l.b16 %v100
  %v1000 = vunpack.c.h.b16 %v100
  %v1001 = vunpack.c.l.b16 %v101
  %v1002 = vunpack.c.h.b16 %v101
  %v1003 = vunpack.c.l.b16 %v102
  %v1004 = vunpack.c.h.b16 %v102
  %v1005 = vunpack.c.l.b16 %v103
  %v1006 = vunpack.c.h.b16 %v103
  %v1007 = vunpack.c.l.b16 %v104
  %v1008 = vunpack.c.h.b16 %v104
  %v1009 = vunpack.c.l.b16 %v105
  %v1010 = vunpack.c.h.b16 %v105
  %v1011 = vunpack.c.l.b16 %v106
  %v1012 = vunpack.c.h.b16 %v106
  %v1013 = vunpack.c.l.b16 %v107
  %v1014 = vunpack.c.h.b16 %v107
  %v1015 = vunpack.c.l.b16 %v108
  %v1016 = vunpack.c.h.b16 %v108
  %v1017 = vunpack.c.l.b16 %v109
  %v1018 = vunpack.c.h.b16 %v109
  %v1019 = vunpack.c.l.b16 %v110
  %v1020 = vunpack.c.h.b16 %v110
  %v1021 = vunpack.c.l.b16 %v111
  %v1022 = vunpack.c.h.b16 %v111
  %v1023 = vunpack.c.l.b16 %v112
  %v1024 = vunpack.c.h.b16 %v112
  %v1025 = vunpack.c.l.b16 %v113
  %v1026 = vunpack.c.h.b16 %v113
  %v1027 = vunpack.c.l.b16 %v114
  %v1028 = vunpack.c.h.b16 %v114
  %v1029 = vunpack.c.l.b16 %v115
  %v1030 = vunpack.c.h.b16 %v115
  %v1031 = vunpack.c.l.b16 %v116
  %v1032 = vunpack.c.h.b16 %v116
  %v1033 = vunpack.c.l.b16 %v117
  %v1034 = vunpack.c.h.b16 %v117
  %v1035 = vunpack.c.l.b16 %v118
  %v1036 = vunpack.c.h.b16 %v118
  %v1037 = vunpack.c.l.b16 %v119
  %v1038 = vunpack.c.h.b16 %v119
  %v1039 = vunpack.c.l.b16 %v120
  %v1040 = vunpack.c.h.b16 %v120
  %v1041 = vunpack.c.l.b16 %v121
  %v1042 = vunpack.c.h.b16 %v121
  %v1043 = vunpack.c.l.b16 %v122
  %v1044 = vunpack.c.h.b16 %v122
  %v1045 = vunpack.c.l.b16 %v123
  %v1046 = vunpack.c.h.b16 %v123
  %v1047 = vunpack.c.l.b16 %v124
  %v1048 = vunpack.c.h.b16 %v124
  %v1049 = vunpack.c.l.b16 %v125
  %v1050 = vunpack.c.h.b16 %v125
  %v1051 = vunpack.c.l.b16 %v126
  %v1052 = vunpack.c.h.b16 %v126
  %v1053 = vunpack.c.l.b16 %v127
  %v1054 = vunpack.c.h.b16 %v127
  %v1055 = vunpack.c.l.b16 %v128
  %v1056 = vunpack.c.h.b16 %v128
  %v1057 = vunpack.c.l.b16 %v129
  %v1058 = vunpack.c.h.b16 %v129
  %v1059 = vunpack.c.l.b16 %v130
  %v1060 = vunpack.c.h.b16 %v130
  %v1061 = vunpack.c.l.b16 %v131
  %v1062 = vunpack.c.h.b16 %v131
  %v1063 = vunpack.c.l.b16 %v132
  %v1064 = vunpack.c.h.b16 %v132
  %v1065 = vunpack.c.l.b16 %v133
  %v1066 = vunpack.c.h.b16 %v133
  %v1067 = vunpack.c.l.b16 %v134
  %v1068 = vunpack.c.h.b16 %v134
  %v1069 = vunpack.c.l.b16 %v135
  %v1070 = vunpack.c.h.b16 %v135
  %v1071 = vunpack.c.l.b16 %v136
  %v1072 = vunpack.c.h.b16 %v136
  %v1073 = vunpack.c.l.b16 %v137
  %v1074 = vunpack.c.h.b16 %v137
  %v1075 = vunpack.c.l.b16 %v138
  %v1076 = vunpack.c.h.b16 %v138
  %v1077 = vunpack.c.l.b16 %v139
  %v1078 = vunpack.c.h.b16 %v139
  %v1079 = vunpack.c.l.b16 %v140
  %v1080 = vunpack.c.h.b16 %v140
  %v1081 = vunpack.c.l.b16 %v141
  %v1082 = vunpack.c.h.b16 %v141
  %v1083 = vunpack.c.l.b16 %v142
  %v1084 = vunpack.c.h.b16 %v142
  %v1085 = vunpack.c.l.b16 %v143
  %v1086 = vunpack.c.h.b16 %v143
  %v1087 = vunpack.c.l.b16 %v144
  %v1088 = vunpack.c.h.b16 %v144
  %v1089 = vunpack.c.l.b16 %v145
  %v1090 = vunpack.c.h.b16 %v145
  %v1091 = vunpack.c.l.b16 %v146
  %v1092 = vunpack.c.h.b16 %v146
  %v1093 = vunpack.c.l.b16 %v147
  %v1094 = vunpack.c.h.b16 %v147
  %v1095 = vunpack.c.l.b16 %v148
  %v1096 = vunpack.c.h.b16 %v148
  %v1097 = vunpack.c.l.b16 %v149
  %v1098 = vunpack.c.h.b16 %v149
  %v1099 = vunpack.c.l.b16 %v150
  %v1100 = vunpack.c.h.b16 %v150
  %v1101 = vunpack.c.l.b16 %v151
  %v1102 = vunpack.c.h.b16 %v151
  %v1103 = vunpack.c.l.b16 %v152
  %v1104 = vunpack.c.h.b16 %v152
  %v1105 = vunpack.c.l.b16 %v153
  %v1106 = vunpack.c.h.b16 %v153
  %v1107 = vunpack.c.l.b16 %v154
  %v1108 = vunpack.c.h.b16 %v154
  %v1109 = vunpack.c.l.b16 %v155
  %v1110 = vunpack.c.h.b16 %v155
  %v1111 = vunpack.c.l.b16 %v156
  %v1112 = vunpack.c.h.b16 %v156
  %v1113 = vunpack.c.l.b16 %v157
  %v1114 = vunpack.c.h.b16 %v157
  %v1115 = vunpack.c.l.b16 %v158
  %v1116 = vunpack.c.h.b16 %v158
  %v1117 = vunpack.c.l.b16 %v159
  %v1118 = vunpack.c.h.b16 %v159
  %v1119 = vunpack.c.l.b16 %v160
  %v1120 = vunpack.c.h.b16 %v160
  %v1121 = vunpack.c.l.b16 %v161
  %v1122 = vunpack.c.h.b16 %v161
  %v1123 = vunpack.c.l.b16 %v162
  %v1124 = vunpack.c.h.b16 %v162
  %v1125 = vunpack.c.l.b16 %v163
  %v1126 = vunpack.c.h.b16 %v163
  %v1127 = vunpack.c.l.b16 %v164
  %v1128 = vunpack.c.h.b16 %v164
  %v1129 = vunpack.c.l.b16 %v165
  %v1130 = vunpack.c.h.b16 %v165
  %v1131 = vunpack.c.l.b16 %v166
  %v1132 = vunpack.c.h.b16 %v166
  %v1133 = vunpack.c.l.b16 %v167
  %v1134 = vunpack.c.h.b16 %v167
  %v1135 = vunpack.c.l.b16 %v168
  %v1136 = vunpack.c.h.b16 %v168
  %v1137 = vunpack.c.l.b16 %v169
  %v1138 = vunpack.c.h.b16 %v169
  %v1139 = vunpack.c.l.b16 %v170
  %v1140 = vunpack.c.h.b16 %v170
  %v1141 = vunpack.c.l.b16 %v171
  %v1142 = vunpack.c.h.b16 %v171
  %v1143 = vunpack.c.l.b16 %v172
  %v1144 = vunpack.c.h.b16 %v172
  %v1145 = vunpack.c.l.b16 %v173
  %v1146 = vunpack.c.h.b16 %v173
  %v1147 = vunpack.c.l.b16 %v174
  %v1148 = vunpack.c.h.b16 %v174
  %v1149 = vunpack.c.l.b16 %v175
  %v1150 = vunpack.c.h.b16 %v175
  %v1151 = vunpack.c.l.b16 %v176
  %v1152 = vunpack.c.h.b16 %v176
  %v1153 = vunpack.c.l.b16 %v177
  %v1154 = vunpack.c.h.b16 %v177
  %v1155 = vunpack.c.l.b16 %v178
  %v1156 = vunpack.c.h.b16 %v178
  %v1157 = vunpack.c.l.b16 %v179
  %v1158 = vunpack.c.h.b16 %v179
  %v1159 = vunpack.c.l.b16 %v180
  %v1160 = vunpack.c.h.b16 %v180
  %v1161 = vunpack.c.l.b16 %v181
  %v1162 = vunpack.c.h.b16 %v181
  %v1163 = vunpack.c.l.b16 %v182
  %v1164 = vunpack.c.h.b16 %v182
  %v1165 = vunpack.c.l.b16 %v183
  %v1166 = vunpack.c.h.b16 %v183
  %v1167 = vunpack.c.l.b16 %v184
  %v1168 = vunpack.c.h.b16 %v184
  %v1169 = vunpack.c.l.b16 %v185
  %v1170 = vunpack.c.h.b16 %v185
  %v1171 = vunpack.c.l.b16 %v186
  %v1172 = vunpack.c.h.b16 %v186
  %v1173 = vunpack.c.l.b16 %v187
  %v1174 = vunpack.c.h.b16 %v187
  %v1175 = vunpack.c.l.b16 %v188
  %v1176 = vunpack.c.h.b16 %v188
  %v1177 = vunpack.c.l.b16 %v189
  %v1178 = vunpack.c.h.b16 %v189
  %v1179 = vunpack.c.l.b16 %v190
  %v1180 = vunpack.c.h.b16 %v190
  %v1181 = vunpack.c.l.b16 %v191
  %v1182 = vunpack.c.h.b16 %v191
  %v1183 = vunpack.c.l.b16 %v192
  %v1184 = vunpack.c.h.b16 %v192
  %v1185 = vunpack.c.l.b16 %v193
  %v1186 = vunpack.c.h.b16 %v193
  %v1187 = vunpack.c.l.b16 %v194
  %v1188 = vunpack.c.h.b16 %v194
  %v1189 = vunpack.c.l.b16 %v195
  %v1190 = vunpack.c.h.b16 %v195
  %v1191 = vunpack.c.l.b16 %v196
  %v1192 = vunpack.c.h.b16 %v196
  %v1193 = vunpack.c.l.b16 %v197
  %v1194 = vunpack.c.h.b16 %v197
  %v1195 = vunpack.c.l.b16 %v198
  %v1196 = vunpack.c.h.b16 %v198
  %v1197 = vunpack.c.l.b16 %v199
  %v1198 = vunpack.c.h.b16 %v199
  %v1199 = vunpack.c.l.b16 %v200
  %v1200 = vunpack.c.h.b16 %v200
  %v1201 = vunpack.c.l.b16 %v201
  %v1202 = vunpack.c.h.b16 %v201
  %v1203 = vunpack.c.l.b16 %v202
  %v1204 = vunpack.c.h.b16 %v202
  %v1205 = vunpack.c.l.b16 %v203
  %v1206 = vunpack.c.h.b16 %v203
  %v1207 = vunpack.c.l.b16 %v204
  %v1208 = vunpack.c.h.b16 %v204
  %v1209 = vunpack.c.l.b16 %v205
  %v1210 = vunpack.c.h.b16 %v205
  %v1211 = vunpack.c.l.b16 %v206
  %v1212 = vunpack.c.h.b16 %v206
  %v1213 = vunpack.c.l.b16 %v207
  %v1214 = vunpack.c.h.b16 %v207
  %v1215 = vunpack.c.l.b16 %v208
  %v1216 = vunpack.c.h.b16 %v208
  %v1217 = vunpack.c.l.b16 %v209
  %v1218 = vunpack.c.h.b16 %v209
  %v1219 = vunpack.c.l.b16 %v210
  %v1220 = vunpack.c.h.b16 %v210
  %v1221 = vunpack.c.l.b16 %v211
  %v1222 = vunpack.c.h.b16 %v211
  %v1223 = vunpack.c.l.b16 %v212
  %v1224 = vunpack.c.h.b16 %v212
  %v1225 = vunpack.c.l.b16 %v213
  %v1226 = vunpack.c.h.b16 %v213
  %v1227 = vunpack.c.l.b16 %v214
  %v1228 = vunpack.c.h.b16 %v214
  %v1229 = vunpack.c.l.b16 %v215
  %v1230 = vunpack.c.h.b16 %v215
  %v1231 = vunpack.c.l.b16 %v216
  %v1232 = vunpack.c.h.b16 %v216
  %v1233 = vunpack.c.l.b16 %v217
  %v1234 = vunpack.c.h.b16 %v217
  %v1235 = vunpack.c.l.b16 %v218
  %v1236 = vunpack.c.h.b16 %v218
  %v1237 = vunpack.c.l.b16 %v219
  %v1238 = vunpack.c.h.b16 %v219
  %v1239 = vunpack.c.l.b16 %v220
  %v1240 = vunpack.c.h.b16 %v220
  %v1241 = vunpack.c.l.b16 %v221
  %v1242 = vunpack.c.h.b16 %v221
  %v1243 = vunpack.c.l.b16 %v222
  %v1244 = vunpack.c.h.b16 %v222
  %v1245 = vunpack.c.l.b16 %v223
  %v1246 = vunpack.c.h.b16 %v223
  %v1247 = vunpack.c.l.b16 %v224
  %v1248 = vunpack.c.h.b16 %v224
  %v1249 = vunpack.c.l.b16 %v225
  %v1250 = vunpack.c.h.b16 %v225
  %v1251 = vunpack.c.l.b16 %v226
  %v1252 = vunpack.c.h.b16 %v226
  %v1253 = vunpack.c.l.b16 %v227
  %v1254 = vunpack.c.h.b16 %v227
  %v1255 = vunpack.c.l.b16 %v228
  %v1256 = vunpack.c.h.b16 %v228
  %v1257 = vunpack.c.l.b16 %v229
  %v1258 = vunpack.c.h.b16 %v229
  %v1259 = vunpack.c.l.b16 %v230
  %v1260 = vunpack.c.h.b16 %v230
  %v1261 = vunpack.c.l.b16 %v231
  %v1262 = vunpack.c.h.b16 %v231
  %v1263 = vunpack.c.l.b16 %v232
  %v1264 = vunpack.c.h.b16 %v232
  %v1265 = vunpack.c.l.b16 %v233
  %v1266 = vunpack.c.h.b16 %v233
  %v1267 = vunpack.c.l.b16 %v234
  %v1268 = vunpack.c.h.b16 %v234
  %v1269 = vunpack.c.l.b16 %v235
  %v1270 = vunpack.c.h.b16 %v235
  %v1271 = vunpack.c.l.b16 %v236
  %v1272 = vunpack.c.h.b16 %v236
  %v1273 = vunpack.c.l.b16 %v237
  %v1274 = vunpack.c.h.b16 %v237
  %v1275 = vunpack.c.l.b16 %v238
  %v1276 = vunpack.c.h.b16 %v238
  %v1277 = vunpack.c.l.b16 %v239
  %v1278 = vunpack.c.h.b16 %v239
  %v1279 = vunpack.c.l.b16 %v240
  %v1280 = vunpack.c.h.b16 %v240
  %v1281 = vunpack.c.l.b16 %v241
  %v1282 = vunpack.c.h.b16 %v241
  %v1283 = vunpack.c.l.b16 %v242
  %v1284 = vunpack.c.h.b16 %v242
  %v1285 = vunpack.c.l.b16 %v243
  %v1286 = vunpack.c.h.b16 %v243
  %v1287 = vunpack.c.l.b16 %v244
  %v1288 = vunpack.c.h.b16 %v244
  %v1289 = vunpack.c.l.b16 %v245
  %v1290 = vunpack.c.h.b16 %v245
  %v1291 = vunpack.c.l.b16 %v246
  %v1292 = vunpack.c.h.b16 %v246
  %v1293 = vunpack.c.l.b16 %v247
  %v1294 = vunpack.c.h.b16 %v247
  %v1295 = vunpack.c.l.b16 %v248
  %v1296 = vunpack.c.h.b16 %v248
  %v1297 = vunpack.c.l.b16 %v249
  %v1298 = vunpack.c.h.b16 %v249
  %v1299 = vunpack.c.l.b16 %v250
  %v1300 = vunpack.c.h.b16 %v250
  %v1301 = vunpack.c.l.b16 %v251
  %v1302 = vunpack.c.h.b16 %v251
  %v1303 = vunpack.c.l.b16 %v252
  %v1304 = vunpack.c.h.b16 %v252
  %v1305 = vunpack.c.l.b16 %v253
  %v1306 = vunpack.c.h.b16 %v253
  %v1307 = vunpack.c.l.b16 %v254
  %v1308 = vunpack.c.h.b16 %v254
  %v1309 = vunpack.c.l.b16 %v255
  %v1310 = vunpack.c.h.b16 %v255
  %v1311 = vunpack.c.l.b16 %v256
  %v1312 = vunpack.c.h.b16 %v256
  %v1313 = vunpack.c.l.b16 %v257
  %v1314 = vunpack.c.h.b16 %v257
  %v1315 = vunpack.c.l.b16 %v258
  %v1316 = vunpack.c.h.b16 %v258
  %v1317 = vunpack.c.l.b16 %v259
  %v1318 = vunpack.c.h.b16 %v259
  %v1319 = vunpack.c.l.b16 %v260
  %v1320 = vunpack.c.h.b16 %v260
  %v1321 = vunpack.c.l.b16 %v261
  %v1322 = vunpack.c.h.b16 %v261
  %v1323 = vunpack.c.l.b16 %v262
  %v1324 = vunpack.c.h.b16 %v262
  %v1325 = vunpack.c.l.b16 %v263
  %v1326 = vunpack.c.h.b16 %v263
  %v1327 = vunpack.c.l.b16 %v264
  %v1328 = vunpack.c.h.b16 %v264
  %v1329 = vunpack.c.l.b16 %v265
  %v1330 = vunpack.c.h.b16 %v265
  %v1331 = vunpack.c.l.b16 %v266
  %v1332 = vunpack.c.h.b16 %v266
  %v1333 = vunpack.c.l.b16 %v267
  %v1334 = vunpack.c.h.b16 %v267
  %v1335 = vunpack.c.l.b16 %v268
  %v1336 = vunpack.c.h.b16 %v268
  %v1337 = vunpack.c.l.b16 %v269
  %v1338 = vunpack.c.h.b16 %v269
  %v1339 = vunpack.c.l.b16 %v270
  %v1340 = vunpack.c.h.b16 %v270
  %v1341 = vunpack.c.l.b16 %v271
  %v1342 = vunpack.c.h.b16 %v271
  %v1343 = vunpack.c.l.b16 %v272
  %v1344 = vunpack.c.h.b16 %v272
  %v1345 = vunpack.c.l.b16 %v273
  %v1346 = vunpack.c.h.b16 %v273
  %v1347 = vunpack.c.l.b16 %v274
  %v1348 = vunpack.c.h.b16 %v274
  %v1349 = vunpack.c.l.b16 %v275
  %v1350 = vunpack.c.h.b16 %v275
  %v1351 = vunpack.c.l.b16 %v276
  %v1352 = vunpack.c.h.b16 %v276
  %v1353 = vunpack.c.l.b16 %v277
  %v1354 = vunpack.c.h.b16 %v277
  %v1355 = vunpack.c.l.b16 %v278
  %v1356 = vunpack.c.h.b16 %v278
  %v1357 = vunpack.c.l.b16 %v279
  %v1358 = vunpack.c.h.b16 %v279
  %v1359 = vunpack.c.l.b16 %v280
  %v1360 = vunpack.c.h.b16 %v280
  %v1361 = vunpack.c.l.b16 %v281
  %v1362 = vunpack.c.h.b16 %v281
  %v1363 = vunpack.c.l.b16 %v282
  %v1364 = vunpack.c.h.b16 %v282
  %v1365 = vunpack.c.l.b16 %v283
  %v1366 = vunpack.c.h.b16 %v283
  %v1367 = vunpack.c.l.b16 %v284
  %v1368 = vunpack.c.h.b16 %v284
  %v1369 = vunpack.c.l.b16 %v285
  %v1370 = vunpack.c.h.b16 %v285
  %v1371 = vunpack.c.l.b16 %v286
  %v1372 = vunpack.c.h.b16 %v286
  %v1373 = vunpack.c.l.b16 %v287
  %v1374 = vunpack.c.h.b16 %v287
  %v1375 = vunpack.c.l.b16 %v288
  %v1376 = vunpack.c.h.b16 %v288
  %v1377 = vunpack.c.l.b16 %v289
  %v1378 = vunpack.c.h.b16 %v289
  %v1379 = vunpack.c.l.b16 %v290
  %v1380 = vunpack.c.h.b16 %v290
  %v1381 = vunpack.c.l.b16 %v291
  %v1382 = vunpack.c.h.b16 %v291
  %v1383 = vunpack.c.l.b16 %v292
  %v1384 = vunpack.c.h.b16 %v292
  %v1385 = vunpack.c.l.b16 %v293
  %v1386 = vunpack.c.h.b16 %v293
  %v1387 = vunpack.c.l.b16 %v294
  %v1388 = vunpack.c.h.b16 %v294
  %v1389 = vunpack.c.l.b16 %v295
  %v1390 = vunpack.c.h.b16 %v295
  %v1391 = vunpack.c.l.b16 %v296
  %v1392 = vunpack.c.h.b16 %v296
  %v1393 = vunpack.c.l.b16 %v297
  %v1394 = vunpack.c.h.b16 %v297
  %v1395 = vunpack.c.l.b16 %v298
  %v1396 = vunpack.c.h.b16 %v298
  %v1397 = vunpack.c.l.b16 %v299
  %v1398 = vunpack.c.h.b16 %v299
  %v1399 = vunpack.c.l.b16 %v300
  %v1400 = vunpack.c.h.b16 %v300
  %v1401 = vunpack.c.l.b16 %v301
  %v1402 = vunpack.c.h.b16 %v301
  %v1403 = vunpack.c.l.b16 %v302
  %v1404 = vunpack.c.h.b16 %v302
  %v1405 = vunpack.c.l.b16 %v303
  %v1406 = vunpack.c.h.b16 %v303
  %v1407 = vunpack.c.l.b16 %v304
  %v1408 = vunpack.c.h.b16 %v304
  %v1409 = vunpack.c.l.b16 %v305
  %v1410 = vunpack.c.h.b16 %v305
  %v1411 = vunpack.c.l.b16 %v306
  %v1412 = vunpack.c.h.b16 %v306
  %v1413 = vunpack.c.l.b16 %v307
  %v1414 = vunpack.c.h.b16 %v307
  %v1415 = vunpack.c.l.b16 %v308
  %v1416 = vunpack.c.h.b16 %v308
  %v1417 = vunpack.c.l.b16 %v309
  %v1418 = vunpack.c.h.b16 %v309
  %v1419 = vunpack.c.l.b16 %v310
  %v1420 = vunpack.c.h.b16 %v310
  %v1421 = vunpack.c.l.b16 %v311
  %v1422 = vunpack.c.h.b16 %v311
  %v1423 = vunpack.c.l.b16 %v312
  %v1424 = vunpack.c.h.b16 %v312
  %v1425 = vunpack.c.l.b16 %v313
  %v1426 = vunpack.c.h.b16 %v313
  %v1427 = vunpack.c.l.b16 %v314
  %v1428 = vunpack.c.h.b16 %v314
  %v1429 = vunpack.c.l.b16 %v315
  %v1430 = vunpack.c.h.b16 %v315
  %v1431 = vunpack.c.l.b16 %v316
  %v1432 = vunpack.c.h.b16 %v316
  %v1433 = vunpack.c.l.b16 %v317
  %v1434 = vunpack.c.h.b16 %v317
  %v1435 = vunpack.c.l.b16 %v318
  %v1436 = vunpack.c.h.b16 %v318
  %v1437 = vunpack.c.l.b16 %v319
  %v1438 = vunpack.c.h.b16 %v319
  %v1439 = vunpack.c.l.b16 %v320
  %v1440 = vunpack.c.h.b16 %v320
  %v1441 = vunpack.c.l.b16 %v321
  %v1442 = vunpack.c.h.b16 %v321
  %v1443 = vunpack.c.l.b16 %v322
  %v1444 = vunpack.c.h.b16 %v322
  %v1445 = vunpack.c.l.b16 %v323
  %v1446 = vunpack.c.h.b16 %v323
  %v1447 = vunpack.c.l.b16 %v324
  %v1448 = vunpack.c.h.b16 %v324
  %v1449 = vunpack.c.l.b16 %v325
  %v1450 = vunpack.c.h.b16 %v325
  %v1451 = vunpack.c.l.b16 %v326
  %v1452 = vunpack.c.h.b16 %v326
  %v1453 = vunpack.c.l.b16 %v327
  %v1454 = vunpack.c.h.b16 %v327
  %v1455 = vunpack.c.l.b16 %v328
  %v1456 = vunpack.c.h.b16 %v328
  %v1457 = vunpack.c.l.b16 %v329
  %v1458 = vunpack.c.h.b16 %v329
  %v1459 = vunpack.c.l.b16 %v330
  %v1460 = vunpack.c.h.b16 %v330
  %v1461 = vunpack.c.l.b16 %v331
  %v1462 = vunpack.c.h.b16 %v331
  %v1463 = vunpack.c.l.b16 %v332
  %v1464 = vunpack.c.h.b16 %v332
  %v1465 = vunpack.c.l.b16 %v333
  %v1466 = vunpack.c.h.b16 %v333
  %v1467 = vunpack.c.l.b16 %v334
  %v1468 = vunpack.c.h.b16 %v334
  %v1469 = vunpack.c.l.b16 %v335
  %v1470 = vunpack.c.h.b16 %v335
  %v1471 = vunpack.c.l.b16 %v336
  %v1472 = vunpack.c.h.b16 %v336
  %v1473 = vunpack.c.l.b16 %v337
  %v1474 = vunpack.c.h.b16 %v337
  %v1475 = vunpack.c.l.b16 %v338
  %v1476 = vunpack.c.h.b16 %v338
  %v1477 = vunpack.c.l.b16 %v339
  %v1478 = vunpack.c.h.b16 %v339
  %v1479 = vunpack.c.l.b16 %v340
  %v1480 = vunpack.c.h.b16 %v340
  %v1481 = vunpack.c.l.b16 %v341
  %v1482 = vunpack.c.h.b16 %v341
  %v1483 = vunpack.c.l.b16 %v342
  %v1484 = vunpack.c.h.b16 %v342
  %v1485 = vunpack.c.l.b16 %v343
  %v1486 = vunpack.c.h.b16 %v343
  %v1487 = vunpack.c.l.b16 %v344
  %v1488 = vunpack.c.h.b16 %v344
  %v1489 = vunpack.c.l.b16 %v345
  %v1490 = vunpack.c.h.b16 %v345
  %v1491 = vunpack.c.l.b16 %v346
  %v1492 = vunpack.c.h.b16 %v346
  %v1493 = vunpack.c.l.b16 %v347
  %v1494 = vunpack.c.h.b16 %v347
  %v1495 = vunpack.c.l.b16 %v348
  %v1496 = vunpack.c.h.b16 %v348
  %v1497 = vunpack.c.l.b16 %v349
  %v1498 = vunpack.c.h.b16 %v349
  %v1499 = vunpack.c.l.b16 %v350
  %v1500 = vunpack.c.h.b16 %v350
  %v1501 = vunpack.c.l.b16 %v351
  %v1502 = vunpack.c.h.b16 %v351
  %v1503 = vunpack.c.l.b16 %v352
  %v1504 = vunpack.c.h.b16 %v352
  %v1505 = vunpack.c.l.b16 %v353
  %v1506 = vunpack.c.h.b16 %v353
  %v1507 = vunpack.c.l.b16 %v354
  %v1508 = vunpack.c.h.b16 %v354
  %v1509 = vunpack.c.l.b16 %v355
  %v1510 = vunpack.c.h.b16 %v355
  %v1511 = vunpack.c.l.b16 %v356
  %v1512 = vunpack.c.h.b16 %v356
  %v1513 = vunpack.c.l.b16 %v357
  %v1514 = vunpack.c.h.b16 %v357
  %v1515 = vunpack.c.l.b16 %v358
  %v1516 = vunpack.c.h.b16 %v358
  %v1517 = vunpack.c.l.b16 %v359
  %v1518 = vunpack.c.h.b16 %v359
  %v1519 = vunpack.c.l.b16 %v360
  %v1520 = vunpack.c.h.b16 %v360
  %v1521 = vunpack.c.l.b16 %v361
  %v1522 = vunpack.c.h.b16 %v361
  %v1523 = vunpack.c.l.b16 %v362
  %v1524 = vunpack.c.h.b16 %v362
  %v1525 = vunpack.c.l.b16 %v363
  %v1526 = vunpack.c.h.b16 %v363
  %v1527 = vunpack.c.l.b16 %v364
  %v1528 = vunpack.c.h.b16 %v364
  %v1529 = vunpack.c.l.b16 %v365
  %v1530 = vunpack.c.h.b16 %v365
  %v1531 = vunpack.c.l.b16 %v366
  %v1532 = vunpack.c.h.b16 %v366
  %v1533 = vunpack.c.l.b16 %v367
  %v1534 = vunpack.c.h.b16 %v367
  %v1535 = vunpack.c.l.b16 %v368
  %v1536 = vunpack.c.h.b16 %v368
  %v1537 = vunpack.c.l.b16 %v369
  %v1538 = vunpack.c.h.b16 %v369
  %v1539 = vunpack.c.l.b16 %v370
  %v1540 = vunpack.c.h.b16 %v370
  %v1541 = vunpack.c.l.b16 %v371
  %v1542 = vunpack.c.h.b16 %v371
  %v1543 = vunpack.c.l.b16 %v372
  %v1544 = vunpack.c.h.b16 %v372
  %v1545 = vunpack.c.l.b16 %v373
  %v1546 = vunpack.c.h.b16 %v373
  %v1547 = vunpack.c.l.b16 %v374
  %v1548 = vunpack.c.h.b16 %v374
  %v1549 = vunpack.c.l.b16 %v375
  %v1550 = vunpack.c.h.b16 %v375
  %v1551 = vunpack.c.l.b16 %v376
  %v1552 = vunpack.c.h.b16 %v376
  %v1553 = vunpack.c.l.b16 %v377
  %v1554 = vunpack.c.h.b16 %v377
  %v1555 = vunpack.c.l.b16 %v378
  %v1556 = vunpack.c.h.b16 %v378
  %v1557 = vunpack.c.l.b16 %v379
  %v1558 = vunpack.c.h.b16 %v379
  %v1559 = vunpack.c.l.b16 %v380
  %v1560 = vunpack.c.h.b16 %v380
  %v1561 = vunpack.c.l.b16 %v381
  %v1562 = vunpack.c.h.b16 %v381
  %v1563 = vunpack.c.l.b16 %v382
  %v1564 = vunpack.c.h.b16 %v382
  %v1565 = vunpack.c.l.b16 %v383
  %v1566 = vunpack.c.h.b16 %v383
  %v1567 = vunpack.c.l.b16 %v384
  %v1568 = vunpack.c.h.b16 %v384
  %v1569 = vunpack.c.l.b16 %v385
  %v1570 = vunpack.c.h.b16 %v385
  %v1571 = vunpack.c.l.b16 %v386
  %v1572 = vunpack.c.h.b16 %v386
  %v1573 = vunpack.c.l.b16 %v387
  %v1574 = vunpack.c.h.b16 %v387
  %v1575 = vunpack.c.l.b16 %v388
  %v1576 = vunpack.c.h.b16 %v388
  %v1577 = vunpack.c.l.b16 %v389
  %v1578 = vunpack.c.h.b16 %v389
  %v1579 = vunpack.c.l.b16 %v390
  %v1580 = vunpack.c.h.b16 %v390
  %v1581 = vunpack.c.l.b16 %v391
  %v1582 = vunpack.c.h.b16 %v391
  %v1583 = vunpack.c.l.b16 %v392
  %v1584 = vunpack.c.h.b16 %v392
  %v1585 = vunpack.c.l.b16 %v393
  %v1586 = vunpack.c.h.b16 %v393
  %v1587 = vunpack.c.l.b16 %v394
  %v1588 = vunpack.c.h.b16 %v394
  %v1589 = vunpack.c.l.b16 %v395
  %v1590 = vunpack.c.h.b16 %v395
  %v1591 = vunpack.c.l.b16 %v396
  %v1592 = vunpack.c.h.b16 %v396
  %v1593 = vunpack.c.l.b16 %v397
  %v1594 = vunpack.c.h.b16 %v397
  %v1595 = vunpack.c.l.b16 %v398
  %v1596 = vunpack.c.h.b16 %v398
  %v1597 = vunpack.c.l.b16 %v399
  %v1598 = vunpack.c.h.b16 %v399
  %v1599 = vunpack.c.l.b16 %v400
  %v1600 = vunpack.c.h.b16 %v400
  %v1601 = vunpack.c.l.b16 %v401
  %v1602 = vunpack.c.h.b16 %v401
  %v1603 = vunpack.c.l.b16 %v402
  %v1604 = vunpack.c.h.b16 %v402
  %v1605 = vunpack.c.l.b16 %v403
  %v1606 = vunpack.c.h.b16 %v403
  %v1607 = vunpack.c.l.b16 %v404
  %v1608 = vunpack.c.h.b16 %v404
  %v1609 = vunpack.c.l.b16 %v405
  %v1610 = vunpack.c.h.b16 %v405
  %v1611 = vunpack.c.l.b16 %v406
  %v1612 = vunpack.c.h.b16 %v406
  %v1613 = vunpack.c.l.b16 %v407
  %v1614 = vunpack.c.h.b16 %v407
  %v1615 = vunpack.c.l.b16 %v408
  %v1616 = vunpack.c.h.b16 %v408
  %v1617 = vunpack.c.l.b16 %v409
  %v1618 = vunpack.c.h.b16 %v409
  %v1619 = vunpack.c.l.b16 %v410
  %v1620 = vunpack.c.h.b16 %v410
  %v1621 = vunpack.c.l.b16 %v411
  %v1622 = vunpack.c.h.b16 %v411
  %v1623 = vunpack.c.l.b16 %v412
  %v1624 = vunpack.c.h.b16 %v412
  %v1625 = vunpack.c.l.b16 %v413
  %v1626 = vunpack.c.h.b16 %v413
  %v1627 = vunpack.c.l.b16 %v414
  %v1628 = vunpack.c.h.b16 %v414
  %v1629 = vunpack.c.l.b16 %v415
  %v1630 = vunpack.c.h.b16 %v415
  %v1631 = vunpack.c.l.b16 %v416
  %v1632 = vunpack.c.h.b16 %v416
  %v1633 = vpack.c.b16 %v869, %v865
  %v1634 = vpack.c.b16 %v870, %v866
  %v1635 = vpack.c.b16 %v871, %v867
  %v1636 = vpack.c.b16 %v872, %v868
  %v1637 = vpack.c.b16 %v877, %v873
  %v1638 = vpack.c.b16 %v878, %v874
  %v1639 = vpack.c.b16 %v879, %v875
  %v1640 = vpack.c.b16 %v880, %v876
  %v1641 = vpack.c.b16 %v885, %v881
  %v1642 = vpack.c.b16 %v886, %v882
  %v1643 = vpack.c.b16 %v887, %v883
  %v1644 = vpack.c.b16 %v888, %v884
  %v1645 = vpack.c.b16 %v893, %v889
  %v1646 = vpack.c.b16 %v894, %v890
  %v1647 = vpack.c.b16 %v895, %v891
  %v1648 = vpack.c.b16 %v896, %v892
  %v1649 = vpack.c.b16 %v901, %v897
  %v1650 = vpack.c.b16 %v902, %v898
  %v1651 = vpack.c.b16 %v903, %v899
  %v1652 = vpack.c.b16 %v904, %v900
  %v1653 = vpack.c.b16 %v909, %v905
  %v1654 = vpack.c.b16 %v910, %v906
  %v1655 = vpack.c.b16 %v911, %v907
  %v1656 = vpack.c.b16 %v912, %v908
  %v1657 = vpack.c.b16 %v917, %v913
  %v1658 = vpack.c.b16 %v918, %v914
  %v1659 = vpack.c.b16 %v919, %v915
  %v1660 = vpack.c.b16 %v920, %v916
  %v1661 = vpack.c.b16 %v925, %v921
  %v1662 = vpack.c.b16 %v926, %v922
  %v1663 = vpack.c.b16 %v927, %v923
  %v1664 = vpack.c.b16 %v928, %v924
  %v1665 = vpack.c.b16 %v933, %v929
  %v1666 = vpack.c.b16 %v934, %v930
  %v1667 = vpack.c.b16 %v935, %v931
  %v1668 = vpack.c.b16 %v936, %v932
  %v1669 = vpack.c.b16 %v941, %v937
  %v1670 = vpack.c.b16 %v942, %v938
  %v1671 = vpack.c.b16 %v943, %v939
  %v1672 = vpack.c.b16 %v944, %v940
  %v1673 = vpack.c.b16 %v949, %v945
  %v1674 = vpack.c.b16 %v950, %v946
  %v1675 = vpack.c.b16 %v951, %v947
  %v1676 = vpack.c.b16 %v952, %v948
  %v1677 = vpack.c.b16 %v957, %v953
  %v1678 = vpack.c.b16 %v958, %v954
  %v1679 = vpack.c.b16 %v959, %v955
  %v1680 = vpack.c.b16 %v960, %v956
  %v1681 = vpack.c.b16 %v965, %v961
  %v1682 = vpack.c.b16 %v966, %v962
  %v1683 = vpack.c.b16 %v967, %v963
  %v1684 = vpack.c.b16 %v968, %v964
  %v1685 = vpack.c.b16 %v973, %v969
  %v1686 = vpack.c.b16 %v974, %v970
  %v1687 = vpack.c.b16 %v975, %v971
  %v1688 = vpack.c.b16 %v976, %v972
  %v1689 = vpack.c.b16 %v981, %v977
  %v1690 = vpack.c.b16 %v982, %v978
  %v1691 = vpack.c.b16 %v983, %v979
  %v1692 = vpack.c.b16 %v984, %v980
  %v1693 = vpack.c.b16 %v989, %v985
  %v1694 = vpack.c.b16 %v990, %v986
  %v1695 = vpack.c.b16 %v991, %v987
  %v1696 = vpack.c.b16 %v992, %v988
  %v1697 = vpack.c.b16 %v997, %v993
  %v1698 = vpack.c.b16 %v998, %v994
  %v1699 = vpack.c.b16 %v999, %v995
  %v1700 = vpack.c.b16 %v1000, %v996
  %v1701 = vpack.c.b16 %v1005, %v1001
  %v1702 = vpack.c.b16 %v1006, %v1002
  %v1703 = vpack.c.b16 %v1007, %v1003
  %v1704 = vpack.c.b16 %v1008, %v1004
  %v1705 = vpack.c.b16 %v1013, %v1009
  %v1706 = vpack.c.b16 %v1014, %v1010
  %v1707 = vpack.c.b16 %v1015, %v1011
  %v1708 = vpack.c.b16 %v1016, %v1012
  %v1709 = vpack.c.b16 %v1021, %v1017
  %v1710 = vpack.c.b16 %v1022, %v1018
  %v1711 = vpack.c.b16 %v1023, %v1019
  %v1712 = vpack.c.b16 %v1024, %v1020
  %v1713 = vpack.c.b16 %v1029, %v1025
  %v1714 = vpack.c.b16 %v1030, %v1026
  %v1715 = vpack.c.b16 %v1031, %v1027
  %v1716 = vpack.c.b16 %v1032, %v1028
  %v1717 = vpack.c.b16 %v1037, %v1033
  %v1718 = vpack.c.b16 %v1038, %v1034
  %v1719 = vpack.c.b16 %v1039, %v1035
  %v1720 = vpack.c.b16 %v1040, %v1036
  %v1721 = vpack.c.b16 %v1045, %v1041
  %v1722 = vpack.c.b16 %v1046, %v1042
  %v1723 = vpack.c.b16 %v1047, %v1043
  %v1724 = vpack.c.b16 %v1048, %v1044
  %v1725 = vpack.c.b16 %v1053, %v1049
  %v1726 = vpack.c.b16 %v1054, %v1050
  %v1727 = vpack.c.b16 %v1055, %v1051
  %v1728 = vpack.c.b16 %v1056, %v1052
  %v1729 = vpack.c.b16 %v1061, %v1057
  %v1730 = vpack.c.b16 %v1062, %v1058
  %v1731 = vpack.c.b16 %v1063, %v1059
  %v1732 = vpack.c.b16 %v1064, %v1060
  %v1733 = vpack.c.b16 %v1069, %v1065
  %v1734 = vpack.c.b16 %v1070, %v1066
  %v1735 = vpack.c.b16 %v1071, %v1067
  %v1736 = vpack.c.b16 %v1072, %v1068
  %v1737 = vpack.c.b16 %v1077, %v1073
  %v1738 = vpack.c.b16 %v1078, %v1074
  %v1739 = vpack.c.b16 %v1079, %v1075
  %v1740 = vpack.c.b16 %v1080, %v1076
  %v1741 = vpack.c.b16 %v1085, %v1081
  %v1742 = vpack.c.b16 %v1086, %v1082
  %v1743 = vpack.c.b16 %v1087, %v1083
  %v1744 = vpack.c.b16 %v1088, %v1084
  %v1745 = vpack.c.b16 %v1093, %v1089
  %v1746 = vpack.c.b16 %v1094, %v1090
  %v1747 = vpack.c.b16 %v1095, %v1091
  %v1748 = vpack.c.b16 %v1096, %v1092
  %v1749 = vpack.c.b16 %v1101, %v1097
  %v1750 = vpack.c.b16 %v1102, %v1098
  %v1751 = vpack.c.b16 %v1103, %v1099
  %v1752 = vpack.c.b16 %v1104, %v1100
  %v1753 = vpack.c.b16 %v1109, %v1105
  %v1754 = vpack.c.b16 %v1110, %v1106
  %v1755 = vpack.c.b16 %v1111, %v1107
  %v1756 = vpack.c.b16 %v1112, %v1108
  %v1757 = vpack.c.b16 %v1117, %v1113
  %v1758 = vpack.c.b16 %v1118, %v1114
  %v1759 = vpack.c.b16 %v1119, %v1115
  %v1760 = vpack.c.b16 %v1120, %v1116
  %v1761 = vpack.c.b16 %v1125, %v1121
  %v1762 = vpack.c.b16 %v1126, %v1122
  %v1763 = vpack.c.b16 %v1127, %v1123
  %v1764 = vpack.c.b16 %v1128, %v1124
  %v1765 = vpack.c.b16 %v1133, %v1129
  %v1766 = vpack.c.b16 %v1134, %v1130
  %v1767 = vpack.c.b16 %v1135, %v1131
  %v1768 = vpack.c.b16 %v1136, %v1132
  %v1769 = vpack.c.b16 %v1141, %v1137
  %v1770 = vpack.c.b16 %v1142, %v1138
  %v1771 = vpack.c.b16 %v1143, %v1139
  %v1772 = vpack.c.b16 %v1144, %v1140
  %v1773 = vpack.c.b16 %v1149, %v1145
  %v1774 = vpack.c.b16 %v1150, %v1146
  %v1775 = vpack.c.b16 %v1151, %v1147
  %v1776 = vpack.c.b16 %v1152, %v1148
  %v1777 = vpack.c.b16 %v1157, %v1153
  %v1778 = vpack.c.b16 %v1158, %v1154
  %v1779 = vpack.c.b16 %v1159, %v1155
  %v1780 = vpack.c.b16 %v1160, %v1156
  %v1781 = vpack.c.b16 %v1165, %v1161
  %v1782 = vpack.c.b16 %v1166, %v1162
  %v1783 = vpack.c.b16 %v1167, %v1163
  %v1784 = vpack.c.b16 %v1168, %v1164
  %v1785 = vpack.c.b16 %v1173, %v1169
  %v1786 = vpack.c.b16 %v1174, %v1170
  %v1787 = vpack.c.b16 %v1175, %v1171
  %v1788 = vpack.c.b16 %v1176, %v1172
  %v1789 = vpack.c.b16 %v1181, %v1177
  %v1790 = vpack.c.b16 %v1182, %v1178
  %v1791 = vpack.c.b16 %v1183, %v1179
  %v1792 = vpack.c.b16 %v1184, %v1180
  %v1793 = vpack.c.b16 %v1189, %v1185
  %v1794 = vpack.c.b16 %v1190, %v1186
  %v1795 = vpack.c.b16 %v1191, %v1187
  %v1796 = vpack.c.b16 %v1192, %v1188
  %v1797 = vpack.c.b16 %v1197, %v1193
  %v1798 = vpack.c.b16 %v1198, %v1194
  %v1799 = vpack.c.b16 %v1199, %v1195
  %v1800 = vpack.c.b16 %v1200, %v1196
  %v1801 = vpack.c.b16 %v1205, %v1201
  %v1802 = vpack.c.b16 %v1206, %v1202
  %v1803 = vpack.c.b16 %v1207, %v1203
  %v1804 = vpack.c.b16 %v1208, %v1204
  %v1805 = vpack.c.b16 %v1213, %v1209
  %v1806 = vpack.c.b16 %v1214, %v1210
  %v1807 = vpack.c.b16 %v1215, %v1211
  %v1808 = vpack.c.b16 %v1216, %v1212
  %v1809 = vpack.c.b16 %v1221, %v1217
  %v1810 = vpack.c.b16 %v1222, %v1218
  %v1811 = vpack.c.b16 %v1223, %v1219
  %v1812 = vpack.c.b16 %v1224, %v1220
  %v1813 = vpack.c.b16 %v1229, %v1225
  %v1814 = vpack.c.b16 %v1230, %v1226
  %v1815 = vpack.c.b16 %v1231, %v1227
  %v1816 = vpack.c.b16 %v1232, %v1228
  %v1817 = vpack.c.b16 %v1237, %v1233
  %v1818 = vpack.c.b16 %v1238, %v1234
  %v1819 = vpack.c.b16 %v1239, %v1235
  %v1820 = vpack.c.b16 %v1240, %v1236
  %v1821 = vpack.c.b16 %v1245, %v1241
  %v1822 = vpack.c.b16 %v1246, %v1242
  %v1823 = vpack.c.b16 %v1247, %v1243
  %v1824 = vpack.c.b16 %v1248, %v1244
  %v1825 = vpack.c.b16 %v1253, %v1249
  %v1826 = vpack.c.b16 %v1254, %v1250
  %v1827 = vpack.c.b16 %v1255, %v1251
  %v1828 = vpack.c.b16 %v1256, %v1252
  %v1829 = vpack.c.b16 %v1261, %v1257
  %v1830 = vpack.c.b16 %v1262, %v1258
  %v1831 = vpack.c.b16 %v1263, %v1259
  %v1832 = vpack.c.b16 %v1264, %v1260
  %v1833 = vpack.c.b16 %v1269, %v1265
  %v1834 = vpack.c.b16 %v1270, %v1266
  %v1835 = vpack.c.b16 %v1271, %v1267
  %v1836 = vpack.c.b16 %v1272, %v1268
  %v1837 = vpack.c.b16 %v1277, %v1273
  %v1838 = vpack.c.b16 %v1278, %v1274
  %v1839 = vpack.c.b16 %v1279, %v1275
  %v1840 = vpack.c.b16 %v1280, %v1276
  %v1841 = vpack.c.b16 %v1285, %v1281
  %v1842 = vpack.c.b16 %v1286, %v1282
  %v1843 = vpack.c.b16 %v1287, %v1283
  %v1844 = vpack.c.b16 %v1288, %v1284
  %v1845 = vpack.c.b16 %v1293, %v1289
  %v1846 = vpack.c.b16 %v1294, %v1290
  %v1847 = vpack.c.b16 %v1295, %v1291
  %v1848 = vpack.c.b16 %v1296, %v1292
  %v1849 = vpack.c.b16 %v1301, %v1297
  %v1850 = vpack.c.b16 %v1302, %v1298
  %v1851 = vpack.c.b16 %v1303, %v1299
  %v1852 = vpack.c.b16 %v1304, %v1300
  %v1853 = vpack.c.b16 %v1309, %v1305
  %v1854 = vpack.c.b16 %v1310, %v1306
  %v1855 = vpack.c.b16 %v1311, %v1307
  %v1856 = vpack.c.b16 %v1312, %v1308
  %v1857 = vpack.c.b16 %v1317, %v1313
  %v1858 = vpack.c.b16 %v1318, %v1314
  %v1859 = vpack.c.b16 %v1319, %v1315
  %v1860 = vpack.c.b16 %v1320, %v1316
  %v1861 = vpack.c.b16 %v1325, %v1321
  %v1862 = vpack.c.b16 %v1326, %v1322
  %v1863 = vpack.c.b16 %v1327, %v1323
  %v1864 = vpack.c.b16 %v1328, %v1324
  %v1865 = vpack.c.b16 %v1333, %v1329
  %v1866 = vpack.c.b16 %v1334, %v1330
  %v1867 = vpack.c.b16 %v1335, %v1331
  %v1868 = vpack.c.b16 %v1336, %v1332
  %v1869 = vpack.c.b16 %v1341, %v1337
  %v1870 = vpack.c.b16 %v1342, %v1338
  %v1871 = vpack.c.b16 %v1343, %v1339
  %v1872 = vpack.c.b16 %v1344, %v1340
  %v1873 = vpack.c.b16 %v1349, %v1345
  %v1874 = vpack.c.b16 %v1350, %v1346
  %v1875 = vpack.c.b16 %v1351, %v1347
  %v1876 = vpack.c.b16 %v1352, %v1348
  %v1877 = vpack.c.b16 %v1357, %v1353
  %v1878 = vpack.c.b16 %v1358, %v1354
  %v1879 = vpack.c.b16 %v1359, %v1355
  %v1880 = vpack.c.b16 %v1360, %v1356
  %v1881 = vpack.c.b16 %v1365, %v1361
  %v1882 = vpack.c.b16 %v1366, %v1362
  %v1883 = vpack.c.b16 %v1367, %v1363
  %v1884 = vpack.c.b16 %v1368, %v1364
  %v1885 = vpack.c.b16 %v1373, %v1369
  %v1886 = vpack.c.b16 %v1374, %v1370
  %v1887 = vpack.c.b16 %v1375, %v1371
  %v1888 = vpack.c.b16 %v1376, %v1372
  %v1889 = vpack.c.b16 %v1381, %v1377
  %v1890 = vpack.c.b16 %v1382, %v1378
  %v1891 = vpack.c.b16 %v1383, %v1379
  %v1892 = vpack.c.b16 %v1384, %v1380
  %v1893 = vpack.c.b16 %v1389, %v1385
  %v1894 = vpack.c.b16 %v1390, %v1386
  %v1895 = vpack.c.b16 %v1391, %v1387
  %v1896 = vpack.c.b16 %v1392, %v1388
  %v1897 = vpack.c.b16 %v1397, %v1393
  %v1898 = vpack.c.b16 %v1398, %v1394
  %v1899 = vpack.c.b16 %v1399, %v1395
  %v1900 = vpack.c.b16 %v1400, %v1396
  %v1901 = vpack.c.b16 %v1405, %v1401
  %v1902 = vpack.c.b16 %v1406, %v1402
  %v1903 = vpack.c.b16 %v1407, %v1403
  %v1904 = vpack.c.b16 %v1408, %v1404
  %v1905 = vpack.c.b16 %v1413, %v1409
  %v1906 = vpack.c.b16 %v1414, %v1410
  %v1907 = vpack.c.b16 %v1415, %v1411
  %v1908 = vpack.c.b16 %v1416, %v1412
  %v1909 = vpack.c.b16 %v1421, %v1417
  %v1910 = vpack.c.b16 %v1422, %v1418
  %v1911 = vpack.c.b16 %v1423, %v1419
  %v1912 = vpack.c.b16 %v1424, %v1420
  %v1913 = vpack.c.b16 %v1429, %v1425
  %v1914 = vpack.c.b16 %v1430, %v1426
  %v1915 = vpack.c.b16 %v1431, %v1427
  %v1916 = vpack.c.b16 %v1432, %v1428
  %v1917 = vpack.c.b16 %v1437, %v1433
  %v1918 = vpack.c.b16 %v1438, %v1434
  %v1919 = vpack.c.b16 %v1439, %v1435
  %v1920 = vpack.c.b16 %v1440, %v1436
  %v1921 = vpack.c.b16 %v1445, %v1441
  %v1922 = vpack.c.b16 %v1446, %v1442
  %v1923 = vpack.c.b16 %v1447, %v1443
  %v1924 = vpack.c.b16 %v1448, %v1444
  %v1925 = vpack.c.b16 %v1453, %v1449
  %v1926 = vpack.c.b16 %v1454, %v1450
  %v1927 = vpack.c.b16 %v1455, %v1451
  %v1928 = vpack.c.b16 %v1456, %v1452
  %v1929 = vpack.c.b16 %v1461, %v1457
  %v1930 = vpack.c.b16 %v1462, %v1458
  %v1931 = vpack.c.b16 %v1463, %v1459
  %v1932 = vpack.c.b16 %v1464, %v1460
  %v1933 = vpack.c.b16 %v1469, %v1465
  %v1934 = vpack.c.b16 %v1470, %v1466
  %v1935 = vpack.c.b16 %v1471, %v1467
  %v1936 = vpack.c.b16 %v1472, %v1468
  %v1937 = vpack.c.b16 %v1477, %v1473
  %v1938 = vpack.c.b16 %v1478, %v1474
  %v1939 = vpack.c.b16 %v1479, %v1475
  %v1940 = vpack.c.b16 %v1480, %v1476
  %v1941 = vpack.c.b16 %v1485, %v1481
  %v1942 = vpack.c.b16 %v1486, %v1482
  %v1943 = vpack.c.b16 %v1487, %v1483
  %v1944 = vpack.c.b16 %v1488, %v1484
  %v1945 = vpack.c.b16 %v1493, %v1489
  %v1946 = vpack.c.b16 %v1494, %v1490
  %v1947 = vpack.c.b16 %v1495, %v1491
  %v1948 = vpack.c.b16 %v1496, %v1492
  %v1949 = vpack.c.b16 %v1501, %v1497
  %v1950 = vpack.c.b16 %v1502, %v1498
  %v1951 = vpack.c.b16 %v1503, %v1499
  %v1952 = vpack.c.b16 %v1504, %v1500
  %v1953 = vpack.c.b16 %v1509, %v1505
  %v1954 = vpack.c.b16 %v1510, %v1506
  %v1955 = vpack.c.b16 %v1511, %v1507
  %v1956 = vpack.c.b16 %v1512, %v1508
  %v1957 = vpack.c.b16 %v1517, %v1513
  %v1958 = vpack.c.b16 %v1518, %v1514
  %v1959 = vpack.c.b16 %v1519, %v1515
  %v1960 = vpack.c.b16 %v1520, %v1516
  %v1961 = vpack.c.b16 %v1525, %v1521
  %v1962 = vpack.c.b16 %v1526, %v1522
  %v1963 = vpack.c.b16 %v1527, %v1523
  %v1964 = vpack.c.b16 %v1528, %v1524
  %v1965 = vpack.c.b16 %v1533, %v1529
  %v1966 = vpack.c.b16 %v1534, %v1530
  %v1967 = vpack.c.b16 %v1535, %v1531
  %v1968 = vpack.c.b16 %v1536, %v1532
  %v1969 = vpack.c.b16 %v1541, %v1537
  %v1970 = vpack.c.b16 %v1542, %v1538
  %v1971 = vpack.c.b16 %v1543, %v1539
  %v1972 = vpack.c.b16 %v1544, %v1540
  %v1973 = vpack.c.b16 %v1549, %v1545
  %v1974 = vpack.c.b16 %v1550, %v1546
  %v1975 = vpack.c.b16 %v1551, %v1547
  %v1976 = vpack.c.b16 %v1552, %v1548
  %v1977 = vpack.c.b16 %v1557, %v1553
  %v1978 = vpack.c.b16 %v1558, %v1554
  %v1979 = vpack.c.b16 %v1559, %v1555
  %v1980 = vpack.c.b16 %v1560, %v1556
  %v1981 = vpack.c.b16 %v1565, %v1561
  %v1982 = vpack.c.b16 %v1566, %v1562
  %v1983 = vpack.c.b16 %v1567, %v1563
  %v1984 = vpack.c.b16 %v1568, %v1564
  %v1985 = vpack.c.b16 %v1573, %v1569
  %v1986 = vpack.c.b16 %v1574, %v1570
  %v1987 = vpack.c.b16 %v1575, %v1571
  %v1988 = vpack.c.b16 %v1576, %v1572
  %v1989 = vpack.c.b16 %v1581, %v1577
  %v1990 = vpack.c.b16 %v1582, %v1578
  %v1991 = vpack.c.b16 %v1583, %v1579
  %v1992 = vpack.c.b16 %v1584, %v1580
  %v1993 = vpack.c.b16 %v1589, %v1585
  %v1994 = vpack.c.b16 %v1590, %v1586
  %v1995 = vpack.c.b16 %v1591, %v1587
  %v1996 = vpack.c.b16 %v1592, %v1588
  %v1997 = vpack.c.b16 %v1597, %v1593
  %v1998 = vpack.c.b16 %v1598, %v1594
  %v1999 = vpack.c.b16 %v1599, %v1595
  %v2000 = vpack.c.b16 %v1600, %v1596
  %v2001 = vpack.c.b16 %v1605, %v1601
  %v2002 = vpack.c.b16 %v1606, %v1602
  %v2003 = vpack.c.b16 %v1607, %v1603
  %v2004 = vpack.c.b16 %v1608, %v1604
  %v2005 = vpack.c.b16 %v1613, %v1609
  %v2006 = vpack.c.b16 %v1614, %v1610
  %v2007 = vpack.c.b16 %v1615, %v1611
  %v2008 = vpack.c.b16 %v1616, %v1612
  %v2009 = vpack.c.b16 %v1621, %v1617
  %v2010 = vpack.c.b16 %v1622, %v1618
  %v2011 = vpack.c.b16 %v1623, %v1619
  %v2012 = vpack.c.b16 %v1624, %v1620
  %v2013 = vpack.c.b16 %v1629, %v1625
  %v2014 = vpack.c.b16 %v1630, %v1626
  %v2015 = vpack.c.b16 %v1631, %v1627
  %v2016 = vpack.c.b16 %v1632, %v1628
  %2401 = vmatprep.subr.bf16.mxu0 %v1662
  %2402 = vmatpush1.bf16.msra.mxu0 %v1661
  %2403 = vmatprep.subr.bf16.mxu0 %v1658
  %2404 = vmatpush1.bf16.msra.mxu0 %v1657
  %2405 = vmatprep.subr.bf16.mxu0 %v1654
  %2406 = vmatpush1.bf16.msra.mxu0 %v1653
  %2407 = vmatprep.subr.bf16.mxu0 %v1650
  %2408 = vmatpush1.bf16.msra.mxu0 %v1649
  %2409 = vmatprep.subr.bf16.mxu0 %v1646
  %2410 = vmatpush1.bf16.msra.mxu0 %v1645
  %2411 = vmatprep.subr.bf16.mxu0 %v1642
  %2412 = vmatpush1.bf16.msra.mxu0 %v1641
  %2413 = vmatprep.subr.bf16.mxu0 %v1638
  %2414 = vmatpush1.bf16.msra.mxu0 %v1637
  %2415 = vmatprep.subr.bf16.mxu0 %v1634
  %2416 = vmatpush1.bf16.msra.mxu0 %v1633
  %2417 = vmatprep.subr.bf16.mxu0 %v1694
  %2418 = vmatpush2.bf16.msra.mxu0 %v1693
  %2419 = vmatprep.subr.bf16.mxu0 %v1690
  %2420 = vmatpush2.bf16.msra.mxu0 %v1689
  %2421 = vmatprep.subr.bf16.mxu0 %v1686
  %2422 = vmatpush2.bf16.msra.mxu0 %v1685
  %2423 = vmatprep.subr.bf16.mxu0 %v1682
  %2424 = vmatpush2.bf16.msra.mxu0 %v1681
  %2425 = vmatprep.subr.bf16.mxu0 %v1678
  %2426 = vmatpush2.bf16.msra.mxu0 %v1677
  %2427 = vmatprep.subr.bf16.mxu0 %v1674
  %2428 = vmatpush2.bf16.msra.mxu0 %v1673
  %2429 = vmatprep.subr.bf16.mxu0 %v1670
  %2430 = vmatpush2.bf16.msra.mxu0 %v1669
  %2431 = vmatprep.subr.bf16.mxu0 %v1666
  %2432 = vmatpush2.bf16.msra.mxu0 %v1665
  %2433 = vmatprep.mubr.bf16.mxu0 %v458
  %2434 = vmatmul.mubr.bf16.gmra.mxu0 %v457
  %v2435 = vpop.f32.mrf.mxu0
  %v2436 = vadd.f32 %v422, %v2435
  %v2437 = vpop.f32.mrf.mxu0
  %v2438 = vadd.f32 %v426, %v2437
  %v2439 = vpop.f32.mrf.mxu0
  %v2440 = vpop.f32.mrf.mxu0
  %2441 = vdwg.mxu0
  %2442 = vmatprep.subr.bf16.mxu0 %v1726
  %2443 = vmatpush1.bf16.msra.mxu0 %v1725
  %2444 = vmatprep.subr.bf16.mxu0 %v1722
  %2445 = vmatpush1.bf16.msra.mxu0 %v1721
  %2446 = vmatprep.subr.bf16.mxu0 %v1718
  %2447 = vmatpush1.bf16.msra.mxu0 %v1717
  %2448 = vmatprep.subr.bf16.mxu0 %v1714
  %2449 = vmatpush1.bf16.msra.mxu0 %v1713
  %2450 = vmatprep.subr.bf16.mxu0 %v1710
  %2451 = vmatpush1.bf16.msra.mxu0 %v1709
  %2452 = vmatprep.subr.bf16.mxu0 %v1706
  %2453 = vmatpush1.bf16.msra.mxu0 %v1705
  %2454 = vmatprep.subr.bf16.mxu0 %v1702
  %2455 = vmatpush1.bf16.msra.mxu0 %v1701
  %2456 = vmatprep.subr.bf16.mxu0 %v1698
  %2457 = vmatpush1.bf16.msra.mxu0 %v1697
  %2458 = vmatprep.subr.bf16.mxu0 %v1758
  %2459 = vmatpush2.bf16.msra.mxu0 %v1757
  %2460 = vmatprep.subr.bf16.mxu0 %v1754
  %2461 = vmatpush2.bf16.msra.mxu0 %v1753
  %2462 = vmatprep.subr.bf16.mxu0 %v1750
  %2463 = vmatpush2.bf16.msra.mxu0 %v1749
  %2464 = vmatprep.subr.bf16.mxu0 %v1746
  %2465 = vmatpush2.bf16.msra.mxu0 %v1745
  %2466 = vmatprep.subr.bf16.mxu0 %v1742
  %2467 = vmatpush2.bf16.msra.mxu0 %v1741
  %2468 = vmatprep.subr.bf16.mxu0 %v1738
  %2469 = vmatpush2.bf16.msra.mxu0 %v1737
  %2470 = vmatprep.subr.bf16.mxu0 %v1734
  %2471 = vmatpush2.bf16.msra.mxu0 %v1733
  %2472 = vmatprep.subr.bf16.mxu0 %v1730
  %2473 = vmatpush2.bf16.msra.mxu0 %v1729
  %2474 = vmatprep.mubr.bf16.mxu0 %v460
  %2475 = vmatmul.mubr.bf16.gmra.mxu0 %v459
  %v2476 = vpop.f32.mrf.mxu0
  %v2477 = vadd.f32 %v2436, %v2476
  %v2478 = vpop.f32.mrf.mxu0
  %v2479 = vadd.f32 %v2438, %v2478
  %v2480 = vpop.f32.mrf.mxu0
  %v2481 = vpop.f32.mrf.mxu0
  %2482 = vdwg.mxu0
  %2483 = vmatprep.subr.bf16.mxu0 %v1790
  %2484 = vmatpush1.bf16.msra.mxu0 %v1789
  %2485 = vmatprep.subr.bf16.mxu0 %v1786
  %2486 = vmatpush1.bf16.msra.mxu0 %v1785
  %2487 = vmatprep.subr.bf16.mxu0 %v1782
  %2488 = vmatpush1.bf16.msra.mxu0 %v1781
  %2489 = vmatprep.subr.bf16.mxu0 %v1778
  %2490 = vmatpush1.bf16.msra.mxu0 %v1777
  %2491 = vmatprep.subr.bf16.mxu0 %v1774
  %2492 = vmatpush1.bf16.msra.mxu0 %v1773
  %2493 = vmatprep.subr.bf16.mxu0 %v1770
  %2494 = vmatpush1.bf16.msra.mxu0 %v1769
  %2495 = vmatprep.subr.bf16.mxu0 %v1766
  %2496 = vmatpush1.bf16.msra.mxu0 %v1765
  %2497 = vmatprep.subr.bf16.mxu0 %v1762
  %2498 = vmatpush1.bf16.msra.mxu0 %v1761
  %2499 = vmatprep.subr.bf16.mxu0 %v1822
  %2500 = vmatpush2.bf16.msra.mxu0 %v1821
  %2501 = vmatprep.subr.bf16.mxu0 %v1818
  %2502 = vmatpush2.bf16.msra.mxu0 %v1817
  %2503 = vmatprep.subr.bf16.mxu0 %v1814
  %2504 = vmatpush2.bf16.msra.mxu0 %v1813
  %2505 = vmatprep.subr.bf16.mxu0 %v1810
  %2506 = vmatpush2.bf16.msra.mxu0 %v1809
  %2507 = vmatprep.subr.bf16.mxu0 %v1806
  %2508 = vmatpush2.bf16.msra.mxu0 %v1805
  %2509 = vmatprep.subr.bf16.mxu0 %v1802
  %2510 = vmatpush2.bf16.msra.mxu0 %v1801
  %2511 = vmatprep.subr.bf16.mxu0 %v1798
  %2512 = vmatpush2.bf16.msra.mxu0 %v1797
  %2513 = vmatprep.subr.bf16.mxu0 %v1794
  %2514 = vmatpush2.bf16.msra.mxu0 %v1793
  %2515 = vmatprep.mubr.bf16.mxu0 %v462
  %2516 = vmatmul.mubr.bf16.gmra.mxu0 %v461
  %v2517 = vpop.f32.mrf.mxu0
  %v2518 = vadd.f32 %v2477, %v2517
  %v2519 = vpop.f32.mrf.mxu0
  %v2520 = vadd.f32 %v2479, %v2519
  %v2521 = vpop.f32.mrf.mxu0
  %v2522 = vpop.f32.mrf.mxu0
  %2523 = vdwg.mxu0
  %2524 = vmatprep.subr.bf16.mxu0 %v1854
  %2525 = vmatpush1.bf16.msra.mxu0 %v1853
  %2526 = vmatprep.subr.bf16.mxu0 %v1850
  %2527 = vmatpush1.bf16.msra.mxu0 %v1849
  %2528 = vmatprep.subr.bf16.mxu0 %v1846
  %2529 = vmatpush1.bf16.msra.mxu0 %v1845
  %2530 = vmatprep.subr.bf16.mxu0 %v1842
  %2531 = vmatpush1.bf16.msra.mxu0 %v1841
  %2532 = vmatprep.subr.bf16.mxu0 %v1838
  %2533 = vmatpush1.bf16.msra.mxu0 %v1837
  %2534 = vmatprep.subr.bf16.mxu0 %v1834
  %2535 = vmatpush1.bf16.msra.mxu0 %v1833
  %2536 = vmatprep.subr.bf16.mxu0 %v1830
  %2537 = vmatpush1.bf16.msra.mxu0 %v1829
  %2538 = vmatprep.subr.bf16.mxu0 %v1826
  %2539 = vmatpush1.bf16.msra.mxu0 %v1825
  %2540 = vmatprep.subr.bf16.mxu0 %v1886
  %2541 = vmatpush2.bf16.msra.mxu0 %v1885
  %2542 = vmatprep.subr.bf16.mxu0 %v1882
  %2543 = vmatpush2.bf16.msra.mxu0 %v1881
  %2544 = vmatprep.subr.bf16.mxu0 %v1878
  %2545 = vmatpush2.bf16.msra.mxu0 %v1877
  %2546 = vmatprep.subr.bf16.mxu0 %v1874
  %2547 = vmatpush2.bf16.msra.mxu0 %v1873
  %2548 = vmatprep.subr.bf16.mxu0 %v1870
  %2549 = vmatpush2.bf16.msra.mxu0 %v1869
  %2550 = vmatprep.subr.bf16.mxu0 %v1866
  %2551 = vmatpush2.bf16.msra.mxu0 %v1865
  %2552 = vmatprep.subr.bf16.mxu0 %v1862
  %2553 = vmatpush2.bf16.msra.mxu0 %v1861
  %2554 = vmatprep.subr.bf16.mxu0 %v1858
  %2555 = vmatpush2.bf16.msra.mxu0 %v1857
  %2556 = vmatprep.mubr.bf16.mxu0 %v464
  %2557 = vmatmul.mubr.bf16.gmra.mxu0 %v463
  %v2558 = vpop.f32.mrf.mxu0
  %v2559 = vadd.f32 %v2518, %v2558
  %v2560 = vpop.f32.mrf.mxu0
  %v2561 = vadd.f32 %v2520, %v2560
  %v2562 = vpop.f32.mrf.mxu0
  %v2563 = vpop.f32.mrf.mxu0
  %2564 = vdwg.mxu0
  %2565 = vmatprep.subr.bf16.mxu0 %v1918
  %2566 = vmatpush1.bf16.msra.mxu0 %v1917
  %2567 = vmatprep.subr.bf16.mxu0 %v1914
  %2568 = vmatpush1.bf16.msra.mxu0 %v1913
  %2569 = vmatprep.subr.bf16.mxu0 %v1910
  %2570 = vmatpush1.bf16.msra.mxu0 %v1909
  %2571 = vmatprep.subr.bf16.mxu0 %v1906
  %2572 = vmatpush1.bf16.msra.mxu0 %v1905
  %2573 = vmatprep.subr.bf16.mxu0 %v1902
  %2574 = vmatpush1.bf16.msra.mxu0 %v1901
  %2575 = vmatprep.subr.bf16.mxu0 %v1898
  %2576 = vmatpush1.bf16.msra.mxu0 %v1897
  %2577 = vmatprep.subr.bf16.mxu0 %v1894
  %2578 = vmatpush1.bf16.msra.mxu0 %v1893
  %2579 = vmatprep.subr.bf16.mxu0 %v1890
  %2580 = vmatpush1.bf16.msra.mxu0 %v1889
  %2581 = vmatprep.subr.bf16.mxu0 %v1950
  %2582 = vmatpush2.bf16.msra.mxu0 %v1949
  %2583 = vmatprep.subr.bf16.mxu0 %v1946
  %2584 = vmatpush2.bf16.msra.mxu0 %v1945
  %2585 = vmatprep.subr.bf16.mxu0 %v1942
  %2586 = vmatpush2.bf16.msra.mxu0 %v1941
  %2587 = vmatprep.subr.bf16.mxu0 %v1938
  %2588 = vmatpush2.bf16.msra.mxu0 %v1937
  %2589 = vmatprep.subr.bf16.mxu0 %v1934
  %2590 = vmatpush2.bf16.msra.mxu0 %v1933
  %2591 = vmatprep.subr.bf16.mxu0 %v1930
  %2592 = vmatpush2.bf16.msra.mxu0 %v1929
  %2593 = vmatprep.subr.bf16.mxu0 %v1926
  %2594 = vmatpush2.bf16.msra.mxu0 %v1925
  %2595 = vmatprep.subr.bf16.mxu0 %v1922
  %2596 = vmatpush2.bf16.msra.mxu0 %v1921
  %2597 = vmatprep.mubr.bf16.mxu0 %v466
  %2598 = vmatmul.mubr.bf16.gmra.mxu0 %v465
  %v2599 = vpop.f32.mrf.mxu0
  %v2600 = vadd.f32 %v2559, %v2599
  %v2601 = vpop.f32.mrf.mxu0
  %v2602 = vadd.f32 %v2561, %v2601
  %v2603 = vpop.f32.mrf.mxu0
  %v2604 = vpop.f32.mrf.mxu0
  %2605 = vdwg.mxu0
  %2606 = vmatprep.subr.bf16.mxu0 %v1982
  %2607 = vmatpush1.bf16.msra.mxu0 %v1981
  %2608 = vmatprep.subr.bf16.mxu0 %v1978
  %2609 = vmatpush1.bf16.msra.mxu0 %v1977
  %2610 = vmatprep.subr.bf16.mxu0 %v1974
  %2611 = vmatpush1.bf16.msra.mxu0 %v1973
  %2612 = vmatprep.subr.bf16.mxu0 %v1970
  %2613 = vmatpush1.bf16.msra.mxu0 %v1969
  %2614 = vmatprep.subr.bf16.mxu0 %v1966
  %2615 = vmatpush1.bf16.msra.mxu0 %v1965
  %2616 = vmatprep.subr.bf16.mxu0 %v1962
  %2617 = vmatpush1.bf16.msra.mxu0 %v1961
  %2618 = vmatprep.subr.bf16.mxu0 %v1958
  %2619 = vmatpush1.bf16.msra.mxu0 %v1957
  %2620 = vmatprep.subr.bf16.mxu0 %v1954
  %2621 = vmatpush1.bf16.msra.mxu0 %v1953
  %2622 = vmatprep.subr.bf16.mxu0 %v2014
  %2623 = vmatpush2.bf16.msra.mxu0 %v2013
  %2624 = vmatprep.subr.bf16.mxu0 %v2010
  %2625 = vmatpush2.bf16.msra.mxu0 %v2009
  %2626 = vmatprep.subr.bf16.mxu0 %v2006
  %2627 = vmatpush2.bf16.msra.mxu0 %v2005
  %2628 = vmatprep.subr.bf16.mxu0 %v2002
  %2629 = vmatpush2.bf16.msra.mxu0 %v2001
  %2630 = vmatprep.subr.bf16.mxu0 %v1998
  %2631 = vmatpush2.bf16.msra.mxu0 %v1997
  %2632 = vmatprep.subr.bf16.mxu0 %v1994
  %2633 = vmatpush2.bf16.msra.mxu0 %v1993
  %2634 = vmatprep.subr.bf16.mxu0 %v1990
  %2635 = vmatpush2.bf16.msra.mxu0 %v1989
  %2636 = vmatprep.subr.bf16.mxu0 %v1986
  %2637 = vmatpush2.bf16.msra.mxu0 %v1985
  %2638 = vmatprep.mubr.bf16.mxu0 %v468
  %2639 = vmatmul.mubr.bf16.gmra.mxu0 %v467
  %v2640 = vpop.f32.mrf.mxu0
  %v2641 = vadd.f32 %v2600, %v2640
  %v2642 = vpop.f32.mrf.mxu0
  %v2643 = vadd.f32 %v2602, %v2642
  %v2644 = vpop.f32.mrf.mxu0
  %v2645 = vpop.f32.mrf.mxu0
  %2646 = vdwg.mxu0
  %2647 = vmatprep.subr.bf16.mxu0 %v1664
  %2648 = vmatpush1.bf16.msra.mxu0 %v1663
  %2649 = vmatprep.subr.bf16.mxu0 %v1660
  %2650 = vmatpush1.bf16.msra.mxu0 %v1659
  %2651 = vmatprep.subr.bf16.mxu0 %v1656
  %2652 = vmatpush1.bf16.msra.mxu0 %v1655
  %2653 = vmatprep.subr.bf16.mxu0 %v1652
  %2654 = vmatpush1.bf16.msra.mxu0 %v1651
  %2655 = vmatprep.subr.bf16.mxu0 %v1648
  %2656 = vmatpush1.bf16.msra.mxu0 %v1647
  %2657 = vmatprep.subr.bf16.mxu0 %v1644
  %2658 = vmatpush1.bf16.msra.mxu0 %v1643
  %2659 = vmatprep.subr.bf16.mxu0 %v1640
  %2660 = vmatpush1.bf16.msra.mxu0 %v1639
  %2661 = vmatprep.subr.bf16.mxu0 %v1636
  %2662 = vmatpush1.bf16.msra.mxu0 %v1635
  %2663 = vmatprep.subr.bf16.mxu0 %v1696
  %2664 = vmatpush2.bf16.msra.mxu0 %v1695
  %2665 = vmatprep.subr.bf16.mxu0 %v1692
  %2666 = vmatpush2.bf16.msra.mxu0 %v1691
  %2667 = vmatprep.subr.bf16.mxu0 %v1688
  %2668 = vmatpush2.bf16.msra.mxu0 %v1687
  %2669 = vmatprep.subr.bf16.mxu0 %v1684
  %2670 = vmatpush2.bf16.msra.mxu0 %v1683
  %2671 = vmatprep.subr.bf16.mxu0 %v1680
  %2672 = vmatpush2.bf16.msra.mxu0 %v1679
  %2673 = vmatprep.subr.bf16.mxu0 %v1676
  %2674 = vmatpush2.bf16.msra.mxu0 %v1675
  %2675 = vmatprep.subr.bf16.mxu0 %v1672
  %2676 = vmatpush2.bf16.msra.mxu0 %v1671
  %2677 = vmatprep.subr.bf16.mxu0 %v1668
  %2678 = vmatpush2.bf16.msra.mxu0 %v1667
  %2679 = vmatprep.mubr.bf16.mxu0 %v458
  %2680 = vmatmul.mubr.bf16.gmra.mxu0 %v457
  %v2681 = vpop.f32.mrf.mxu0
  %v2682 = vadd.f32 %v430, %v2681
  %v2683 = vpop.f32.mrf.mxu0
  %v2684 = vadd.f32 %v434, %v2683
  %v2685 = vpop.f32.mrf.mxu0
  %v2686 = vpop.f32.mrf.mxu0
  %2687 = vdwg.mxu0
  %2688 = vmatprep.subr.bf16.mxu0 %v1728
  %2689 = vmatpush1.bf16.msra.mxu0 %v1727
  %2690 = vmatprep.subr.bf16.mxu0 %v1724
  %2691 = vmatpush1.bf16.msra.mxu0 %v1723
  %2692 = vmatprep.subr.bf16.mxu0 %v1720
  %2693 = vmatpush1.bf16.msra.mxu0 %v1719
  %2694 = vmatprep.subr.bf16.mxu0 %v1716
  %2695 = vmatpush1.bf16.msra.mxu0 %v1715
  %2696 = vmatprep.subr.bf16.mxu0 %v1712
  %2697 = vmatpush1.bf16.msra.mxu0 %v1711
  %2698 = vmatprep.subr.bf16.mxu0 %v1708
  %2699 = vmatpush1.bf16.msra.mxu0 %v1707
  %2700 = vmatprep.subr.bf16.mxu0 %v1704
  %2701 = vmatpush1.bf16.msra.mxu0 %v1703
  %2702 = vmatprep.subr.bf16.mxu0 %v1700
  %2703 = vmatpush1.bf16.msra.mxu0 %v1699
  %2704 = vmatprep.subr.bf16.mxu0 %v1760
  %2705 = vmatpush2.bf16.msra.mxu0 %v1759
  %2706 = vmatprep.subr.bf16.mxu0 %v1756
  %2707 = vmatpush2.bf16.msra.mxu0 %v1755
  %2708 = vmatprep.subr.bf16.mxu0 %v1752
  %2709 = vmatpush2.bf16.msra.mxu0 %v1751
  %2710 = vmatprep.subr.bf16.mxu0 %v1748
  %2711 = vmatpush2.bf16.msra.mxu0 %v1747
  %2712 = vmatprep.subr.bf16.mxu0 %v1744
  %2713 = vmatpush2.bf16.msra.mxu0 %v1743
  %2714 = vmatprep.subr.bf16.mxu0 %v1740
  %2715 = vmatpush2.bf16.msra.mxu0 %v1739
  %2716 = vmatprep.subr.bf16.mxu0 %v1736
  %2717 = vmatpush2.bf16.msra.mxu0 %v1735
  %2718 = vmatprep.subr.bf16.mxu0 %v1732
  %2719 = vmatpush2.bf16.msra.mxu0 %v1731
  %2720 = vmatprep.mubr.bf16.mxu0 %v460
  %2721 = vmatmul.mubr.bf16.gmra.mxu0 %v459
  %v2722 = vpop.f32.mrf.mxu0
  %v2723 = vadd.f32 %v2682, %v2722
  %v2724 = vpop.f32.mrf.mxu0
  %v2725 = vadd.f32 %v2684, %v2724
  %v2726 = vpop.f32.mrf.mxu0
  %v2727 = vpop.f32.mrf.mxu0
  %2728 = vdwg.mxu0
  %2729 = vmatprep.subr.bf16.mxu0 %v1792
  %2730 = vmatpush1.bf16.msra.mxu0 %v1791
  %2731 = vmatprep.subr.bf16.mxu0 %v1788
  %2732 = vmatpush1.bf16.msra.mxu0 %v1787
  %2733 = vmatprep.subr.bf16.mxu0 %v1784
  %2734 = vmatpush1.bf16.msra.mxu0 %v1783
  %2735 = vmatprep.subr.bf16.mxu0 %v1780
  %2736 = vmatpush1.bf16.msra.mxu0 %v1779
  %2737 = vmatprep.subr.bf16.mxu0 %v1776
  %2738 = vmatpush1.bf16.msra.mxu0 %v1775
  %2739 = vmatprep.subr.bf16.mxu0 %v1772
  %2740 = vmatpush1.bf16.msra.mxu0 %v1771
  %2741 = vmatprep.subr.bf16.mxu0 %v1768
  %2742 = vmatpush1.bf16.msra.mxu0 %v1767
  %2743 = vmatprep.subr.bf16.mxu0 %v1764
  %2744 = vmatpush1.bf16.msra.mxu0 %v1763
  %2745 = vmatprep.subr.bf16.mxu0 %v1824
  %2746 = vmatpush2.bf16.msra.mxu0 %v1823
  %2747 = vmatprep.subr.bf16.mxu0 %v1820
  %2748 = vmatpush2.bf16.msra.mxu0 %v1819
  %2749 = vmatprep.subr.bf16.mxu0 %v1816
  %2750 = vmatpush2.bf16.msra.mxu0 %v1815
  %2751 = vmatprep.subr.bf16.mxu0 %v1812
  %2752 = vmatpush2.bf16.msra.mxu0 %v1811
  %2753 = vmatprep.subr.bf16.mxu0 %v1808
  %2754 = vmatpush2.bf16.msra.mxu0 %v1807
  %2755 = vmatprep.subr.bf16.mxu0 %v1804
  %2756 = vmatpush2.bf16.msra.mxu0 %v1803
  %2757 = vmatprep.subr.bf16.mxu0 %v1800
  %2758 = vmatpush2.bf16.msra.mxu0 %v1799
  %2759 = vmatprep.subr.bf16.mxu0 %v1796
  %2760 = vmatpush2.bf16.msra.mxu0 %v1795
  %2761 = vmatprep.mubr.bf16.mxu0 %v462
  %2762 = vmatmul.mubr.bf16.gmra.mxu0 %v461
  %v2763 = vpop.f32.mrf.mxu0
  %v2764 = vadd.f32 %v2723, %v2763
  %v2765 = vpop.f32.mrf.mxu0
  %v2766 = vadd.f32 %v2725, %v2765
  %v2767 = vpop.f32.mrf.mxu0
  %v2768 = vpop.f32.mrf.mxu0
  %2769 = vdwg.mxu0
  %2770 = vmatprep.subr.bf16.mxu0 %v1856
  %2771 = vmatpush1.bf16.msra.mxu0 %v1855
  %2772 = vmatprep.subr.bf16.mxu0 %v1852
  %2773 = vmatpush1.bf16.msra.mxu0 %v1851
  %2774 = vmatprep.subr.bf16.mxu0 %v1848
  %2775 = vmatpush1.bf16.msra.mxu0 %v1847
  %2776 = vmatprep.subr.bf16.mxu0 %v1844
  %2777 = vmatpush1.bf16.msra.mxu0 %v1843
  %2778 = vmatprep.subr.bf16.mxu0 %v1840
  %2779 = vmatpush1.bf16.msra.mxu0 %v1839
  %2780 = vmatprep.subr.bf16.mxu0 %v1836
  %2781 = vmatpush1.bf16.msra.mxu0 %v1835
  %2782 = vmatprep.subr.bf16.mxu0 %v1832
  %2783 = vmatpush1.bf16.msra.mxu0 %v1831
  %2784 = vmatprep.subr.bf16.mxu0 %v1828
  %2785 = vmatpush1.bf16.msra.mxu0 %v1827
  %2786 = vmatprep.subr.bf16.mxu0 %v1888
  %2787 = vmatpush2.bf16.msra.mxu0 %v1887
  %2788 = vmatprep.subr.bf16.mxu0 %v1884
  %2789 = vmatpush2.bf16.msra.mxu0 %v1883
  %2790 = vmatprep.subr.bf16.mxu0 %v1880
  %2791 = vmatpush2.bf16.msra.mxu0 %v1879
  %2792 = vmatprep.subr.bf16.mxu0 %v1876
  %2793 = vmatpush2.bf16.msra.mxu0 %v1875
  %2794 = vmatprep.subr.bf16.mxu0 %v1872
  %2795 = vmatpush2.bf16.msra.mxu0 %v1871
  %2796 = vmatprep.subr.bf16.mxu0 %v1868
  %2797 = vmatpush2.bf16.msra.mxu0 %v1867
  %2798 = vmatprep.subr.bf16.mxu0 %v1864
  %2799 = vmatpush2.bf16.msra.mxu0 %v1863
  %2800 = vmatprep.subr.bf16.mxu0 %v1860
  %2801 = vmatpush2.bf16.msra.mxu0 %v1859
  %2802 = vmatprep.mubr.bf16.mxu0 %v464
  %2803 = vmatmul.mubr.bf16.gmra.mxu0 %v463
  %v2804 = vpop.f32.mrf.mxu0
  %v2805 = vadd.f32 %v2764, %v2804
  %v2806 = vpop.f32.mrf.mxu0
  %v2807 = vadd.f32 %v2766, %v2806
  %v2808 = vpop.f32.mrf.mxu0
  %v2809 = vpop.f32.mrf.mxu0
  %2810 = vdwg.mxu0
  %2811 = vmatprep.subr.bf16.mxu0 %v1920
  %2812 = vmatpush1.bf16.msra.mxu0 %v1919
  %2813 = vmatprep.subr.bf16.mxu0 %v1916
  %2814 = vmatpush1.bf16.msra.mxu0 %v1915
  %2815 = vmatprep.subr.bf16.mxu0 %v1912
  %2816 = vmatpush1.bf16.msra.mxu0 %v1911
  %2817 = vmatprep.subr.bf16.mxu0 %v1908
  %2818 = vmatpush1.bf16.msra.mxu0 %v1907
  %2819 = vmatprep.subr.bf16.mxu0 %v1904
  %2820 = vmatpush1.bf16.msra.mxu0 %v1903
  %2821 = vmatprep.subr.bf16.mxu0 %v1900
  %2822 = vmatpush1.bf16.msra.mxu0 %v1899
  %2823 = vmatprep.subr.bf16.mxu0 %v1896
  %2824 = vmatpush1.bf16.msra.mxu0 %v1895
  %2825 = vmatprep.subr.bf16.mxu0 %v1892
  %2826 = vmatpush1.bf16.msra.mxu0 %v1891
  %2827 = vmatprep.subr.bf16.mxu0 %v1952
  %2828 = vmatpush2.bf16.msra.mxu0 %v1951
  %2829 = vmatprep.subr.bf16.mxu0 %v1948
  %2830 = vmatpush2.bf16.msra.mxu0 %v1947
  %2831 = vmatprep.subr.bf16.mxu0 %v1944
  %2832 = vmatpush2.bf16.msra.mxu0 %v1943
  %2833 = vmatprep.subr.bf16.mxu0 %v1940
  %2834 = vmatpush2.bf16.msra.mxu0 %v1939
  %2835 = vmatprep.subr.bf16.mxu0 %v1936
  %2836 = vmatpush2.bf16.msra.mxu0 %v1935
  %2837 = vmatprep.subr.bf16.mxu0 %v1932
  %2838 = vmatpush2.bf16.msra.mxu0 %v1931
  %2839 = vmatprep.subr.bf16.mxu0 %v1928
  %2840 = vmatpush2.bf16.msra.mxu0 %v1927
  %2841 = vmatprep.subr.bf16.mxu0 %v1924
  %2842 = vmatpush2.bf16.msra.mxu0 %v1923
  %2843 = vmatprep.mubr.bf16.mxu0 %v466
  %2844 = vmatmul.mubr.bf16.gmra.mxu0 %v465
  %v2845 = vpop.f32.mrf.mxu0
  %v2846 = vadd.f32 %v2805, %v2845
  %v2847 = vpop.f32.mrf.mxu0
  %v2848 = vadd.f32 %v2807, %v2847
  %v2849 = vpop.f32.mrf.mxu0
  %v2850 = vpop.f32.mrf.mxu0
  %2851 = vdwg.mxu0
  %2852 = vmatprep.subr.bf16.mxu0 %v1984
  %2853 = vmatpush1.bf16.msra.mxu0 %v1983
  %2854 = vmatprep.subr.bf16.mxu0 %v1980
  %2855 = vmatpush1.bf16.msra.mxu0 %v1979
  %2856 = vmatprep.subr.bf16.mxu0 %v1976
  %2857 = vmatpush1.bf16.msra.mxu0 %v1975
  %2858 = vmatprep.subr.bf16.mxu0 %v1972
  %2859 = vmatpush1.bf16.msra.mxu0 %v1971
  %2860 = vmatprep.subr.bf16.mxu0 %v1968
  %2861 = vmatpush1.bf16.msra.mxu0 %v1967
  %2862 = vmatprep.subr.bf16.mxu0 %v1964
  %2863 = vmatpush1.bf16.msra.mxu0 %v1963
  %2864 = vmatprep.subr.bf16.mxu0 %v1960
  %2865 = vmatpush1.bf16.msra.mxu0 %v1959
  %2866 = vmatprep.subr.bf16.mxu0 %v1956
  %2867 = vmatpush1.bf16.msra.mxu0 %v1955
  %2868 = vmatprep.subr.bf16.mxu0 %v2016
  %2869 = vmatpush2.bf16.msra.mxu0 %v2015
  %2870 = vmatprep.subr.bf16.mxu0 %v2012
  %2871 = vmatpush2.bf16.msra.mxu0 %v2011
  %2872 = vmatprep.subr.bf16.mxu0 %v2008
  %2873 = vmatpush2.bf16.msra.mxu0 %v2007
  %2874 = vmatprep.subr.bf16.mxu0 %v2004
  %2875 = vmatpush2.bf16.msra.mxu0 %v2003
  %2876 = vmatprep.subr.bf16.mxu0 %v2000
  %2877 = vmatpush2.bf16.msra.mxu0 %v1999
  %2878 = vmatprep.subr.bf16.mxu0 %v1996
  %2879 = vmatpush2.bf16.msra.mxu0 %v1995
  %2880 = vmatprep.subr.bf16.mxu0 %v1992
  %2881 = vmatpush2.bf16.msra.mxu0 %v1991
  %2882 = vmatprep.subr.bf16.mxu0 %v1988
  %2883 = vmatpush2.bf16.msra.mxu0 %v1987
  %2884 = vmatprep.mubr.bf16.mxu0 %v468
  %2885 = vmatmul.mubr.bf16.gmra.mxu0 %v467
  %v2886 = vpop.f32.mrf.mxu0
  %v2887 = vadd.f32 %v2846, %v2886
  %v2888 = vpop.f32.mrf.mxu0
  %v2889 = vadd.f32 %v2848, %v2888
  %v2890 = vpop.f32.mrf.mxu0
  %v2891 = vpop.f32.mrf.mxu0
  %2892 = vdwg.mxu0
  %v2893 = vmax.f32 %v2641, 0.0
  %v2894 = vmax.f32 %v2643, 0.0
  %v2895 = vmax.f32 %v2887, 0.0
  %v2896 = vmax.f32 %v2889, 0.0
  %v2897 = vpack.c.bf16 %v2893, %v2893
  %v2898 = vpack.c.bf16 %v2894, %v2894
  %v2899 = vpack.c.bf16 %v2895, %v2895
  %v2900 = vpack.c.bf16 %v2896, %v2896
  %v2901 = vld [vmem:[%s3] sm:$0xff]
  %v2902 = vld [vmem:[%s3 + $0x8] sm:$0xff]
  %v2903 = vld [vmem:[%s3 + $0x10] sm:$0xff]
  %v2904 = vld [vmem:[%s3 + $0x18] sm:$0xff]
  %v2905 = vld [vmem:[%s3 + $0x20] sm:$0xff]
  %v2906 = vld [vmem:[%s3 + $0x28] sm:$0xff]
  %v2907 = vld [vmem:[%s3 + $0x30] sm:$0xff]
  %v2908 = vld [vmem:[%s3 + $0x38] sm:$0xff]
  %v2909 = vld [vmem:[%s3 + $0x40] sm:$0xff]
  %v2910 = vld [vmem:[%s3 + $0x48] sm:$0xff]
  %v2911 = vld [vmem:[%s3 + $0x50] sm:$0xff]
  %v2912 = vld [vmem:[%s3 + $0x58] sm:$0xff]
  %v2913 = vld [vmem:[%s3 + $0x60] sm:$0xff]
  %v2914 = vld [vmem:[%s3 + $0x68] sm:$0xff]
  %v2915 = vld [vmem:[%s3 + $0x70] sm:$0xff]
  %v2916 = vld [vmem:[%s3 + $0x78] sm:$0xff]
  %v2917 = vld [vmem:[%s3 + $0x80] sm:$0xff]
  %v2918 = vld [vmem:[%s3 + $0x88] sm:$0xff]
  %v2919 = vld [vmem:[%s3 + $0x90] sm:$0xff]
  %v2920 = vld [vmem:[%s3 + $0x98] sm:$0xff]
  %v2921 = vld [vmem:[%s3 + $0xa0] sm:$0xff]
  %v2922 = vld [vmem:[%s3 + $0xa8] sm:$0xff]
  %v2923 = vld [vmem:[%s3 + $0xb0] sm:$0xff]
  %v2924 = vld [vmem:[%s3 + $0xb8] sm:$0xff]
  %v2925 = vld [vmem:[%s3 + $0xc0] sm:$0xff]
  %v2926 = vld [vmem:[%s3 + $0xc8] sm:$0xff]
  %v2927 = vld [vmem:[%s3 + $0xd0] sm:$0xff]
  %v2928 = vld [vmem:[%s3 + $0xd8] sm:$0xff]
  %v2929 = vld [vmem:[%s3 + $0xe0] sm:$0xff]
  %v2930 = vld [vmem:[%s3 + $0xe8] sm:$0xff]
  %v2931 = vld [vmem:[%s3 + $0xf0] sm:$0xff]
  %v2932 = vld [vmem:[%s3 + $0xf8] sm:$0xff]
  %v2933 = vld [vmem:[%s3 + $0x100] sm:$0xff]
  %v2934 = vld [vmem:[%s3 + $0x108] sm:$0xff]
  %v2935 = vld [vmem:[%s3 + $0x110] sm:$0xff]
  %v2936 = vld [vmem:[%s3 + $0x118] sm:$0xff]
  %v2937 = vld [vmem:[%s3 + $0x120] sm:$0xff]
  %v2938 = vld [vmem:[%s3 + $0x128] sm:$0xff]
  %v2939 = vld [vmem:[%s3 + $0x130] sm:$0xff]
  %v2940 = vld [vmem:[%s3 + $0x138] sm:$0xff]
  %v2941 = vld [vmem:[%s3 + $0x140] sm:$0xff]
  %v2942 = vld [vmem:[%s3 + $0x148] sm:$0xff]
  %v2943 = vld [vmem:[%s3 + $0x150] sm:$0xff]
  %v2944 = vld [vmem:[%s3 + $0x158] sm:$0xff]
  %v2945 = vld [vmem:[%s3 + $0x160] sm:$0xff]
  %v2946 = vld [vmem:[%s3 + $0x168] sm:$0xff]
  %v2947 = vld [vmem:[%s3 + $0x170] sm:$0xff]
  %v2948 = vld [vmem:[%s3 + $0x178] sm:$0xff]
  %v2949 = vld [vmem:[%s3 + $0x180] sm:$0xff]
  %v2950 = vld [vmem:[%s3 + $0x188] sm:$0xff]
  %v2951 = vld [vmem:[%s3 + $0x190] sm:$0xff]
  %v2952 = vld [vmem:[%s3 + $0x198] sm:$0xff]
  %v2953 = vld [vmem:[%s3 + $0x1a0] sm:$0xff]
  %v2954 = vld [vmem:[%s3 + $0x1a8] sm:$0xff]
  %v2955 = vld [vmem:[%s3 + $0x1b0] sm:$0xff]
  %v2956 = vld [vmem:[%s3 + $0x1b8] sm:$0xff]
  %v2957 = vld [vmem:[%s3 + $0x1c0] sm:$0xff]
  %v2958 = vld [vmem:[%s3 + $0x1c8] sm:$0xff]
  %v2959 = vld [vmem:[%s3 + $0x1d0] sm:$0xff]
  %v2960 = vld [vmem:[%s3 + $0x1d8] sm:$0xff]
  %v2961 = vld [vmem:[%s3 + $0x1e0] sm:$0xff]
  %v2962 = vld [vmem:[%s3 + $0x1e8] sm:$0xff]
  %v2963 = vld [vmem:[%s3 + $0x1f0] sm:$0xff]
  %v2964 = vld [vmem:[%s3 + $0x1f8] sm:$0xff]
  %v2965 = vld [vmem:[%s4] sm:$0x3]
  %v2967 = vlaneseq
  %v2968 = vshrl.u32 %v2967, 7
  %v2969 = vsub.s32 0, %v2968
  %v2970 = vrot.slane %v2965, %v2969
  %v2971 = vlaneseq
  %v2972 = vshrl.u32 %v2971, 7
  %v2973 = vsub.s32 1, %v2972
  %v2974 = vrot.slane %v2965, %v2973
  %v3041 = vunpack.c.l.b16 %v2901
  %v3042 = vunpack.c.h.b16 %v2901
  %v3043 = vunpack.c.l.b16 %v2902
  %v3044 = vunpack.c.h.b16 %v2902
  %v3045 = vunpack.c.l.b16 %v2903
  %v3046 = vunpack.c.h.b16 %v2903
  %v3047 = vunpack.c.l.b16 %v2904
  %v3048 = vunpack.c.h.b16 %v2904
  %v3049 = vunpack.c.l.b16 %v2905
  %v3050 = vunpack.c.h.b16 %v2905
  %v3051 = vunpack.c.l.b16 %v2906
  %v3052 = vunpack.c.h.b16 %v2906
  %v3053 = vunpack.c.l.b16 %v2907
  %v3054 = vunpack.c.h.b16 %v2907
  %v3055 = vunpack.c.l.b16 %v2908
  %v3056 = vunpack.c.h.b16 %v2908
  %v3057 = vunpack.c.l.b16 %v2909
  %v3058 = vunpack.c.h.b16 %v2909
  %v3059 = vunpack.c.l.b16 %v2910
  %v3060 = vunpack.c.h.b16 %v2910
  %v3061 = vunpack.c.l.b16 %v2911
  %v3062 = vunpack.c.h.b16 %v2911
  %v3063 = vunpack.c.l.b16 %v2912
  %v3064 = vunpack.c.h.b16 %v2912
  %v3065 = vunpack.c.l.b16 %v2913
  %v3066 = vunpack.c.h.b16 %v2913
  %v3067 = vunpack.c.l.b16 %v2914
  %v3068 = vunpack.c.h.b16 %v2914
  %v3069 = vunpack.c.l.b16 %v2915
  %v3070 = vunpack.c.h.b16 %v2915
  %v3071 = vunpack.c.l.b16 %v2916
  %v3072 = vunpack.c.h.b16 %v2916
  %v3073 = vunpack.c.l.b16 %v2917
  %v3074 = vunpack.c.h.b16 %v2917
  %v3075 = vunpack.c.l.b16 %v2918
  %v3076 = vunpack.c.h.b16 %v2918
  %v3077 = vunpack.c.l.b16 %v2919
  %v3078 = vunpack.c.h.b16 %v2919
  %v3079 = vunpack.c.l.b16 %v2920
  %v3080 = vunpack.c.h.b16 %v2920
  %v3081 = vunpack.c.l.b16 %v2921
  %v3082 = vunpack.c.h.b16 %v2921
  %v3083 = vunpack.c.l.b16 %v2922
  %v3084 = vunpack.c.h.b16 %v2922
  %v3085 = vunpack.c.l.b16 %v2923
  %v3086 = vunpack.c.h.b16 %v2923
  %v3087 = vunpack.c.l.b16 %v2924
  %v3088 = vunpack.c.h.b16 %v2924
  %v3089 = vunpack.c.l.b16 %v2925
  %v3090 = vunpack.c.h.b16 %v2925
  %v3091 = vunpack.c.l.b16 %v2926
  %v3092 = vunpack.c.h.b16 %v2926
  %v3093 = vunpack.c.l.b16 %v2927
  %v3094 = vunpack.c.h.b16 %v2927
  %v3095 = vunpack.c.l.b16 %v2928
  %v3096 = vunpack.c.h.b16 %v2928
  %v3097 = vunpack.c.l.b16 %v2929
  %v3098 = vunpack.c.h.b16 %v2929
  %v3099 = vunpack.c.l.b16 %v2930
  %v3100 = vunpack.c.h.b16 %v2930
  %v3101 = vunpack.c.l.b16 %v2931
  %v3102 = vunpack.c.h.b16 %v2931
  %v3103 = vunpack.c.l.b16 %v2932
  %v3104 = vunpack.c.h.b16 %v2932
  %v3105 = vunpack.c.l.b16 %v2933
  %v3106 = vunpack.c.h.b16 %v2933
  %v3107 = vunpack.c.l.b16 %v2934
  %v3108 = vunpack.c.h.b16 %v2934
  %v3109 = vunpack.c.l.b16 %v2935
  %v3110 = vunpack.c.h.b16 %v2935
  %v3111 = vunpack.c.l.b16 %v2936
  %v3112 = vunpack.c.h.b16 %v2936
  %v3113 = vunpack.c.l.b16 %v2937
  %v3114 = vunpack.c.h.b16 %v2937
  %v3115 = vunpack.c.l.b16 %v2938
  %v3116 = vunpack.c.h.b16 %v2938
  %v3117 = vunpack.c.l.b16 %v2939
  %v3118 = vunpack.c.h.b16 %v2939
  %v3119 = vunpack.c.l.b16 %v2940
  %v3120 = vunpack.c.h.b16 %v2940
  %v3121 = vunpack.c.l.b16 %v2941
  %v3122 = vunpack.c.h.b16 %v2941
  %v3123 = vunpack.c.l.b16 %v2942
  %v3124 = vunpack.c.h.b16 %v2942
  %v3125 = vunpack.c.l.b16 %v2943
  %v3126 = vunpack.c.h.b16 %v2943
  %v3127 = vunpack.c.l.b16 %v2944
  %v3128 = vunpack.c.h.b16 %v2944
  %v3129 = vunpack.c.l.b16 %v2945
  %v3130 = vunpack.c.h.b16 %v2945
  %v3131 = vunpack.c.l.b16 %v2946
  %v3132 = vunpack.c.h.b16 %v2946
  %v3133 = vunpack.c.l.b16 %v2947
  %v3134 = vunpack.c.h.b16 %v2947
  %v3135 = vunpack.c.l.b16 %v2948
  %v3136 = vunpack.c.h.b16 %v2948
  %v3137 = vunpack.c.l.b16 %v2949
  %v3138 = vunpack.c.h.b16 %v2949
  %v3139 = vunpack.c.l.b16 %v2950
  %v3140 = vunpack.c.h.b16 %v2950
  %v3141 = vunpack.c.l.b16 %v2951
  %v3142 = vunpack.c.h.b16 %v2951
  %v3143 = vunpack.c.l.b16 %v2952
  %v3144 = vunpack.c.h.b16 %v2952
  %v3145 = vunpack.c.l.b16 %v2953
  %v3146 = vunpack.c.h.b16 %v2953
  %v3147 = vunpack.c.l.b16 %v2954
  %v3148 = vunpack.c.h.b16 %v2954
  %v3149 = vunpack.c.l.b16 %v2955
  %v3150 = vunpack.c.h.b16 %v2955
  %v3151 = vunpack.c.l.b16 %v2956
  %v3152 = vunpack.c.h.b16 %v2956
  %v3153 = vunpack.c.l.b16 %v2957
  %v3154 = vunpack.c.h.b16 %v2957
  %v3155 = vunpack.c.l.b16 %v2958
  %v3156 = vunpack.c.h.b16 %v2958
  %v3157 = vunpack.c.l.b16 %v2959
  %v3158 = vunpack.c.h.b16 %v2959
  %v3159 = vunpack.c.l.b16 %v2960
  %v3160 = vunpack.c.h.b16 %v2960
  %v3161 = vunpack.c.l.b16 %v2961
  %v3162 = vunpack.c.h.b16 %v2961
  %v3163 = vunpack.c.l.b16 %v2962
  %v3164 = vunpack.c.h.b16 %v2962
  %v3165 = vunpack.c.l.b16 %v2963
  %v3166 = vunpack.c.h.b16 %v2963
  %v3167 = vunpack.c.l.b16 %v2964
  %v3168 = vunpack.c.h.b16 %v2964
  %v3169 = vpack.c.b16 %v3043, %v3041
  %v3170 = vpack.c.b16 %v3044, %v3042
  %v3171 = vpack.c.b16 %v3047, %v3045
  %v3172 = vpack.c.b16 %v3048, %v3046
  %v3173 = vpack.c.b16 %v3051, %v3049
  %v3174 = vpack.c.b16 %v3052, %v3050
  %v3175 = vpack.c.b16 %v3055, %v3053
  %v3176 = vpack.c.b16 %v3056, %v3054
  %v3177 = vpack.c.b16 %v3059, %v3057
  %v3178 = vpack.c.b16 %v3060, %v3058
  %v3179 = vpack.c.b16 %v3063, %v3061
  %v3180 = vpack.c.b16 %v3064, %v3062
  %v3181 = vpack.c.b16 %v3067, %v3065
  %v3182 = vpack.c.b16 %v3068, %v3066
  %v3183 = vpack.c.b16 %v3071, %v3069
  %v3184 = vpack.c.b16 %v3072, %v3070
  %v3185 = vpack.c.b16 %v3075, %v3073
  %v3186 = vpack.c.b16 %v3076, %v3074
  %v3187 = vpack.c.b16 %v3079, %v3077
  %v3188 = vpack.c.b16 %v3080, %v3078
  %v3189 = vpack.c.b16 %v3083, %v3081
  %v3190 = vpack.c.b16 %v3084, %v3082
  %v3191 = vpack.c.b16 %v3087, %v3085
  %v3192 = vpack.c.b16 %v3088, %v3086
  %v3193 = vpack.c.b16 %v3091, %v3089
  %v3194 = vpack.c.b16 %v3092, %v3090
  %v3195 = vpack.c.b16 %v3095, %v3093
  %v3196 = vpack.c.b16 %v3096, %v3094
  %v3197 = vpack.c.b16 %v3099, %v3097
  %v3198 = vpack.c.b16 %v3100, %v3098
  %v3199 = vpack.c.b16 %v3103, %v3101
  %v3200 = vpack.c.b16 %v3104, %v3102
  %v3201 = vpack.c.b16 %v3107, %v3105
  %v3202 = vpack.c.b16 %v3108, %v3106
  %v3203 = vpack.c.b16 %v3111, %v3109
  %v3204 = vpack.c.b16 %v3112, %v3110
  %v3205 = vpack.c.b16 %v3115, %v3113
  %v3206 = vpack.c.b16 %v3116, %v3114
  %v3207 = vpack.c.b16 %v3119, %v3117
  %v3208 = vpack.c.b16 %v3120, %v3118
  %v3209 = vpack.c.b16 %v3123, %v3121
  %v3210 = vpack.c.b16 %v3124, %v3122
  %v3211 = vpack.c.b16 %v3127, %v3125
  %v3212 = vpack.c.b16 %v3128, %v3126
  %v3213 = vpack.c.b16 %v3131, %v3129
  %v3214 = vpack.c.b16 %v3132, %v3130
  %v3215 = vpack.c.b16 %v3135, %v3133
  %v3216 = vpack.c.b16 %v3136, %v3134
  %v3217 = vpack.c.b16 %v3139, %v3137
  %v3218 = vpack.c.b16 %v3140, %v3138
  %v3219 = vpack.c.b16 %v3143, %v3141
  %v3220 = vpack.c.b16 %v3144, %v3142
  %v3221 = vpack.c.b16 %v3147, %v3145
  %v3222 = vpack.c.b16 %v3148, %v3146
  %v3223 = vpack.c.b16 %v3151, %v3149
  %v3224 = vpack.c.b16 %v3152, %v3150
  %v3225 = vpack.c.b16 %v3155, %v3153
  %v3226 = vpack.c.b16 %v3156, %v3154
  %v3227 = vpack.c.b16 %v3159, %v3157
  %v3228 = vpack.c.b16 %v3160, %v3158
  %v3229 = vpack.c.b16 %v3163, %v3161
  %v3230 = vpack.c.b16 %v3164, %v3162
  %v3231 = vpack.c.b16 %v3167, %v3165
  %v3232 = vpack.c.b16 %v3168, %v3166
  %3297 = vmatprep.subr.bf16.mxu0 %v3184
  %3298 = vmatpush1.bf16.msra.mxu0 %v3183
  %3299 = vmatprep.subr.bf16.mxu0 %v3182
  %3300 = vmatpush1.bf16.msra.mxu0 %v3181
  %3301 = vmatprep.subr.bf16.mxu0 %v3180
  %3302 = vmatpush1.bf16.msra.mxu0 %v3179
  %3303 = vmatprep.subr.bf16.mxu0 %v3178
  %3304 = vmatpush1.bf16.msra.mxu0 %v3177
  %3305 = vmatprep.subr.bf16.mxu0 %v3176
  %3306 = vmatpush1.bf16.msra.mxu0 %v3175
  %3307 = vmatprep.subr.bf16.mxu0 %v3174
  %3308 = vmatpush1.bf16.msra.mxu0 %v3173
  %3309 = vmatprep.subr.bf16.mxu0 %v3172
  %3310 = vmatpush1.bf16.msra.mxu0 %v3171
  %3311 = vmatprep.subr.bf16.mxu0 %v3170
  %3312 = vmatpush1.bf16.msra.mxu0 %v3169
  %3313 = vmatprep.subr.bf16.mxu0 %v3200
  %3314 = vmatpush2.bf16.msra.mxu0 %v3199
  %3315 = vmatprep.subr.bf16.mxu0 %v3198
  %3316 = vmatpush2.bf16.msra.mxu0 %v3197
  %3317 = vmatprep.subr.bf16.mxu0 %v3196
  %3318 = vmatpush2.bf16.msra.mxu0 %v3195
  %3319 = vmatprep.subr.bf16.mxu0 %v3194
  %3320 = vmatpush2.bf16.msra.mxu0 %v3193
  %3321 = vmatprep.subr.bf16.mxu0 %v3192
  %3322 = vmatpush2.bf16.msra.mxu0 %v3191
  %3323 = vmatprep.subr.bf16.mxu0 %v3190
  %3324 = vmatpush2.bf16.msra.mxu0 %v3189
  %3325 = vmatprep.subr.bf16.mxu0 %v3188
  %3326 = vmatpush2.bf16.msra.mxu0 %v3187
  %3327 = vmatprep.subr.bf16.mxu0 %v3186
  %3328 = vmatpush2.bf16.msra.mxu0 %v3185
  %3329 = vmatprep.mubr.bf16.mxu0 %v2898
  %3330 = vmatmul.mubr.bf16.gmra.mxu0 %v2897
  %v3331 = vpop.f32.mrf.mxu0
  %v3332 = vadd.f32 %v2970, %v3331
  %v3333 = vpop.f32.mrf.mxu0
  %v3334 = vadd.f32 %v2974, %v3333
  %v3335 = vpop.f32.mrf.mxu0
  %v3336 = vpop.f32.mrf.mxu0
  %3337 = vdwg.mxu0
  %3338 = vmatprep.subr.bf16.mxu0 %v3216
  %3339 = vmatpush1.bf16.msra.mxu0 %v3215
  %3340 = vmatprep.subr.bf16.mxu0 %v3214
  %3341 = vmatpush1.bf16.msra.mxu0 %v3213
  %3342 = vmatprep.subr.bf16.mxu0 %v3212
  %3343 = vmatpush1.bf16.msra.mxu0 %v3211
  %3344 = vmatprep.subr.bf16.mxu0 %v3210
  %3345 = vmatpush1.bf16.msra.mxu0 %v3209
  %3346 = vmatprep.subr.bf16.mxu0 %v3208
  %3347 = vmatpush1.bf16.msra.mxu0 %v3207
  %3348 = vmatprep.subr.bf16.mxu0 %v3206
  %3349 = vmatpush1.bf16.msra.mxu0 %v3205
  %3350 = vmatprep.subr.bf16.mxu0 %v3204
  %3351 = vmatpush1.bf16.msra.mxu0 %v3203
  %3352 = vmatprep.subr.bf16.mxu0 %v3202
  %3353 = vmatpush1.bf16.msra.mxu0 %v3201
  %3354 = vmatprep.subr.bf16.mxu0 %v3232
  %3355 = vmatpush2.bf16.msra.mxu0 %v3231
  %3356 = vmatprep.subr.bf16.mxu0 %v3230
  %3357 = vmatpush2.bf16.msra.mxu0 %v3229
  %3358 = vmatprep.subr.bf16.mxu0 %v3228
  %3359 = vmatpush2.bf16.msra.mxu0 %v3227
  %3360 = vmatprep.subr.bf16.mxu0 %v3226
  %3361 = vmatpush2.bf16.msra.mxu0 %v3225
  %3362 = vmatprep.subr.bf16.mxu0 %v3224
  %3363 = vmatpush2.bf16.msra.mxu0 %v3223
  %3364 = vmatprep.subr.bf16.mxu0 %v3222
  %3365 = vmatpush2.bf16.msra.mxu0 %v3221
  %3366 = vmatprep.subr.bf16.mxu0 %v3220
  %3367 = vmatpush2.bf16.msra.mxu0 %v3219
  %3368 = vmatprep.subr.bf16.mxu0 %v3218
  %3369 = vmatpush2.bf16.msra.mxu0 %v3217
  %3370 = vmatprep.mubr.bf16.mxu0 %v2900
  %3371 = vmatmul.mubr.bf16.gmra.mxu0 %v2899
  %v3372 = vpop.f32.mrf.mxu0
  %v3373 = vadd.f32 %v3332, %v3372
  %v3374 = vpop.f32.mrf.mxu0
  %v3375 = vadd.f32 %v3334, %v3374
  %v3376 = vpop.f32.mrf.mxu0
  %v3377 = vpop.f32.mrf.mxu0
  %3378 = vdwg.mxu0
  %v3379 = vmax.f32 %v3373, 0.0
  %v3380 = vmax.f32 %v3375, 0.0
  %v3381 = vpack.c.bf16 %v3379, %v3379
  %v3382 = vpack.c.bf16 %v3380, %v3380
  %v3383 = vld [vmem:[%s5] sm:$0xf]
  %v3384 = vld [vmem:[%s5 + $0x4] sm:$0xf]
  %v3385 = vld [vmem:[%s5 + $0x8] sm:$0xf]
  %v3386 = vld [vmem:[%s5 + $0xc] sm:$0xf]
  %v3387 = vld [vmem:[%s5 + $0x10] sm:$0xf]
  %v3388 = vld [vmem:[%s5 + $0x14] sm:$0xf]
  %v3389 = vld [vmem:[%s5 + $0x18] sm:$0xf]
  %v3390 = vld [vmem:[%s5 + $0x1c] sm:$0xf]
  %v3391 = vld [vmem:[%s5 + $0x20] sm:$0xf]
  %v3392 = vld [vmem:[%s5 + $0x24] sm:$0xf]
  %v3393 = vld [vmem:[%s5 + $0x28] sm:$0xf]
  %v3394 = vld [vmem:[%s5 + $0x2c] sm:$0xf]
  %v3395 = vld [vmem:[%s5 + $0x30] sm:$0xf]
  %v3396 = vld [vmem:[%s5 + $0x34] sm:$0xf]
  %v3397 = vld [vmem:[%s5 + $0x38] sm:$0xf]
  %v3398 = vld [vmem:[%s5 + $0x3c] sm:$0xf]
  %v3399 = vld [vmem:[%s5 + $0x40] sm:$0xf]
  %v3400 = vld [vmem:[%s5 + $0x44] sm:$0xf]
  %v3401 = vld [vmem:[%s5 + $0x48] sm:$0xf]
  %v3402 = vld [vmem:[%s5 + $0x4c] sm:$0xf]
  %v3403 = vld [vmem:[%s5 + $0x50] sm:$0xf]
  %v3404 = vld [vmem:[%s5 + $0x54] sm:$0xf]
  %v3405 = vld [vmem:[%s5 + $0x58] sm:$0xf]
  %v3406 = vld [vmem:[%s5 + $0x5c] sm:$0xf]
  %v3407 = vld [vmem:[%s5 + $0x60] sm:$0xf]
  %v3408 = vld [vmem:[%s5 + $0x64] sm:$0xf]
  %v3409 = vld [vmem:[%s5 + $0x68] sm:$0xf]
  %v3410 = vld [vmem:[%s5 + $0x6c] sm:$0xf]
  %v3411 = vld [vmem:[%s5 + $0x70] sm:$0xf]
  %v3412 = vld [vmem:[%s5 + $0x74] sm:$0xf]
  %v3413 = vld [vmem:[%s5 + $0x78] sm:$0xf]
  %v3414 = vld [vmem:[%s5 + $0x7c] sm:$0xf]
  %v3415 = vld [vmem:[%s6] sm:$0x1]
  %v3417 = vlaneseq
  %v3418 = vshrl.u32 %v3417, 7
  %v3419 = vsub.s32 0, %v3418
  %v3420 = vrot.slane %v3415, %v3419
  %v3454 = vunpack.c.l.b16 %v3383
  %v3455 = vunpack.c.l.b16 %v3384
  %v3456 = vunpack.c.l.b16 %v3385
  %v3457 = vunpack.c.l.b16 %v3386
  %v3458 = vunpack.c.l.b16 %v3387
  %v3459 = vunpack.c.l.b16 %v3388
  %v3460 = vunpack.c.l.b16 %v3389
  %v3461 = vunpack.c.l.b16 %v3390
  %v3462 = vunpack.c.l.b16 %v3391
  %v3463 = vunpack.c.l.b16 %v3392
  %v3464 = vunpack.c.l.b16 %v3393
  %v3465 = vunpack.c.l.b16 %v3394
  %v3466 = vunpack.c.l.b16 %v3395
  %v3467 = vunpack.c.l.b16 %v3396
  %v3468 = vunpack.c.l.b16 %v3397
  %v3469 = vunpack.c.l.b16 %v3398
  %v3470 = vunpack.c.l.b16 %v3399
  %v3471 = vunpack.c.l.b16 %v3400
  %v3472 = vunpack.c.l.b16 %v3401
  %v3473 = vunpack.c.l.b16 %v3402
  %v3474 = vunpack.c.l.b16 %v3403
  %v3475 = vunpack.c.l.b16 %v3404
  %v3476 = vunpack.c.l.b16 %v3405
  %v3477 = vunpack.c.l.b16 %v3406
  %v3478 = vunpack.c.l.b16 %v3407
  %v3479 = vunpack.c.l.b16 %v3408
  %v3480 = vunpack.c.l.b16 %v3409
  %v3481 = vunpack.c.l.b16 %v3410
  %v3482 = vunpack.c.l.b16 %v3411
  %v3483 = vunpack.c.l.b16 %v3412
  %v3484 = vunpack.c.l.b16 %v3413
  %v3485 = vunpack.c.l.b16 %v3414
  %v3486 = vpack.c.b16 %v3455, %v3454
  %v3487 = vpack.c.b16 %v3457, %v3456
  %v3488 = vpack.c.b16 %v3459, %v3458
  %v3489 = vpack.c.b16 %v3461, %v3460
  %v3490 = vpack.c.b16 %v3463, %v3462
  %v3491 = vpack.c.b16 %v3465, %v3464
  %v3492 = vpack.c.b16 %v3467, %v3466
  %v3493 = vpack.c.b16 %v3469, %v3468
  %v3494 = vpack.c.b16 %v3471, %v3470
  %v3495 = vpack.c.b16 %v3473, %v3472
  %v3496 = vpack.c.b16 %v3475, %v3474
  %v3497 = vpack.c.b16 %v3477, %v3476
  %v3498 = vpack.c.b16 %v3479, %v3478
  %v3499 = vpack.c.b16 %v3481, %v3480
  %v3500 = vpack.c.b16 %v3483, %v3482
  %v3501 = vpack.c.b16 %v3485, %v3484
  %3518 = vmatprep.subr.bf16.mxu0 0
  %3519 = vmatpush1.bf16.msra.mxu0 %v3493
  %3520 = vmatprep.subr.bf16.mxu0 0
  %3521 = vmatpush1.bf16.msra.mxu0 %v3492
  %3522 = vmatprep.subr.bf16.mxu0 0
  %3523 = vmatpush1.bf16.msra.mxu0 %v3491
  %3524 = vmatprep.subr.bf16.mxu0 0
  %3525 = vmatpush1.bf16.msra.mxu0 %v3490
  %3526 = vmatprep.subr.bf16.mxu0 0
  %3527 = vmatpush1.bf16.msra.mxu0 %v3489
  %3528 = vmatprep.subr.bf16.mxu0 0
  %3529 = vmatpush1.bf16.msra.mxu0 %v3488
  %3530 = vmatprep.subr.bf16.mxu0 0
  %3531 = vmatpush1.bf16.msra.mxu0 %v3487
  %3532 = vmatprep.subr.bf16.mxu0 0
  %3533 = vmatpush1.bf16.msra.mxu0 %v3486
  %3534 = vmatprep.subr.bf16.mxu0 0
  %3535 = vmatpush2.bf16.msra.mxu0 %v3501
  %3536 = vmatprep.subr.bf16.mxu0 0
  %3537 = vmatpush2.bf16.msra.mxu0 %v3500
  %3538 = vmatprep.subr.bf16.mxu0 0
  %3539 = vmatpush2.bf16.msra.mxu0 %v3499
  %3540 = vmatprep.subr.bf16.mxu0 0
  %3541 = vmatpush2.bf16.msra.mxu0 %v3498
  %3542 = vmatprep.subr.bf16.mxu0 0
  %3543 = vmatpush2.bf16.msra.mxu0 %v3497
  %3544 = vmatprep.subr.bf16.mxu0 0
  %3545 = vmatpush2.bf16.msra.mxu0 %v3496
  %3546 = vmatprep.subr.bf16.mxu0 0
  %3547 = vmatpush2.bf16.msra.mxu0 %v3495
  %3548 = vmatprep.subr.bf16.mxu0 0
  %3549 = vmatpush2.bf16.msra.mxu0 %v3494
  %3550 = vmatprep.mubr.bf16.mxu0 %v3382
  %3551 = vmatmul.mubr.bf16.gmra.mxu0 %v3381
  %v3552 = vpop.f32.mrf.mxu0
  %v3553 = vadd.f32 %v3420, %v3552
  %v3554 = vpop.f32.mrf.mxu0
  %v3555 = vpop.f32.mrf.mxu0
  %v3556 = vpop.f32.mrf.mxu0
  %3557 = vdwg.mxu0
  %3558 = vst [vmem:[%s7] sm:$0xff] %v3553
  // Predicated region
  $region30: #{forward.3} parent=0 // pred_check
    _
  $region31: #{forward.3} parent=0 // pred_check_branch
    %3560 = sbr.rel (0) target = $region33
  $region32: #{forward.3} parent=0 // pred_region
    _
  $region33: #{forward.3} parent=0 // pred_fallthru
    _
  // Predicated region
  $region34: #{forward.3} parent=0 // pred_check
    _
  $region35: #{forward.3} parent=0 // pred_check_branch
    %3562 = sbr.rel (0) target = $region37
  $region36: #{forward.3} parent=0 // pred_region
    _
  $region37: #{forward.3} parent=0 // pred_fallthru
    _

</llo_original>
